<compile_context>
chip_gen: v7x
topology: tpu7x:2x2x1
jax: 0.10.0
libtpu: 0.0.40
codegen_flags: <defaults>
</compile_context>

<pallas_src>
import jax
import jax.numpy as jnp
from jax.experimental import pallas as pl
from jax.experimental.pallas import tpu as pltpu


HIDDEN = 512


def _lstm_kernel(x_ref, wih_ref, whh_ref, bias_ref, wout_ref, bout_ref,
                 out_ref, pre_ref, h_ref, c_ref):
    """One Tc-timestep chunk of the LSTM recurrence.

    x_ref:    (Tc*Bp, D)  bf16  time-major input chunk (row = t*Bp + b)
    wih_ref:  (D, 4H)     bf16  W_ih^T, loop invariant (fetched once)
    whh_ref:  (H, 4H)     bf16  W_hh^T, loop invariant (fetched once)
    bias_ref: (1, 4H)     f32   b_ih + b_hh
    wout_ref: (1, H)      f32   score-head weight row
    bout_ref: (1, 1)      f32   score-head bias
    out_ref:  (Bp, 1)     f32   score (written on the final chunk only)
    pre_ref:  (Tc*Bp, 4H) f32   scratch: chunk pre-activations
    h_ref/c_ref: (Bp, H)  f32   persistent hidden / cell state
    """
    t_chunk = pl.program_id(0)
    rows, _ = x_ref.shape
    Bp, H = h_ref.shape
    Tc = rows // Bp

    @pl.when(t_chunk == 0)
    def _():
        h_ref[...] = jnp.zeros_like(h_ref)
        c_ref[...] = jnp.zeros_like(c_ref)

    # Chunk input projection: one (Tc*Bp, D) @ (D, 4H) bf16 matmul with f32
    # accumulation, bias fused.  Never round-trips through HBM.
    pre_ref[...] = (jnp.dot(x_ref[...], wih_ref[...],
                            preferred_element_type=jnp.float32)
                    + bias_ref[...])

    def sigmoid_t(x):
        # sigmoid(x) == 0.5 * (tanh(0.5 * x) + 1): single EUP op.
        return 0.5 * jnp.tanh(0.5 * x) + 0.5

    def step(t, carry):
        h, c = carry
        hb = h.astype(jnp.bfloat16)            # single pack at the MXU boundary
        r0 = pl.multiple_of(t * Bp, Bp)        # sublane-aligned dynamic slice
        pg = pre_ref[pl.ds(r0, Bp), :]
        # Four per-gate MXU dots interleaved with EUP nonlinearities so the
        # weight pushes and the tanh evaluations co-issue in different slots.
        z_i = jnp.dot(hb, whh_ref[:, 0 * H:1 * H],
                      preferred_element_type=jnp.float32)
        z_f = jnp.dot(hb, whh_ref[:, 1 * H:2 * H],
                      preferred_element_type=jnp.float32)
        i_g = sigmoid_t(pg[:, 0 * H:1 * H] + z_i)
        z_g = jnp.dot(hb, whh_ref[:, 2 * H:3 * H],
                      preferred_element_type=jnp.float32)
        f_g = sigmoid_t(pg[:, 1 * H:2 * H] + z_f)
        z_o = jnp.dot(hb, whh_ref[:, 3 * H:4 * H],
                      preferred_element_type=jnp.float32)
        g_g = jnp.tanh(pg[:, 2 * H:3 * H] + z_g)
        o_g = sigmoid_t(pg[:, 3 * H:4 * H] + z_o)
        c_new = f_g * c + i_g * g_g
        h_new = o_g * jnp.tanh(c_new)
        return h_new, c_new

    h, c = jax.lax.fori_loop(0, Tc, step, (h_ref[...], c_ref[...]),
                             unroll=True)
    h_ref[...] = h
    c_ref[...] = c

    @pl.when(t_chunk == pl.num_programs(0) - 1)
    def _():
        # Score head as a VPU/XLU reduction instead of an N=1 MXU matmul.
        out_ref[...] = (jnp.sum(h * wout_ref[...], axis=-1, keepdims=True)
                        + bout_ref[...])


def _pick_time_chunk(T, Bp, max_rows=128, max_unroll=16):
    """Largest divisor of T such that the chunk stays small and fully unrollable."""
    cap = max(1, min(max_unroll, max_rows // Bp))
    for tc in range(min(T, cap), 0, -1):
        if T % tc == 0:
            return tc
    return 1


@jax.jit
def lstm_score(x_seq, w_ih, w_hh, b_ih, b_hh, w_out, b_out):
    """x_seq: (B, T, D) f32.  Weights in PyTorch nn.LSTM layout.  Returns (B, 1)."""
    B, T, D = x_seq.shape
    H = w_hh.shape[1]
    G = 4 * H

    # Pad the batch to a full sublane tile: per-step MXU/VPU/EUP cost is flat
    # up to 8 rows, so the padding rows cost nothing.
    Bp = ((B + 7) // 8) * 8
    Tc = _pick_time_chunk(T, Bp)
    n_chunks = T // Tc

    # Time-major, batch-padded, flattened so row index = t*Bp + b; bf16 MXU
    # operand (tiny: T*Bp*D*2 bytes total HBM traffic for the recurrence input).
    x_tm = jnp.transpose(x_seq, (1, 0, 2))                       # (T, B, D)
    x_tm = jnp.pad(x_tm, ((0, 0), (0, Bp - B), (0, 0)))          # (T, Bp, D)
    x2d = x_tm.reshape(T * Bp, D).astype(jnp.bfloat16)           # (T*Bp, D)

    wih_t = jnp.transpose(w_ih).astype(jnp.bfloat16)             # (D, 4H)
    whh_t = jnp.transpose(w_hh).astype(jnp.bfloat16)             # (H, 4H)
    bias = (b_ih + b_hh).reshape(1, G).astype(jnp.float32)       # (1, 4H)
    wout_row = w_out.astype(jnp.float32)                         # (1, H)
    bout = b_out.reshape(1, 1).astype(jnp.float32)               # (1, 1)

    out = pl.pallas_call(
        _lstm_kernel,
        out_shape=jax.ShapeDtypeStruct((Bp, 1), jnp.float32),
        grid=(n_chunks,),
        in_specs=[
            pl.BlockSpec((Tc * Bp, D), lambda t: (t, 0)),   # streamed x chunk
            pl.BlockSpec((D, G), lambda t: (0, 0)),         # W_ih^T (resident)
            pl.BlockSpec((H, G), lambda t: (0, 0)),         # W_hh^T (resident)
            pl.BlockSpec((1, G), lambda t: (0, 0)),         # fused bias
            pl.BlockSpec((1, H), lambda t: (0, 0)),         # w_out row
            pl.BlockSpec((1, 1), lambda t: (0, 0)),         # b_out
        ],
        out_specs=pl.BlockSpec((Bp, 1), lambda t: (0, 0)),
        scratch_shapes=[
            pltpu.VMEM((Tc * Bp, G), jnp.float32),   # chunk pre-activations
            pltpu.VMEM((Bp, H), jnp.float32),        # h carry
            pltpu.VMEM((Bp, H), jnp.float32),        # c carry
        ],
        compiler_params=pltpu.CompilerParams(
            dimension_semantics=("arbitrary",)),
    )(x2d, wih_t, whh_t, bias, wout_row, bout)
    return out[:B]


def lstm_score_ref(x_seq, w_ih, w_hh, b_ih, b_hh, w_out, b_out):
    """Pure-JAX f32 reference matching PyTorch nn.LSTM (gate order i,f,g,o)."""
    B, T, D = x_seq.shape
    H = w_hh.shape[1]

    def step(carry, x_t):
        h, c = carry
        gates = x_t @ w_ih.T + b_ih + h @ w_hh.T + b_hh
        i = jax.nn.sigmoid(gates[:, 0 * H:1 * H])
        f = jax.nn.sigmoid(gates[:, 1 * H:2 * H])
        g = jnp.tanh(gates[:, 2 * H:3 * H])
        o = jax.nn.sigmoid(gates[:, 3 * H:4 * H])
        c = f * c + i * g
        h = o * jnp.tanh(c)
        return (h, c), h

    h0 = jnp.zeros((B, H), jnp.float32)
    c0 = jnp.zeros((B, H), jnp.float32)
    (h_last, _), _ = jax.lax.scan(step, (h0, c0),
                                  jnp.transpose(x_seq, (1, 0, 2)))
    return h_last @ w_out.T + b_out


if __name__ == "__main__":
    B, T, D = 2, 8, 32
    H = HIDDEN

    key = jax.random.PRNGKey(0)
    ks = jax.random.split(key, 7)
    scale = 1.0 / jnp.sqrt(jnp.float32(H))   # PyTorch-style uniform range

    x_seq = jax.random.normal(ks[0], (B, T, D), jnp.float32)
    w_ih = jax.random.uniform(ks[1], (4 * H, D), jnp.float32, -scale, scale)
    w_hh = jax.random.uniform(ks[2], (4 * H, H), jnp.float32, -scale, scale)
    b_ih = jax.random.uniform(ks[3], (4 * H,), jnp.float32, -scale, scale)
    b_hh = jax.random.uniform(ks[4], (4 * H,), jnp.float32, -scale, scale)
    w_out = jax.random.uniform(ks[5], (1, H), jnp.float32, -scale, scale)
    b_out = jax.random.uniform(ks[6], (1,), jnp.float32, -scale, scale)

    score = lstm_score(x_seq, w_ih, w_hh, b_ih, b_hh, w_out, b_out)
    score = jax.block_until_ready(score)

    ref = lstm_score_ref(x_seq, w_ih, w_hh, b_ih, b_hh, w_out, b_out)
    assert score.shape == (B, 1)
    # Tolerance loosened vs. the all-f32 reference: x, W_ih and W_hh enter the
    # MXU in bf16 (accumulation, gate math and the h/c state remain f32).
    assert jnp.allclose(score, ref, atol=2e-2, rtol=2e-2), (score, ref)

    print("KERNEL_OK")
</pallas_src>

<mosaic_0001>
module attributes {stable_mosaic.version = 11 : i64} {
  func.func @_lstm_kernel(%arg0: i32, %arg1: memref<64x32xbf16, #tpu.memory_space<vmem>>, %arg2: memref<32x2048xbf16, #tpu.memory_space<vmem>>, %arg3: memref<512x2048xbf16, #tpu.memory_space<vmem>>, %arg4: memref<1x2048xf32, #tpu.memory_space<vmem>>, %arg5: memref<1x512xf32, #tpu.memory_space<vmem>>, %arg6: memref<1x1xf32, #tpu.memory_space<vmem>>, %arg7: memref<8x1xf32, #tpu.memory_space<vmem>>, %arg8: memref<64x2048xf32, #tpu.memory_space<vmem>>, %arg9: memref<8x512xf32, #tpu.memory_space<vmem>>, %arg10: memref<8x512xf32, #tpu.memory_space<vmem>>) attributes {dimension_semantics = [#tpu.dimension_semantics<arbitrary>], iteration_bounds = array<i64: 1>, scalar_prefetch = 0 : i64, scratch_operands = 3 : i64, tpu.core_type = #tpu.core_type<tc>, window_params = [{transform_indices = @transform_0, window_bounds = array<i64: 64, 32>}, {pipeline_mode = #tpu.pipeline_mode<synchronous>, transform_indices = @transform_1, window_bounds = array<i64: 32, 2048>}, {pipeline_mode = #tpu.pipeline_mode<synchronous>, transform_indices = @transform_2, window_bounds = array<i64: 512, 2048>}, {pipeline_mode = #tpu.pipeline_mode<synchronous>, transform_indices = @transform_3, window_bounds = array<i64: 1, 2048>}, {pipeline_mode = #tpu.pipeline_mode<synchronous>, transform_indices = @transform_4, window_bounds = array<i64: 1, 512>}, {pipeline_mode = #tpu.pipeline_mode<synchronous>, transform_indices = @transform_5, window_bounds = array<i64: 1, 1>}, {pipeline_mode = #tpu.pipeline_mode<synchronous>, transform_indices = @transform_6, window_bounds = array<i64: 8, 1>}]} {
    %c0_i32 = arith.constant 0 : i32
    %0 = arith.cmpi eq, %arg0, %c0_i32 : i32
    %1 = arith.extui %0 : i1 to i32
    %c0_i32_0 = arith.constant 0 : i32
    %2 = arith.cmpi ne, %1, %c0_i32_0 : i32
    scf.if %2 {
      %cst_200 = arith.constant 0.000000e+00 : f32
      %401 = vector.broadcast %cst_200 : f32 to vector<8x512xf32>
      %c0_201 = arith.constant 0 : index
      %c0_202 = arith.constant 0 : index
      %402 = vector.load %arg9[%c0_201, %c0_202] : memref<8x512xf32, #tpu.memory_space<vmem>>, vector<8x512xf32>
      tpu.vector_store %arg9[%c0_201, %c0_202], %401 {strides = array<i32>} : memref<8x512xf32, #tpu.memory_space<vmem>>, vector<8x512xf32>,
      %cst_203 = arith.constant 0.000000e+00 : f32
      %403 = vector.broadcast %cst_203 : f32 to vector<8x512xf32>
      %c0_204 = arith.constant 0 : index
      %c0_205 = arith.constant 0 : index
      %404 = vector.load %arg10[%c0_204, %c0_205] : memref<8x512xf32, #tpu.memory_space<vmem>>, vector<8x512xf32>
      tpu.vector_store %arg10[%c0_204, %c0_205], %403 {strides = array<i32>} : memref<8x512xf32, #tpu.memory_space<vmem>>, vector<8x512xf32>,
    } else {
    }
    %c0 = arith.constant 0 : index
    %c0_1 = arith.constant 0 : index
    %3 = vector.load %arg1[%c0, %c0_1] : memref<64x32xbf16, #tpu.memory_space<vmem>>, vector<64x32xbf16>
    %c0_2 = arith.constant 0 : index
    %c0_3 = arith.constant 0 : index
    %4 = vector.load %arg2[%c0_2, %c0_3] : memref<32x2048xbf16, #tpu.memory_space<vmem>>, vector<32x2048xbf16>
    %cst = arith.constant dense<0.000000e+00> : vector<64x2048xf32>
    %5 = tpu.matmul %3, %4, %cst {dimension_numbers = #tpu.dot_dimension_numbers<[1], [0], [0], [1], [0, 0, 1, 1], [], []>} : vector<64x32xbf16>, vector<32x2048xbf16>, vector<64x2048xf32> -> vector<64x2048xf32>
    %c0_4 = arith.constant 0 : index
    %c0_5 = arith.constant 0 : index
    %6 = vector.load %arg4[%c0_4, %c0_5] : memref<1x2048xf32, #tpu.memory_space<vmem>>, vector<1x2048xf32>
    %7 = vector.broadcast %6 : vector<1x2048xf32> to vector<64x2048xf32>
    %8 = arith.addf %5, %7 : vector<64x2048xf32>
    %c0_6 = arith.constant 0 : index
    %c0_7 = arith.constant 0 : index
    %9 = vector.load %arg8[%c0_6, %c0_7] : memref<64x2048xf32, #tpu.memory_space<vmem>>, vector<64x2048xf32>
    tpu.vector_store %arg8[%c0_6, %c0_7], %8 {strides = array<i32>} : memref<64x2048xf32, #tpu.memory_space<vmem>>, vector<64x2048xf32>,
    %c0_8 = arith.constant 0 : index
    %c0_9 = arith.constant 0 : index
    %10 = vector.load %arg9[%c0_8, %c0_9] : memref<8x512xf32, #tpu.memory_space<vmem>>, vector<8x512xf32>
    %c0_10 = arith.constant 0 : index
    %c0_11 = arith.constant 0 : index
    %11 = vector.load %arg10[%c0_10, %c0_11] : memref<8x512xf32, #tpu.memory_space<vmem>>, vector<8x512xf32>
    %c0_i32_12 = arith.constant 0 : i32
    %12 = arith.truncf %10 : vector<8x512xf32> to vector<8x512xbf16>
    %c8_i32 = arith.constant 8 : i32
    %13 = arith.muli %c0_i32_12, %c8_i32 : i32
    %14 = tpu.assume_multiple %13, 8 : i32
    %15 = arith.index_cast %14 : i32 to index
    %c0_13 = arith.constant 0 : index
    %16 = vector.load %arg8[%15, %c0_13] : memref<64x2048xf32, #tpu.memory_space<vmem>>, vector<8x2048xf32>
    %c0_14 = arith.constant 0 : index
    %c0_15 = arith.constant 0 : index
    %17 = vector.load %arg3[%c0_14, %c0_15] : memref<512x2048xbf16, #tpu.memory_space<vmem>>, vector<512x512xbf16>
    %cst_16 = arith.constant dense<0.000000e+00> : vector<8x512xf32>
    %18 = tpu.matmul %12, %17, %cst_16 {dimension_numbers = #tpu.dot_dimension_numbers<[1], [0], [0], [1], [0, 0, 1, 1], [], []>} : vector<8x512xbf16>, vector<512x512xbf16>, vector<8x512xf32> -> vector<8x512xf32>
    %c0_17 = arith.constant 0 : index
    %c512 = arith.constant 512 : index
    %19 = vector.load %arg3[%c0_17, %c512] : memref<512x2048xbf16, #tpu.memory_space<vmem>>, vector<512x512xbf16>
    %cst_18 = arith.constant dense<0.000000e+00> : vector<8x512xf32>
    %20 = tpu.matmul %12, %19, %cst_18 {dimension_numbers = #tpu.dot_dimension_numbers<[1], [0], [0], [1], [0, 0, 1, 1], [], []>} : vector<8x512xbf16>, vector<512x512xbf16>, vector<8x512xf32> -> vector<8x512xf32>
    %21 = vector.extract_strided_slice %16 {offsets = [0, 0], sizes = [8, 512], strides = [1, 1]} : vector<8x2048xf32> to vector<8x512xf32>
    %22 = arith.addf %21, %18 : vector<8x512xf32>
    %cst_19 = arith.constant 5.000000e-01 : f32
    %23 = vector.broadcast %cst_19 : f32 to vector<8x512xf32>
    %24 = arith.mulf %23, %22 : vector<8x512xf32>
    %25 = math.tanh %24 : vector<8x512xf32>
    %cst_20 = arith.constant 5.000000e-01 : f32
    %26 = vector.broadcast %cst_20 : f32 to vector<8x512xf32>
    %27 = arith.mulf %26, %25 : vector<8x512xf32>
    %cst_21 = arith.constant 5.000000e-01 : f32
    %28 = vector.broadcast %cst_21 : f32 to vector<8x512xf32>
    %29 = arith.addf %27, %28 : vector<8x512xf32>
    %c0_22 = arith.constant 0 : index
    %c1024 = arith.constant 1024 : index
    %30 = vector.load %arg3[%c0_22, %c1024] : memref<512x2048xbf16, #tpu.memory_space<vmem>>, vector<512x512xbf16>
    %cst_23 = arith.constant dense<0.000000e+00> : vector<8x512xf32>
    %31 = tpu.matmul %12, %30, %cst_23 {dimension_numbers = #tpu.dot_dimension_numbers<[1], [0], [0], [1], [0, 0, 1, 1], [], []>} : vector<8x512xbf16>, vector<512x512xbf16>, vector<8x512xf32> -> vector<8x512xf32>
    %32 = vector.extract_strided_slice %16 {offsets = [0, 512], sizes = [8, 512], strides = [1, 1]} : vector<8x2048xf32> to vector<8x512xf32>
    %33 = arith.addf %32, %20 : vector<8x512xf32>
    %cst_24 = arith.constant 5.000000e-01 : f32
    %34 = vector.broadcast %cst_24 : f32 to vector<8x512xf32>
    %35 = arith.mulf %34, %33 : vector<8x512xf32>
    %36 = math.tanh %35 : vector<8x512xf32>
    %cst_25 = arith.constant 5.000000e-01 : f32
    %37 = vector.broadcast %cst_25 : f32 to vector<8x512xf32>
    %38 = arith.mulf %37, %36 : vector<8x512xf32>
    %cst_26 = arith.constant 5.000000e-01 : f32
    %39 = vector.broadcast %cst_26 : f32 to vector<8x512xf32>
    %40 = arith.addf %38, %39 : vector<8x512xf32>
    %c0_27 = arith.constant 0 : index
    %c1536 = arith.constant 1536 : index
    %41 = vector.load %arg3[%c0_27, %c1536] : memref<512x2048xbf16, #tpu.memory_space<vmem>>, vector<512x512xbf16>
    %cst_28 = arith.constant dense<0.000000e+00> : vector<8x512xf32>
    %42 = tpu.matmul %12, %41, %cst_28 {dimension_numbers = #tpu.dot_dimension_numbers<[1], [0], [0], [1], [0, 0, 1, 1], [], []>} : vector<8x512xbf16>, vector<512x512xbf16>, vector<8x512xf32> -> vector<8x512xf32>
    %43 = vector.extract_strided_slice %16 {offsets = [0, 1024], sizes = [8, 512], strides = [1, 1]} : vector<8x2048xf32> to vector<8x512xf32>
    %44 = arith.addf %43, %31 : vector<8x512xf32>
    %45 = math.tanh %44 : vector<8x512xf32>
    %46 = vector.extract_strided_slice %16 {offsets = [0, 1536], sizes = [8, 512], strides = [1, 1]} : vector<8x2048xf32> to vector<8x512xf32>
    %47 = arith.addf %46, %42 : vector<8x512xf32>
    %cst_29 = arith.constant 5.000000e-01 : f32
    %48 = vector.broadcast %cst_29 : f32 to vector<8x512xf32>
    %49 = arith.mulf %48, %47 : vector<8x512xf32>
    %50 = math.tanh %49 : vector<8x512xf32>
    %cst_30 = arith.constant 5.000000e-01 : f32
    %51 = vector.broadcast %cst_30 : f32 to vector<8x512xf32>
    %52 = arith.mulf %51, %50 : vector<8x512xf32>
    %cst_31 = arith.constant 5.000000e-01 : f32
    %53 = vector.broadcast %cst_31 : f32 to vector<8x512xf32>
    %54 = arith.addf %52, %53 : vector<8x512xf32>
    %55 = arith.mulf %40, %11 : vector<8x512xf32>
    %56 = arith.mulf %29, %45 : vector<8x512xf32>
    %57 = arith.addf %55, %56 : vector<8x512xf32>
    %58 = math.tanh %57 : vector<8x512xf32>
    %59 = arith.mulf %54, %58 : vector<8x512xf32>
    %c1_i32 = arith.constant 1 : i32
    %60 = arith.truncf %59 : vector<8x512xf32> to vector<8x512xbf16>
    %c8_i32_32 = arith.constant 8 : i32
    %61 = arith.muli %c1_i32, %c8_i32_32 : i32
    %62 = tpu.assume_multiple %61, 8 : i32
    %63 = arith.index_cast %62 : i32 to index
    %c0_33 = arith.constant 0 : index
    %64 = vector.load %arg8[%63, %c0_33] : memref<64x2048xf32, #tpu.memory_space<vmem>>, vector<8x2048xf32>
    %c0_34 = arith.constant 0 : index
    %c0_35 = arith.constant 0 : index
    %65 = vector.load %arg3[%c0_34, %c0_35] : memref<512x2048xbf16, #tpu.memory_space<vmem>>, vector<512x512xbf16>
    %cst_36 = arith.constant dense<0.000000e+00> : vector<8x512xf32>
    %66 = tpu.matmul %60, %65, %cst_36 {dimension_numbers = #tpu.dot_dimension_numbers<[1], [0], [0], [1], [0, 0, 1, 1], [], []>} : vector<8x512xbf16>, vector<512x512xbf16>, vector<8x512xf32> -> vector<8x512xf32>
    %c0_37 = arith.constant 0 : index
    %c512_38 = arith.constant 512 : index
    %67 = vector.load %arg3[%c0_37, %c512_38] : memref<512x2048xbf16, #tpu.memory_space<vmem>>, vector<512x512xbf16>
    %cst_39 = arith.constant dense<0.000000e+00> : vector<8x512xf32>
    %68 = tpu.matmul %60, %67, %cst_39 {dimension_numbers = #tpu.dot_dimension_numbers<[1], [0], [0], [1], [0, 0, 1, 1], [], []>} : vector<8x512xbf16>, vector<512x512xbf16>, vector<8x512xf32> -> vector<8x512xf32>
    %69 = vector.extract_strided_slice %64 {offsets = [0, 0], sizes = [8, 512], strides = [1, 1]} : vector<8x2048xf32> to vector<8x512xf32>
    %70 = arith.addf %69, %66 : vector<8x512xf32>
    %cst_40 = arith.constant 5.000000e-01 : f32
    %71 = vector.broadcast %cst_40 : f32 to vector<8x512xf32>
    %72 = arith.mulf %71, %70 : vector<8x512xf32>
    %73 = math.tanh %72 : vector<8x512xf32>
    %cst_41 = arith.constant 5.000000e-01 : f32
    %74 = vector.broadcast %cst_41 : f32 to vector<8x512xf32>
    %75 = arith.mulf %74, %73 : vector<8x512xf32>
    %cst_42 = arith.constant 5.000000e-01 : f32
    %76 = vector.broadcast %cst_42 : f32 to vector<8x512xf32>
    %77 = arith.addf %75, %76 : vector<8x512xf32>
    %c0_43 = arith.constant 0 : index
    %c1024_44 = arith.constant 1024 : index
    %78 = vector.load %arg3[%c0_43, %c1024_44] : memref<512x2048xbf16, #tpu.memory_space<vmem>>, vector<512x512xbf16>
    %cst_45 = arith.constant dense<0.000000e+00> : vector<8x512xf32>
    %79 = tpu.matmul %60, %78, %cst_45 {dimension_numbers = #tpu.dot_dimension_numbers<[1], [0], [0], [1], [0, 0, 1, 1], [], []>} : vector<8x512xbf16>, vector<512x512xbf16>, vector<8x512xf32> -> vector<8x512xf32>
    %80 = vector.extract_strided_slice %64 {offsets = [0, 512], sizes = [8, 512], strides = [1, 1]} : vector<8x2048xf32> to vector<8x512xf32>
    %81 = arith.addf %80, %68 : vector<8x512xf32>
    %cst_46 = arith.constant 5.000000e-01 : f32
    %82 = vector.broadcast %cst_46 : f32 to vector<8x512xf32>
    %83 = arith.mulf %82, %81 : vector<8x512xf32>
    %84 = math.tanh %83 : vector<8x512xf32>
    %cst_47 = arith.constant 5.000000e-01 : f32
    %85 = vector.broadcast %cst_47 : f32 to vector<8x512xf32>
    %86 = arith.mulf %85, %84 : vector<8x512xf32>
    %cst_48 = arith.constant 5.000000e-01 : f32
    %87 = vector.broadcast %cst_48 : f32 to vector<8x512xf32>
    %88 = arith.addf %86, %87 : vector<8x512xf32>
    %c0_49 = arith.constant 0 : index
    %c1536_50 = arith.constant 1536 : index
    %89 = vector.load %arg3[%c0_49, %c1536_50] : memref<512x2048xbf16, #tpu.memory_space<vmem>>, vector<512x512xbf16>
    %cst_51 = arith.constant dense<0.000000e+00> : vector<8x512xf32>
    %90 = tpu.matmul %60, %89, %cst_51 {dimension_numbers = #tpu.dot_dimension_numbers<[1], [0], [0], [1], [0, 0, 1, 1], [], []>} : vector<8x512xbf16>, vector<512x512xbf16>, vector<8x512xf32> -> vector<8x512xf32>
    %91 = vector.extract_strided_slice %64 {offsets = [0, 1024], sizes = [8, 512], strides = [1, 1]} : vector<8x2048xf32> to vector<8x512xf32>
    %92 = arith.addf %91, %79 : vector<8x512xf32>
    %93 = math.tanh %92 : vector<8x512xf32>
    %94 = vector.extract_strided_slice %64 {offsets = [0, 1536], sizes = [8, 512], strides = [1, 1]} : vector<8x2048xf32> to vector<8x512xf32>
    %95 = arith.addf %94, %90 : vector<8x512xf32>
    %cst_52 = arith.constant 5.000000e-01 : f32
    %96 = vector.broadcast %cst_52 : f32 to vector<8x512xf32>
    %97 = arith.mulf %96, %95 : vector<8x512xf32>
    %98 = math.tanh %97 : vector<8x512xf32>
    %cst_53 = arith.constant 5.000000e-01 : f32
    %99 = vector.broadcast %cst_53 : f32 to vector<8x512xf32>
    %100 = arith.mulf %99, %98 : vector<8x512xf32>
    %cst_54 = arith.constant 5.000000e-01 : f32
    %101 = vector.broadcast %cst_54 : f32 to vector<8x512xf32>
    %102 = arith.addf %100, %101 : vector<8x512xf32>
    %103 = arith.mulf %88, %57 : vector<8x512xf32>
    %104 = arith.mulf %77, %93 : vector<8x512xf32>
    %105 = arith.addf %103, %104 : vector<8x512xf32>
    %106 = math.tanh %105 : vector<8x512xf32>
    %107 = arith.mulf %102, %106 : vector<8x512xf32>
    %c2_i32 = arith.constant 2 : i32
    %108 = arith.truncf %107 : vector<8x512xf32> to vector<8x512xbf16>
    %c8_i32_55 = arith.constant 8 : i32
    %109 = arith.muli %c2_i32, %c8_i32_55 : i32
    %110 = tpu.assume_multiple %109, 8 : i32
    %111 = arith.index_cast %110 : i32 to index
    %c0_56 = arith.constant 0 : index
    %112 = vector.load %arg8[%111, %c0_56] : memref<64x2048xf32, #tpu.memory_space<vmem>>, vector<8x2048xf32>
    %c0_57 = arith.constant 0 : index
    %c0_58 = arith.constant 0 : index
    %113 = vector.load %arg3[%c0_57, %c0_58] : memref<512x2048xbf16, #tpu.memory_space<vmem>>, vector<512x512xbf16>
    %cst_59 = arith.constant dense<0.000000e+00> : vector<8x512xf32>
    %114 = tpu.matmul %108, %113, %cst_59 {dimension_numbers = #tpu.dot_dimension_numbers<[1], [0], [0], [1], [0, 0, 1, 1], [], []>} : vector<8x512xbf16>, vector<512x512xbf16>, vector<8x512xf32> -> vector<8x512xf32>
    %c0_60 = arith.constant 0 : index
    %c512_61 = arith.constant 512 : index
    %115 = vector.load %arg3[%c0_60, %c512_61] : memref<512x2048xbf16, #tpu.memory_space<vmem>>, vector<512x512xbf16>
    %cst_62 = arith.constant dense<0.000000e+00> : vector<8x512xf32>
    %116 = tpu.matmul %108, %115, %cst_62 {dimension_numbers = #tpu.dot_dimension_numbers<[1], [0], [0], [1], [0, 0, 1, 1], [], []>} : vector<8x512xbf16>, vector<512x512xbf16>, vector<8x512xf32> -> vector<8x512xf32>
    %117 = vector.extract_strided_slice %112 {offsets = [0, 0], sizes = [8, 512], strides = [1, 1]} : vector<8x2048xf32> to vector<8x512xf32>
    %118 = arith.addf %117, %114 : vector<8x512xf32>
    %cst_63 = arith.constant 5.000000e-01 : f32
    %119 = vector.broadcast %cst_63 : f32 to vector<8x512xf32>
    %120 = arith.mulf %119, %118 : vector<8x512xf32>
    %121 = math.tanh %120 : vector<8x512xf32>
    %cst_64 = arith.constant 5.000000e-01 : f32
    %122 = vector.broadcast %cst_64 : f32 to vector<8x512xf32>
    %123 = arith.mulf %122, %121 : vector<8x512xf32>
    %cst_65 = arith.constant 5.000000e-01 : f32
    %124 = vector.broadcast %cst_65 : f32 to vector<8x512xf32>
    %125 = arith.addf %123, %124 : vector<8x512xf32>
    %c0_66 = arith.constant 0 : index
    %c1024_67 = arith.constant 1024 : index
    %126 = vector.load %arg3[%c0_66, %c1024_67] : memref<512x2048xbf16, #tpu.memory_space<vmem>>, vector<512x512xbf16>
    %cst_68 = arith.constant dense<0.000000e+00> : vector<8x512xf32>
    %127 = tpu.matmul %108, %126, %cst_68 {dimension_numbers = #tpu.dot_dimension_numbers<[1], [0], [0], [1], [0, 0, 1, 1], [], []>} : vector<8x512xbf16>, vector<512x512xbf16>, vector<8x512xf32> -> vector<8x512xf32>
    %128 = vector.extract_strided_slice %112 {offsets = [0, 512], sizes = [8, 512], strides = [1, 1]} : vector<8x2048xf32> to vector<8x512xf32>
    %129 = arith.addf %128, %116 : vector<8x512xf32>
    %cst_69 = arith.constant 5.000000e-01 : f32
    %130 = vector.broadcast %cst_69 : f32 to vector<8x512xf32>
    %131 = arith.mulf %130, %129 : vector<8x512xf32>
    %132 = math.tanh %131 : vector<8x512xf32>
    %cst_70 = arith.constant 5.000000e-01 : f32
    %133 = vector.broadcast %cst_70 : f32 to vector<8x512xf32>
    %134 = arith.mulf %133, %132 : vector<8x512xf32>
    %cst_71 = arith.constant 5.000000e-01 : f32
    %135 = vector.broadcast %cst_71 : f32 to vector<8x512xf32>
    %136 = arith.addf %134, %135 : vector<8x512xf32>
    %c0_72 = arith.constant 0 : index
    %c1536_73 = arith.constant 1536 : index
    %137 = vector.load %arg3[%c0_72, %c1536_73] : memref<512x2048xbf16, #tpu.memory_space<vmem>>, vector<512x512xbf16>
    %cst_74 = arith.constant dense<0.000000e+00> : vector<8x512xf32>
    %138 = tpu.matmul %108, %137, %cst_74 {dimension_numbers = #tpu.dot_dimension_numbers<[1], [0], [0], [1], [0, 0, 1, 1], [], []>} : vector<8x512xbf16>, vector<512x512xbf16>, vector<8x512xf32> -> vector<8x512xf32>
    %139 = vector.extract_strided_slice %112 {offsets = [0, 1024], sizes = [8, 512], strides = [1, 1]} : vector<8x2048xf32> to vector<8x512xf32>
    %140 = arith.addf %139, %127 : vector<8x512xf32>
    %141 = math.tanh %140 : vector<8x512xf32>
    %142 = vector.extract_strided_slice %112 {offsets = [0, 1536], sizes = [8, 512], strides = [1, 1]} : vector<8x2048xf32> to vector<8x512xf32>
    %143 = arith.addf %142, %138 : vector<8x512xf32>
    %cst_75 = arith.constant 5.000000e-01 : f32
    %144 = vector.broadcast %cst_75 : f32 to vector<8x512xf32>
    %145 = arith.mulf %144, %143 : vector<8x512xf32>
    %146 = math.tanh %145 : vector<8x512xf32>
    %cst_76 = arith.constant 5.000000e-01 : f32
    %147 = vector.broadcast %cst_76 : f32 to vector<8x512xf32>
    %148 = arith.mulf %147, %146 : vector<8x512xf32>
    %cst_77 = arith.constant 5.000000e-01 : f32
    %149 = vector.broadcast %cst_77 : f32 to vector<8x512xf32>
    %150 = arith.addf %148, %149 : vector<8x512xf32>
    %151 = arith.mulf %136, %105 : vector<8x512xf32>
    %152 = arith.mulf %125, %141 : vector<8x512xf32>
    %153 = arith.addf %151, %152 : vector<8x512xf32>
    %154 = math.tanh %153 : vector<8x512xf32>
    %155 = arith.mulf %150, %154 : vector<8x512xf32>
    %c3_i32 = arith.constant 3 : i32
    %156 = arith.truncf %155 : vector<8x512xf32> to vector<8x512xbf16>
    %c8_i32_78 = arith.constant 8 : i32
    %157 = arith.muli %c3_i32, %c8_i32_78 : i32
    %158 = tpu.assume_multiple %157, 8 : i32
    %159 = arith.index_cast %158 : i32 to index
    %c0_79 = arith.constant 0 : index
    %160 = vector.load %arg8[%159, %c0_79] : memref<64x2048xf32, #tpu.memory_space<vmem>>, vector<8x2048xf32>
    %c0_80 = arith.constant 0 : index
    %c0_81 = arith.constant 0 : index
    %161 = vector.load %arg3[%c0_80, %c0_81] : memref<512x2048xbf16, #tpu.memory_space<vmem>>, vector<512x512xbf16>
    %cst_82 = arith.constant dense<0.000000e+00> : vector<8x512xf32>
    %162 = tpu.matmul %156, %161, %cst_82 {dimension_numbers = #tpu.dot_dimension_numbers<[1], [0], [0], [1], [0, 0, 1, 1], [], []>} : vector<8x512xbf16>, vector<512x512xbf16>, vector<8x512xf32> -> vector<8x512xf32>
    %c0_83 = arith.constant 0 : index
    %c512_84 = arith.constant 512 : index
    %163 = vector.load %arg3[%c0_83, %c512_84] : memref<512x2048xbf16, #tpu.memory_space<vmem>>, vector<512x512xbf16>
    %cst_85 = arith.constant dense<0.000000e+00> : vector<8x512xf32>
    %164 = tpu.matmul %156, %163, %cst_85 {dimension_numbers = #tpu.dot_dimension_numbers<[1], [0], [0], [1], [0, 0, 1, 1], [], []>} : vector<8x512xbf16>, vector<512x512xbf16>, vector<8x512xf32> -> vector<8x512xf32>
    %165 = vector.extract_strided_slice %160 {offsets = [0, 0], sizes = [8, 512], strides = [1, 1]} : vector<8x2048xf32> to vector<8x512xf32>
    %166 = arith.addf %165, %162 : vector<8x512xf32>
    %cst_86 = arith.constant 5.000000e-01 : f32
    %167 = vector.broadcast %cst_86 : f32 to vector<8x512xf32>
    %168 = arith.mulf %167, %166 : vector<8x512xf32>
    %169 = math.tanh %168 : vector<8x512xf32>
    %cst_87 = arith.constant 5.000000e-01 : f32
    %170 = vector.broadcast %cst_87 : f32 to vector<8x512xf32>
    %171 = arith.mulf %170, %169 : vector<8x512xf32>
    %cst_88 = arith.constant 5.000000e-01 : f32
    %172 = vector.broadcast %cst_88 : f32 to vector<8x512xf32>
    %173 = arith.addf %171, %172 : vector<8x512xf32>
    %c0_89 = arith.constant 0 : index
    %c1024_90 = arith.constant 1024 : index
    %174 = vector.load %arg3[%c0_89, %c1024_90] : memref<512x2048xbf16, #tpu.memory_space<vmem>>, vector<512x512xbf16>
    %cst_91 = arith.constant dense<0.000000e+00> : vector<8x512xf32>
    %175 = tpu.matmul %156, %174, %cst_91 {dimension_numbers = #tpu.dot_dimension_numbers<[1], [0], [0], [1], [0, 0, 1, 1], [], []>} : vector<8x512xbf16>, vector<512x512xbf16>, vector<8x512xf32> -> vector<8x512xf32>
    %176 = vector.extract_strided_slice %160 {offsets = [0, 512], sizes = [8, 512], strides = [1, 1]} : vector<8x2048xf32> to vector<8x512xf32>
    %177 = arith.addf %176, %164 : vector<8x512xf32>
    %cst_92 = arith.constant 5.000000e-01 : f32
    %178 = vector.broadcast %cst_92 : f32 to vector<8x512xf32>
    %179 = arith.mulf %178, %177 : vector<8x512xf32>
    %180 = math.tanh %179 : vector<8x512xf32>
    %cst_93 = arith.constant 5.000000e-01 : f32
    %181 = vector.broadcast %cst_93 : f32 to vector<8x512xf32>
    %182 = arith.mulf %181, %180 : vector<8x512xf32>
    %cst_94 = arith.constant 5.000000e-01 : f32
    %183 = vector.broadcast %cst_94 : f32 to vector<8x512xf32>
    %184 = arith.addf %182, %183 : vector<8x512xf32>
    %c0_95 = arith.constant 0 : index
    %c1536_96 = arith.constant 1536 : index
    %185 = vector.load %arg3[%c0_95, %c1536_96] : memref<512x2048xbf16, #tpu.memory_space<vmem>>, vector<512x512xbf16>
    %cst_97 = arith.constant dense<0.000000e+00> : vector<8x512xf32>
    %186 = tpu.matmul %156, %185, %cst_97 {dimension_numbers = #tpu.dot_dimension_numbers<[1], [0], [0], [1], [0, 0, 1, 1], [], []>} : vector<8x512xbf16>, vector<512x512xbf16>, vector<8x512xf32> -> vector<8x512xf32>
    %187 = vector.extract_strided_slice %160 {offsets = [0, 1024], sizes = [8, 512], strides = [1, 1]} : vector<8x2048xf32> to vector<8x512xf32>
    %188 = arith.addf %187, %175 : vector<8x512xf32>
    %189 = math.tanh %188 : vector<8x512xf32>
    %190 = vector.extract_strided_slice %160 {offsets = [0, 1536], sizes = [8, 512], strides = [1, 1]} : vector<8x2048xf32> to vector<8x512xf32>
    %191 = arith.addf %190, %186 : vector<8x512xf32>
    %cst_98 = arith.constant 5.000000e-01 : f32
    %192 = vector.broadcast %cst_98 : f32 to vector<8x512xf32>
    %193 = arith.mulf %192, %191 : vector<8x512xf32>
    %194 = math.tanh %193 : vector<8x512xf32>
    %cst_99 = arith.constant 5.000000e-01 : f32
    %195 = vector.broadcast %cst_99 : f32 to vector<8x512xf32>
    %196 = arith.mulf %195, %194 : vector<8x512xf32>
    %cst_100 = arith.constant 5.000000e-01 : f32
    %197 = vector.broadcast %cst_100 : f32 to vector<8x512xf32>
    %198 = arith.addf %196, %197 : vector<8x512xf32>
    %199 = arith.mulf %184, %153 : vector<8x512xf32>
    %200 = arith.mulf %173, %189 : vector<8x512xf32>
    %201 = arith.addf %199, %200 : vector<8x512xf32>
    %202 = math.tanh %201 : vector<8x512xf32>
    %203 = arith.mulf %198, %202 : vector<8x512xf32>
    %c4_i32 = arith.constant 4 : i32
    %204 = arith.truncf %203 : vector<8x512xf32> to vector<8x512xbf16>
    %c8_i32_101 = arith.constant 8 : i32
    %205 = arith.muli %c4_i32, %c8_i32_101 : i32
    %206 = tpu.assume_multiple %205, 8 : i32
    %207 = arith.index_cast %206 : i32 to index
    %c0_102 = arith.constant 0 : index
    %208 = vector.load %arg8[%207, %c0_102] : memref<64x2048xf32, #tpu.memory_space<vmem>>, vector<8x2048xf32>
    %c0_103 = arith.constant 0 : index
    %c0_104 = arith.constant 0 : index
    %209 = vector.load %arg3[%c0_103, %c0_104] : memref<512x2048xbf16, #tpu.memory_space<vmem>>, vector<512x512xbf16>
    %cst_105 = arith.constant dense<0.000000e+00> : vector<8x512xf32>
    %210 = tpu.matmul %204, %209, %cst_105 {dimension_numbers = #tpu.dot_dimension_numbers<[1], [0], [0], [1], [0, 0, 1, 1], [], []>} : vector<8x512xbf16>, vector<512x512xbf16>, vector<8x512xf32> -> vector<8x512xf32>
    %c0_106 = arith.constant 0 : index
    %c512_107 = arith.constant 512 : index
    %211 = vector.load %arg3[%c0_106, %c512_107] : memref<512x2048xbf16, #tpu.memory_space<vmem>>, vector<512x512xbf16>
    %cst_108 = arith.constant dense<0.000000e+00> : vector<8x512xf32>
    %212 = tpu.matmul %204, %211, %cst_108 {dimension_numbers = #tpu.dot_dimension_numbers<[1], [0], [0], [1], [0, 0, 1, 1], [], []>} : vector<8x512xbf16>, vector<512x512xbf16>, vector<8x512xf32> -> vector<8x512xf32>
    %213 = vector.extract_strided_slice %208 {offsets = [0, 0], sizes = [8, 512], strides = [1, 1]} : vector<8x2048xf32> to vector<8x512xf32>
    %214 = arith.addf %213, %210 : vector<8x512xf32>
    %cst_109 = arith.constant 5.000000e-01 : f32
    %215 = vector.broadcast %cst_109 : f32 to vector<8x512xf32>
    %216 = arith.mulf %215, %214 : vector<8x512xf32>
    %217 = math.tanh %216 : vector<8x512xf32>
    %cst_110 = arith.constant 5.000000e-01 : f32
    %218 = vector.broadcast %cst_110 : f32 to vector<8x512xf32>
    %219 = arith.mulf %218, %217 : vector<8x512xf32>
    %cst_111 = arith.constant 5.000000e-01 : f32
    %220 = vector.broadcast %cst_111 : f32 to vector<8x512xf32>
    %221 = arith.addf %219, %220 : vector<8x512xf32>
    %c0_112 = arith.constant 0 : index
    %c1024_113 = arith.constant 1024 : index
    %222 = vector.load %arg3[%c0_112, %c1024_113] : memref<512x2048xbf16, #tpu.memory_space<vmem>>, vector<512x512xbf16>
    %cst_114 = arith.constant dense<0.000000e+00> : vector<8x512xf32>
    %223 = tpu.matmul %204, %222, %cst_114 {dimension_numbers = #tpu.dot_dimension_numbers<[1], [0], [0], [1], [0, 0, 1, 1], [], []>} : vector<8x512xbf16>, vector<512x512xbf16>, vector<8x512xf32> -> vector<8x512xf32>
    %224 = vector.extract_strided_slice %208 {offsets = [0, 512], sizes = [8, 512], strides = [1, 1]} : vector<8x2048xf32> to vector<8x512xf32>
    %225 = arith.addf %224, %212 : vector<8x512xf32>
    %cst_115 = arith.constant 5.000000e-01 : f32
    %226 = vector.broadcast %cst_115 : f32 to vector<8x512xf32>
    %227 = arith.mulf %226, %225 : vector<8x512xf32>
    %228 = math.tanh %227 : vector<8x512xf32>
    %cst_116 = arith.constant 5.000000e-01 : f32
    %229 = vector.broadcast %cst_116 : f32 to vector<8x512xf32>
    %230 = arith.mulf %229, %228 : vector<8x512xf32>
    %cst_117 = arith.constant 5.000000e-01 : f32
    %231 = vector.broadcast %cst_117 : f32 to vector<8x512xf32>
    %232 = arith.addf %230, %231 : vector<8x512xf32>
    %c0_118 = arith.constant 0 : index
    %c1536_119 = arith.constant 1536 : index
    %233 = vector.load %arg3[%c0_118, %c1536_119] : memref<512x2048xbf16, #tpu.memory_space<vmem>>, vector<512x512xbf16>
    %cst_120 = arith.constant dense<0.000000e+00> : vector<8x512xf32>
    %234 = tpu.matmul %204, %233, %cst_120 {dimension_numbers = #tpu.dot_dimension_numbers<[1], [0], [0], [1], [0, 0, 1, 1], [], []>} : vector<8x512xbf16>, vector<512x512xbf16>, vector<8x512xf32> -> vector<8x512xf32>
    %235 = vector.extract_strided_slice %208 {offsets = [0, 1024], sizes = [8, 512], strides = [1, 1]} : vector<8x2048xf32> to vector<8x512xf32>
    %236 = arith.addf %235, %223 : vector<8x512xf32>
    %237 = math.tanh %236 : vector<8x512xf32>
    %238 = vector.extract_strided_slice %208 {offsets = [0, 1536], sizes = [8, 512], strides = [1, 1]} : vector<8x2048xf32> to vector<8x512xf32>
    %239 = arith.addf %238, %234 : vector<8x512xf32>
    %cst_121 = arith.constant 5.000000e-01 : f32
    %240 = vector.broadcast %cst_121 : f32 to vector<8x512xf32>
    %241 = arith.mulf %240, %239 : vector<8x512xf32>
    %242 = math.tanh %241 : vector<8x512xf32>
    %cst_122 = arith.constant 5.000000e-01 : f32
    %243 = vector.broadcast %cst_122 : f32 to vector<8x512xf32>
    %244 = arith.mulf %243, %242 : vector<8x512xf32>
    %cst_123 = arith.constant 5.000000e-01 : f32
    %245 = vector.broadcast %cst_123 : f32 to vector<8x512xf32>
    %246 = arith.addf %244, %245 : vector<8x512xf32>
    %247 = arith.mulf %232, %201 : vector<8x512xf32>
    %248 = arith.mulf %221, %237 : vector<8x512xf32>
    %249 = arith.addf %247, %248 : vector<8x512xf32>
    %250 = math.tanh %249 : vector<8x512xf32>
    %251 = arith.mulf %246, %250 : vector<8x512xf32>
    %c5_i32 = arith.constant 5 : i32
    %252 = arith.truncf %251 : vector<8x512xf32> to vector<8x512xbf16>
    %c8_i32_124 = arith.constant 8 : i32
    %253 = arith.muli %c5_i32, %c8_i32_124 : i32
    %254 = tpu.assume_multiple %253, 8 : i32
    %255 = arith.index_cast %254 : i32 to index
    %c0_125 = arith.constant 0 : index
    %256 = vector.load %arg8[%255, %c0_125] : memref<64x2048xf32, #tpu.memory_space<vmem>>, vector<8x2048xf32>
    %c0_126 = arith.constant 0 : index
    %c0_127 = arith.constant 0 : index
    %257 = vector.load %arg3[%c0_126, %c0_127] : memref<512x2048xbf16, #tpu.memory_space<vmem>>, vector<512x512xbf16>
    %cst_128 = arith.constant dense<0.000000e+00> : vector<8x512xf32>
    %258 = tpu.matmul %252, %257, %cst_128 {dimension_numbers = #tpu.dot_dimension_numbers<[1], [0], [0], [1], [0, 0, 1, 1], [], []>} : vector<8x512xbf16>, vector<512x512xbf16>, vector<8x512xf32> -> vector<8x512xf32>
    %c0_129 = arith.constant 0 : index
    %c512_130 = arith.constant 512 : index
    %259 = vector.load %arg3[%c0_129, %c512_130] : memref<512x2048xbf16, #tpu.memory_space<vmem>>, vector<512x512xbf16>
    %cst_131 = arith.constant dense<0.000000e+00> : vector<8x512xf32>
    %260 = tpu.matmul %252, %259, %cst_131 {dimension_numbers = #tpu.dot_dimension_numbers<[1], [0], [0], [1], [0, 0, 1, 1], [], []>} : vector<8x512xbf16>, vector<512x512xbf16>, vector<8x512xf32> -> vector<8x512xf32>
    %261 = vector.extract_strided_slice %256 {offsets = [0, 0], sizes = [8, 512], strides = [1, 1]} : vector<8x2048xf32> to vector<8x512xf32>
    %262 = arith.addf %261, %258 : vector<8x512xf32>
    %cst_132 = arith.constant 5.000000e-01 : f32
    %263 = vector.broadcast %cst_132 : f32 to vector<8x512xf32>
    %264 = arith.mulf %263, %262 : vector<8x512xf32>
    %265 = math.tanh %264 : vector<8x512xf32>
    %cst_133 = arith.constant 5.000000e-01 : f32
    %266 = vector.broadcast %cst_133 : f32 to vector<8x512xf32>
    %267 = arith.mulf %266, %265 : vector<8x512xf32>
    %cst_134 = arith.constant 5.000000e-01 : f32
    %268 = vector.broadcast %cst_134 : f32 to vector<8x512xf32>
    %269 = arith.addf %267, %268 : vector<8x512xf32>
    %c0_135 = arith.constant 0 : index
    %c1024_136 = arith.constant 1024 : index
    %270 = vector.load %arg3[%c0_135, %c1024_136] : memref<512x2048xbf16, #tpu.memory_space<vmem>>, vector<512x512xbf16>
    %cst_137 = arith.constant dense<0.000000e+00> : vector<8x512xf32>
    %271 = tpu.matmul %252, %270, %cst_137 {dimension_numbers = #tpu.dot_dimension_numbers<[1], [0], [0], [1], [0, 0, 1, 1], [], []>} : vector<8x512xbf16>, vector<512x512xbf16>, vector<8x512xf32> -> vector<8x512xf32>
    %272 = vector.extract_strided_slice %256 {offsets = [0, 512], sizes = [8, 512], strides = [1, 1]} : vector<8x2048xf32> to vector<8x512xf32>
    %273 = arith.addf %272, %260 : vector<8x512xf32>
    %cst_138 = arith.constant 5.000000e-01 : f32
    %274 = vector.broadcast %cst_138 : f32 to vector<8x512xf32>
    %275 = arith.mulf %274, %273 : vector<8x512xf32>
    %276 = math.tanh %275 : vector<8x512xf32>
    %cst_139 = arith.constant 5.000000e-01 : f32
    %277 = vector.broadcast %cst_139 : f32 to vector<8x512xf32>
    %278 = arith.mulf %277, %276 : vector<8x512xf32>
    %cst_140 = arith.constant 5.000000e-01 : f32
    %279 = vector.broadcast %cst_140 : f32 to vector<8x512xf32>
    %280 = arith.addf %278, %279 : vector<8x512xf32>
    %c0_141 = arith.constant 0 : index
    %c1536_142 = arith.constant 1536 : index
    %281 = vector.load %arg3[%c0_141, %c1536_142] : memref<512x2048xbf16, #tpu.memory_space<vmem>>, vector<512x512xbf16>
    %cst_143 = arith.constant dense<0.000000e+00> : vector<8x512xf32>
    %282 = tpu.matmul %252, %281, %cst_143 {dimension_numbers = #tpu.dot_dimension_numbers<[1], [0], [0], [1], [0, 0, 1, 1], [], []>} : vector<8x512xbf16>, vector<512x512xbf16>, vector<8x512xf32> -> vector<8x512xf32>
    %283 = vector.extract_strided_slice %256 {offsets = [0, 1024], sizes = [8, 512], strides = [1, 1]} : vector<8x2048xf32> to vector<8x512xf32>
    %284 = arith.addf %283, %271 : vector<8x512xf32>
    %285 = math.tanh %284 : vector<8x512xf32>
    %286 = vector.extract_strided_slice %256 {offsets = [0, 1536], sizes = [8, 512], strides = [1, 1]} : vector<8x2048xf32> to vector<8x512xf32>
    %287 = arith.addf %286, %282 : vector<8x512xf32>
    %cst_144 = arith.constant 5.000000e-01 : f32
    %288 = vector.broadcast %cst_144 : f32 to vector<8x512xf32>
    %289 = arith.mulf %288, %287 : vector<8x512xf32>
    %290 = math.tanh %289 : vector<8x512xf32>
    %cst_145 = arith.constant 5.000000e-01 : f32
    %291 = vector.broadcast %cst_145 : f32 to vector<8x512xf32>
    %292 = arith.mulf %291, %290 : vector<8x512xf32>
    %cst_146 = arith.constant 5.000000e-01 : f32
    %293 = vector.broadcast %cst_146 : f32 to vector<8x512xf32>
    %294 = arith.addf %292, %293 : vector<8x512xf32>
    %295 = arith.mulf %280, %249 : vector<8x512xf32>
    %296 = arith.mulf %269, %285 : vector<8x512xf32>
    %297 = arith.addf %295, %296 : vector<8x512xf32>
    %298 = math.tanh %297 : vector<8x512xf32>
    %299 = arith.mulf %294, %298 : vector<8x512xf32>
    %c6_i32 = arith.constant 6 : i32
    %300 = arith.truncf %299 : vector<8x512xf32> to vector<8x512xbf16>
    %c8_i32_147 = arith.constant 8 : i32
    %301 = arith.muli %c6_i32, %c8_i32_147 : i32
    %302 = tpu.assume_multiple %301, 8 : i32
    %303 = arith.index_cast %302 : i32 to index
    %c0_148 = arith.constant 0 : index
    %304 = vector.load %arg8[%303, %c0_148] : memref<64x2048xf32, #tpu.memory_space<vmem>>, vector<8x2048xf32>
    %c0_149 = arith.constant 0 : index
    %c0_150 = arith.constant 0 : index
    %305 = vector.load %arg3[%c0_149, %c0_150] : memref<512x2048xbf16, #tpu.memory_space<vmem>>, vector<512x512xbf16>
    %cst_151 = arith.constant dense<0.000000e+00> : vector<8x512xf32>
    %306 = tpu.matmul %300, %305, %cst_151 {dimension_numbers = #tpu.dot_dimension_numbers<[1], [0], [0], [1], [0, 0, 1, 1], [], []>} : vector<8x512xbf16>, vector<512x512xbf16>, vector<8x512xf32> -> vector<8x512xf32>
    %c0_152 = arith.constant 0 : index
    %c512_153 = arith.constant 512 : index
    %307 = vector.load %arg3[%c0_152, %c512_153] : memref<512x2048xbf16, #tpu.memory_space<vmem>>, vector<512x512xbf16>
    %cst_154 = arith.constant dense<0.000000e+00> : vector<8x512xf32>
    %308 = tpu.matmul %300, %307, %cst_154 {dimension_numbers = #tpu.dot_dimension_numbers<[1], [0], [0], [1], [0, 0, 1, 1], [], []>} : vector<8x512xbf16>, vector<512x512xbf16>, vector<8x512xf32> -> vector<8x512xf32>
    %309 = vector.extract_strided_slice %304 {offsets = [0, 0], sizes = [8, 512], strides = [1, 1]} : vector<8x2048xf32> to vector<8x512xf32>
    %310 = arith.addf %309, %306 : vector<8x512xf32>
    %cst_155 = arith.constant 5.000000e-01 : f32
    %311 = vector.broadcast %cst_155 : f32 to vector<8x512xf32>
    %312 = arith.mulf %311, %310 : vector<8x512xf32>
    %313 = math.tanh %312 : vector<8x512xf32>
    %cst_156 = arith.constant 5.000000e-01 : f32
    %314 = vector.broadcast %cst_156 : f32 to vector<8x512xf32>
    %315 = arith.mulf %314, %313 : vector<8x512xf32>
    %cst_157 = arith.constant 5.000000e-01 : f32
    %316 = vector.broadcast %cst_157 : f32 to vector<8x512xf32>
    %317 = arith.addf %315, %316 : vector<8x512xf32>
    %c0_158 = arith.constant 0 : index
    %c1024_159 = arith.constant 1024 : index
    %318 = vector.load %arg3[%c0_158, %c1024_159] : memref<512x2048xbf16, #tpu.memory_space<vmem>>, vector<512x512xbf16>
    %cst_160 = arith.constant dense<0.000000e+00> : vector<8x512xf32>
    %319 = tpu.matmul %300, %318, %cst_160 {dimension_numbers = #tpu.dot_dimension_numbers<[1], [0], [0], [1], [0, 0, 1, 1], [], []>} : vector<8x512xbf16>, vector<512x512xbf16>, vector<8x512xf32> -> vector<8x512xf32>
    %320 = vector.extract_strided_slice %304 {offsets = [0, 512], sizes = [8, 512], strides = [1, 1]} : vector<8x2048xf32> to vector<8x512xf32>
    %321 = arith.addf %320, %308 : vector<8x512xf32>
    %cst_161 = arith.constant 5.000000e-01 : f32
    %322 = vector.broadcast %cst_161 : f32 to vector<8x512xf32>
    %323 = arith.mulf %322, %321 : vector<8x512xf32>
    %324 = math.tanh %323 : vector<8x512xf32>
    %cst_162 = arith.constant 5.000000e-01 : f32
    %325 = vector.broadcast %cst_162 : f32 to vector<8x512xf32>
    %326 = arith.mulf %325, %324 : vector<8x512xf32>
    %cst_163 = arith.constant 5.000000e-01 : f32
    %327 = vector.broadcast %cst_163 : f32 to vector<8x512xf32>
    %328 = arith.addf %326, %327 : vector<8x512xf32>
    %c0_164 = arith.constant 0 : index
    %c1536_165 = arith.constant 1536 : index
    %329 = vector.load %arg3[%c0_164, %c1536_165] : memref<512x2048xbf16, #tpu.memory_space<vmem>>, vector<512x512xbf16>
    %cst_166 = arith.constant dense<0.000000e+00> : vector<8x512xf32>
    %330 = tpu.matmul %300, %329, %cst_166 {dimension_numbers = #tpu.dot_dimension_numbers<[1], [0], [0], [1], [0, 0, 1, 1], [], []>} : vector<8x512xbf16>, vector<512x512xbf16>, vector<8x512xf32> -> vector<8x512xf32>
    %331 = vector.extract_strided_slice %304 {offsets = [0, 1024], sizes = [8, 512], strides = [1, 1]} : vector<8x2048xf32> to vector<8x512xf32>
    %332 = arith.addf %331, %319 : vector<8x512xf32>
    %333 = math.tanh %332 : vector<8x512xf32>
    %334 = vector.extract_strided_slice %304 {offsets = [0, 1536], sizes = [8, 512], strides = [1, 1]} : vector<8x2048xf32> to vector<8x512xf32>
    %335 = arith.addf %334, %330 : vector<8x512xf32>
    %cst_167 = arith.constant 5.000000e-01 : f32
    %336 = vector.broadcast %cst_167 : f32 to vector<8x512xf32>
    %337 = arith.mulf %336, %335 : vector<8x512xf32>
    %338 = math.tanh %337 : vector<8x512xf32>
    %cst_168 = arith.constant 5.000000e-01 : f32
    %339 = vector.broadcast %cst_168 : f32 to vector<8x512xf32>
    %340 = arith.mulf %339, %338 : vector<8x512xf32>
    %cst_169 = arith.constant 5.000000e-01 : f32
    %341 = vector.broadcast %cst_169 : f32 to vector<8x512xf32>
    %342 = arith.addf %340, %341 : vector<8x512xf32>
    %343 = arith.mulf %328, %297 : vector<8x512xf32>
    %344 = arith.mulf %317, %333 : vector<8x512xf32>
    %345 = arith.addf %343, %344 : vector<8x512xf32>
    %346 = math.tanh %345 : vector<8x512xf32>
    %347 = arith.mulf %342, %346 : vector<8x512xf32>
    %c7_i32 = arith.constant 7 : i32
    %348 = arith.truncf %347 : vector<8x512xf32> to vector<8x512xbf16>
    %c8_i32_170 = arith.constant 8 : i32
    %349 = arith.muli %c7_i32, %c8_i32_170 : i32
    %350 = tpu.assume_multiple %349, 8 : i32
    %351 = arith.index_cast %350 : i32 to index
    %c0_171 = arith.constant 0 : index
    %352 = vector.load %arg8[%351, %c0_171] : memref<64x2048xf32, #tpu.memory_space<vmem>>, vector<8x2048xf32>
    %c0_172 = arith.constant 0 : index
    %c0_173 = arith.constant 0 : index
    %353 = vector.load %arg3[%c0_172, %c0_173] : memref<512x2048xbf16, #tpu.memory_space<vmem>>, vector<512x512xbf16>
    %cst_174 = arith.constant dense<0.000000e+00> : vector<8x512xf32>
    %354 = tpu.matmul %348, %353, %cst_174 {dimension_numbers = #tpu.dot_dimension_numbers<[1], [0], [0], [1], [0, 0, 1, 1], [], []>} : vector<8x512xbf16>, vector<512x512xbf16>, vector<8x512xf32> -> vector<8x512xf32>
    %c0_175 = arith.constant 0 : index
    %c512_176 = arith.constant 512 : index
    %355 = vector.load %arg3[%c0_175, %c512_176] : memref<512x2048xbf16, #tpu.memory_space<vmem>>, vector<512x512xbf16>
    %cst_177 = arith.constant dense<0.000000e+00> : vector<8x512xf32>
    %356 = tpu.matmul %348, %355, %cst_177 {dimension_numbers = #tpu.dot_dimension_numbers<[1], [0], [0], [1], [0, 0, 1, 1], [], []>} : vector<8x512xbf16>, vector<512x512xbf16>, vector<8x512xf32> -> vector<8x512xf32>
    %357 = vector.extract_strided_slice %352 {offsets = [0, 0], sizes = [8, 512], strides = [1, 1]} : vector<8x2048xf32> to vector<8x512xf32>
    %358 = arith.addf %357, %354 : vector<8x512xf32>
    %cst_178 = arith.constant 5.000000e-01 : f32
    %359 = vector.broadcast %cst_178 : f32 to vector<8x512xf32>
    %360 = arith.mulf %359, %358 : vector<8x512xf32>
    %361 = math.tanh %360 : vector<8x512xf32>
    %cst_179 = arith.constant 5.000000e-01 : f32
    %362 = vector.broadcast %cst_179 : f32 to vector<8x512xf32>
    %363 = arith.mulf %362, %361 : vector<8x512xf32>
    %cst_180 = arith.constant 5.000000e-01 : f32
    %364 = vector.broadcast %cst_180 : f32 to vector<8x512xf32>
    %365 = arith.addf %363, %364 : vector<8x512xf32>
    %c0_181 = arith.constant 0 : index
    %c1024_182 = arith.constant 1024 : index
    %366 = vector.load %arg3[%c0_181, %c1024_182] : memref<512x2048xbf16, #tpu.memory_space<vmem>>, vector<512x512xbf16>
    %cst_183 = arith.constant dense<0.000000e+00> : vector<8x512xf32>
    %367 = tpu.matmul %348, %366, %cst_183 {dimension_numbers = #tpu.dot_dimension_numbers<[1], [0], [0], [1], [0, 0, 1, 1], [], []>} : vector<8x512xbf16>, vector<512x512xbf16>, vector<8x512xf32> -> vector<8x512xf32>
    %368 = vector.extract_strided_slice %352 {offsets = [0, 512], sizes = [8, 512], strides = [1, 1]} : vector<8x2048xf32> to vector<8x512xf32>
    %369 = arith.addf %368, %356 : vector<8x512xf32>
    %cst_184 = arith.constant 5.000000e-01 : f32
    %370 = vector.broadcast %cst_184 : f32 to vector<8x512xf32>
    %371 = arith.mulf %370, %369 : vector<8x512xf32>
    %372 = math.tanh %371 : vector<8x512xf32>
    %cst_185 = arith.constant 5.000000e-01 : f32
    %373 = vector.broadcast %cst_185 : f32 to vector<8x512xf32>
    %374 = arith.mulf %373, %372 : vector<8x512xf32>
    %cst_186 = arith.constant 5.000000e-01 : f32
    %375 = vector.broadcast %cst_186 : f32 to vector<8x512xf32>
    %376 = arith.addf %374, %375 : vector<8x512xf32>
    %c0_187 = arith.constant 0 : index
    %c1536_188 = arith.constant 1536 : index
    %377 = vector.load %arg3[%c0_187, %c1536_188] : memref<512x2048xbf16, #tpu.memory_space<vmem>>, vector<512x512xbf16>
    %cst_189 = arith.constant dense<0.000000e+00> : vector<8x512xf32>
    %378 = tpu.matmul %348, %377, %cst_189 {dimension_numbers = #tpu.dot_dimension_numbers<[1], [0], [0], [1], [0, 0, 1, 1], [], []>} : vector<8x512xbf16>, vector<512x512xbf16>, vector<8x512xf32> -> vector<8x512xf32>
    %379 = vector.extract_strided_slice %352 {offsets = [0, 1024], sizes = [8, 512], strides = [1, 1]} : vector<8x2048xf32> to vector<8x512xf32>
    %380 = arith.addf %379, %367 : vector<8x512xf32>
    %381 = math.tanh %380 : vector<8x512xf32>
    %382 = vector.extract_strided_slice %352 {offsets = [0, 1536], sizes = [8, 512], strides = [1, 1]} : vector<8x2048xf32> to vector<8x512xf32>
    %383 = arith.addf %382, %378 : vector<8x512xf32>
    %cst_190 = arith.constant 5.000000e-01 : f32
    %384 = vector.broadcast %cst_190 : f32 to vector<8x512xf32>
    %385 = arith.mulf %384, %383 : vector<8x512xf32>
    %386 = math.tanh %385 : vector<8x512xf32>
    %cst_191 = arith.constant 5.000000e-01 : f32
    %387 = vector.broadcast %cst_191 : f32 to vector<8x512xf32>
    %388 = arith.mulf %387, %386 : vector<8x512xf32>
    %cst_192 = arith.constant 5.000000e-01 : f32
    %389 = vector.broadcast %cst_192 : f32 to vector<8x512xf32>
    %390 = arith.addf %388, %389 : vector<8x512xf32>
    %391 = arith.mulf %376, %345 : vector<8x512xf32>
    %392 = arith.mulf %365, %381 : vector<8x512xf32>
    %393 = arith.addf %391, %392 : vector<8x512xf32>
    %394 = math.tanh %393 : vector<8x512xf32>
    %395 = arith.mulf %390, %394 : vector<8x512xf32>
    %c8_i32_193 = arith.constant 8 : i32
    %c0_194 = arith.constant 0 : index
    %c0_195 = arith.constant 0 : index
    %396 = vector.load %arg9[%c0_194, %c0_195] : memref<8x512xf32, #tpu.memory_space<vmem>>, vector<8x512xf32>
    tpu.vector_store %arg9[%c0_194, %c0_195], %395 {strides = array<i32>} : memref<8x512xf32, #tpu.memory_space<vmem>>, vector<8x512xf32>,
    %c0_196 = arith.constant 0 : index
    %c0_197 = arith.constant 0 : index
    %397 = vector.load %arg10[%c0_196, %c0_197] : memref<8x512xf32, #tpu.memory_space<vmem>>, vector<8x512xf32>
    tpu.vector_store %arg10[%c0_196, %c0_197], %393 {strides = array<i32>} : memref<8x512xf32, #tpu.memory_space<vmem>>, vector<8x512xf32>,
    %c0_i32_198 = arith.constant 0 : i32
    %398 = arith.cmpi eq, %arg0, %c0_i32_198 : i32
    %399 = arith.extui %398 : i1 to i32
    %c0_i32_199 = arith.constant 0 : i32
    %400 = arith.cmpi ne, %399, %c0_i32_199 : i32
    scf.if %400 {
      %c0_200 = arith.constant 0 : index
      %c0_201 = arith.constant 0 : index
      %401 = vector.load %arg5[%c0_200, %c0_201] : memref<1x512xf32, #tpu.memory_space<vmem>>, vector<1x512xf32>
      %402 = vector.broadcast %401 : vector<1x512xf32> to vector<8x512xf32>
      %403 = arith.mulf %395, %402 : vector<8x512xf32>
      %cst_202 = arith.constant dense<0.000000e+00> : vector<8xf32>
      %404 = vector.multi_reduction <add>, %403, %cst_202 [1] : vector<8x512xf32> to vector<8xf32>
      %405 = vector.shape_cast %404 : vector<8xf32> to vector<8x1xf32>
      %c0_203 = arith.constant 0 : index
      %c0_204 = arith.constant 0 : index
      %406 = vector.load %arg6[%c0_203, %c0_204] : memref<1x1xf32, #tpu.memory_space<vmem>>, vector<1x1xf32>
      %407 = vector.broadcast %406 : vector<1x1xf32> to vector<8x1xf32>
      %408 = arith.addf %405, %407 : vector<8x1xf32>
      %c0_205 = arith.constant 0 : index
      %c0_206 = arith.constant 0 : index
      %409 = vector.load %arg7[%c0_205, %c0_206] : memref<8x1xf32, #tpu.memory_space<vmem>>, vector<8x1xf32>
      tpu.vector_store %arg7[%c0_205, %c0_206], %408 {strides = array<i32>} : memref<8x1xf32, #tpu.memory_space<vmem>>, vector<8x1xf32>,
    } else {
    }
    return
  }
  func.func @transform_0(%arg0: i32) -> (i32, i32) {
    %c0_i32 = arith.constant 0 : i32
    %c0_i32_0 = arith.constant 0 : i32
    return %arg0, %c0_i32 : i32, i32
  }
  func.func @transform_1(%arg0: i32) -> (i32, i32) {
    %c0_i32 = arith.constant 0 : i32
    %c0_i32_0 = arith.constant 0 : i32
    %c0_i32_1 = arith.constant 0 : i32
    return %c0_i32, %c0_i32_0 : i32, i32
  }
  func.func @transform_2(%arg0: i32) -> (i32, i32) {
    %c0_i32 = arith.constant 0 : i32
    %c0_i32_0 = arith.constant 0 : i32
    %c0_i32_1 = arith.constant 0 : i32
    return %c0_i32, %c0_i32_0 : i32, i32
  }
  func.func @transform_3(%arg0: i32) -> (i32, i32) {
    %c0_i32 = arith.constant 0 : i32
    %c0_i32_0 = arith.constant 0 : i32
    %c0_i32_1 = arith.constant 0 : i32
    return %c0_i32, %c0_i32_0 : i32, i32
  }
  func.func @transform_4(%arg0: i32) -> (i32, i32) {
    %c0_i32 = arith.constant 0 : i32
    %c0_i32_0 = arith.constant 0 : i32
    %c0_i32_1 = arith.constant 0 : i32
    return %c0_i32, %c0_i32_0 : i32, i32
  }
  func.func @transform_5(%arg0: i32) -> (i32, i32) {
    %c0_i32 = arith.constant 0 : i32
    %c0_i32_0 = arith.constant 0 : i32
    %c0_i32_1 = arith.constant 0 : i32
    return %c0_i32, %c0_i32_0 : i32, i32
  }
  func.func @transform_6(%arg0: i32) -> (i32, i32) {
    %c0_i32 = arith.constant 0 : i32
    %c0_i32_0 = arith.constant 0 : i32
    %c0_i32_1 = arith.constant 0 : i32
    return %c0_i32, %c0_i32_0 : i32, i32
  }
}

</mosaic_0001>

<llo_original>
// kernel: lstm_score.1
$region0: #{lstm_score.1}
  #allocation0 [shape = 'u32[]', space=smem, size = 0x4, offset = 0x4, fixed_abs, tag = 'smem constant byte address 0x4 - core index']
  #allocation1 [shape = 'u32[144,128]{1,0:T(1,128)}', space=vmem, size = 0x12000, scoped, tag = 'internal scratch']
  #allocation2 [shape = 'f32[64,2048]{1,0:T(8,128)}', space=vmem, size = 0x80000, scoped, tag = 'scratch operand']
  #allocation3 [shape = 'f32[8,512]{1,0:T(8,128)}', space=vmem, size = 0x4000, scoped, tag = 'scratch operand']
  #allocation4 [shape = 'f32[8,512]{1,0:T(8,128)}', space=vmem, size = 0x4000, scoped, tag = 'scratch operand']
  #allocation5 [shape = 'f32[1,1]{1,0:T(1,128)S(1)}', space=vmem, size = 0x200, scoped, tag = 'scoped memory for lstm_score.1']
  %s0 = inlined_call_operand.vmem [shape: bf16[64,32], index: 0, kind: input, shape index: {}]
  %s1 = inlined_call_operand.vmem [shape: bf16[32,2048], index: 1, kind: input, shape index: {}]
  %s2 = inlined_call_operand.vmem [shape: bf16[512,2048], index: 2, kind: input, shape index: {}]
  %s3 = inlined_call_operand.vmem [shape: f32[1,2048], index: 3, kind: input, shape index: {}]
  %s4 = inlined_call_operand.vmem [shape: f32[1,512], index: 4, kind: input, shape index: {}]
  %s5 = inlined_call_operand.<no memory space> [shape: f32[1,1], index: 5, kind: input, shape index: {}]
  %s6 = inlined_call_operand.vmem [shape: f32[8,1], index: 6, kind: output, shape index: {}]
  %s7 = sld [smem:[#allocation0]]
  $region42: #{lstm_score.1} parent=0
    _
  %s9 = ssub.s32 1, %s7
  %s10 = scalar_select 0, %s9, %s7
  %v11 = vstv %s5
  %12 = vst [vmem:[#allocation5] sm:$0x1] %v11
  // Predicated region
  $region2: #{lstm_score.1} parent=0 // pred_check
    _
  $region3: #{lstm_score.1} parent=0 // pred_check_branch
    %14 = sbr.rel (0) target = $region5
  $region4: #{lstm_score.1} parent=0 // pred_region
    _
  $region5: #{lstm_score.1} parent=0 // pred_fallthru
    _
  // Predicated region
  $region6: #{lstm_score.1} parent=0 // pred_check
    _
  $region7: #{lstm_score.1} parent=0 // pred_check_branch
    %16 = sbr.rel (0) target = $region9
  $region8: #{lstm_score.1} parent=0 // pred_region
    _
  $region9: #{lstm_score.1} parent=0 // pred_fallthru
    _
  // Predicated region
  $region10: #{lstm_score.1} parent=0 // pred_check
    _
  $region11: #{lstm_score.1} parent=0 // pred_check_branch
    %18 = sbr.rel (0) target = $region13
  $region12: #{lstm_score.1} parent=0 // pred_region
    _
  $region13: #{lstm_score.1} parent=0 // pred_fallthru
    _
  // Predicated region
  $region14: #{lstm_score.1} parent=0 // pred_check
    _
  $region15: #{lstm_score.1} parent=0 // pred_check_branch
    %20 = sbr.rel (0) target = $region17
  $region16: #{lstm_score.1} parent=0 // pred_region
    _
  $region17: #{lstm_score.1} parent=0 // pred_fallthru
    _
  // Predicated region
  $region18: #{lstm_score.1} parent=0 // pred_check
    _
  $region19: #{lstm_score.1} parent=0 // pred_check_branch
    %22 = sbr.rel (0) target = $region21
  $region20: #{lstm_score.1} parent=0 // pred_region
    _
  $region21: #{lstm_score.1} parent=0 // pred_fallthru
    _
  // Predicated region
  $region22: #{lstm_score.1} parent=0 // pred_check
    _
  $region23: #{lstm_score.1} parent=0 // pred_check_branch
    %24 = sbr.rel (0) target = $region25
  $region24: #{lstm_score.1} parent=0 // pred_region
    _
  $region25: #{lstm_score.1} parent=0 // pred_fallthru
    _
  %p26 = scmp.eq.s32.totalorder 0, 0
  // Predicated region
  $region26: #{lstm_score.1} parent=0 // pred_check
    %p27 = pneg %p26
  $region27: #{lstm_score.1} parent=0 // pred_check_branch
    %29 = sbr.rel (%p27) target = $region29
  $region28: #{lstm_score.1} parent=0 // pred_region
    %30 = vst [vmem:[#allocation3] sm:$0xff] 0.0
    %31 = vst [vmem:[#allocation3 + $0x8] sm:$0xff] 0.0
    %32 = vst [vmem:[#allocation3 + $0x10] sm:$0xff] 0.0
    %33 = vst [vmem:[#allocation3 + $0x18] sm:$0xff] 0.0
    %34 = vst [vmem:[#allocation4] sm:$0xff] 0.0
    %35 = vst [vmem:[#allocation4 + $0x8] sm:$0xff] 0.0
    %36 = vst [vmem:[#allocation4 + $0x10] sm:$0xff] 0.0
    %37 = vst [vmem:[#allocation4 + $0x18] sm:$0xff] 0.0
  $region29: #{lstm_score.1} parent=0 // pred_fallthru
    _
  %v38 = vld [vmem:[%s0] sm:$0xf]
  %v39 = vld [vmem:[%s0 + $0x4] sm:$0xf]
  %v40 = vld [vmem:[%s0 + $0x8] sm:$0xf]
  %v41 = vld [vmem:[%s0 + $0xc] sm:$0xf]
  %v42 = vld [vmem:[%s0 + $0x10] sm:$0xf]
  %v43 = vld [vmem:[%s0 + $0x14] sm:$0xf]
  %v44 = vld [vmem:[%s0 + $0x18] sm:$0xf]
  %v45 = vld [vmem:[%s0 + $0x1c] sm:$0xf]
  %v46 = vld [vmem:[%s1] sm:$0xff]
  %v47 = vld [vmem:[%s1 + $0x8] sm:$0xff]
  %v48 = vld [vmem:[%s1 + $0x10] sm:$0xff]
  %v49 = vld [vmem:[%s1 + $0x18] sm:$0xff]
  %v50 = vld [vmem:[%s1 + $0x20] sm:$0xff]
  %v51 = vld [vmem:[%s1 + $0x28] sm:$0xff]
  %v52 = vld [vmem:[%s1 + $0x30] sm:$0xff]
  %v53 = vld [vmem:[%s1 + $0x38] sm:$0xff]
  %v54 = vld [vmem:[%s1 + $0x40] sm:$0xff]
  %v55 = vld [vmem:[%s1 + $0x48] sm:$0xff]
  %v56 = vld [vmem:[%s1 + $0x50] sm:$0xff]
  %v57 = vld [vmem:[%s1 + $0x58] sm:$0xff]
  %v58 = vld [vmem:[%s1 + $0x60] sm:$0xff]
  %v59 = vld [vmem:[%s1 + $0x68] sm:$0xff]
  %v60 = vld [vmem:[%s1 + $0x70] sm:$0xff]
  %v61 = vld [vmem:[%s1 + $0x78] sm:$0xff]
  %v62 = vld [vmem:[%s1 + $0x80] sm:$0xff]
  %v63 = vld [vmem:[%s1 + $0x88] sm:$0xff]
  %v64 = vld [vmem:[%s1 + $0x90] sm:$0xff]
  %v65 = vld [vmem:[%s1 + $0x98] sm:$0xff]
  %v66 = vld [vmem:[%s1 + $0xa0] sm:$0xff]
  %v67 = vld [vmem:[%s1 + $0xa8] sm:$0xff]
  %v68 = vld [vmem:[%s1 + $0xb0] sm:$0xff]
  %v69 = vld [vmem:[%s1 + $0xb8] sm:$0xff]
  %v70 = vld [vmem:[%s1 + $0xc0] sm:$0xff]
  %v71 = vld [vmem:[%s1 + $0xc8] sm:$0xff]
  %v72 = vld [vmem:[%s1 + $0xd0] sm:$0xff]
  %v73 = vld [vmem:[%s1 + $0xd8] sm:$0xff]
  %v74 = vld [vmem:[%s1 + $0xe0] sm:$0xff]
  %v75 = vld [vmem:[%s1 + $0xe8] sm:$0xff]
  %v76 = vld [vmem:[%s1 + $0xf0] sm:$0xff]
  %v77 = vld [vmem:[%s1 + $0xf8] sm:$0xff]
  %v78 = vld [vmem:[%s3] sm:$0xff]
  %v79 = vld [vmem:[%s3 + $0x8] sm:$0xff]
  %v82 = vlaneseq
  %v83 = vshrl.u32 %v82, 7
  %v84 = vsub.s32 0, %v83
  %v85 = vrot.slane %v78, %v84
  %v86 = vlaneseq
  %v87 = vshrl.u32 %v86, 7
  %v88 = vsub.s32 1, %v87
  %v89 = vrot.slane %v78, %v88
  %v90 = vlaneseq
  %v91 = vshrl.u32 %v90, 7
  %v92 = vsub.s32 2, %v91
  %v93 = vrot.slane %v78, %v92
  %v94 = vlaneseq
  %v95 = vshrl.u32 %v94, 7
  %v96 = vsub.s32 3, %v95
  %v97 = vrot.slane %v78, %v96
  %v98 = vlaneseq
  %v99 = vshrl.u32 %v98, 7
  %v100 = vsub.s32 4, %v99
  %v101 = vrot.slane %v78, %v100
  %v102 = vlaneseq
  %v103 = vshrl.u32 %v102, 7
  %v104 = vsub.s32 5, %v103
  %v105 = vrot.slane %v78, %v104
  %v106 = vlaneseq
  %v107 = vshrl.u32 %v106, 7
  %v108 = vsub.s32 6, %v107
  %v109 = vrot.slane %v78, %v108
  %v110 = vlaneseq
  %v111 = vshrl.u32 %v110, 7
  %v112 = vsub.s32 7, %v111
  %v113 = vrot.slane %v78, %v112
  %v114 = vlaneseq
  %v115 = vshrl.u32 %v114, 7
  %v116 = vsub.s32 0, %v115
  %v117 = vrot.slane %v79, %v116
  %v118 = vlaneseq
  %v119 = vshrl.u32 %v118, 7
  %v120 = vsub.s32 1, %v119
  %v121 = vrot.slane %v79, %v120
  %v122 = vlaneseq
  %v123 = vshrl.u32 %v122, 7
  %v124 = vsub.s32 2, %v123
  %v125 = vrot.slane %v79, %v124
  %v126 = vlaneseq
  %v127 = vshrl.u32 %v126, 7
  %v128 = vsub.s32 3, %v127
  %v129 = vrot.slane %v79, %v128
  %v130 = vlaneseq
  %v131 = vshrl.u32 %v130, 7
  %v132 = vsub.s32 4, %v131
  %v133 = vrot.slane %v79, %v132
  %v134 = vlaneseq
  %v135 = vshrl.u32 %v134, 7
  %v136 = vsub.s32 5, %v135
  %v137 = vrot.slane %v79, %v136
  %v138 = vlaneseq
  %v139 = vshrl.u32 %v138, 7
  %v140 = vsub.s32 6, %v139
  %v141 = vrot.slane %v79, %v140
  %v142 = vlaneseq
  %v143 = vshrl.u32 %v142, 7
  %v144 = vsub.s32 7, %v143
  %v145 = vrot.slane %v79, %v144
  %v170 = vunpack.c.l.b16 %v38
  %v171 = vunpack.c.l.b16 %v39
  %v172 = vunpack.c.l.b16 %v40
  %v173 = vunpack.c.l.b16 %v41
  %v174 = vunpack.c.l.b16 %v42
  %v175 = vunpack.c.l.b16 %v43
  %v176 = vunpack.c.l.b16 %v44
  %v177 = vunpack.c.l.b16 %v45
  %v178 = vpack.c.b16 %v171, %v170
  %v179 = vpack.c.b16 %v173, %v172
  %v180 = vpack.c.b16 %v175, %v174
  %v181 = vpack.c.b16 %v177, %v176
  %v214 = vunpack.c.l.b16 %v46
  %v215 = vunpack.c.h.b16 %v46
  %v216 = vunpack.c.l.b16 %v47
  %v217 = vunpack.c.h.b16 %v47
  %v218 = vunpack.c.l.b16 %v48
  %v219 = vunpack.c.h.b16 %v48
  %v220 = vunpack.c.l.b16 %v49
  %v221 = vunpack.c.h.b16 %v49
  %v222 = vunpack.c.l.b16 %v50
  %v223 = vunpack.c.h.b16 %v50
  %v224 = vunpack.c.l.b16 %v51
  %v225 = vunpack.c.h.b16 %v51
  %v226 = vunpack.c.l.b16 %v52
  %v227 = vunpack.c.h.b16 %v52
  %v228 = vunpack.c.l.b16 %v53
  %v229 = vunpack.c.h.b16 %v53
  %v230 = vunpack.c.l.b16 %v54
  %v231 = vunpack.c.h.b16 %v54
  %v232 = vunpack.c.l.b16 %v55
  %v233 = vunpack.c.h.b16 %v55
  %v234 = vunpack.c.l.b16 %v56
  %v235 = vunpack.c.h.b16 %v56
  %v236 = vunpack.c.l.b16 %v57
  %v237 = vunpack.c.h.b16 %v57
  %v238 = vunpack.c.l.b16 %v58
  %v239 = vunpack.c.h.b16 %v58
  %v240 = vunpack.c.l.b16 %v59
  %v241 = vunpack.c.h.b16 %v59
  %v242 = vunpack.c.l.b16 %v60
  %v243 = vunpack.c.h.b16 %v60
  %v244 = vunpack.c.l.b16 %v61
  %v245 = vunpack.c.h.b16 %v61
  %v246 = vunpack.c.l.b16 %v62
  %v247 = vunpack.c.h.b16 %v62
  %v248 = vunpack.c.l.b16 %v63
  %v249 = vunpack.c.h.b16 %v63
  %v250 = vunpack.c.l.b16 %v64
  %v251 = vunpack.c.h.b16 %v64
  %v252 = vunpack.c.l.b16 %v65
  %v253 = vunpack.c.h.b16 %v65
  %v254 = vunpack.c.l.b16 %v66
  %v255 = vunpack.c.h.b16 %v66
  %v256 = vunpack.c.l.b16 %v67
  %v257 = vunpack.c.h.b16 %v67
  %v258 = vunpack.c.l.b16 %v68
  %v259 = vunpack.c.h.b16 %v68
  %v260 = vunpack.c.l.b16 %v69
  %v261 = vunpack.c.h.b16 %v69
  %v262 = vunpack.c.l.b16 %v70
  %v263 = vunpack.c.h.b16 %v70
  %v264 = vunpack.c.l.b16 %v71
  %v265 = vunpack.c.h.b16 %v71
  %v266 = vunpack.c.l.b16 %v72
  %v267 = vunpack.c.h.b16 %v72
  %v268 = vunpack.c.l.b16 %v73
  %v269 = vunpack.c.h.b16 %v73
  %v270 = vunpack.c.l.b16 %v74
  %v271 = vunpack.c.h.b16 %v74
  %v272 = vunpack.c.l.b16 %v75
  %v273 = vunpack.c.h.b16 %v75
  %v274 = vunpack.c.l.b16 %v76
  %v275 = vunpack.c.h.b16 %v76
  %v276 = vunpack.c.l.b16 %v77
  %v277 = vunpack.c.h.b16 %v77
  %v278 = vpack.c.b16 %v230, %v214
  %v279 = vpack.c.b16 %v231, %v215
  %v280 = vpack.c.b16 %v232, %v216
  %v281 = vpack.c.b16 %v233, %v217
  %v282 = vpack.c.b16 %v234, %v218
  %v283 = vpack.c.b16 %v235, %v219
  %v284 = vpack.c.b16 %v236, %v220
  %v285 = vpack.c.b16 %v237, %v221
  %v286 = vpack.c.b16 %v238, %v222
  %v287 = vpack.c.b16 %v239, %v223
  %v288 = vpack.c.b16 %v240, %v224
  %v289 = vpack.c.b16 %v241, %v225
  %v290 = vpack.c.b16 %v242, %v226
  %v291 = vpack.c.b16 %v243, %v227
  %v292 = vpack.c.b16 %v244, %v228
  %v293 = vpack.c.b16 %v245, %v229
  %v294 = vpack.c.b16 %v262, %v246
  %v295 = vpack.c.b16 %v263, %v247
  %v296 = vpack.c.b16 %v264, %v248
  %v297 = vpack.c.b16 %v265, %v249
  %v298 = vpack.c.b16 %v266, %v250
  %v299 = vpack.c.b16 %v267, %v251
  %v300 = vpack.c.b16 %v268, %v252
  %v301 = vpack.c.b16 %v269, %v253
  %v302 = vpack.c.b16 %v270, %v254
  %v303 = vpack.c.b16 %v271, %v255
  %v304 = vpack.c.b16 %v272, %v256
  %v305 = vpack.c.b16 %v273, %v257
  %v306 = vpack.c.b16 %v274, %v258
  %v307 = vpack.c.b16 %v275, %v259
  %v308 = vpack.c.b16 %v276, %v260
  %v309 = vpack.c.b16 %v277, %v261
  %vm342 = vcmask 261120
  %v344 = vsel %vm342, %v178, 0
  %v347 = vsel %vm342, %v179, 0
  %v350 = vsel %vm342, %v180, 0
  %v353 = vsel %vm342, %v181, 0
  %355 = vmatprep.subr.bf16.mxu0 %v279
  %356 = vmatpush1.bf16.msra.mxu0 %v278
  %357 = vmatprep.subr.bf16.mxu0 %v295
  %358 = vmatpush1.bf16.msra.mxu0 %v294
  %359 = vmatprep.subr.bf16.mxu0 0
  %360 = vmatpush1.bf16.msra.mxu0 0
  %361 = vmatprep.subr.bf16.mxu0 0
  %362 = vmatpush1.bf16.msra.mxu0 0
  %363 = vmatprep.subr.bf16.mxu0 0
  %364 = vmatpush1.bf16.msra.mxu0 0
  %365 = vmatprep.subr.bf16.mxu0 0
  %366 = vmatpush1.bf16.msra.mxu0 0
  %367 = vmatprep.subr.bf16.mxu0 0
  %368 = vmatpush1.bf16.msra.mxu0 0
  %369 = vmatprep.subr.bf16.mxu0 0
  %370 = vmatpush1.bf16.msra.mxu0 0
  %371 = vmatprep.subr.bf16.mxu0 0
  %372 = vmatpush1.bf16.msra.mxu0 0
  %373 = vmatprep.subr.bf16.mxu0 0
  %374 = vmatpush1.bf16.msra.mxu0 0
  %375 = vmatprep.subr.bf16.mxu0 0
  %376 = vmatpush1.bf16.msra.mxu0 0
  %377 = vmatprep.subr.bf16.mxu0 0
  %378 = vmatpush1.bf16.msra.mxu0 0
  %379 = vmatprep.subr.bf16.mxu0 0
  %380 = vmatpush1.bf16.msra.mxu0 0
  %381 = vmatprep.subr.bf16.mxu0 0
  %382 = vmatpush1.bf16.msra.mxu0 0
  %383 = vmatprep.subr.bf16.mxu0 0
  %384 = vmatpush1.bf16.msra.mxu0 0
  %385 = vmatprep.subr.bf16.mxu0 0
  %386 = vmatpush1.bf16.msra.mxu0 0
  %387 = vmatprep.mubr.bf16.mxu0 0
  %388 = vmatmul.mubr.bf16.gmra.mrb[0].mxu0 %v344
  %v389 = vpop.f32.mrb[0].mxu0
  %v390 = vadd.f32 %v85, %v389
  %v391 = vpop.f32.mrb[0].mxu0
  %v392 = vadd.f32 %v89, %v391
  %v393 = vpop.f32.mrb[0].mxu0
  %v394 = vadd.f32 %v85, %v393
  %v395 = vpop.f32.mrb[0].mxu0
  %v396 = vadd.f32 %v89, %v395
  %397 = vmatprep.mubr.bf16.mxu0 0
  %398 = vmatmul.mubr.bf16.gmra.mrb[0].mxu0 %v347
  %v399 = vpop.f32.mrb[0].mxu0
  %v400 = vadd.f32 %v85, %v399
  %v401 = vpop.f32.mrb[0].mxu0
  %v402 = vadd.f32 %v89, %v401
  %v403 = vpop.f32.mrb[0].mxu0
  %v404 = vadd.f32 %v85, %v403
  %v405 = vpop.f32.mrb[0].mxu0
  %v406 = vadd.f32 %v89, %v405
  %407 = vmatprep.mubr.bf16.mxu0 0
  %408 = vmatmul.mubr.bf16.gmra.mrb[0].mxu0 %v350
  %v409 = vpop.f32.mrb[0].mxu0
  %v410 = vadd.f32 %v85, %v409
  %v411 = vpop.f32.mrb[0].mxu0
  %v412 = vadd.f32 %v89, %v411
  %v413 = vpop.f32.mrb[0].mxu0
  %v414 = vadd.f32 %v85, %v413
  %v415 = vpop.f32.mrb[0].mxu0
  %v416 = vadd.f32 %v89, %v415
  %417 = vmatprep.mubr.bf16.mxu0 0
  %418 = vmatmul.mubr.bf16.gmra.mrb[0].mxu0 %v353
  %v419 = vpop.f32.mrb[0].mxu0
  %v420 = vadd.f32 %v85, %v419
  %v421 = vpop.f32.mrb[0].mxu0
  %v422 = vadd.f32 %v89, %v421
  %v423 = vpop.f32.mrb[0].mxu0
  %v424 = vadd.f32 %v85, %v423
  %v425 = vpop.f32.mrb[0].mxu0
  %v426 = vadd.f32 %v89, %v425
  %427 = vdwg.mxu0
  %428 = vmatprep.subr.bf16.mxu0 %v281
  %429 = vmatpush1.bf16.msra.mxu0 %v280
  %430 = vmatprep.subr.bf16.mxu0 %v297
  %431 = vmatpush1.bf16.msra.mxu0 %v296
  %432 = vmatprep.subr.bf16.mxu0 0
  %433 = vmatpush1.bf16.msra.mxu0 0
  %434 = vmatprep.subr.bf16.mxu0 0
  %435 = vmatpush1.bf16.msra.mxu0 0
  %436 = vmatprep.subr.bf16.mxu0 0
  %437 = vmatpush1.bf16.msra.mxu0 0
  %438 = vmatprep.subr.bf16.mxu0 0
  %439 = vmatpush1.bf16.msra.mxu0 0
  %440 = vmatprep.subr.bf16.mxu0 0
  %441 = vmatpush1.bf16.msra.mxu0 0
  %442 = vmatprep.subr.bf16.mxu0 0
  %443 = vmatpush1.bf16.msra.mxu0 0
  %444 = vmatprep.subr.bf16.mxu0 0
  %445 = vmatpush1.bf16.msra.mxu0 0
  %446 = vmatprep.subr.bf16.mxu0 0
  %447 = vmatpush1.bf16.msra.mxu0 0
  %448 = vmatprep.subr.bf16.mxu0 0
  %449 = vmatpush1.bf16.msra.mxu0 0
  %450 = vmatprep.subr.bf16.mxu0 0
  %451 = vmatpush1.bf16.msra.mxu0 0
  %452 = vmatprep.subr.bf16.mxu0 0
  %453 = vmatpush1.bf16.msra.mxu0 0
  %454 = vmatprep.subr.bf16.mxu0 0
  %455 = vmatpush1.bf16.msra.mxu0 0
  %456 = vmatprep.subr.bf16.mxu0 0
  %457 = vmatpush1.bf16.msra.mxu0 0
  %458 = vmatprep.subr.bf16.mxu0 0
  %459 = vmatpush1.bf16.msra.mxu0 0
  %460 = vmatprep.mubr.bf16.mxu0 0
  %461 = vmatmul.mubr.bf16.gmra.mrb[0].mxu0 %v344
  %v462 = vpop.f32.mrb[0].mxu0
  %v463 = vadd.f32 %v93, %v462
  %v464 = vpop.f32.mrb[0].mxu0
  %v465 = vadd.f32 %v97, %v464
  %v466 = vpop.f32.mrb[0].mxu0
  %v467 = vadd.f32 %v93, %v466
  %v468 = vpop.f32.mrb[0].mxu0
  %v469 = vadd.f32 %v97, %v468
  %470 = vmatprep.mubr.bf16.mxu0 0
  %471 = vmatmul.mubr.bf16.gmra.mrb[0].mxu0 %v347
  %v472 = vpop.f32.mrb[0].mxu0
  %v473 = vadd.f32 %v93, %v472
  %v474 = vpop.f32.mrb[0].mxu0
  %v475 = vadd.f32 %v97, %v474
  %v476 = vpop.f32.mrb[0].mxu0
  %v477 = vadd.f32 %v93, %v476
  %v478 = vpop.f32.mrb[0].mxu0
  %v479 = vadd.f32 %v97, %v478
  %480 = vmatprep.mubr.bf16.mxu0 0
  %481 = vmatmul.mubr.bf16.gmra.mrb[0].mxu0 %v350
  %v482 = vpop.f32.mrb[0].mxu0
  %v483 = vadd.f32 %v93, %v482
  %v484 = vpop.f32.mrb[0].mxu0
  %v485 = vadd.f32 %v97, %v484
  %v486 = vpop.f32.mrb[0].mxu0
  %v487 = vadd.f32 %v93, %v486
  %v488 = vpop.f32.mrb[0].mxu0
  %v489 = vadd.f32 %v97, %v488
  %490 = vmatprep.mubr.bf16.mxu0 0
  %491 = vmatmul.mubr.bf16.gmra.mrb[0].mxu0 %v353
  %v492 = vpop.f32.mrb[0].mxu0
  %v493 = vadd.f32 %v93, %v492
  %v494 = vpop.f32.mrb[0].mxu0
  %v495 = vadd.f32 %v97, %v494
  %v496 = vpop.f32.mrb[0].mxu0
  %v497 = vadd.f32 %v93, %v496
  %v498 = vpop.f32.mrb[0].mxu0
  %v499 = vadd.f32 %v97, %v498
  %500 = vdwg.mxu0
  %501 = vmatprep.subr.bf16.mxu0 %v283
  %502 = vmatpush1.bf16.msra.mxu0 %v282
  %503 = vmatprep.subr.bf16.mxu0 %v299
  %504 = vmatpush1.bf16.msra.mxu0 %v298
  %505 = vmatprep.subr.bf16.mxu0 0
  %506 = vmatpush1.bf16.msra.mxu0 0
  %507 = vmatprep.subr.bf16.mxu0 0
  %508 = vmatpush1.bf16.msra.mxu0 0
  %509 = vmatprep.subr.bf16.mxu0 0
  %510 = vmatpush1.bf16.msra.mxu0 0
  %511 = vmatprep.subr.bf16.mxu0 0
  %512 = vmatpush1.bf16.msra.mxu0 0
  %513 = vmatprep.subr.bf16.mxu0 0
  %514 = vmatpush1.bf16.msra.mxu0 0
  %515 = vmatprep.subr.bf16.mxu0 0
  %516 = vmatpush1.bf16.msra.mxu0 0
  %517 = vmatprep.subr.bf16.mxu0 0
  %518 = vmatpush1.bf16.msra.mxu0 0
  %519 = vmatprep.subr.bf16.mxu0 0
  %520 = vmatpush1.bf16.msra.mxu0 0
  %521 = vmatprep.subr.bf16.mxu0 0
  %522 = vmatpush1.bf16.msra.mxu0 0
  %523 = vmatprep.subr.bf16.mxu0 0
  %524 = vmatpush1.bf16.msra.mxu0 0
  %525 = vmatprep.subr.bf16.mxu0 0
  %526 = vmatpush1.bf16.msra.mxu0 0
  %527 = vmatprep.subr.bf16.mxu0 0
  %528 = vmatpush1.bf16.msra.mxu0 0
  %529 = vmatprep.subr.bf16.mxu0 0
  %530 = vmatpush1.bf16.msra.mxu0 0
  %531 = vmatprep.subr.bf16.mxu0 0
  %532 = vmatpush1.bf16.msra.mxu0 0
  %533 = vmatprep.mubr.bf16.mxu0 0
  %534 = vmatmul.mubr.bf16.gmra.mrb[0].mxu0 %v344
  %v535 = vpop.f32.mrb[0].mxu0
  %v536 = vadd.f32 %v101, %v535
  %v537 = vpop.f32.mrb[0].mxu0
  %v538 = vadd.f32 %v105, %v537
  %v539 = vpop.f32.mrb[0].mxu0
  %v540 = vadd.f32 %v101, %v539
  %v541 = vpop.f32.mrb[0].mxu0
  %v542 = vadd.f32 %v105, %v541
  %543 = vmatprep.mubr.bf16.mxu0 0
  %544 = vmatmul.mubr.bf16.gmra.mrb[0].mxu0 %v347
  %v545 = vpop.f32.mrb[0].mxu0
  %v546 = vadd.f32 %v101, %v545
  %v547 = vpop.f32.mrb[0].mxu0
  %v548 = vadd.f32 %v105, %v547
  %v549 = vpop.f32.mrb[0].mxu0
  %v550 = vadd.f32 %v101, %v549
  %v551 = vpop.f32.mrb[0].mxu0
  %v552 = vadd.f32 %v105, %v551
  %553 = vmatprep.mubr.bf16.mxu0 0
  %554 = vmatmul.mubr.bf16.gmra.mrb[0].mxu0 %v350
  %v555 = vpop.f32.mrb[0].mxu0
  %v556 = vadd.f32 %v101, %v555
  %v557 = vpop.f32.mrb[0].mxu0
  %v558 = vadd.f32 %v105, %v557
  %v559 = vpop.f32.mrb[0].mxu0
  %v560 = vadd.f32 %v101, %v559
  %v561 = vpop.f32.mrb[0].mxu0
  %v562 = vadd.f32 %v105, %v561
  %563 = vmatprep.mubr.bf16.mxu0 0
  %564 = vmatmul.mubr.bf16.gmra.mrb[0].mxu0 %v353
  %v565 = vpop.f32.mrb[0].mxu0
  %v566 = vadd.f32 %v101, %v565
  %v567 = vpop.f32.mrb[0].mxu0
  %v568 = vadd.f32 %v105, %v567
  %v569 = vpop.f32.mrb[0].mxu0
  %v570 = vadd.f32 %v101, %v569
  %v571 = vpop.f32.mrb[0].mxu0
  %v572 = vadd.f32 %v105, %v571
  %573 = vdwg.mxu0
  %574 = vmatprep.subr.bf16.mxu0 %v285
  %575 = vmatpush1.bf16.msra.mxu0 %v284
  %576 = vmatprep.subr.bf16.mxu0 %v301
  %577 = vmatpush1.bf16.msra.mxu0 %v300
  %578 = vmatprep.subr.bf16.mxu0 0
  %579 = vmatpush1.bf16.msra.mxu0 0
  %580 = vmatprep.subr.bf16.mxu0 0
  %581 = vmatpush1.bf16.msra.mxu0 0
  %582 = vmatprep.subr.bf16.mxu0 0
  %583 = vmatpush1.bf16.msra.mxu0 0
  %584 = vmatprep.subr.bf16.mxu0 0
  %585 = vmatpush1.bf16.msra.mxu0 0
  %586 = vmatprep.subr.bf16.mxu0 0
  %587 = vmatpush1.bf16.msra.mxu0 0
  %588 = vmatprep.subr.bf16.mxu0 0
  %589 = vmatpush1.bf16.msra.mxu0 0
  %590 = vmatprep.subr.bf16.mxu0 0
  %591 = vmatpush1.bf16.msra.mxu0 0
  %592 = vmatprep.subr.bf16.mxu0 0
  %593 = vmatpush1.bf16.msra.mxu0 0
  %594 = vmatprep.subr.bf16.mxu0 0
  %595 = vmatpush1.bf16.msra.mxu0 0
  %596 = vmatprep.subr.bf16.mxu0 0
  %597 = vmatpush1.bf16.msra.mxu0 0
  %598 = vmatprep.subr.bf16.mxu0 0
  %599 = vmatpush1.bf16.msra.mxu0 0
  %600 = vmatprep.subr.bf16.mxu0 0
  %601 = vmatpush1.bf16.msra.mxu0 0
  %602 = vmatprep.subr.bf16.mxu0 0
  %603 = vmatpush1.bf16.msra.mxu0 0
  %604 = vmatprep.subr.bf16.mxu0 0
  %605 = vmatpush1.bf16.msra.mxu0 0
  %606 = vmatprep.mubr.bf16.mxu0 0
  %607 = vmatmul.mubr.bf16.gmra.mrb[0].mxu0 %v344
  %v608 = vpop.f32.mrb[0].mxu0
  %v609 = vadd.f32 %v109, %v608
  %v610 = vpop.f32.mrb[0].mxu0
  %v611 = vadd.f32 %v113, %v610
  %v612 = vpop.f32.mrb[0].mxu0
  %v613 = vadd.f32 %v109, %v612
  %v614 = vpop.f32.mrb[0].mxu0
  %v615 = vadd.f32 %v113, %v614
  %616 = vmatprep.mubr.bf16.mxu0 0
  %617 = vmatmul.mubr.bf16.gmra.mrb[0].mxu0 %v347
  %v618 = vpop.f32.mrb[0].mxu0
  %v619 = vadd.f32 %v109, %v618
  %v620 = vpop.f32.mrb[0].mxu0
  %v621 = vadd.f32 %v113, %v620
  %v622 = vpop.f32.mrb[0].mxu0
  %v623 = vadd.f32 %v109, %v622
  %v624 = vpop.f32.mrb[0].mxu0
  %v625 = vadd.f32 %v113, %v624
  %626 = vmatprep.mubr.bf16.mxu0 0
  %627 = vmatmul.mubr.bf16.gmra.mrb[0].mxu0 %v350
  %v628 = vpop.f32.mrb[0].mxu0
  %v629 = vadd.f32 %v109, %v628
  %v630 = vpop.f32.mrb[0].mxu0
  %v631 = vadd.f32 %v113, %v630
  %v632 = vpop.f32.mrb[0].mxu0
  %v633 = vadd.f32 %v109, %v632
  %v634 = vpop.f32.mrb[0].mxu0
  %v635 = vadd.f32 %v113, %v634
  %636 = vmatprep.mubr.bf16.mxu0 0
  %637 = vmatmul.mubr.bf16.gmra.mrb[0].mxu0 %v353
  %v638 = vpop.f32.mrb[0].mxu0
  %v639 = vadd.f32 %v109, %v638
  %v640 = vpop.f32.mrb[0].mxu0
  %v641 = vadd.f32 %v113, %v640
  %v642 = vpop.f32.mrb[0].mxu0
  %v643 = vadd.f32 %v109, %v642
  %v644 = vpop.f32.mrb[0].mxu0
  %v645 = vadd.f32 %v113, %v644
  %646 = vdwg.mxu0
  %647 = vmatprep.subr.bf16.mxu0 %v287
  %648 = vmatpush1.bf16.msra.mxu0 %v286
  %649 = vmatprep.subr.bf16.mxu0 %v303
  %650 = vmatpush1.bf16.msra.mxu0 %v302
  %651 = vmatprep.subr.bf16.mxu0 0
  %652 = vmatpush1.bf16.msra.mxu0 0
  %653 = vmatprep.subr.bf16.mxu0 0
  %654 = vmatpush1.bf16.msra.mxu0 0
  %655 = vmatprep.subr.bf16.mxu0 0
  %656 = vmatpush1.bf16.msra.mxu0 0
  %657 = vmatprep.subr.bf16.mxu0 0
  %658 = vmatpush1.bf16.msra.mxu0 0
  %659 = vmatprep.subr.bf16.mxu0 0
  %660 = vmatpush1.bf16.msra.mxu0 0
  %661 = vmatprep.subr.bf16.mxu0 0
  %662 = vmatpush1.bf16.msra.mxu0 0
  %663 = vmatprep.subr.bf16.mxu0 0
  %664 = vmatpush1.bf16.msra.mxu0 0
  %665 = vmatprep.subr.bf16.mxu0 0
  %666 = vmatpush1.bf16.msra.mxu0 0
  %667 = vmatprep.subr.bf16.mxu0 0
  %668 = vmatpush1.bf16.msra.mxu0 0
  %669 = vmatprep.subr.bf16.mxu0 0
  %670 = vmatpush1.bf16.msra.mxu0 0
  %671 = vmatprep.subr.bf16.mxu0 0
  %672 = vmatpush1.bf16.msra.mxu0 0
  %673 = vmatprep.subr.bf16.mxu0 0
  %674 = vmatpush1.bf16.msra.mxu0 0
  %675 = vmatprep.subr.bf16.mxu0 0
  %676 = vmatpush1.bf16.msra.mxu0 0
  %677 = vmatprep.subr.bf16.mxu0 0
  %678 = vmatpush1.bf16.msra.mxu0 0
  %679 = vmatprep.mubr.bf16.mxu0 0
  %680 = vmatmul.mubr.bf16.gmra.mrb[0].mxu0 %v344
  %v681 = vpop.f32.mrb[0].mxu0
  %v682 = vadd.f32 %v117, %v681
  %v683 = vpop.f32.mrb[0].mxu0
  %v684 = vadd.f32 %v121, %v683
  %v685 = vpop.f32.mrb[0].mxu0
  %v686 = vadd.f32 %v117, %v685
  %v687 = vpop.f32.mrb[0].mxu0
  %v688 = vadd.f32 %v121, %v687
  %689 = vmatprep.mubr.bf16.mxu0 0
  %690 = vmatmul.mubr.bf16.gmra.mrb[0].mxu0 %v347
  %v691 = vpop.f32.mrb[0].mxu0
  %v692 = vadd.f32 %v117, %v691
  %v693 = vpop.f32.mrb[0].mxu0
  %v694 = vadd.f32 %v121, %v693
  %v695 = vpop.f32.mrb[0].mxu0
  %v696 = vadd.f32 %v117, %v695
  %v697 = vpop.f32.mrb[0].mxu0
  %v698 = vadd.f32 %v121, %v697
  %699 = vmatprep.mubr.bf16.mxu0 0
  %700 = vmatmul.mubr.bf16.gmra.mrb[0].mxu0 %v350
  %v701 = vpop.f32.mrb[0].mxu0
  %v702 = vadd.f32 %v117, %v701
  %v703 = vpop.f32.mrb[0].mxu0
  %v704 = vadd.f32 %v121, %v703
  %v705 = vpop.f32.mrb[0].mxu0
  %v706 = vadd.f32 %v117, %v705
  %v707 = vpop.f32.mrb[0].mxu0
  %v708 = vadd.f32 %v121, %v707
  %709 = vmatprep.mubr.bf16.mxu0 0
  %710 = vmatmul.mubr.bf16.gmra.mrb[0].mxu0 %v353
  %v711 = vpop.f32.mrb[0].mxu0
  %v712 = vadd.f32 %v117, %v711
  %v713 = vpop.f32.mrb[0].mxu0
  %v714 = vadd.f32 %v121, %v713
  %v715 = vpop.f32.mrb[0].mxu0
  %v716 = vadd.f32 %v117, %v715
  %v717 = vpop.f32.mrb[0].mxu0
  %v718 = vadd.f32 %v121, %v717
  %719 = vdwg.mxu0
  %720 = vmatprep.subr.bf16.mxu0 %v289
  %721 = vmatpush1.bf16.msra.mxu0 %v288
  %722 = vmatprep.subr.bf16.mxu0 %v305
  %723 = vmatpush1.bf16.msra.mxu0 %v304
  %724 = vmatprep.subr.bf16.mxu0 0
  %725 = vmatpush1.bf16.msra.mxu0 0
  %726 = vmatprep.subr.bf16.mxu0 0
  %727 = vmatpush1.bf16.msra.mxu0 0
  %728 = vmatprep.subr.bf16.mxu0 0
  %729 = vmatpush1.bf16.msra.mxu0 0
  %730 = vmatprep.subr.bf16.mxu0 0
  %731 = vmatpush1.bf16.msra.mxu0 0
  %732 = vmatprep.subr.bf16.mxu0 0
  %733 = vmatpush1.bf16.msra.mxu0 0
  %734 = vmatprep.subr.bf16.mxu0 0
  %735 = vmatpush1.bf16.msra.mxu0 0
  %736 = vmatprep.subr.bf16.mxu0 0
  %737 = vmatpush1.bf16.msra.mxu0 0
  %738 = vmatprep.subr.bf16.mxu0 0
  %739 = vmatpush1.bf16.msra.mxu0 0
  %740 = vmatprep.subr.bf16.mxu0 0
  %741 = vmatpush1.bf16.msra.mxu0 0
  %742 = vmatprep.subr.bf16.mxu0 0
  %743 = vmatpush1.bf16.msra.mxu0 0
  %744 = vmatprep.subr.bf16.mxu0 0
  %745 = vmatpush1.bf16.msra.mxu0 0
  %746 = vmatprep.subr.bf16.mxu0 0
  %747 = vmatpush1.bf16.msra.mxu0 0
  %748 = vmatprep.subr.bf16.mxu0 0
  %749 = vmatpush1.bf16.msra.mxu0 0
  %750 = vmatprep.subr.bf16.mxu0 0
  %751 = vmatpush1.bf16.msra.mxu0 0
  %752 = vmatprep.mubr.bf16.mxu0 0
  %753 = vmatmul.mubr.bf16.gmra.mrb[0].mxu0 %v344
  %v754 = vpop.f32.mrb[0].mxu0
  %v755 = vadd.f32 %v125, %v754
  %v756 = vpop.f32.mrb[0].mxu0
  %v757 = vadd.f32 %v129, %v756
  %v758 = vpop.f32.mrb[0].mxu0
  %v759 = vadd.f32 %v125, %v758
  %v760 = vpop.f32.mrb[0].mxu0
  %v761 = vadd.f32 %v129, %v760
  %762 = vmatprep.mubr.bf16.mxu0 0
  %763 = vmatmul.mubr.bf16.gmra.mrb[0].mxu0 %v347
  %v764 = vpop.f32.mrb[0].mxu0
  %v765 = vadd.f32 %v125, %v764
  %v766 = vpop.f32.mrb[0].mxu0
  %v767 = vadd.f32 %v129, %v766
  %v768 = vpop.f32.mrb[0].mxu0
  %v769 = vadd.f32 %v125, %v768
  %v770 = vpop.f32.mrb[0].mxu0
  %v771 = vadd.f32 %v129, %v770
  %772 = vmatprep.mubr.bf16.mxu0 0
  %773 = vmatmul.mubr.bf16.gmra.mrb[0].mxu0 %v350
  %v774 = vpop.f32.mrb[0].mxu0
  %v775 = vadd.f32 %v125, %v774
  %v776 = vpop.f32.mrb[0].mxu0
  %v777 = vadd.f32 %v129, %v776
  %v778 = vpop.f32.mrb[0].mxu0
  %v779 = vadd.f32 %v125, %v778
  %v780 = vpop.f32.mrb[0].mxu0
  %v781 = vadd.f32 %v129, %v780
  %782 = vmatprep.mubr.bf16.mxu0 0
  %783 = vmatmul.mubr.bf16.gmra.mrb[0].mxu0 %v353
  %v784 = vpop.f32.mrb[0].mxu0
  %v785 = vadd.f32 %v125, %v784
  %v786 = vpop.f32.mrb[0].mxu0
  %v787 = vadd.f32 %v129, %v786
  %v788 = vpop.f32.mrb[0].mxu0
  %v789 = vadd.f32 %v125, %v788
  %v790 = vpop.f32.mrb[0].mxu0
  %v791 = vadd.f32 %v129, %v790
  %792 = vdwg.mxu0
  %793 = vmatprep.subr.bf16.mxu0 %v291
  %794 = vmatpush1.bf16.msra.mxu0 %v290
  %795 = vmatprep.subr.bf16.mxu0 %v307
  %796 = vmatpush1.bf16.msra.mxu0 %v306
  %797 = vmatprep.subr.bf16.mxu0 0
  %798 = vmatpush1.bf16.msra.mxu0 0
  %799 = vmatprep.subr.bf16.mxu0 0
  %800 = vmatpush1.bf16.msra.mxu0 0
  %801 = vmatprep.subr.bf16.mxu0 0
  %802 = vmatpush1.bf16.msra.mxu0 0
  %803 = vmatprep.subr.bf16.mxu0 0
  %804 = vmatpush1.bf16.msra.mxu0 0
  %805 = vmatprep.subr.bf16.mxu0 0
  %806 = vmatpush1.bf16.msra.mxu0 0
  %807 = vmatprep.subr.bf16.mxu0 0
  %808 = vmatpush1.bf16.msra.mxu0 0
  %809 = vmatprep.subr.bf16.mxu0 0
  %810 = vmatpush1.bf16.msra.mxu0 0
  %811 = vmatprep.subr.bf16.mxu0 0
  %812 = vmatpush1.bf16.msra.mxu0 0
  %813 = vmatprep.subr.bf16.mxu0 0
  %814 = vmatpush1.bf16.msra.mxu0 0
  %815 = vmatprep.subr.bf16.mxu0 0
  %816 = vmatpush1.bf16.msra.mxu0 0
  %817 = vmatprep.subr.bf16.mxu0 0
  %818 = vmatpush1.bf16.msra.mxu0 0
  %819 = vmatprep.subr.bf16.mxu0 0
  %820 = vmatpush1.bf16.msra.mxu0 0
  %821 = vmatprep.subr.bf16.mxu0 0
  %822 = vmatpush1.bf16.msra.mxu0 0
  %823 = vmatprep.subr.bf16.mxu0 0
  %824 = vmatpush1.bf16.msra.mxu0 0
  %825 = vmatprep.mubr.bf16.mxu0 0
  %826 = vmatmul.mubr.bf16.gmra.mrb[0].mxu0 %v344
  %v827 = vpop.f32.mrb[0].mxu0
  %v828 = vadd.f32 %v133, %v827
  %v829 = vpop.f32.mrb[0].mxu0
  %v830 = vadd.f32 %v137, %v829
  %v831 = vpop.f32.mrb[0].mxu0
  %v832 = vadd.f32 %v133, %v831
  %v833 = vpop.f32.mrb[0].mxu0
  %v834 = vadd.f32 %v137, %v833
  %835 = vmatprep.mubr.bf16.mxu0 0
  %836 = vmatmul.mubr.bf16.gmra.mrb[0].mxu0 %v347
  %v837 = vpop.f32.mrb[0].mxu0
  %v838 = vadd.f32 %v133, %v837
  %v839 = vpop.f32.mrb[0].mxu0
  %v840 = vadd.f32 %v137, %v839
  %v841 = vpop.f32.mrb[0].mxu0
  %v842 = vadd.f32 %v133, %v841
  %v843 = vpop.f32.mrb[0].mxu0
  %v844 = vadd.f32 %v137, %v843
  %845 = vmatprep.mubr.bf16.mxu0 0
  %846 = vmatmul.mubr.bf16.gmra.mrb[0].mxu0 %v350
  %v847 = vpop.f32.mrb[0].mxu0
  %v848 = vadd.f32 %v133, %v847
  %v849 = vpop.f32.mrb[0].mxu0
  %v850 = vadd.f32 %v137, %v849
  %v851 = vpop.f32.mrb[0].mxu0
  %v852 = vadd.f32 %v133, %v851
  %v853 = vpop.f32.mrb[0].mxu0
  %v854 = vadd.f32 %v137, %v853
  %855 = vmatprep.mubr.bf16.mxu0 0
  %856 = vmatmul.mubr.bf16.gmra.mrb[0].mxu0 %v353
  %v857 = vpop.f32.mrb[0].mxu0
  %v858 = vadd.f32 %v133, %v857
  %v859 = vpop.f32.mrb[0].mxu0
  %v860 = vadd.f32 %v137, %v859
  %v861 = vpop.f32.mrb[0].mxu0
  %v862 = vadd.f32 %v133, %v861
  %v863 = vpop.f32.mrb[0].mxu0
  %v864 = vadd.f32 %v137, %v863
  %865 = vdwg.mxu0
  %866 = vmatprep.subr.bf16.mxu0 %v293
  %867 = vmatpush1.bf16.msra.mxu0 %v292
  %868 = vmatprep.subr.bf16.mxu0 %v309
  %869 = vmatpush1.bf16.msra.mxu0 %v308
  %870 = vmatprep.subr.bf16.mxu0 0
  %871 = vmatpush1.bf16.msra.mxu0 0
  %872 = vmatprep.subr.bf16.mxu0 0
  %873 = vmatpush1.bf16.msra.mxu0 0
  %874 = vmatprep.subr.bf16.mxu0 0
  %875 = vmatpush1.bf16.msra.mxu0 0
  %876 = vmatprep.subr.bf16.mxu0 0
  %877 = vmatpush1.bf16.msra.mxu0 0
  %878 = vmatprep.subr.bf16.mxu0 0
  %879 = vmatpush1.bf16.msra.mxu0 0
  %880 = vmatprep.subr.bf16.mxu0 0
  %881 = vmatpush1.bf16.msra.mxu0 0
  %882 = vmatprep.subr.bf16.mxu0 0
  %883 = vmatpush1.bf16.msra.mxu0 0
  %884 = vmatprep.subr.bf16.mxu0 0
  %885 = vmatpush1.bf16.msra.mxu0 0
  %886 = vmatprep.subr.bf16.mxu0 0
  %887 = vmatpush1.bf16.msra.mxu0 0
  %888 = vmatprep.subr.bf16.mxu0 0
  %889 = vmatpush1.bf16.msra.mxu0 0
  %890 = vmatprep.subr.bf16.mxu0 0
  %891 = vmatpush1.bf16.msra.mxu0 0
  %892 = vmatprep.subr.bf16.mxu0 0
  %893 = vmatpush1.bf16.msra.mxu0 0
  %894 = vmatprep.subr.bf16.mxu0 0
  %895 = vmatpush1.bf16.msra.mxu0 0
  %896 = vmatprep.subr.bf16.mxu0 0
  %897 = vmatpush1.bf16.msra.mxu0 0
  %898 = vmatprep.mubr.bf16.mxu0 0
  %899 = vmatmul.mubr.bf16.gmra.mrb[0].mxu0 %v344
  %v900 = vpop.f32.mrb[0].mxu0
  %v901 = vadd.f32 %v141, %v900
  %v902 = vpop.f32.mrb[0].mxu0
  %v903 = vadd.f32 %v145, %v902
  %v904 = vpop.f32.mrb[0].mxu0
  %v905 = vadd.f32 %v141, %v904
  %v906 = vpop.f32.mrb[0].mxu0
  %v907 = vadd.f32 %v145, %v906
  %908 = vmatprep.mubr.bf16.mxu0 0
  %909 = vmatmul.mubr.bf16.gmra.mrb[0].mxu0 %v347
  %v910 = vpop.f32.mrb[0].mxu0
  %v911 = vadd.f32 %v141, %v910
  %v912 = vpop.f32.mrb[0].mxu0
  %v913 = vadd.f32 %v145, %v912
  %v914 = vpop.f32.mrb[0].mxu0
  %v915 = vadd.f32 %v141, %v914
  %v916 = vpop.f32.mrb[0].mxu0
  %v917 = vadd.f32 %v145, %v916
  %918 = vmatprep.mubr.bf16.mxu0 0
  %919 = vmatmul.mubr.bf16.gmra.mrb[0].mxu0 %v350
  %v920 = vpop.f32.mrb[0].mxu0
  %v921 = vadd.f32 %v141, %v920
  %v922 = vpop.f32.mrb[0].mxu0
  %v923 = vadd.f32 %v145, %v922
  %v924 = vpop.f32.mrb[0].mxu0
  %v925 = vadd.f32 %v141, %v924
  %v926 = vpop.f32.mrb[0].mxu0
  %v927 = vadd.f32 %v145, %v926
  %928 = vmatprep.mubr.bf16.mxu0 0
  %929 = vmatmul.mubr.bf16.gmra.mrb[0].mxu0 %v353
  %v930 = vpop.f32.mrb[0].mxu0
  %v931 = vadd.f32 %v141, %v930
  %v932 = vpop.f32.mrb[0].mxu0
  %v933 = vadd.f32 %v145, %v932
  %v934 = vpop.f32.mrb[0].mxu0
  %v935 = vadd.f32 %v141, %v934
  %v936 = vpop.f32.mrb[0].mxu0
  %v937 = vadd.f32 %v145, %v936
  %938 = vdwg.mxu0
  %939 = vst [vmem:[#allocation2] sm:$0xff] %v390
  %940 = vst [vmem:[#allocation2 + $0x8] sm:$0xff] %v392
  %941 = vst [vmem:[#allocation2 + $0x10] sm:$0xff] %v463
  %942 = vst [vmem:[#allocation2 + $0x18] sm:$0xff] %v465
  %943 = vst [vmem:[#allocation2 + $0x20] sm:$0xff] %v536
  %944 = vst [vmem:[#allocation2 + $0x28] sm:$0xff] %v538
  %945 = vst [vmem:[#allocation2 + $0x30] sm:$0xff] %v609
  %946 = vst [vmem:[#allocation2 + $0x38] sm:$0xff] %v611
  %947 = vst [vmem:[#allocation2 + $0x40] sm:$0xff] %v682
  %948 = vst [vmem:[#allocation2 + $0x48] sm:$0xff] %v684
  %949 = vst [vmem:[#allocation2 + $0x50] sm:$0xff] %v755
  %950 = vst [vmem:[#allocation2 + $0x58] sm:$0xff] %v757
  %951 = vst [vmem:[#allocation2 + $0x60] sm:$0xff] %v828
  %952 = vst [vmem:[#allocation2 + $0x68] sm:$0xff] %v830
  %953 = vst [vmem:[#allocation2 + $0x70] sm:$0xff] %v901
  %954 = vst [vmem:[#allocation2 + $0x78] sm:$0xff] %v903
  %955 = vst [vmem:[#allocation2 + $0x80] sm:$0xff] %v394
  %956 = vst [vmem:[#allocation2 + $0x88] sm:$0xff] %v396
  %957 = vst [vmem:[#allocation2 + $0x90] sm:$0xff] %v467
  %958 = vst [vmem:[#allocation2 + $0x98] sm:$0xff] %v469
  %959 = vst [vmem:[#allocation2 + $0xa0] sm:$0xff] %v540
  %960 = vst [vmem:[#allocation2 + $0xa8] sm:$0xff] %v542
  %961 = vst [vmem:[#allocation2 + $0xb0] sm:$0xff] %v613
  %962 = vst [vmem:[#allocation2 + $0xb8] sm:$0xff] %v615
  %963 = vst [vmem:[#allocation2 + $0xc0] sm:$0xff] %v686
  %964 = vst [vmem:[#allocation2 + $0xc8] sm:$0xff] %v688
  %965 = vst [vmem:[#allocation2 + $0xd0] sm:$0xff] %v759
  %966 = vst [vmem:[#allocation2 + $0xd8] sm:$0xff] %v761
  %967 = vst [vmem:[#allocation2 + $0xe0] sm:$0xff] %v832
  %968 = vst [vmem:[#allocation2 + $0xe8] sm:$0xff] %v834
  %969 = vst [vmem:[#allocation2 + $0xf0] sm:$0xff] %v905
  %970 = vst [vmem:[#allocation2 + $0xf8] sm:$0xff] %v907
  %971 = vst [vmem:[#allocation2 + $0x100] sm:$0xff] %v400
  %972 = vst [vmem:[#allocation2 + $0x108] sm:$0xff] %v402
  %973 = vst [vmem:[#allocation2 + $0x110] sm:$0xff] %v473
  %974 = vst [vmem:[#allocation2 + $0x118] sm:$0xff] %v475
  %975 = vst [vmem:[#allocation2 + $0x120] sm:$0xff] %v546
  %976 = vst [vmem:[#allocation2 + $0x128] sm:$0xff] %v548
  %977 = vst [vmem:[#allocation2 + $0x130] sm:$0xff] %v619
  %978 = vst [vmem:[#allocation2 + $0x138] sm:$0xff] %v621
  %979 = vst [vmem:[#allocation2 + $0x140] sm:$0xff] %v692
  %980 = vst [vmem:[#allocation2 + $0x148] sm:$0xff] %v694
  %981 = vst [vmem:[#allocation2 + $0x150] sm:$0xff] %v765
  %982 = vst [vmem:[#allocation2 + $0x158] sm:$0xff] %v767
  %983 = vst [vmem:[#allocation2 + $0x160] sm:$0xff] %v838
  %984 = vst [vmem:[#allocation2 + $0x168] sm:$0xff] %v840
  %985 = vst [vmem:[#allocation2 + $0x170] sm:$0xff] %v911
  %986 = vst [vmem:[#allocation2 + $0x178] sm:$0xff] %v913
  %987 = vst [vmem:[#allocation2 + $0x180] sm:$0xff] %v404
  %988 = vst [vmem:[#allocation2 + $0x188] sm:$0xff] %v406
  %989 = vst [vmem:[#allocation2 + $0x190] sm:$0xff] %v477
  %990 = vst [vmem:[#allocation2 + $0x198] sm:$0xff] %v479
  %991 = vst [vmem:[#allocation2 + $0x1a0] sm:$0xff] %v550
  %992 = vst [vmem:[#allocation2 + $0x1a8] sm:$0xff] %v552
  %993 = vst [vmem:[#allocation2 + $0x1b0] sm:$0xff] %v623
  %994 = vst [vmem:[#allocation2 + $0x1b8] sm:$0xff] %v625
  %995 = vst [vmem:[#allocation2 + $0x1c0] sm:$0xff] %v696
  %996 = vst [vmem:[#allocation2 + $0x1c8] sm:$0xff] %v698
  %997 = vst [vmem:[#allocation2 + $0x1d0] sm:$0xff] %v769
  %998 = vst [vmem:[#allocation2 + $0x1d8] sm:$0xff] %v771
  %999 = vst [vmem:[#allocation2 + $0x1e0] sm:$0xff] %v842
  %1000 = vst [vmem:[#allocation2 + $0x1e8] sm:$0xff] %v844
  %1001 = vst [vmem:[#allocation2 + $0x1f0] sm:$0xff] %v915
  %1002 = vst [vmem:[#allocation2 + $0x1f8] sm:$0xff] %v917
  %1003 = vst [vmem:[#allocation2 + $0x200] sm:$0xff] %v410
  %1004 = vst [vmem:[#allocation2 + $0x208] sm:$0xff] %v412
  %1005 = vst [vmem:[#allocation2 + $0x210] sm:$0xff] %v483
  %1006 = vst [vmem:[#allocation2 + $0x218] sm:$0xff] %v485
  %1007 = vst [vmem:[#allocation2 + $0x220] sm:$0xff] %v556
  %1008 = vst [vmem:[#allocation2 + $0x228] sm:$0xff] %v558
  %1009 = vst [vmem:[#allocation2 + $0x230] sm:$0xff] %v629
  %1010 = vst [vmem:[#allocation2 + $0x238] sm:$0xff] %v631
  %1011 = vst [vmem:[#allocation2 + $0x240] sm:$0xff] %v702
  %1012 = vst [vmem:[#allocation2 + $0x248] sm:$0xff] %v704
  %1013 = vst [vmem:[#allocation2 + $0x250] sm:$0xff] %v775
  %1014 = vst [vmem:[#allocation2 + $0x258] sm:$0xff] %v777
  %1015 = vst [vmem:[#allocation2 + $0x260] sm:$0xff] %v848
  %1016 = vst [vmem:[#allocation2 + $0x268] sm:$0xff] %v850
  %1017 = vst [vmem:[#allocation2 + $0x270] sm:$0xff] %v921
  %1018 = vst [vmem:[#allocation2 + $0x278] sm:$0xff] %v923
  %1019 = vst [vmem:[#allocation2 + $0x280] sm:$0xff] %v414
  %1020 = vst [vmem:[#allocation2 + $0x288] sm:$0xff] %v416
  %1021 = vst [vmem:[#allocation2 + $0x290] sm:$0xff] %v487
  %1022 = vst [vmem:[#allocation2 + $0x298] sm:$0xff] %v489
  %1023 = vst [vmem:[#allocation2 + $0x2a0] sm:$0xff] %v560
  %1024 = vst [vmem:[#allocation2 + $0x2a8] sm:$0xff] %v562
  %1025 = vst [vmem:[#allocation2 + $0x2b0] sm:$0xff] %v633
  %1026 = vst [vmem:[#allocation2 + $0x2b8] sm:$0xff] %v635
  %1027 = vst [vmem:[#allocation2 + $0x2c0] sm:$0xff] %v706
  %1028 = vst [vmem:[#allocation2 + $0x2c8] sm:$0xff] %v708
  %1029 = vst [vmem:[#allocation2 + $0x2d0] sm:$0xff] %v779
  %1030 = vst [vmem:[#allocation2 + $0x2d8] sm:$0xff] %v781
  %1031 = vst [vmem:[#allocation2 + $0x2e0] sm:$0xff] %v852
  %1032 = vst [vmem:[#allocation2 + $0x2e8] sm:$0xff] %v854
  %1033 = vst [vmem:[#allocation2 + $0x2f0] sm:$0xff] %v925
  %1034 = vst [vmem:[#allocation2 + $0x2f8] sm:$0xff] %v927
  %1035 = vst [vmem:[#allocation2 + $0x300] sm:$0xff] %v420
  %1036 = vst [vmem:[#allocation2 + $0x308] sm:$0xff] %v422
  %1037 = vst [vmem:[#allocation2 + $0x310] sm:$0xff] %v493
  %1038 = vst [vmem:[#allocation2 + $0x318] sm:$0xff] %v495
  %1039 = vst [vmem:[#allocation2 + $0x320] sm:$0xff] %v566
  %1040 = vst [vmem:[#allocation2 + $0x328] sm:$0xff] %v568
  %1041 = vst [vmem:[#allocation2 + $0x330] sm:$0xff] %v639
  %1042 = vst [vmem:[#allocation2 + $0x338] sm:$0xff] %v641
  %1043 = vst [vmem:[#allocation2 + $0x340] sm:$0xff] %v712
  %1044 = vst [vmem:[#allocation2 + $0x348] sm:$0xff] %v714
  %1045 = vst [vmem:[#allocation2 + $0x350] sm:$0xff] %v785
  %1046 = vst [vmem:[#allocation2 + $0x358] sm:$0xff] %v787
  %1047 = vst [vmem:[#allocation2 + $0x360] sm:$0xff] %v858
  %1048 = vst [vmem:[#allocation2 + $0x368] sm:$0xff] %v860
  %1049 = vst [vmem:[#allocation2 + $0x370] sm:$0xff] %v931
  %1050 = vst [vmem:[#allocation2 + $0x378] sm:$0xff] %v933
  %1051 = vst [vmem:[#allocation2 + $0x380] sm:$0xff] %v424
  %1052 = vst [vmem:[#allocation2 + $0x388] sm:$0xff] %v426
  %1053 = vst [vmem:[#allocation2 + $0x390] sm:$0xff] %v497
  %1054 = vst [vmem:[#allocation2 + $0x398] sm:$0xff] %v499
  %1055 = vst [vmem:[#allocation2 + $0x3a0] sm:$0xff] %v570
  %1056 = vst [vmem:[#allocation2 + $0x3a8] sm:$0xff] %v572
  %1057 = vst [vmem:[#allocation2 + $0x3b0] sm:$0xff] %v643
  %1058 = vst [vmem:[#allocation2 + $0x3b8] sm:$0xff] %v645
  %1059 = vst [vmem:[#allocation2 + $0x3c0] sm:$0xff] %v716
  %1060 = vst [vmem:[#allocation2 + $0x3c8] sm:$0xff] %v718
  %1061 = vst [vmem:[#allocation2 + $0x3d0] sm:$0xff] %v789
  %1062 = vst [vmem:[#allocation2 + $0x3d8] sm:$0xff] %v791
  %1063 = vst [vmem:[#allocation2 + $0x3e0] sm:$0xff] %v862
  %1064 = vst [vmem:[#allocation2 + $0x3e8] sm:$0xff] %v864
  %1065 = vst [vmem:[#allocation2 + $0x3f0] sm:$0xff] %v935
  %1066 = vst [vmem:[#allocation2 + $0x3f8] sm:$0xff] %v937
  %v1067 = vld [vmem:[#allocation3] sm:$0xff]
  %v1068 = vld [vmem:[#allocation3 + $0x8] sm:$0xff]
  %v1069 = vld [vmem:[#allocation3 + $0x10] sm:$0xff]
  %v1070 = vld [vmem:[#allocation3 + $0x18] sm:$0xff]
  %v1071 = vld [vmem:[#allocation4] sm:$0xff]
  %v1072 = vld [vmem:[#allocation4 + $0x8] sm:$0xff]
  %v1073 = vld [vmem:[#allocation4 + $0x10] sm:$0xff]
  %v1074 = vld [vmem:[#allocation4 + $0x18] sm:$0xff]
  %v1075 = vpack.c.bf16 %v1067, %v1067
  %v1076 = vpack.c.bf16 %v1068, %v1068
  %v1077 = vpack.c.bf16 %v1069, %v1069
  %v1078 = vpack.c.bf16 %v1070, %v1070
  %s1079 = smul.u32 0, 16
  %s1080 = smul.addr %s1079, 8
  %s1081 = scalar_lea.vmem [#allocation2], %s1080
  %v1082 = vld [vmem:[%s1081] sm:$0xff]
  %v1083 = vld [vmem:[%s1081 + $0x8] sm:$0xff]
  %v1084 = vld [vmem:[%s1081 + $0x10] sm:$0xff]
  %v1085 = vld [vmem:[%s1081 + $0x18] sm:$0xff]
  %v1086 = vld [vmem:[%s1081 + $0x20] sm:$0xff]
  %v1087 = vld [vmem:[%s1081 + $0x28] sm:$0xff]
  %v1088 = vld [vmem:[%s1081 + $0x30] sm:$0xff]
  %v1089 = vld [vmem:[%s1081 + $0x38] sm:$0xff]
  %v1090 = vld [vmem:[%s1081 + $0x40] sm:$0xff]
  %v1091 = vld [vmem:[%s1081 + $0x48] sm:$0xff]
  %v1092 = vld [vmem:[%s1081 + $0x50] sm:$0xff]
  %v1093 = vld [vmem:[%s1081 + $0x58] sm:$0xff]
  %v1094 = vld [vmem:[%s1081 + $0x60] sm:$0xff]
  %v1095 = vld [vmem:[%s1081 + $0x68] sm:$0xff]
  %v1096 = vld [vmem:[%s1081 + $0x70] sm:$0xff]
  %v1097 = vld [vmem:[%s1081 + $0x78] sm:$0xff]
  %v1098 = vld [vmem:[%s2] sm:$0xff]
  %v1099 = vld [vmem:[%s2 + $0x8] sm:$0xff]
  %v1100 = vld [vmem:[%s2 + $0x40] sm:$0xff]
  %v1101 = vld [vmem:[%s2 + $0x48] sm:$0xff]
  %v1102 = vld [vmem:[%s2 + $0x80] sm:$0xff]
  %v1103 = vld [vmem:[%s2 + $0x88] sm:$0xff]
  %v1104 = vld [vmem:[%s2 + $0xc0] sm:$0xff]
  %v1105 = vld [vmem:[%s2 + $0xc8] sm:$0xff]
  %v1106 = vld [vmem:[%s2 + $0x100] sm:$0xff]
  %v1107 = vld [vmem:[%s2 + $0x108] sm:$0xff]
  %v1108 = vld [vmem:[%s2 + $0x140] sm:$0xff]
  %v1109 = vld [vmem:[%s2 + $0x148] sm:$0xff]
  %v1110 = vld [vmem:[%s2 + $0x180] sm:$0xff]
  %v1111 = vld [vmem:[%s2 + $0x188] sm:$0xff]
  %v1112 = vld [vmem:[%s2 + $0x1c0] sm:$0xff]
  %v1113 = vld [vmem:[%s2 + $0x1c8] sm:$0xff]
  %v1114 = vld [vmem:[%s2 + $0x200] sm:$0xff]
  %v1115 = vld [vmem:[%s2 + $0x208] sm:$0xff]
  %v1116 = vld [vmem:[%s2 + $0x240] sm:$0xff]
  %v1117 = vld [vmem:[%s2 + $0x248] sm:$0xff]
  %v1118 = vld [vmem:[%s2 + $0x280] sm:$0xff]
  %v1119 = vld [vmem:[%s2 + $0x288] sm:$0xff]
  %v1120 = vld [vmem:[%s2 + $0x2c0] sm:$0xff]
  %v1121 = vld [vmem:[%s2 + $0x2c8] sm:$0xff]
  %v1122 = vld [vmem:[%s2 + $0x300] sm:$0xff]
  %v1123 = vld [vmem:[%s2 + $0x308] sm:$0xff]
  %v1124 = vld [vmem:[%s2 + $0x340] sm:$0xff]
  %v1125 = vld [vmem:[%s2 + $0x348] sm:$0xff]
  %v1126 = vld [vmem:[%s2 + $0x380] sm:$0xff]
  %v1127 = vld [vmem:[%s2 + $0x388] sm:$0xff]
  %v1128 = vld [vmem:[%s2 + $0x3c0] sm:$0xff]
  %v1129 = vld [vmem:[%s2 + $0x3c8] sm:$0xff]
  %v1130 = vld [vmem:[%s2 + $0x400] sm:$0xff]
  %v1131 = vld [vmem:[%s2 + $0x408] sm:$0xff]
  %v1132 = vld [vmem:[%s2 + $0x440] sm:$0xff]
  %v1133 = vld [vmem:[%s2 + $0x448] sm:$0xff]
  %v1134 = vld [vmem:[%s2 + $0x480] sm:$0xff]
  %v1135 = vld [vmem:[%s2 + $0x488] sm:$0xff]
  %v1136 = vld [vmem:[%s2 + $0x4c0] sm:$0xff]
  %v1137 = vld [vmem:[%s2 + $0x4c8] sm:$0xff]
  %v1138 = vld [vmem:[%s2 + $0x500] sm:$0xff]
  %v1139 = vld [vmem:[%s2 + $0x508] sm:$0xff]
  %v1140 = vld [vmem:[%s2 + $0x540] sm:$0xff]
  %v1141 = vld [vmem:[%s2 + $0x548] sm:$0xff]
  %v1142 = vld [vmem:[%s2 + $0x580] sm:$0xff]
  %v1143 = vld [vmem:[%s2 + $0x588] sm:$0xff]
  %v1144 = vld [vmem:[%s2 + $0x5c0] sm:$0xff]
  %v1145 = vld [vmem:[%s2 + $0x5c8] sm:$0xff]
  %v1146 = vld [vmem:[%s2 + $0x600] sm:$0xff]
  %v1147 = vld [vmem:[%s2 + $0x608] sm:$0xff]
  %v1148 = vld [vmem:[%s2 + $0x640] sm:$0xff]
  %v1149 = vld [vmem:[%s2 + $0x648] sm:$0xff]
  %v1150 = vld [vmem:[%s2 + $0x680] sm:$0xff]
  %v1151 = vld [vmem:[%s2 + $0x688] sm:$0xff]
  %v1152 = vld [vmem:[%s2 + $0x6c0] sm:$0xff]
  %v1153 = vld [vmem:[%s2 + $0x6c8] sm:$0xff]
  %v1154 = vld [vmem:[%s2 + $0x700] sm:$0xff]
  %v1155 = vld [vmem:[%s2 + $0x708] sm:$0xff]
  %v1156 = vld [vmem:[%s2 + $0x740] sm:$0xff]
  %v1157 = vld [vmem:[%s2 + $0x748] sm:$0xff]
  %v1158 = vld [vmem:[%s2 + $0x780] sm:$0xff]
  %v1159 = vld [vmem:[%s2 + $0x788] sm:$0xff]
  %v1160 = vld [vmem:[%s2 + $0x7c0] sm:$0xff]
  %v1161 = vld [vmem:[%s2 + $0x7c8] sm:$0xff]
  %v1162 = vld [vmem:[%s2 + $0x800] sm:$0xff]
  %v1163 = vld [vmem:[%s2 + $0x808] sm:$0xff]
  %v1164 = vld [vmem:[%s2 + $0x840] sm:$0xff]
  %v1165 = vld [vmem:[%s2 + $0x848] sm:$0xff]
  %v1166 = vld [vmem:[%s2 + $0x880] sm:$0xff]
  %v1167 = vld [vmem:[%s2 + $0x888] sm:$0xff]
  %v1168 = vld [vmem:[%s2 + $0x8c0] sm:$0xff]
  %v1169 = vld [vmem:[%s2 + $0x8c8] sm:$0xff]
  %v1170 = vld [vmem:[%s2 + $0x900] sm:$0xff]
  %v1171 = vld [vmem:[%s2 + $0x908] sm:$0xff]
  %v1172 = vld [vmem:[%s2 + $0x940] sm:$0xff]
  %v1173 = vld [vmem:[%s2 + $0x948] sm:$0xff]
  %v1174 = vld [vmem:[%s2 + $0x980] sm:$0xff]
  %v1175 = vld [vmem:[%s2 + $0x988] sm:$0xff]
  %v1176 = vld [vmem:[%s2 + $0x9c0] sm:$0xff]
  %v1177 = vld [vmem:[%s2 + $0x9c8] sm:$0xff]
  %v1178 = vld [vmem:[%s2 + $0xa00] sm:$0xff]
  %v1179 = vld [vmem:[%s2 + $0xa08] sm:$0xff]
  %v1180 = vld [vmem:[%s2 + $0xa40] sm:$0xff]
  %v1181 = vld [vmem:[%s2 + $0xa48] sm:$0xff]
  %v1182 = vld [vmem:[%s2 + $0xa80] sm:$0xff]
  %v1183 = vld [vmem:[%s2 + $0xa88] sm:$0xff]
  %v1184 = vld [vmem:[%s2 + $0xac0] sm:$0xff]
  %v1185 = vld [vmem:[%s2 + $0xac8] sm:$0xff]
  %v1186 = vld [vmem:[%s2 + $0xb00] sm:$0xff]
  %v1187 = vld [vmem:[%s2 + $0xb08] sm:$0xff]
  %v1188 = vld [vmem:[%s2 + $0xb40] sm:$0xff]
  %v1189 = vld [vmem:[%s2 + $0xb48] sm:$0xff]
  %v1190 = vld [vmem:[%s2 + $0xb80] sm:$0xff]
  %v1191 = vld [vmem:[%s2 + $0xb88] sm:$0xff]
  %v1192 = vld [vmem:[%s2 + $0xbc0] sm:$0xff]
  %v1193 = vld [vmem:[%s2 + $0xbc8] sm:$0xff]
  %v1194 = vld [vmem:[%s2 + $0xc00] sm:$0xff]
  %v1195 = vld [vmem:[%s2 + $0xc08] sm:$0xff]
  %v1196 = vld [vmem:[%s2 + $0xc40] sm:$0xff]
  %v1197 = vld [vmem:[%s2 + $0xc48] sm:$0xff]
  %v1198 = vld [vmem:[%s2 + $0xc80] sm:$0xff]
  %v1199 = vld [vmem:[%s2 + $0xc88] sm:$0xff]
  %v1200 = vld [vmem:[%s2 + $0xcc0] sm:$0xff]
  %v1201 = vld [vmem:[%s2 + $0xcc8] sm:$0xff]
  %v1202 = vld [vmem:[%s2 + $0xd00] sm:$0xff]
  %v1203 = vld [vmem:[%s2 + $0xd08] sm:$0xff]
  %v1204 = vld [vmem:[%s2 + $0xd40] sm:$0xff]
  %v1205 = vld [vmem:[%s2 + $0xd48] sm:$0xff]
  %v1206 = vld [vmem:[%s2 + $0xd80] sm:$0xff]
  %v1207 = vld [vmem:[%s2 + $0xd88] sm:$0xff]
  %v1208 = vld [vmem:[%s2 + $0xdc0] sm:$0xff]
  %v1209 = vld [vmem:[%s2 + $0xdc8] sm:$0xff]
  %v1210 = vld [vmem:[%s2 + $0xe00] sm:$0xff]
  %v1211 = vld [vmem:[%s2 + $0xe08] sm:$0xff]
  %v1212 = vld [vmem:[%s2 + $0xe40] sm:$0xff]
  %v1213 = vld [vmem:[%s2 + $0xe48] sm:$0xff]
  %v1214 = vld [vmem:[%s2 + $0xe80] sm:$0xff]
  %v1215 = vld [vmem:[%s2 + $0xe88] sm:$0xff]
  %v1216 = vld [vmem:[%s2 + $0xec0] sm:$0xff]
  %v1217 = vld [vmem:[%s2 + $0xec8] sm:$0xff]
  %v1218 = vld [vmem:[%s2 + $0xf00] sm:$0xff]
  %v1219 = vld [vmem:[%s2 + $0xf08] sm:$0xff]
  %v1220 = vld [vmem:[%s2 + $0xf40] sm:$0xff]
  %v1221 = vld [vmem:[%s2 + $0xf48] sm:$0xff]
  %v1222 = vld [vmem:[%s2 + $0xf80] sm:$0xff]
  %v1223 = vld [vmem:[%s2 + $0xf88] sm:$0xff]
  %v1224 = vld [vmem:[%s2 + $0xfc0] sm:$0xff]
  %v1225 = vld [vmem:[%s2 + $0xfc8] sm:$0xff]
  %v1354 = vunpack.c.l.b16 %v1098
  %v1355 = vunpack.c.h.b16 %v1098
  %v1356 = vunpack.c.l.b16 %v1099
  %v1357 = vunpack.c.h.b16 %v1099
  %v1358 = vunpack.c.l.b16 %v1100
  %v1359 = vunpack.c.h.b16 %v1100
  %v1360 = vunpack.c.l.b16 %v1101
  %v1361 = vunpack.c.h.b16 %v1101
  %v1362 = vunpack.c.l.b16 %v1102
  %v1363 = vunpack.c.h.b16 %v1102
  %v1364 = vunpack.c.l.b16 %v1103
  %v1365 = vunpack.c.h.b16 %v1103
  %v1366 = vunpack.c.l.b16 %v1104
  %v1367 = vunpack.c.h.b16 %v1104
  %v1368 = vunpack.c.l.b16 %v1105
  %v1369 = vunpack.c.h.b16 %v1105
  %v1370 = vunpack.c.l.b16 %v1106
  %v1371 = vunpack.c.h.b16 %v1106
  %v1372 = vunpack.c.l.b16 %v1107
  %v1373 = vunpack.c.h.b16 %v1107
  %v1374 = vunpack.c.l.b16 %v1108
  %v1375 = vunpack.c.h.b16 %v1108
  %v1376 = vunpack.c.l.b16 %v1109
  %v1377 = vunpack.c.h.b16 %v1109
  %v1378 = vunpack.c.l.b16 %v1110
  %v1379 = vunpack.c.h.b16 %v1110
  %v1380 = vunpack.c.l.b16 %v1111
  %v1381 = vunpack.c.h.b16 %v1111
  %v1382 = vunpack.c.l.b16 %v1112
  %v1383 = vunpack.c.h.b16 %v1112
  %v1384 = vunpack.c.l.b16 %v1113
  %v1385 = vunpack.c.h.b16 %v1113
  %v1386 = vunpack.c.l.b16 %v1114
  %v1387 = vunpack.c.h.b16 %v1114
  %v1388 = vunpack.c.l.b16 %v1115
  %v1389 = vunpack.c.h.b16 %v1115
  %v1390 = vunpack.c.l.b16 %v1116
  %v1391 = vunpack.c.h.b16 %v1116
  %v1392 = vunpack.c.l.b16 %v1117
  %v1393 = vunpack.c.h.b16 %v1117
  %v1394 = vunpack.c.l.b16 %v1118
  %v1395 = vunpack.c.h.b16 %v1118
  %v1396 = vunpack.c.l.b16 %v1119
  %v1397 = vunpack.c.h.b16 %v1119
  %v1398 = vunpack.c.l.b16 %v1120
  %v1399 = vunpack.c.h.b16 %v1120
  %v1400 = vunpack.c.l.b16 %v1121
  %v1401 = vunpack.c.h.b16 %v1121
  %v1402 = vunpack.c.l.b16 %v1122
  %v1403 = vunpack.c.h.b16 %v1122
  %v1404 = vunpack.c.l.b16 %v1123
  %v1405 = vunpack.c.h.b16 %v1123
  %v1406 = vunpack.c.l.b16 %v1124
  %v1407 = vunpack.c.h.b16 %v1124
  %v1408 = vunpack.c.l.b16 %v1125
  %v1409 = vunpack.c.h.b16 %v1125
  %v1410 = vunpack.c.l.b16 %v1126
  %v1411 = vunpack.c.h.b16 %v1126
  %v1412 = vunpack.c.l.b16 %v1127
  %v1413 = vunpack.c.h.b16 %v1127
  %v1414 = vunpack.c.l.b16 %v1128
  %v1415 = vunpack.c.h.b16 %v1128
  %v1416 = vunpack.c.l.b16 %v1129
  %v1417 = vunpack.c.h.b16 %v1129
  %v1418 = vunpack.c.l.b16 %v1130
  %v1419 = vunpack.c.h.b16 %v1130
  %v1420 = vunpack.c.l.b16 %v1131
  %v1421 = vunpack.c.h.b16 %v1131
  %v1422 = vunpack.c.l.b16 %v1132
  %v1423 = vunpack.c.h.b16 %v1132
  %v1424 = vunpack.c.l.b16 %v1133
  %v1425 = vunpack.c.h.b16 %v1133
  %v1426 = vunpack.c.l.b16 %v1134
  %v1427 = vunpack.c.h.b16 %v1134
  %v1428 = vunpack.c.l.b16 %v1135
  %v1429 = vunpack.c.h.b16 %v1135
  %v1430 = vunpack.c.l.b16 %v1136
  %v1431 = vunpack.c.h.b16 %v1136
  %v1432 = vunpack.c.l.b16 %v1137
  %v1433 = vunpack.c.h.b16 %v1137
  %v1434 = vunpack.c.l.b16 %v1138
  %v1435 = vunpack.c.h.b16 %v1138
  %v1436 = vunpack.c.l.b16 %v1139
  %v1437 = vunpack.c.h.b16 %v1139
  %v1438 = vunpack.c.l.b16 %v1140
  %v1439 = vunpack.c.h.b16 %v1140
  %v1440 = vunpack.c.l.b16 %v1141
  %v1441 = vunpack.c.h.b16 %v1141
  %v1442 = vunpack.c.l.b16 %v1142
  %v1443 = vunpack.c.h.b16 %v1142
  %v1444 = vunpack.c.l.b16 %v1143
  %v1445 = vunpack.c.h.b16 %v1143
  %v1446 = vunpack.c.l.b16 %v1144
  %v1447 = vunpack.c.h.b16 %v1144
  %v1448 = vunpack.c.l.b16 %v1145
  %v1449 = vunpack.c.h.b16 %v1145
  %v1450 = vunpack.c.l.b16 %v1146
  %v1451 = vunpack.c.h.b16 %v1146
  %v1452 = vunpack.c.l.b16 %v1147
  %v1453 = vunpack.c.h.b16 %v1147
  %v1454 = vunpack.c.l.b16 %v1148
  %v1455 = vunpack.c.h.b16 %v1148
  %v1456 = vunpack.c.l.b16 %v1149
  %v1457 = vunpack.c.h.b16 %v1149
  %v1458 = vunpack.c.l.b16 %v1150
  %v1459 = vunpack.c.h.b16 %v1150
  %v1460 = vunpack.c.l.b16 %v1151
  %v1461 = vunpack.c.h.b16 %v1151
  %v1462 = vunpack.c.l.b16 %v1152
  %v1463 = vunpack.c.h.b16 %v1152
  %v1464 = vunpack.c.l.b16 %v1153
  %v1465 = vunpack.c.h.b16 %v1153
  %v1466 = vunpack.c.l.b16 %v1154
  %v1467 = vunpack.c.h.b16 %v1154
  %v1468 = vunpack.c.l.b16 %v1155
  %v1469 = vunpack.c.h.b16 %v1155
  %v1470 = vunpack.c.l.b16 %v1156
  %v1471 = vunpack.c.h.b16 %v1156
  %v1472 = vunpack.c.l.b16 %v1157
  %v1473 = vunpack.c.h.b16 %v1157
  %v1474 = vunpack.c.l.b16 %v1158
  %v1475 = vunpack.c.h.b16 %v1158
  %v1476 = vunpack.c.l.b16 %v1159
  %v1477 = vunpack.c.h.b16 %v1159
  %v1478 = vunpack.c.l.b16 %v1160
  %v1479 = vunpack.c.h.b16 %v1160
  %v1480 = vunpack.c.l.b16 %v1161
  %v1481 = vunpack.c.h.b16 %v1161
  %v1482 = vunpack.c.l.b16 %v1162
  %v1483 = vunpack.c.h.b16 %v1162
  %v1484 = vunpack.c.l.b16 %v1163
  %v1485 = vunpack.c.h.b16 %v1163
  %v1486 = vunpack.c.l.b16 %v1164
  %v1487 = vunpack.c.h.b16 %v1164
  %v1488 = vunpack.c.l.b16 %v1165
  %v1489 = vunpack.c.h.b16 %v1165
  %v1490 = vunpack.c.l.b16 %v1166
  %v1491 = vunpack.c.h.b16 %v1166
  %v1492 = vunpack.c.l.b16 %v1167
  %v1493 = vunpack.c.h.b16 %v1167
  %v1494 = vunpack.c.l.b16 %v1168
  %v1495 = vunpack.c.h.b16 %v1168
  %v1496 = vunpack.c.l.b16 %v1169
  %v1497 = vunpack.c.h.b16 %v1169
  %v1498 = vunpack.c.l.b16 %v1170
  %v1499 = vunpack.c.h.b16 %v1170
  %v1500 = vunpack.c.l.b16 %v1171
  %v1501 = vunpack.c.h.b16 %v1171
  %v1502 = vunpack.c.l.b16 %v1172
  %v1503 = vunpack.c.h.b16 %v1172
  %v1504 = vunpack.c.l.b16 %v1173
  %v1505 = vunpack.c.h.b16 %v1173
  %v1506 = vunpack.c.l.b16 %v1174
  %v1507 = vunpack.c.h.b16 %v1174
  %v1508 = vunpack.c.l.b16 %v1175
  %v1509 = vunpack.c.h.b16 %v1175
  %v1510 = vunpack.c.l.b16 %v1176
  %v1511 = vunpack.c.h.b16 %v1176
  %v1512 = vunpack.c.l.b16 %v1177
  %v1513 = vunpack.c.h.b16 %v1177
  %v1514 = vunpack.c.l.b16 %v1178
  %v1515 = vunpack.c.h.b16 %v1178
  %v1516 = vunpack.c.l.b16 %v1179
  %v1517 = vunpack.c.h.b16 %v1179
  %v1518 = vunpack.c.l.b16 %v1180
  %v1519 = vunpack.c.h.b16 %v1180
  %v1520 = vunpack.c.l.b16 %v1181
  %v1521 = vunpack.c.h.b16 %v1181
  %v1522 = vunpack.c.l.b16 %v1182
  %v1523 = vunpack.c.h.b16 %v1182
  %v1524 = vunpack.c.l.b16 %v1183
  %v1525 = vunpack.c.h.b16 %v1183
  %v1526 = vunpack.c.l.b16 %v1184
  %v1527 = vunpack.c.h.b16 %v1184
  %v1528 = vunpack.c.l.b16 %v1185
  %v1529 = vunpack.c.h.b16 %v1185
  %v1530 = vunpack.c.l.b16 %v1186
  %v1531 = vunpack.c.h.b16 %v1186
  %v1532 = vunpack.c.l.b16 %v1187
  %v1533 = vunpack.c.h.b16 %v1187
  %v1534 = vunpack.c.l.b16 %v1188
  %v1535 = vunpack.c.h.b16 %v1188
  %v1536 = vunpack.c.l.b16 %v1189
  %v1537 = vunpack.c.h.b16 %v1189
  %v1538 = vunpack.c.l.b16 %v1190
  %v1539 = vunpack.c.h.b16 %v1190
  %v1540 = vunpack.c.l.b16 %v1191
  %v1541 = vunpack.c.h.b16 %v1191
  %v1542 = vunpack.c.l.b16 %v1192
  %v1543 = vunpack.c.h.b16 %v1192
  %v1544 = vunpack.c.l.b16 %v1193
  %v1545 = vunpack.c.h.b16 %v1193
  %v1546 = vunpack.c.l.b16 %v1194
  %v1547 = vunpack.c.h.b16 %v1194
  %v1548 = vunpack.c.l.b16 %v1195
  %v1549 = vunpack.c.h.b16 %v1195
  %v1550 = vunpack.c.l.b16 %v1196
  %v1551 = vunpack.c.h.b16 %v1196
  %v1552 = vunpack.c.l.b16 %v1197
  %v1553 = vunpack.c.h.b16 %v1197
  %v1554 = vunpack.c.l.b16 %v1198
  %v1555 = vunpack.c.h.b16 %v1198
  %v1556 = vunpack.c.l.b16 %v1199
  %v1557 = vunpack.c.h.b16 %v1199
  %v1558 = vunpack.c.l.b16 %v1200
  %v1559 = vunpack.c.h.b16 %v1200
  %v1560 = vunpack.c.l.b16 %v1201
  %v1561 = vunpack.c.h.b16 %v1201
  %v1562 = vunpack.c.l.b16 %v1202
  %v1563 = vunpack.c.h.b16 %v1202
  %v1564 = vunpack.c.l.b16 %v1203
  %v1565 = vunpack.c.h.b16 %v1203
  %v1566 = vunpack.c.l.b16 %v1204
  %v1567 = vunpack.c.h.b16 %v1204
  %v1568 = vunpack.c.l.b16 %v1205
  %v1569 = vunpack.c.h.b16 %v1205
  %v1570 = vunpack.c.l.b16 %v1206
  %v1571 = vunpack.c.h.b16 %v1206
  %v1572 = vunpack.c.l.b16 %v1207
  %v1573 = vunpack.c.h.b16 %v1207
  %v1574 = vunpack.c.l.b16 %v1208
  %v1575 = vunpack.c.h.b16 %v1208
  %v1576 = vunpack.c.l.b16 %v1209
  %v1577 = vunpack.c.h.b16 %v1209
  %v1578 = vunpack.c.l.b16 %v1210
  %v1579 = vunpack.c.h.b16 %v1210
  %v1580 = vunpack.c.l.b16 %v1211
  %v1581 = vunpack.c.h.b16 %v1211
  %v1582 = vunpack.c.l.b16 %v1212
  %v1583 = vunpack.c.h.b16 %v1212
  %v1584 = vunpack.c.l.b16 %v1213
  %v1585 = vunpack.c.h.b16 %v1213
  %v1586 = vunpack.c.l.b16 %v1214
  %v1587 = vunpack.c.h.b16 %v1214
  %v1588 = vunpack.c.l.b16 %v1215
  %v1589 = vunpack.c.h.b16 %v1215
  %v1590 = vunpack.c.l.b16 %v1216
  %v1591 = vunpack.c.h.b16 %v1216
  %v1592 = vunpack.c.l.b16 %v1217
  %v1593 = vunpack.c.h.b16 %v1217
  %v1594 = vunpack.c.l.b16 %v1218
  %v1595 = vunpack.c.h.b16 %v1218
  %v1596 = vunpack.c.l.b16 %v1219
  %v1597 = vunpack.c.h.b16 %v1219
  %v1598 = vunpack.c.l.b16 %v1220
  %v1599 = vunpack.c.h.b16 %v1220
  %v1600 = vunpack.c.l.b16 %v1221
  %v1601 = vunpack.c.h.b16 %v1221
  %v1602 = vunpack.c.l.b16 %v1222
  %v1603 = vunpack.c.h.b16 %v1222
  %v1604 = vunpack.c.l.b16 %v1223
  %v1605 = vunpack.c.h.b16 %v1223
  %v1606 = vunpack.c.l.b16 %v1224
  %v1607 = vunpack.c.h.b16 %v1224
  %v1608 = vunpack.c.l.b16 %v1225
  %v1609 = vunpack.c.h.b16 %v1225
  %v1610 = vpack.c.b16 %v1358, %v1354
  %v1611 = vpack.c.b16 %v1359, %v1355
  %v1612 = vpack.c.b16 %v1360, %v1356
  %v1613 = vpack.c.b16 %v1361, %v1357
  %v1614 = vpack.c.b16 %v1366, %v1362
  %v1615 = vpack.c.b16 %v1367, %v1363
  %v1616 = vpack.c.b16 %v1368, %v1364
  %v1617 = vpack.c.b16 %v1369, %v1365
  %v1618 = vpack.c.b16 %v1374, %v1370
  %v1619 = vpack.c.b16 %v1375, %v1371
  %v1620 = vpack.c.b16 %v1376, %v1372
  %v1621 = vpack.c.b16 %v1377, %v1373
  %v1622 = vpack.c.b16 %v1382, %v1378
  %v1623 = vpack.c.b16 %v1383, %v1379
  %v1624 = vpack.c.b16 %v1384, %v1380
  %v1625 = vpack.c.b16 %v1385, %v1381
  %v1626 = vpack.c.b16 %v1390, %v1386
  %v1627 = vpack.c.b16 %v1391, %v1387
  %v1628 = vpack.c.b16 %v1392, %v1388
  %v1629 = vpack.c.b16 %v1393, %v1389
  %v1630 = vpack.c.b16 %v1398, %v1394
  %v1631 = vpack.c.b16 %v1399, %v1395
  %v1632 = vpack.c.b16 %v1400, %v1396
  %v1633 = vpack.c.b16 %v1401, %v1397
  %v1634 = vpack.c.b16 %v1406, %v1402
  %v1635 = vpack.c.b16 %v1407, %v1403
  %v1636 = vpack.c.b16 %v1408, %v1404
  %v1637 = vpack.c.b16 %v1409, %v1405
  %v1638 = vpack.c.b16 %v1414, %v1410
  %v1639 = vpack.c.b16 %v1415, %v1411
  %v1640 = vpack.c.b16 %v1416, %v1412
  %v1641 = vpack.c.b16 %v1417, %v1413
  %v1642 = vpack.c.b16 %v1422, %v1418
  %v1643 = vpack.c.b16 %v1423, %v1419
  %v1644 = vpack.c.b16 %v1424, %v1420
  %v1645 = vpack.c.b16 %v1425, %v1421
  %v1646 = vpack.c.b16 %v1430, %v1426
  %v1647 = vpack.c.b16 %v1431, %v1427
  %v1648 = vpack.c.b16 %v1432, %v1428
  %v1649 = vpack.c.b16 %v1433, %v1429
  %v1650 = vpack.c.b16 %v1438, %v1434
  %v1651 = vpack.c.b16 %v1439, %v1435
  %v1652 = vpack.c.b16 %v1440, %v1436
  %v1653 = vpack.c.b16 %v1441, %v1437
  %v1654 = vpack.c.b16 %v1446, %v1442
  %v1655 = vpack.c.b16 %v1447, %v1443
  %v1656 = vpack.c.b16 %v1448, %v1444
  %v1657 = vpack.c.b16 %v1449, %v1445
  %v1658 = vpack.c.b16 %v1454, %v1450
  %v1659 = vpack.c.b16 %v1455, %v1451
  %v1660 = vpack.c.b16 %v1456, %v1452
  %v1661 = vpack.c.b16 %v1457, %v1453
  %v1662 = vpack.c.b16 %v1462, %v1458
  %v1663 = vpack.c.b16 %v1463, %v1459
  %v1664 = vpack.c.b16 %v1464, %v1460
  %v1665 = vpack.c.b16 %v1465, %v1461
  %v1666 = vpack.c.b16 %v1470, %v1466
  %v1667 = vpack.c.b16 %v1471, %v1467
  %v1668 = vpack.c.b16 %v1472, %v1468
  %v1669 = vpack.c.b16 %v1473, %v1469
  %v1670 = vpack.c.b16 %v1478, %v1474
  %v1671 = vpack.c.b16 %v1479, %v1475
  %v1672 = vpack.c.b16 %v1480, %v1476
  %v1673 = vpack.c.b16 %v1481, %v1477
  %v1674 = vpack.c.b16 %v1486, %v1482
  %v1675 = vpack.c.b16 %v1487, %v1483
  %v1676 = vpack.c.b16 %v1488, %v1484
  %v1677 = vpack.c.b16 %v1489, %v1485
  %v1678 = vpack.c.b16 %v1494, %v1490
  %v1679 = vpack.c.b16 %v1495, %v1491
  %v1680 = vpack.c.b16 %v1496, %v1492
  %v1681 = vpack.c.b16 %v1497, %v1493
  %v1682 = vpack.c.b16 %v1502, %v1498
  %v1683 = vpack.c.b16 %v1503, %v1499
  %v1684 = vpack.c.b16 %v1504, %v1500
  %v1685 = vpack.c.b16 %v1505, %v1501
  %v1686 = vpack.c.b16 %v1510, %v1506
  %v1687 = vpack.c.b16 %v1511, %v1507
  %v1688 = vpack.c.b16 %v1512, %v1508
  %v1689 = vpack.c.b16 %v1513, %v1509
  %v1690 = vpack.c.b16 %v1518, %v1514
  %v1691 = vpack.c.b16 %v1519, %v1515
  %v1692 = vpack.c.b16 %v1520, %v1516
  %v1693 = vpack.c.b16 %v1521, %v1517
  %v1694 = vpack.c.b16 %v1526, %v1522
  %v1695 = vpack.c.b16 %v1527, %v1523
  %v1696 = vpack.c.b16 %v1528, %v1524
  %v1697 = vpack.c.b16 %v1529, %v1525
  %v1698 = vpack.c.b16 %v1534, %v1530
  %v1699 = vpack.c.b16 %v1535, %v1531
  %v1700 = vpack.c.b16 %v1536, %v1532
  %v1701 = vpack.c.b16 %v1537, %v1533
  %v1702 = vpack.c.b16 %v1542, %v1538
  %v1703 = vpack.c.b16 %v1543, %v1539
  %v1704 = vpack.c.b16 %v1544, %v1540
  %v1705 = vpack.c.b16 %v1545, %v1541
  %v1706 = vpack.c.b16 %v1550, %v1546
  %v1707 = vpack.c.b16 %v1551, %v1547
  %v1708 = vpack.c.b16 %v1552, %v1548
  %v1709 = vpack.c.b16 %v1553, %v1549
  %v1710 = vpack.c.b16 %v1558, %v1554
  %v1711 = vpack.c.b16 %v1559, %v1555
  %v1712 = vpack.c.b16 %v1560, %v1556
  %v1713 = vpack.c.b16 %v1561, %v1557
  %v1714 = vpack.c.b16 %v1566, %v1562
  %v1715 = vpack.c.b16 %v1567, %v1563
  %v1716 = vpack.c.b16 %v1568, %v1564
  %v1717 = vpack.c.b16 %v1569, %v1565
  %v1718 = vpack.c.b16 %v1574, %v1570
  %v1719 = vpack.c.b16 %v1575, %v1571
  %v1720 = vpack.c.b16 %v1576, %v1572
  %v1721 = vpack.c.b16 %v1577, %v1573
  %v1722 = vpack.c.b16 %v1582, %v1578
  %v1723 = vpack.c.b16 %v1583, %v1579
  %v1724 = vpack.c.b16 %v1584, %v1580
  %v1725 = vpack.c.b16 %v1585, %v1581
  %v1726 = vpack.c.b16 %v1590, %v1586
  %v1727 = vpack.c.b16 %v1591, %v1587
  %v1728 = vpack.c.b16 %v1592, %v1588
  %v1729 = vpack.c.b16 %v1593, %v1589
  %v1730 = vpack.c.b16 %v1598, %v1594
  %v1731 = vpack.c.b16 %v1599, %v1595
  %v1732 = vpack.c.b16 %v1600, %v1596
  %v1733 = vpack.c.b16 %v1601, %v1597
  %v1734 = vpack.c.b16 %v1606, %v1602
  %v1735 = vpack.c.b16 %v1607, %v1603
  %v1736 = vpack.c.b16 %v1608, %v1604
  %v1737 = vpack.c.b16 %v1609, %v1605
  %1866 = vmatprep.subr.bf16.mxu0 %v1611
  %1867 = vmatpush1.bf16.msra.mxu0 %v1610
  %1868 = vmatprep.subr.bf16.mxu0 %v1615
  %1869 = vmatpush1.bf16.msra.mxu0 %v1614
  %1870 = vmatprep.subr.bf16.mxu0 %v1619
  %1871 = vmatpush1.bf16.msra.mxu0 %v1618
  %1872 = vmatprep.subr.bf16.mxu0 %v1623
  %1873 = vmatpush1.bf16.msra.mxu0 %v1622
  %1874 = vmatprep.subr.bf16.mxu0 %v1627
  %1875 = vmatpush1.bf16.msra.mxu0 %v1626
  %1876 = vmatprep.subr.bf16.mxu0 %v1631
  %1877 = vmatpush1.bf16.msra.mxu0 %v1630
  %1878 = vmatprep.subr.bf16.mxu0 %v1635
  %1879 = vmatpush1.bf16.msra.mxu0 %v1634
  %1880 = vmatprep.subr.bf16.mxu0 %v1639
  %1881 = vmatpush1.bf16.msra.mxu0 %v1638
  %1882 = vmatprep.subr.bf16.mxu0 %v1643
  %1883 = vmatpush1.bf16.msra.mxu0 %v1642
  %1884 = vmatprep.subr.bf16.mxu0 %v1647
  %1885 = vmatpush1.bf16.msra.mxu0 %v1646
  %1886 = vmatprep.subr.bf16.mxu0 %v1651
  %1887 = vmatpush1.bf16.msra.mxu0 %v1650
  %1888 = vmatprep.subr.bf16.mxu0 %v1655
  %1889 = vmatpush1.bf16.msra.mxu0 %v1654
  %1890 = vmatprep.subr.bf16.mxu0 %v1659
  %1891 = vmatpush1.bf16.msra.mxu0 %v1658
  %1892 = vmatprep.subr.bf16.mxu0 %v1663
  %1893 = vmatpush1.bf16.msra.mxu0 %v1662
  %1894 = vmatprep.subr.bf16.mxu0 %v1667
  %1895 = vmatpush1.bf16.msra.mxu0 %v1666
  %1896 = vmatprep.subr.bf16.mxu0 %v1671
  %1897 = vmatpush1.bf16.msra.mxu0 %v1670
  %1898 = vmatprep.mubr.bf16.mxu0 %v1076
  %1899 = vmatmul.mubr.bf16.gmra.mrb[0].mxu0 %v1075
  %v1900 = vpop.f32.mrb[0].mxu0
  %v1901 = vadd.f32 0.0, %v1900
  %v1902 = vpop.f32.mrb[0].mxu0
  %v1903 = vadd.f32 0.0, %v1902
  %v1904 = vpop.f32.mrb[0].mxu0
  %v1905 = vpop.f32.mrb[0].mxu0
  %1906 = vdwg.mxu0
  %1907 = vmatprep.subr.bf16.mxu0 %v1675
  %1908 = vmatpush1.bf16.msra.mxu0 %v1674
  %1909 = vmatprep.subr.bf16.mxu0 %v1679
  %1910 = vmatpush1.bf16.msra.mxu0 %v1678
  %1911 = vmatprep.subr.bf16.mxu0 %v1683
  %1912 = vmatpush1.bf16.msra.mxu0 %v1682
  %1913 = vmatprep.subr.bf16.mxu0 %v1687
  %1914 = vmatpush1.bf16.msra.mxu0 %v1686
  %1915 = vmatprep.subr.bf16.mxu0 %v1691
  %1916 = vmatpush1.bf16.msra.mxu0 %v1690
  %1917 = vmatprep.subr.bf16.mxu0 %v1695
  %1918 = vmatpush1.bf16.msra.mxu0 %v1694
  %1919 = vmatprep.subr.bf16.mxu0 %v1699
  %1920 = vmatpush1.bf16.msra.mxu0 %v1698
  %1921 = vmatprep.subr.bf16.mxu0 %v1703
  %1922 = vmatpush1.bf16.msra.mxu0 %v1702
  %1923 = vmatprep.subr.bf16.mxu0 %v1707
  %1924 = vmatpush1.bf16.msra.mxu0 %v1706
  %1925 = vmatprep.subr.bf16.mxu0 %v1711
  %1926 = vmatpush1.bf16.msra.mxu0 %v1710
  %1927 = vmatprep.subr.bf16.mxu0 %v1715
  %1928 = vmatpush1.bf16.msra.mxu0 %v1714
  %1929 = vmatprep.subr.bf16.mxu0 %v1719
  %1930 = vmatpush1.bf16.msra.mxu0 %v1718
  %1931 = vmatprep.subr.bf16.mxu0 %v1723
  %1932 = vmatpush1.bf16.msra.mxu0 %v1722
  %1933 = vmatprep.subr.bf16.mxu0 %v1727
  %1934 = vmatpush1.bf16.msra.mxu0 %v1726
  %1935 = vmatprep.subr.bf16.mxu0 %v1731
  %1936 = vmatpush1.bf16.msra.mxu0 %v1730
  %1937 = vmatprep.subr.bf16.mxu0 %v1735
  %1938 = vmatpush1.bf16.msra.mxu0 %v1734
  %1939 = vmatprep.mubr.bf16.mxu0 %v1078
  %1940 = vmatmul.mubr.bf16.gmra.mrb[0].mxu0 %v1077
  %v1941 = vpop.f32.mrb[0].mxu0
  %v1942 = vadd.f32 %v1901, %v1941
  %v1943 = vpop.f32.mrb[0].mxu0
  %v1944 = vadd.f32 %v1903, %v1943
  %v1945 = vpop.f32.mrb[0].mxu0
  %v1946 = vpop.f32.mrb[0].mxu0
  %1947 = vdwg.mxu0
  %1948 = vmatprep.subr.bf16.mxu0 %v1613
  %1949 = vmatpush1.bf16.msra.mxu0 %v1612
  %1950 = vmatprep.subr.bf16.mxu0 %v1617
  %1951 = vmatpush1.bf16.msra.mxu0 %v1616
  %1952 = vmatprep.subr.bf16.mxu0 %v1621
  %1953 = vmatpush1.bf16.msra.mxu0 %v1620
  %1954 = vmatprep.subr.bf16.mxu0 %v1625
  %1955 = vmatpush1.bf16.msra.mxu0 %v1624
  %1956 = vmatprep.subr.bf16.mxu0 %v1629
  %1957 = vmatpush1.bf16.msra.mxu0 %v1628
  %1958 = vmatprep.subr.bf16.mxu0 %v1633
  %1959 = vmatpush1.bf16.msra.mxu0 %v1632
  %1960 = vmatprep.subr.bf16.mxu0 %v1637
  %1961 = vmatpush1.bf16.msra.mxu0 %v1636
  %1962 = vmatprep.subr.bf16.mxu0 %v1641
  %1963 = vmatpush1.bf16.msra.mxu0 %v1640
  %1964 = vmatprep.subr.bf16.mxu0 %v1645
  %1965 = vmatpush1.bf16.msra.mxu0 %v1644
  %1966 = vmatprep.subr.bf16.mxu0 %v1649
  %1967 = vmatpush1.bf16.msra.mxu0 %v1648
  %1968 = vmatprep.subr.bf16.mxu0 %v1653
  %1969 = vmatpush1.bf16.msra.mxu0 %v1652
  %1970 = vmatprep.subr.bf16.mxu0 %v1657
  %1971 = vmatpush1.bf16.msra.mxu0 %v1656
  %1972 = vmatprep.subr.bf16.mxu0 %v1661
  %1973 = vmatpush1.bf16.msra.mxu0 %v1660
  %1974 = vmatprep.subr.bf16.mxu0 %v1665
  %1975 = vmatpush1.bf16.msra.mxu0 %v1664
  %1976 = vmatprep.subr.bf16.mxu0 %v1669
  %1977 = vmatpush1.bf16.msra.mxu0 %v1668
  %1978 = vmatprep.subr.bf16.mxu0 %v1673
  %1979 = vmatpush1.bf16.msra.mxu0 %v1672
  %1980 = vmatprep.mubr.bf16.mxu0 %v1076
  %1981 = vmatmul.mubr.bf16.gmra.mrb[0].mxu0 %v1075
  %v1982 = vpop.f32.mrb[0].mxu0
  %v1983 = vadd.f32 0.0, %v1982
  %v1984 = vpop.f32.mrb[0].mxu0
  %v1985 = vadd.f32 0.0, %v1984
  %v1986 = vpop.f32.mrb[0].mxu0
  %v1987 = vpop.f32.mrb[0].mxu0
  %1988 = vdwg.mxu0
  %1989 = vmatprep.subr.bf16.mxu0 %v1677
  %1990 = vmatpush1.bf16.msra.mxu0 %v1676
  %1991 = vmatprep.subr.bf16.mxu0 %v1681
  %1992 = vmatpush1.bf16.msra.mxu0 %v1680
  %1993 = vmatprep.subr.bf16.mxu0 %v1685
  %1994 = vmatpush1.bf16.msra.mxu0 %v1684
  %1995 = vmatprep.subr.bf16.mxu0 %v1689
  %1996 = vmatpush1.bf16.msra.mxu0 %v1688
  %1997 = vmatprep.subr.bf16.mxu0 %v1693
  %1998 = vmatpush1.bf16.msra.mxu0 %v1692
  %1999 = vmatprep.subr.bf16.mxu0 %v1697
  %2000 = vmatpush1.bf16.msra.mxu0 %v1696
  %2001 = vmatprep.subr.bf16.mxu0 %v1701
  %2002 = vmatpush1.bf16.msra.mxu0 %v1700
  %2003 = vmatprep.subr.bf16.mxu0 %v1705
  %2004 = vmatpush1.bf16.msra.mxu0 %v1704
  %2005 = vmatprep.subr.bf16.mxu0 %v1709
  %2006 = vmatpush1.bf16.msra.mxu0 %v1708
  %2007 = vmatprep.subr.bf16.mxu0 %v1713
  %2008 = vmatpush1.bf16.msra.mxu0 %v1712
  %2009 = vmatprep.subr.bf16.mxu0 %v1717
  %2010 = vmatpush1.bf16.msra.mxu0 %v1716
  %2011 = vmatprep.subr.bf16.mxu0 %v1721
  %2012 = vmatpush1.bf16.msra.mxu0 %v1720
  %2013 = vmatprep.subr.bf16.mxu0 %v1725
  %2014 = vmatpush1.bf16.msra.mxu0 %v1724
  %2015 = vmatprep.subr.bf16.mxu0 %v1729
  %2016 = vmatpush1.bf16.msra.mxu0 %v1728
  %2017 = vmatprep.subr.bf16.mxu0 %v1733
  %2018 = vmatpush1.bf16.msra.mxu0 %v1732
  %2019 = vmatprep.subr.bf16.mxu0 %v1737
  %2020 = vmatpush1.bf16.msra.mxu0 %v1736
  %2021 = vmatprep.mubr.bf16.mxu0 %v1078
  %2022 = vmatmul.mubr.bf16.gmra.mrb[0].mxu0 %v1077
  %v2023 = vpop.f32.mrb[0].mxu0
  %v2024 = vadd.f32 %v1983, %v2023
  %v2025 = vpop.f32.mrb[0].mxu0
  %v2026 = vadd.f32 %v1985, %v2025
  %v2027 = vpop.f32.mrb[0].mxu0
  %v2028 = vpop.f32.mrb[0].mxu0
  %2029 = vdwg.mxu0
  %v2030 = vld [vmem:[%s2 + $0x10] sm:$0xff]
  %v2031 = vld [vmem:[%s2 + $0x18] sm:$0xff]
  %v2032 = vld [vmem:[%s2 + $0x50] sm:$0xff]
  %v2033 = vld [vmem:[%s2 + $0x58] sm:$0xff]
  %v2034 = vld [vmem:[%s2 + $0x90] sm:$0xff]
  %v2035 = vld [vmem:[%s2 + $0x98] sm:$0xff]
  %v2036 = vld [vmem:[%s2 + $0xd0] sm:$0xff]
  %v2037 = vld [vmem:[%s2 + $0xd8] sm:$0xff]
  %v2038 = vld [vmem:[%s2 + $0x110] sm:$0xff]
  %v2039 = vld [vmem:[%s2 + $0x118] sm:$0xff]
  %v2040 = vld [vmem:[%s2 + $0x150] sm:$0xff]
  %v2041 = vld [vmem:[%s2 + $0x158] sm:$0xff]
  %v2042 = vld [vmem:[%s2 + $0x190] sm:$0xff]
  %v2043 = vld [vmem:[%s2 + $0x198] sm:$0xff]
  %v2044 = vld [vmem:[%s2 + $0x1d0] sm:$0xff]
  %v2045 = vld [vmem:[%s2 + $0x1d8] sm:$0xff]
  %v2046 = vld [vmem:[%s2 + $0x210] sm:$0xff]
  %v2047 = vld [vmem:[%s2 + $0x218] sm:$0xff]
  %v2048 = vld [vmem:[%s2 + $0x250] sm:$0xff]
  %v2049 = vld [vmem:[%s2 + $0x258] sm:$0xff]
  %v2050 = vld [vmem:[%s2 + $0x290] sm:$0xff]
  %v2051 = vld [vmem:[%s2 + $0x298] sm:$0xff]
  %v2052 = vld [vmem:[%s2 + $0x2d0] sm:$0xff]
  %v2053 = vld [vmem:[%s2 + $0x2d8] sm:$0xff]
  %v2054 = vld [vmem:[%s2 + $0x310] sm:$0xff]
  %v2055 = vld [vmem:[%s2 + $0x318] sm:$0xff]
  %v2056 = vld [vmem:[%s2 + $0x350] sm:$0xff]
  %v2057 = vld [vmem:[%s2 + $0x358] sm:$0xff]
  %v2058 = vld [vmem:[%s2 + $0x390] sm:$0xff]
  %v2059 = vld [vmem:[%s2 + $0x398] sm:$0xff]
  %v2060 = vld [vmem:[%s2 + $0x3d0] sm:$0xff]
  %v2061 = vld [vmem:[%s2 + $0x3d8] sm:$0xff]
  %v2062 = vld [vmem:[%s2 + $0x410] sm:$0xff]
  %v2063 = vld [vmem:[%s2 + $0x418] sm:$0xff]
  %v2064 = vld [vmem:[%s2 + $0x450] sm:$0xff]
  %v2065 = vld [vmem:[%s2 + $0x458] sm:$0xff]
  %v2066 = vld [vmem:[%s2 + $0x490] sm:$0xff]
  %v2067 = vld [vmem:[%s2 + $0x498] sm:$0xff]
  %v2068 = vld [vmem:[%s2 + $0x4d0] sm:$0xff]
  %v2069 = vld [vmem:[%s2 + $0x4d8] sm:$0xff]
  %v2070 = vld [vmem:[%s2 + $0x510] sm:$0xff]
  %v2071 = vld [vmem:[%s2 + $0x518] sm:$0xff]
  %v2072 = vld [vmem:[%s2 + $0x550] sm:$0xff]
  %v2073 = vld [vmem:[%s2 + $0x558] sm:$0xff]
  %v2074 = vld [vmem:[%s2 + $0x590] sm:$0xff]
  %v2075 = vld [vmem:[%s2 + $0x598] sm:$0xff]
  %v2076 = vld [vmem:[%s2 + $0x5d0] sm:$0xff]
  %v2077 = vld [vmem:[%s2 + $0x5d8] sm:$0xff]
  %v2078 = vld [vmem:[%s2 + $0x610] sm:$0xff]
  %v2079 = vld [vmem:[%s2 + $0x618] sm:$0xff]
  %v2080 = vld [vmem:[%s2 + $0x650] sm:$0xff]
  %v2081 = vld [vmem:[%s2 + $0x658] sm:$0xff]
  %v2082 = vld [vmem:[%s2 + $0x690] sm:$0xff]
  %v2083 = vld [vmem:[%s2 + $0x698] sm:$0xff]
  %v2084 = vld [vmem:[%s2 + $0x6d0] sm:$0xff]
  %v2085 = vld [vmem:[%s2 + $0x6d8] sm:$0xff]
  %v2086 = vld [vmem:[%s2 + $0x710] sm:$0xff]
  %v2087 = vld [vmem:[%s2 + $0x718] sm:$0xff]
  %v2088 = vld [vmem:[%s2 + $0x750] sm:$0xff]
  %v2089 = vld [vmem:[%s2 + $0x758] sm:$0xff]
  %v2090 = vld [vmem:[%s2 + $0x790] sm:$0xff]
  %v2091 = vld [vmem:[%s2 + $0x798] sm:$0xff]
  %v2092 = vld [vmem:[%s2 + $0x7d0] sm:$0xff]
  %v2093 = vld [vmem:[%s2 + $0x7d8] sm:$0xff]
  %v2094 = vld [vmem:[%s2 + $0x810] sm:$0xff]
  %v2095 = vld [vmem:[%s2 + $0x818] sm:$0xff]
  %v2096 = vld [vmem:[%s2 + $0x850] sm:$0xff]
  %v2097 = vld [vmem:[%s2 + $0x858] sm:$0xff]
  %v2098 = vld [vmem:[%s2 + $0x890] sm:$0xff]
  %v2099 = vld [vmem:[%s2 + $0x898] sm:$0xff]
  %v2100 = vld [vmem:[%s2 + $0x8d0] sm:$0xff]
  %v2101 = vld [vmem:[%s2 + $0x8d8] sm:$0xff]
  %v2102 = vld [vmem:[%s2 + $0x910] sm:$0xff]
  %v2103 = vld [vmem:[%s2 + $0x918] sm:$0xff]
  %v2104 = vld [vmem:[%s2 + $0x950] sm:$0xff]
  %v2105 = vld [vmem:[%s2 + $0x958] sm:$0xff]
  %v2106 = vld [vmem:[%s2 + $0x990] sm:$0xff]
  %v2107 = vld [vmem:[%s2 + $0x998] sm:$0xff]
  %v2108 = vld [vmem:[%s2 + $0x9d0] sm:$0xff]
  %v2109 = vld [vmem:[%s2 + $0x9d8] sm:$0xff]
  %v2110 = vld [vmem:[%s2 + $0xa10] sm:$0xff]
  %v2111 = vld [vmem:[%s2 + $0xa18] sm:$0xff]
  %v2112 = vld [vmem:[%s2 + $0xa50] sm:$0xff]
  %v2113 = vld [vmem:[%s2 + $0xa58] sm:$0xff]
  %v2114 = vld [vmem:[%s2 + $0xa90] sm:$0xff]
  %v2115 = vld [vmem:[%s2 + $0xa98] sm:$0xff]
  %v2116 = vld [vmem:[%s2 + $0xad0] sm:$0xff]
  %v2117 = vld [vmem:[%s2 + $0xad8] sm:$0xff]
  %v2118 = vld [vmem:[%s2 + $0xb10] sm:$0xff]
  %v2119 = vld [vmem:[%s2 + $0xb18] sm:$0xff]
  %v2120 = vld [vmem:[%s2 + $0xb50] sm:$0xff]
  %v2121 = vld [vmem:[%s2 + $0xb58] sm:$0xff]
  %v2122 = vld [vmem:[%s2 + $0xb90] sm:$0xff]
  %v2123 = vld [vmem:[%s2 + $0xb98] sm:$0xff]
  %v2124 = vld [vmem:[%s2 + $0xbd0] sm:$0xff]
  %v2125 = vld [vmem:[%s2 + $0xbd8] sm:$0xff]
  %v2126 = vld [vmem:[%s2 + $0xc10] sm:$0xff]
  %v2127 = vld [vmem:[%s2 + $0xc18] sm:$0xff]
  %v2128 = vld [vmem:[%s2 + $0xc50] sm:$0xff]
  %v2129 = vld [vmem:[%s2 + $0xc58] sm:$0xff]
  %v2130 = vld [vmem:[%s2 + $0xc90] sm:$0xff]
  %v2131 = vld [vmem:[%s2 + $0xc98] sm:$0xff]
  %v2132 = vld [vmem:[%s2 + $0xcd0] sm:$0xff]
  %v2133 = vld [vmem:[%s2 + $0xcd8] sm:$0xff]
  %v2134 = vld [vmem:[%s2 + $0xd10] sm:$0xff]
  %v2135 = vld [vmem:[%s2 + $0xd18] sm:$0xff]
  %v2136 = vld [vmem:[%s2 + $0xd50] sm:$0xff]
  %v2137 = vld [vmem:[%s2 + $0xd58] sm:$0xff]
  %v2138 = vld [vmem:[%s2 + $0xd90] sm:$0xff]
  %v2139 = vld [vmem:[%s2 + $0xd98] sm:$0xff]
  %v2140 = vld [vmem:[%s2 + $0xdd0] sm:$0xff]
  %v2141 = vld [vmem:[%s2 + $0xdd8] sm:$0xff]
  %v2142 = vld [vmem:[%s2 + $0xe10] sm:$0xff]
  %v2143 = vld [vmem:[%s2 + $0xe18] sm:$0xff]
  %v2144 = vld [vmem:[%s2 + $0xe50] sm:$0xff]
  %v2145 = vld [vmem:[%s2 + $0xe58] sm:$0xff]
  %v2146 = vld [vmem:[%s2 + $0xe90] sm:$0xff]
  %v2147 = vld [vmem:[%s2 + $0xe98] sm:$0xff]
  %v2148 = vld [vmem:[%s2 + $0xed0] sm:$0xff]
  %v2149 = vld [vmem:[%s2 + $0xed8] sm:$0xff]
  %v2150 = vld [vmem:[%s2 + $0xf10] sm:$0xff]
  %v2151 = vld [vmem:[%s2 + $0xf18] sm:$0xff]
  %v2152 = vld [vmem:[%s2 + $0xf50] sm:$0xff]
  %v2153 = vld [vmem:[%s2 + $0xf58] sm:$0xff]
  %v2154 = vld [vmem:[%s2 + $0xf90] sm:$0xff]
  %v2155 = vld [vmem:[%s2 + $0xf98] sm:$0xff]
  %v2156 = vld [vmem:[%s2 + $0xfd0] sm:$0xff]
  %v2157 = vld [vmem:[%s2 + $0xfd8] sm:$0xff]
  %v2286 = vunpack.c.l.b16 %v2030
  %v2287 = vunpack.c.h.b16 %v2030
  %v2288 = vunpack.c.l.b16 %v2031
  %v2289 = vunpack.c.h.b16 %v2031
  %v2290 = vunpack.c.l.b16 %v2032
  %v2291 = vunpack.c.h.b16 %v2032
  %v2292 = vunpack.c.l.b16 %v2033
  %v2293 = vunpack.c.h.b16 %v2033
  %v2294 = vunpack.c.l.b16 %v2034
  %v2295 = vunpack.c.h.b16 %v2034
  %v2296 = vunpack.c.l.b16 %v2035
  %v2297 = vunpack.c.h.b16 %v2035
  %v2298 = vunpack.c.l.b16 %v2036
  %v2299 = vunpack.c.h.b16 %v2036
  %v2300 = vunpack.c.l.b16 %v2037
  %v2301 = vunpack.c.h.b16 %v2037
  %v2302 = vunpack.c.l.b16 %v2038
  %v2303 = vunpack.c.h.b16 %v2038
  %v2304 = vunpack.c.l.b16 %v2039
  %v2305 = vunpack.c.h.b16 %v2039
  %v2306 = vunpack.c.l.b16 %v2040
  %v2307 = vunpack.c.h.b16 %v2040
  %v2308 = vunpack.c.l.b16 %v2041
  %v2309 = vunpack.c.h.b16 %v2041
  %v2310 = vunpack.c.l.b16 %v2042
  %v2311 = vunpack.c.h.b16 %v2042
  %v2312 = vunpack.c.l.b16 %v2043
  %v2313 = vunpack.c.h.b16 %v2043
  %v2314 = vunpack.c.l.b16 %v2044
  %v2315 = vunpack.c.h.b16 %v2044
  %v2316 = vunpack.c.l.b16 %v2045
  %v2317 = vunpack.c.h.b16 %v2045
  %v2318 = vunpack.c.l.b16 %v2046
  %v2319 = vunpack.c.h.b16 %v2046
  %v2320 = vunpack.c.l.b16 %v2047
  %v2321 = vunpack.c.h.b16 %v2047
  %v2322 = vunpack.c.l.b16 %v2048
  %v2323 = vunpack.c.h.b16 %v2048
  %v2324 = vunpack.c.l.b16 %v2049
  %v2325 = vunpack.c.h.b16 %v2049
  %v2326 = vunpack.c.l.b16 %v2050
  %v2327 = vunpack.c.h.b16 %v2050
  %v2328 = vunpack.c.l.b16 %v2051
  %v2329 = vunpack.c.h.b16 %v2051
  %v2330 = vunpack.c.l.b16 %v2052
  %v2331 = vunpack.c.h.b16 %v2052
  %v2332 = vunpack.c.l.b16 %v2053
  %v2333 = vunpack.c.h.b16 %v2053
  %v2334 = vunpack.c.l.b16 %v2054
  %v2335 = vunpack.c.h.b16 %v2054
  %v2336 = vunpack.c.l.b16 %v2055
  %v2337 = vunpack.c.h.b16 %v2055
  %v2338 = vunpack.c.l.b16 %v2056
  %v2339 = vunpack.c.h.b16 %v2056
  %v2340 = vunpack.c.l.b16 %v2057
  %v2341 = vunpack.c.h.b16 %v2057
  %v2342 = vunpack.c.l.b16 %v2058
  %v2343 = vunpack.c.h.b16 %v2058
  %v2344 = vunpack.c.l.b16 %v2059
  %v2345 = vunpack.c.h.b16 %v2059
  %v2346 = vunpack.c.l.b16 %v2060
  %v2347 = vunpack.c.h.b16 %v2060
  %v2348 = vunpack.c.l.b16 %v2061
  %v2349 = vunpack.c.h.b16 %v2061
  %v2350 = vunpack.c.l.b16 %v2062
  %v2351 = vunpack.c.h.b16 %v2062
  %v2352 = vunpack.c.l.b16 %v2063
  %v2353 = vunpack.c.h.b16 %v2063
  %v2354 = vunpack.c.l.b16 %v2064
  %v2355 = vunpack.c.h.b16 %v2064
  %v2356 = vunpack.c.l.b16 %v2065
  %v2357 = vunpack.c.h.b16 %v2065
  %v2358 = vunpack.c.l.b16 %v2066
  %v2359 = vunpack.c.h.b16 %v2066
  %v2360 = vunpack.c.l.b16 %v2067
  %v2361 = vunpack.c.h.b16 %v2067
  %v2362 = vunpack.c.l.b16 %v2068
  %v2363 = vunpack.c.h.b16 %v2068
  %v2364 = vunpack.c.l.b16 %v2069
  %v2365 = vunpack.c.h.b16 %v2069
  %v2366 = vunpack.c.l.b16 %v2070
  %v2367 = vunpack.c.h.b16 %v2070
  %v2368 = vunpack.c.l.b16 %v2071
  %v2369 = vunpack.c.h.b16 %v2071
  %v2370 = vunpack.c.l.b16 %v2072
  %v2371 = vunpack.c.h.b16 %v2072
  %v2372 = vunpack.c.l.b16 %v2073
  %v2373 = vunpack.c.h.b16 %v2073
  %v2374 = vunpack.c.l.b16 %v2074
  %v2375 = vunpack.c.h.b16 %v2074
  %v2376 = vunpack.c.l.b16 %v2075
  %v2377 = vunpack.c.h.b16 %v2075
  %v2378 = vunpack.c.l.b16 %v2076
  %v2379 = vunpack.c.h.b16 %v2076
  %v2380 = vunpack.c.l.b16 %v2077
  %v2381 = vunpack.c.h.b16 %v2077
  %v2382 = vunpack.c.l.b16 %v2078
  %v2383 = vunpack.c.h.b16 %v2078
  %v2384 = vunpack.c.l.b16 %v2079
  %v2385 = vunpack.c.h.b16 %v2079
  %v2386 = vunpack.c.l.b16 %v2080
  %v2387 = vunpack.c.h.b16 %v2080
  %v2388 = vunpack.c.l.b16 %v2081
  %v2389 = vunpack.c.h.b16 %v2081
  %v2390 = vunpack.c.l.b16 %v2082
  %v2391 = vunpack.c.h.b16 %v2082
  %v2392 = vunpack.c.l.b16 %v2083
  %v2393 = vunpack.c.h.b16 %v2083
  %v2394 = vunpack.c.l.b16 %v2084
  %v2395 = vunpack.c.h.b16 %v2084
  %v2396 = vunpack.c.l.b16 %v2085
  %v2397 = vunpack.c.h.b16 %v2085
  %v2398 = vunpack.c.l.b16 %v2086
  %v2399 = vunpack.c.h.b16 %v2086
  %v2400 = vunpack.c.l.b16 %v2087
  %v2401 = vunpack.c.h.b16 %v2087
  %v2402 = vunpack.c.l.b16 %v2088
  %v2403 = vunpack.c.h.b16 %v2088
  %v2404 = vunpack.c.l.b16 %v2089
  %v2405 = vunpack.c.h.b16 %v2089
  %v2406 = vunpack.c.l.b16 %v2090
  %v2407 = vunpack.c.h.b16 %v2090
  %v2408 = vunpack.c.l.b16 %v2091
  %v2409 = vunpack.c.h.b16 %v2091
  %v2410 = vunpack.c.l.b16 %v2092
  %v2411 = vunpack.c.h.b16 %v2092
  %v2412 = vunpack.c.l.b16 %v2093
  %v2413 = vunpack.c.h.b16 %v2093
  %v2414 = vunpack.c.l.b16 %v2094
  %v2415 = vunpack.c.h.b16 %v2094
  %v2416 = vunpack.c.l.b16 %v2095
  %v2417 = vunpack.c.h.b16 %v2095
  %v2418 = vunpack.c.l.b16 %v2096
  %v2419 = vunpack.c.h.b16 %v2096
  %v2420 = vunpack.c.l.b16 %v2097
  %v2421 = vunpack.c.h.b16 %v2097
  %v2422 = vunpack.c.l.b16 %v2098
  %v2423 = vunpack.c.h.b16 %v2098
  %v2424 = vunpack.c.l.b16 %v2099
  %v2425 = vunpack.c.h.b16 %v2099
  %v2426 = vunpack.c.l.b16 %v2100
  %v2427 = vunpack.c.h.b16 %v2100
  %v2428 = vunpack.c.l.b16 %v2101
  %v2429 = vunpack.c.h.b16 %v2101
  %v2430 = vunpack.c.l.b16 %v2102
  %v2431 = vunpack.c.h.b16 %v2102
  %v2432 = vunpack.c.l.b16 %v2103
  %v2433 = vunpack.c.h.b16 %v2103
  %v2434 = vunpack.c.l.b16 %v2104
  %v2435 = vunpack.c.h.b16 %v2104
  %v2436 = vunpack.c.l.b16 %v2105
  %v2437 = vunpack.c.h.b16 %v2105
  %v2438 = vunpack.c.l.b16 %v2106
  %v2439 = vunpack.c.h.b16 %v2106
  %v2440 = vunpack.c.l.b16 %v2107
  %v2441 = vunpack.c.h.b16 %v2107
  %v2442 = vunpack.c.l.b16 %v2108
  %v2443 = vunpack.c.h.b16 %v2108
  %v2444 = vunpack.c.l.b16 %v2109
  %v2445 = vunpack.c.h.b16 %v2109
  %v2446 = vunpack.c.l.b16 %v2110
  %v2447 = vunpack.c.h.b16 %v2110
  %v2448 = vunpack.c.l.b16 %v2111
  %v2449 = vunpack.c.h.b16 %v2111
  %v2450 = vunpack.c.l.b16 %v2112
  %v2451 = vunpack.c.h.b16 %v2112
  %v2452 = vunpack.c.l.b16 %v2113
  %v2453 = vunpack.c.h.b16 %v2113
  %v2454 = vunpack.c.l.b16 %v2114
  %v2455 = vunpack.c.h.b16 %v2114
  %v2456 = vunpack.c.l.b16 %v2115
  %v2457 = vunpack.c.h.b16 %v2115
  %v2458 = vunpack.c.l.b16 %v2116
  %v2459 = vunpack.c.h.b16 %v2116
  %v2460 = vunpack.c.l.b16 %v2117
  %v2461 = vunpack.c.h.b16 %v2117
  %v2462 = vunpack.c.l.b16 %v2118
  %v2463 = vunpack.c.h.b16 %v2118
  %v2464 = vunpack.c.l.b16 %v2119
  %v2465 = vunpack.c.h.b16 %v2119
  %v2466 = vunpack.c.l.b16 %v2120
  %v2467 = vunpack.c.h.b16 %v2120
  %v2468 = vunpack.c.l.b16 %v2121
  %v2469 = vunpack.c.h.b16 %v2121
  %v2470 = vunpack.c.l.b16 %v2122
  %v2471 = vunpack.c.h.b16 %v2122
  %v2472 = vunpack.c.l.b16 %v2123
  %v2473 = vunpack.c.h.b16 %v2123
  %v2474 = vunpack.c.l.b16 %v2124
  %v2475 = vunpack.c.h.b16 %v2124
  %v2476 = vunpack.c.l.b16 %v2125
  %v2477 = vunpack.c.h.b16 %v2125
  %v2478 = vunpack.c.l.b16 %v2126
  %v2479 = vunpack.c.h.b16 %v2126
  %v2480 = vunpack.c.l.b16 %v2127
  %v2481 = vunpack.c.h.b16 %v2127
  %v2482 = vunpack.c.l.b16 %v2128
  %v2483 = vunpack.c.h.b16 %v2128
  %v2484 = vunpack.c.l.b16 %v2129
  %v2485 = vunpack.c.h.b16 %v2129
  %v2486 = vunpack.c.l.b16 %v2130
  %v2487 = vunpack.c.h.b16 %v2130
  %v2488 = vunpack.c.l.b16 %v2131
  %v2489 = vunpack.c.h.b16 %v2131
  %v2490 = vunpack.c.l.b16 %v2132
  %v2491 = vunpack.c.h.b16 %v2132
  %v2492 = vunpack.c.l.b16 %v2133
  %v2493 = vunpack.c.h.b16 %v2133
  %v2494 = vunpack.c.l.b16 %v2134
  %v2495 = vunpack.c.h.b16 %v2134
  %v2496 = vunpack.c.l.b16 %v2135
  %v2497 = vunpack.c.h.b16 %v2135
  %v2498 = vunpack.c.l.b16 %v2136
  %v2499 = vunpack.c.h.b16 %v2136
  %v2500 = vunpack.c.l.b16 %v2137
  %v2501 = vunpack.c.h.b16 %v2137
  %v2502 = vunpack.c.l.b16 %v2138
  %v2503 = vunpack.c.h.b16 %v2138
  %v2504 = vunpack.c.l.b16 %v2139
  %v2505 = vunpack.c.h.b16 %v2139
  %v2506 = vunpack.c.l.b16 %v2140
  %v2507 = vunpack.c.h.b16 %v2140
  %v2508 = vunpack.c.l.b16 %v2141
  %v2509 = vunpack.c.h.b16 %v2141
  %v2510 = vunpack.c.l.b16 %v2142
  %v2511 = vunpack.c.h.b16 %v2142
  %v2512 = vunpack.c.l.b16 %v2143
  %v2513 = vunpack.c.h.b16 %v2143
  %v2514 = vunpack.c.l.b16 %v2144
  %v2515 = vunpack.c.h.b16 %v2144
  %v2516 = vunpack.c.l.b16 %v2145
  %v2517 = vunpack.c.h.b16 %v2145
  %v2518 = vunpack.c.l.b16 %v2146
  %v2519 = vunpack.c.h.b16 %v2146
  %v2520 = vunpack.c.l.b16 %v2147
  %v2521 = vunpack.c.h.b16 %v2147
  %v2522 = vunpack.c.l.b16 %v2148
  %v2523 = vunpack.c.h.b16 %v2148
  %v2524 = vunpack.c.l.b16 %v2149
  %v2525 = vunpack.c.h.b16 %v2149
  %v2526 = vunpack.c.l.b16 %v2150
  %v2527 = vunpack.c.h.b16 %v2150
  %v2528 = vunpack.c.l.b16 %v2151
  %v2529 = vunpack.c.h.b16 %v2151
  %v2530 = vunpack.c.l.b16 %v2152
  %v2531 = vunpack.c.h.b16 %v2152
  %v2532 = vunpack.c.l.b16 %v2153
  %v2533 = vunpack.c.h.b16 %v2153
  %v2534 = vunpack.c.l.b16 %v2154
  %v2535 = vunpack.c.h.b16 %v2154
  %v2536 = vunpack.c.l.b16 %v2155
  %v2537 = vunpack.c.h.b16 %v2155
  %v2538 = vunpack.c.l.b16 %v2156
  %v2539 = vunpack.c.h.b16 %v2156
  %v2540 = vunpack.c.l.b16 %v2157
  %v2541 = vunpack.c.h.b16 %v2157
  %v2542 = vpack.c.b16 %v2290, %v2286
  %v2543 = vpack.c.b16 %v2291, %v2287
  %v2544 = vpack.c.b16 %v2292, %v2288
  %v2545 = vpack.c.b16 %v2293, %v2289
  %v2546 = vpack.c.b16 %v2298, %v2294
  %v2547 = vpack.c.b16 %v2299, %v2295
  %v2548 = vpack.c.b16 %v2300, %v2296
  %v2549 = vpack.c.b16 %v2301, %v2297
  %v2550 = vpack.c.b16 %v2306, %v2302
  %v2551 = vpack.c.b16 %v2307, %v2303
  %v2552 = vpack.c.b16 %v2308, %v2304
  %v2553 = vpack.c.b16 %v2309, %v2305
  %v2554 = vpack.c.b16 %v2314, %v2310
  %v2555 = vpack.c.b16 %v2315, %v2311
  %v2556 = vpack.c.b16 %v2316, %v2312
  %v2557 = vpack.c.b16 %v2317, %v2313
  %v2558 = vpack.c.b16 %v2322, %v2318
  %v2559 = vpack.c.b16 %v2323, %v2319
  %v2560 = vpack.c.b16 %v2324, %v2320
  %v2561 = vpack.c.b16 %v2325, %v2321
  %v2562 = vpack.c.b16 %v2330, %v2326
  %v2563 = vpack.c.b16 %v2331, %v2327
  %v2564 = vpack.c.b16 %v2332, %v2328
  %v2565 = vpack.c.b16 %v2333, %v2329
  %v2566 = vpack.c.b16 %v2338, %v2334
  %v2567 = vpack.c.b16 %v2339, %v2335
  %v2568 = vpack.c.b16 %v2340, %v2336
  %v2569 = vpack.c.b16 %v2341, %v2337
  %v2570 = vpack.c.b16 %v2346, %v2342
  %v2571 = vpack.c.b16 %v2347, %v2343
  %v2572 = vpack.c.b16 %v2348, %v2344
  %v2573 = vpack.c.b16 %v2349, %v2345
  %v2574 = vpack.c.b16 %v2354, %v2350
  %v2575 = vpack.c.b16 %v2355, %v2351
  %v2576 = vpack.c.b16 %v2356, %v2352
  %v2577 = vpack.c.b16 %v2357, %v2353
  %v2578 = vpack.c.b16 %v2362, %v2358
  %v2579 = vpack.c.b16 %v2363, %v2359
  %v2580 = vpack.c.b16 %v2364, %v2360
  %v2581 = vpack.c.b16 %v2365, %v2361
  %v2582 = vpack.c.b16 %v2370, %v2366
  %v2583 = vpack.c.b16 %v2371, %v2367
  %v2584 = vpack.c.b16 %v2372, %v2368
  %v2585 = vpack.c.b16 %v2373, %v2369
  %v2586 = vpack.c.b16 %v2378, %v2374
  %v2587 = vpack.c.b16 %v2379, %v2375
  %v2588 = vpack.c.b16 %v2380, %v2376
  %v2589 = vpack.c.b16 %v2381, %v2377
  %v2590 = vpack.c.b16 %v2386, %v2382
  %v2591 = vpack.c.b16 %v2387, %v2383
  %v2592 = vpack.c.b16 %v2388, %v2384
  %v2593 = vpack.c.b16 %v2389, %v2385
  %v2594 = vpack.c.b16 %v2394, %v2390
  %v2595 = vpack.c.b16 %v2395, %v2391
  %v2596 = vpack.c.b16 %v2396, %v2392
  %v2597 = vpack.c.b16 %v2397, %v2393
  %v2598 = vpack.c.b16 %v2402, %v2398
  %v2599 = vpack.c.b16 %v2403, %v2399
  %v2600 = vpack.c.b16 %v2404, %v2400
  %v2601 = vpack.c.b16 %v2405, %v2401
  %v2602 = vpack.c.b16 %v2410, %v2406
  %v2603 = vpack.c.b16 %v2411, %v2407
  %v2604 = vpack.c.b16 %v2412, %v2408
  %v2605 = vpack.c.b16 %v2413, %v2409
  %v2606 = vpack.c.b16 %v2418, %v2414
  %v2607 = vpack.c.b16 %v2419, %v2415
  %v2608 = vpack.c.b16 %v2420, %v2416
  %v2609 = vpack.c.b16 %v2421, %v2417
  %v2610 = vpack.c.b16 %v2426, %v2422
  %v2611 = vpack.c.b16 %v2427, %v2423
  %v2612 = vpack.c.b16 %v2428, %v2424
  %v2613 = vpack.c.b16 %v2429, %v2425
  %v2614 = vpack.c.b16 %v2434, %v2430
  %v2615 = vpack.c.b16 %v2435, %v2431
  %v2616 = vpack.c.b16 %v2436, %v2432
  %v2617 = vpack.c.b16 %v2437, %v2433
  %v2618 = vpack.c.b16 %v2442, %v2438
  %v2619 = vpack.c.b16 %v2443, %v2439
  %v2620 = vpack.c.b16 %v2444, %v2440
  %v2621 = vpack.c.b16 %v2445, %v2441
  %v2622 = vpack.c.b16 %v2450, %v2446
  %v2623 = vpack.c.b16 %v2451, %v2447
  %v2624 = vpack.c.b16 %v2452, %v2448
  %v2625 = vpack.c.b16 %v2453, %v2449
  %v2626 = vpack.c.b16 %v2458, %v2454
  %v2627 = vpack.c.b16 %v2459, %v2455
  %v2628 = vpack.c.b16 %v2460, %v2456
  %v2629 = vpack.c.b16 %v2461, %v2457
  %v2630 = vpack.c.b16 %v2466, %v2462
  %v2631 = vpack.c.b16 %v2467, %v2463
  %v2632 = vpack.c.b16 %v2468, %v2464
  %v2633 = vpack.c.b16 %v2469, %v2465
  %v2634 = vpack.c.b16 %v2474, %v2470
  %v2635 = vpack.c.b16 %v2475, %v2471
  %v2636 = vpack.c.b16 %v2476, %v2472
  %v2637 = vpack.c.b16 %v2477, %v2473
  %v2638 = vpack.c.b16 %v2482, %v2478
  %v2639 = vpack.c.b16 %v2483, %v2479
  %v2640 = vpack.c.b16 %v2484, %v2480
  %v2641 = vpack.c.b16 %v2485, %v2481
  %v2642 = vpack.c.b16 %v2490, %v2486
  %v2643 = vpack.c.b16 %v2491, %v2487
  %v2644 = vpack.c.b16 %v2492, %v2488
  %v2645 = vpack.c.b16 %v2493, %v2489
  %v2646 = vpack.c.b16 %v2498, %v2494
  %v2647 = vpack.c.b16 %v2499, %v2495
  %v2648 = vpack.c.b16 %v2500, %v2496
  %v2649 = vpack.c.b16 %v2501, %v2497
  %v2650 = vpack.c.b16 %v2506, %v2502
  %v2651 = vpack.c.b16 %v2507, %v2503
  %v2652 = vpack.c.b16 %v2508, %v2504
  %v2653 = vpack.c.b16 %v2509, %v2505
  %v2654 = vpack.c.b16 %v2514, %v2510
  %v2655 = vpack.c.b16 %v2515, %v2511
  %v2656 = vpack.c.b16 %v2516, %v2512
  %v2657 = vpack.c.b16 %v2517, %v2513
  %v2658 = vpack.c.b16 %v2522, %v2518
  %v2659 = vpack.c.b16 %v2523, %v2519
  %v2660 = vpack.c.b16 %v2524, %v2520
  %v2661 = vpack.c.b16 %v2525, %v2521
  %v2662 = vpack.c.b16 %v2530, %v2526
  %v2663 = vpack.c.b16 %v2531, %v2527
  %v2664 = vpack.c.b16 %v2532, %v2528
  %v2665 = vpack.c.b16 %v2533, %v2529
  %v2666 = vpack.c.b16 %v2538, %v2534
  %v2667 = vpack.c.b16 %v2539, %v2535
  %v2668 = vpack.c.b16 %v2540, %v2536
  %v2669 = vpack.c.b16 %v2541, %v2537
  %2798 = vmatprep.subr.bf16.mxu0 %v2543
  %2799 = vmatpush1.bf16.msra.mxu0 %v2542
  %2800 = vmatprep.subr.bf16.mxu0 %v2547
  %2801 = vmatpush1.bf16.msra.mxu0 %v2546
  %2802 = vmatprep.subr.bf16.mxu0 %v2551
  %2803 = vmatpush1.bf16.msra.mxu0 %v2550
  %2804 = vmatprep.subr.bf16.mxu0 %v2555
  %2805 = vmatpush1.bf16.msra.mxu0 %v2554
  %2806 = vmatprep.subr.bf16.mxu0 %v2559
  %2807 = vmatpush1.bf16.msra.mxu0 %v2558
  %2808 = vmatprep.subr.bf16.mxu0 %v2563
  %2809 = vmatpush1.bf16.msra.mxu0 %v2562
  %2810 = vmatprep.subr.bf16.mxu0 %v2567
  %2811 = vmatpush1.bf16.msra.mxu0 %v2566
  %2812 = vmatprep.subr.bf16.mxu0 %v2571
  %2813 = vmatpush1.bf16.msra.mxu0 %v2570
  %2814 = vmatprep.subr.bf16.mxu0 %v2575
  %2815 = vmatpush1.bf16.msra.mxu0 %v2574
  %2816 = vmatprep.subr.bf16.mxu0 %v2579
  %2817 = vmatpush1.bf16.msra.mxu0 %v2578
  %2818 = vmatprep.subr.bf16.mxu0 %v2583
  %2819 = vmatpush1.bf16.msra.mxu0 %v2582
  %2820 = vmatprep.subr.bf16.mxu0 %v2587
  %2821 = vmatpush1.bf16.msra.mxu0 %v2586
  %2822 = vmatprep.subr.bf16.mxu0 %v2591
  %2823 = vmatpush1.bf16.msra.mxu0 %v2590
  %2824 = vmatprep.subr.bf16.mxu0 %v2595
  %2825 = vmatpush1.bf16.msra.mxu0 %v2594
  %2826 = vmatprep.subr.bf16.mxu0 %v2599
  %2827 = vmatpush1.bf16.msra.mxu0 %v2598
  %2828 = vmatprep.subr.bf16.mxu0 %v2603
  %2829 = vmatpush1.bf16.msra.mxu0 %v2602
  %2830 = vmatprep.mubr.bf16.mxu0 %v1076
  %2831 = vmatmul.mubr.bf16.gmra.mrb[0].mxu0 %v1075
  %v2832 = vpop.f32.mrb[0].mxu0
  %v2833 = vadd.f32 0.0, %v2832
  %v2834 = vpop.f32.mrb[0].mxu0
  %v2835 = vadd.f32 0.0, %v2834
  %v2836 = vpop.f32.mrb[0].mxu0
  %v2837 = vpop.f32.mrb[0].mxu0
  %2838 = vdwg.mxu0
  %2839 = vmatprep.subr.bf16.mxu0 %v2607
  %2840 = vmatpush1.bf16.msra.mxu0 %v2606
  %2841 = vmatprep.subr.bf16.mxu0 %v2611
  %2842 = vmatpush1.bf16.msra.mxu0 %v2610
  %2843 = vmatprep.subr.bf16.mxu0 %v2615
  %2844 = vmatpush1.bf16.msra.mxu0 %v2614
  %2845 = vmatprep.subr.bf16.mxu0 %v2619
  %2846 = vmatpush1.bf16.msra.mxu0 %v2618
  %2847 = vmatprep.subr.bf16.mxu0 %v2623
  %2848 = vmatpush1.bf16.msra.mxu0 %v2622
  %2849 = vmatprep.subr.bf16.mxu0 %v2627
  %2850 = vmatpush1.bf16.msra.mxu0 %v2626
  %2851 = vmatprep.subr.bf16.mxu0 %v2631
  %2852 = vmatpush1.bf16.msra.mxu0 %v2630
  %2853 = vmatprep.subr.bf16.mxu0 %v2635
  %2854 = vmatpush1.bf16.msra.mxu0 %v2634
  %2855 = vmatprep.subr.bf16.mxu0 %v2639
  %2856 = vmatpush1.bf16.msra.mxu0 %v2638
  %2857 = vmatprep.subr.bf16.mxu0 %v2643
  %2858 = vmatpush1.bf16.msra.mxu0 %v2642
  %2859 = vmatprep.subr.bf16.mxu0 %v2647
  %2860 = vmatpush1.bf16.msra.mxu0 %v2646
  %2861 = vmatprep.subr.bf16.mxu0 %v2651
  %2862 = vmatpush1.bf16.msra.mxu0 %v2650
  %2863 = vmatprep.subr.bf16.mxu0 %v2655
  %2864 = vmatpush1.bf16.msra.mxu0 %v2654
  %2865 = vmatprep.subr.bf16.mxu0 %v2659
  %2866 = vmatpush1.bf16.msra.mxu0 %v2658
  %2867 = vmatprep.subr.bf16.mxu0 %v2663
  %2868 = vmatpush1.bf16.msra.mxu0 %v2662
  %2869 = vmatprep.subr.bf16.mxu0 %v2667
  %2870 = vmatpush1.bf16.msra.mxu0 %v2666
  %2871 = vmatprep.mubr.bf16.mxu0 %v1078
  %2872 = vmatmul.mubr.bf16.gmra.mrb[0].mxu0 %v1077
  %v2873 = vpop.f32.mrb[0].mxu0
  %v2874 = vadd.f32 %v2833, %v2873
  %v2875 = vpop.f32.mrb[0].mxu0
  %v2876 = vadd.f32 %v2835, %v2875
  %v2877 = vpop.f32.mrb[0].mxu0
  %v2878 = vpop.f32.mrb[0].mxu0
  %2879 = vdwg.mxu0
  %2880 = vmatprep.subr.bf16.mxu0 %v2545
  %2881 = vmatpush1.bf16.msra.mxu0 %v2544
  %2882 = vmatprep.subr.bf16.mxu0 %v2549
  %2883 = vmatpush1.bf16.msra.mxu0 %v2548
  %2884 = vmatprep.subr.bf16.mxu0 %v2553
  %2885 = vmatpush1.bf16.msra.mxu0 %v2552
  %2886 = vmatprep.subr.bf16.mxu0 %v2557
  %2887 = vmatpush1.bf16.msra.mxu0 %v2556
  %2888 = vmatprep.subr.bf16.mxu0 %v2561
  %2889 = vmatpush1.bf16.msra.mxu0 %v2560
  %2890 = vmatprep.subr.bf16.mxu0 %v2565
  %2891 = vmatpush1.bf16.msra.mxu0 %v2564
  %2892 = vmatprep.subr.bf16.mxu0 %v2569
  %2893 = vmatpush1.bf16.msra.mxu0 %v2568
  %2894 = vmatprep.subr.bf16.mxu0 %v2573
  %2895 = vmatpush1.bf16.msra.mxu0 %v2572
  %2896 = vmatprep.subr.bf16.mxu0 %v2577
  %2897 = vmatpush1.bf16.msra.mxu0 %v2576
  %2898 = vmatprep.subr.bf16.mxu0 %v2581
  %2899 = vmatpush1.bf16.msra.mxu0 %v2580
  %2900 = vmatprep.subr.bf16.mxu0 %v2585
  %2901 = vmatpush1.bf16.msra.mxu0 %v2584
  %2902 = vmatprep.subr.bf16.mxu0 %v2589
  %2903 = vmatpush1.bf16.msra.mxu0 %v2588
  %2904 = vmatprep.subr.bf16.mxu0 %v2593
  %2905 = vmatpush1.bf16.msra.mxu0 %v2592
  %2906 = vmatprep.subr.bf16.mxu0 %v2597
  %2907 = vmatpush1.bf16.msra.mxu0 %v2596
  %2908 = vmatprep.subr.bf16.mxu0 %v2601
  %2909 = vmatpush1.bf16.msra.mxu0 %v2600
  %2910 = vmatprep.subr.bf16.mxu0 %v2605
  %2911 = vmatpush1.bf16.msra.mxu0 %v2604
  %2912 = vmatprep.mubr.bf16.mxu0 %v1076
  %2913 = vmatmul.mubr.bf16.gmra.mrb[0].mxu0 %v1075
  %v2914 = vpop.f32.mrb[0].mxu0
  %v2915 = vadd.f32 0.0, %v2914
  %v2916 = vpop.f32.mrb[0].mxu0
  %v2917 = vadd.f32 0.0, %v2916
  %v2918 = vpop.f32.mrb[0].mxu0
  %v2919 = vpop.f32.mrb[0].mxu0
  %2920 = vdwg.mxu0
  %2921 = vmatprep.subr.bf16.mxu0 %v2609
  %2922 = vmatpush1.bf16.msra.mxu0 %v2608
  %2923 = vmatprep.subr.bf16.mxu0 %v2613
  %2924 = vmatpush1.bf16.msra.mxu0 %v2612
  %2925 = vmatprep.subr.bf16.mxu0 %v2617
  %2926 = vmatpush1.bf16.msra.mxu0 %v2616
  %2927 = vmatprep.subr.bf16.mxu0 %v2621
  %2928 = vmatpush1.bf16.msra.mxu0 %v2620
  %2929 = vmatprep.subr.bf16.mxu0 %v2625
  %2930 = vmatpush1.bf16.msra.mxu0 %v2624
  %2931 = vmatprep.subr.bf16.mxu0 %v2629
  %2932 = vmatpush1.bf16.msra.mxu0 %v2628
  %2933 = vmatprep.subr.bf16.mxu0 %v2633
  %2934 = vmatpush1.bf16.msra.mxu0 %v2632
  %2935 = vmatprep.subr.bf16.mxu0 %v2637
  %2936 = vmatpush1.bf16.msra.mxu0 %v2636
  %2937 = vmatprep.subr.bf16.mxu0 %v2641
  %2938 = vmatpush1.bf16.msra.mxu0 %v2640
  %2939 = vmatprep.subr.bf16.mxu0 %v2645
  %2940 = vmatpush1.bf16.msra.mxu0 %v2644
  %2941 = vmatprep.subr.bf16.mxu0 %v2649
  %2942 = vmatpush1.bf16.msra.mxu0 %v2648
  %2943 = vmatprep.subr.bf16.mxu0 %v2653
  %2944 = vmatpush1.bf16.msra.mxu0 %v2652
  %2945 = vmatprep.subr.bf16.mxu0 %v2657
  %2946 = vmatpush1.bf16.msra.mxu0 %v2656
  %2947 = vmatprep.subr.bf16.mxu0 %v2661
  %2948 = vmatpush1.bf16.msra.mxu0 %v2660
  %2949 = vmatprep.subr.bf16.mxu0 %v2665
  %2950 = vmatpush1.bf16.msra.mxu0 %v2664
  %2951 = vmatprep.subr.bf16.mxu0 %v2669
  %2952 = vmatpush1.bf16.msra.mxu0 %v2668
  %2953 = vmatprep.mubr.bf16.mxu0 %v1078
  %2954 = vmatmul.mubr.bf16.gmra.mrb[0].mxu0 %v1077
  %v2955 = vpop.f32.mrb[0].mxu0
  %v2956 = vadd.f32 %v2915, %v2955
  %v2957 = vpop.f32.mrb[0].mxu0
  %v2958 = vadd.f32 %v2917, %v2957
  %v2959 = vpop.f32.mrb[0].mxu0
  %v2960 = vpop.f32.mrb[0].mxu0
  %2961 = vdwg.mxu0
  %v2962 = vadd.f32 %v1082, %v1942
  %v2963 = vadd.f32 %v1083, %v1944
  %v2964 = vadd.f32 %v1084, %v2024
  %v2965 = vadd.f32 %v1085, %v2026
  %v2966 = vmul.f32 %v2962, 0.5
  %v2967 = vmul.f32 %v2963, 0.5
  %v2968 = vmul.f32 %v2964, 0.5
  %v2969 = vmul.f32 %v2965, 0.5
  %v2970 = vtanh.pop %v2966
  %v2971 = vtanh.pop %v2967
  %v2972 = vtanh.pop %v2968
  %v2973 = vtanh.pop %v2969
  %v2974 = vmul.f32 %v2970, 0.5
  %v2975 = vmul.f32 %v2971, 0.5
  %v2976 = vmul.f32 %v2972, 0.5
  %v2977 = vmul.f32 %v2973, 0.5
  %v2978 = vadd.f32 %v2974, 0.5
  %v2979 = vadd.f32 %v2975, 0.5
  %v2980 = vadd.f32 %v2976, 0.5
  %v2981 = vadd.f32 %v2977, 0.5
  %v2982 = vld [vmem:[%s2 + $0x20] sm:$0xff]
  %v2983 = vld [vmem:[%s2 + $0x28] sm:$0xff]
  %v2984 = vld [vmem:[%s2 + $0x60] sm:$0xff]
  %v2985 = vld [vmem:[%s2 + $0x68] sm:$0xff]
  %v2986 = vld [vmem:[%s2 + $0xa0] sm:$0xff]
  %v2987 = vld [vmem:[%s2 + $0xa8] sm:$0xff]
  %v2988 = vld [vmem:[%s2 + $0xe0] sm:$0xff]
  %v2989 = vld [vmem:[%s2 + $0xe8] sm:$0xff]
  %v2990 = vld [vmem:[%s2 + $0x120] sm:$0xff]
  %v2991 = vld [vmem:[%s2 + $0x128] sm:$0xff]
  %v2992 = vld [vmem:[%s2 + $0x160] sm:$0xff]
  %v2993 = vld [vmem:[%s2 + $0x168] sm:$0xff]
  %v2994 = vld [vmem:[%s2 + $0x1a0] sm:$0xff]
  %v2995 = vld [vmem:[%s2 + $0x1a8] sm:$0xff]
  %v2996 = vld [vmem:[%s2 + $0x1e0] sm:$0xff]
  %v2997 = vld [vmem:[%s2 + $0x1e8] sm:$0xff]
  %v2998 = vld [vmem:[%s2 + $0x220] sm:$0xff]
  %v2999 = vld [vmem:[%s2 + $0x228] sm:$0xff]
  %v3000 = vld [vmem:[%s2 + $0x260] sm:$0xff]
  %v3001 = vld [vmem:[%s2 + $0x268] sm:$0xff]
  %v3002 = vld [vmem:[%s2 + $0x2a0] sm:$0xff]
  %v3003 = vld [vmem:[%s2 + $0x2a8] sm:$0xff]
  %v3004 = vld [vmem:[%s2 + $0x2e0] sm:$0xff]
  %v3005 = vld [vmem:[%s2 + $0x2e8] sm:$0xff]
  %v3006 = vld [vmem:[%s2 + $0x320] sm:$0xff]
  %v3007 = vld [vmem:[%s2 + $0x328] sm:$0xff]
  %v3008 = vld [vmem:[%s2 + $0x360] sm:$0xff]
  %v3009 = vld [vmem:[%s2 + $0x368] sm:$0xff]
  %v3010 = vld [vmem:[%s2 + $0x3a0] sm:$0xff]
  %v3011 = vld [vmem:[%s2 + $0x3a8] sm:$0xff]
  %v3012 = vld [vmem:[%s2 + $0x3e0] sm:$0xff]
  %v3013 = vld [vmem:[%s2 + $0x3e8] sm:$0xff]
  %v3014 = vld [vmem:[%s2 + $0x420] sm:$0xff]
  %v3015 = vld [vmem:[%s2 + $0x428] sm:$0xff]
  %v3016 = vld [vmem:[%s2 + $0x460] sm:$0xff]
  %v3017 = vld [vmem:[%s2 + $0x468] sm:$0xff]
  %v3018 = vld [vmem:[%s2 + $0x4a0] sm:$0xff]
  %v3019 = vld [vmem:[%s2 + $0x4a8] sm:$0xff]
  %v3020 = vld [vmem:[%s2 + $0x4e0] sm:$0xff]
  %v3021 = vld [vmem:[%s2 + $0x4e8] sm:$0xff]
  %v3022 = vld [vmem:[%s2 + $0x520] sm:$0xff]
  %v3023 = vld [vmem:[%s2 + $0x528] sm:$0xff]
  %v3024 = vld [vmem:[%s2 + $0x560] sm:$0xff]
  %v3025 = vld [vmem:[%s2 + $0x568] sm:$0xff]
  %v3026 = vld [vmem:[%s2 + $0x5a0] sm:$0xff]
  %v3027 = vld [vmem:[%s2 + $0x5a8] sm:$0xff]
  %v3028 = vld [vmem:[%s2 + $0x5e0] sm:$0xff]
  %v3029 = vld [vmem:[%s2 + $0x5e8] sm:$0xff]
  %v3030 = vld [vmem:[%s2 + $0x620] sm:$0xff]
  %v3031 = vld [vmem:[%s2 + $0x628] sm:$0xff]
  %v3032 = vld [vmem:[%s2 + $0x660] sm:$0xff]
  %v3033 = vld [vmem:[%s2 + $0x668] sm:$0xff]
  %v3034 = vld [vmem:[%s2 + $0x6a0] sm:$0xff]
  %v3035 = vld [vmem:[%s2 + $0x6a8] sm:$0xff]
  %v3036 = vld [vmem:[%s2 + $0x6e0] sm:$0xff]
  %v3037 = vld [vmem:[%s2 + $0x6e8] sm:$0xff]
  %v3038 = vld [vmem:[%s2 + $0x720] sm:$0xff]
  %v3039 = vld [vmem:[%s2 + $0x728] sm:$0xff]
  %v3040 = vld [vmem:[%s2 + $0x760] sm:$0xff]
  %v3041 = vld [vmem:[%s2 + $0x768] sm:$0xff]
  %v3042 = vld [vmem:[%s2 + $0x7a0] sm:$0xff]
  %v3043 = vld [vmem:[%s2 + $0x7a8] sm:$0xff]
  %v3044 = vld [vmem:[%s2 + $0x7e0] sm:$0xff]
  %v3045 = vld [vmem:[%s2 + $0x7e8] sm:$0xff]
  %v3046 = vld [vmem:[%s2 + $0x820] sm:$0xff]
  %v3047 = vld [vmem:[%s2 + $0x828] sm:$0xff]
  %v3048 = vld [vmem:[%s2 + $0x860] sm:$0xff]
  %v3049 = vld [vmem:[%s2 + $0x868] sm:$0xff]
  %v3050 = vld [vmem:[%s2 + $0x8a0] sm:$0xff]
  %v3051 = vld [vmem:[%s2 + $0x8a8] sm:$0xff]
  %v3052 = vld [vmem:[%s2 + $0x8e0] sm:$0xff]
  %v3053 = vld [vmem:[%s2 + $0x8e8] sm:$0xff]
  %v3054 = vld [vmem:[%s2 + $0x920] sm:$0xff]
  %v3055 = vld [vmem:[%s2 + $0x928] sm:$0xff]
  %v3056 = vld [vmem:[%s2 + $0x960] sm:$0xff]
  %v3057 = vld [vmem:[%s2 + $0x968] sm:$0xff]
  %v3058 = vld [vmem:[%s2 + $0x9a0] sm:$0xff]
  %v3059 = vld [vmem:[%s2 + $0x9a8] sm:$0xff]
  %v3060 = vld [vmem:[%s2 + $0x9e0] sm:$0xff]
  %v3061 = vld [vmem:[%s2 + $0x9e8] sm:$0xff]
  %v3062 = vld [vmem:[%s2 + $0xa20] sm:$0xff]
  %v3063 = vld [vmem:[%s2 + $0xa28] sm:$0xff]
  %v3064 = vld [vmem:[%s2 + $0xa60] sm:$0xff]
  %v3065 = vld [vmem:[%s2 + $0xa68] sm:$0xff]
  %v3066 = vld [vmem:[%s2 + $0xaa0] sm:$0xff]
  %v3067 = vld [vmem:[%s2 + $0xaa8] sm:$0xff]
  %v3068 = vld [vmem:[%s2 + $0xae0] sm:$0xff]
  %v3069 = vld [vmem:[%s2 + $0xae8] sm:$0xff]
  %v3070 = vld [vmem:[%s2 + $0xb20] sm:$0xff]
  %v3071 = vld [vmem:[%s2 + $0xb28] sm:$0xff]
  %v3072 = vld [vmem:[%s2 + $0xb60] sm:$0xff]
  %v3073 = vld [vmem:[%s2 + $0xb68] sm:$0xff]
  %v3074 = vld [vmem:[%s2 + $0xba0] sm:$0xff]
  %v3075 = vld [vmem:[%s2 + $0xba8] sm:$0xff]
  %v3076 = vld [vmem:[%s2 + $0xbe0] sm:$0xff]
  %v3077 = vld [vmem:[%s2 + $0xbe8] sm:$0xff]
  %v3078 = vld [vmem:[%s2 + $0xc20] sm:$0xff]
  %v3079 = vld [vmem:[%s2 + $0xc28] sm:$0xff]
  %v3080 = vld [vmem:[%s2 + $0xc60] sm:$0xff]
  %v3081 = vld [vmem:[%s2 + $0xc68] sm:$0xff]
  %v3082 = vld [vmem:[%s2 + $0xca0] sm:$0xff]
  %v3083 = vld [vmem:[%s2 + $0xca8] sm:$0xff]
  %v3084 = vld [vmem:[%s2 + $0xce0] sm:$0xff]
  %v3085 = vld [vmem:[%s2 + $0xce8] sm:$0xff]
  %v3086 = vld [vmem:[%s2 + $0xd20] sm:$0xff]
  %v3087 = vld [vmem:[%s2 + $0xd28] sm:$0xff]
  %v3088 = vld [vmem:[%s2 + $0xd60] sm:$0xff]
  %v3089 = vld [vmem:[%s2 + $0xd68] sm:$0xff]
  %v3090 = vld [vmem:[%s2 + $0xda0] sm:$0xff]
  %v3091 = vld [vmem:[%s2 + $0xda8] sm:$0xff]
  %v3092 = vld [vmem:[%s2 + $0xde0] sm:$0xff]
  %v3093 = vld [vmem:[%s2 + $0xde8] sm:$0xff]
  %v3094 = vld [vmem:[%s2 + $0xe20] sm:$0xff]
  %v3095 = vld [vmem:[%s2 + $0xe28] sm:$0xff]
  %v3096 = vld [vmem:[%s2 + $0xe60] sm:$0xff]
  %v3097 = vld [vmem:[%s2 + $0xe68] sm:$0xff]
  %v3098 = vld [vmem:[%s2 + $0xea0] sm:$0xff]
  %v3099 = vld [vmem:[%s2 + $0xea8] sm:$0xff]
  %v3100 = vld [vmem:[%s2 + $0xee0] sm:$0xff]
  %v3101 = vld [vmem:[%s2 + $0xee8] sm:$0xff]
  %v3102 = vld [vmem:[%s2 + $0xf20] sm:$0xff]
  %v3103 = vld [vmem:[%s2 + $0xf28] sm:$0xff]
  %v3104 = vld [vmem:[%s2 + $0xf60] sm:$0xff]
  %v3105 = vld [vmem:[%s2 + $0xf68] sm:$0xff]
  %v3106 = vld [vmem:[%s2 + $0xfa0] sm:$0xff]
  %v3107 = vld [vmem:[%s2 + $0xfa8] sm:$0xff]
  %v3108 = vld [vmem:[%s2 + $0xfe0] sm:$0xff]
  %v3109 = vld [vmem:[%s2 + $0xfe8] sm:$0xff]
  %v3238 = vunpack.c.l.b16 %v2982
  %v3239 = vunpack.c.h.b16 %v2982
  %v3240 = vunpack.c.l.b16 %v2983
  %v3241 = vunpack.c.h.b16 %v2983
  %v3242 = vunpack.c.l.b16 %v2984
  %v3243 = vunpack.c.h.b16 %v2984
  %v3244 = vunpack.c.l.b16 %v2985
  %v3245 = vunpack.c.h.b16 %v2985
  %v3246 = vunpack.c.l.b16 %v2986
  %v3247 = vunpack.c.h.b16 %v2986
  %v3248 = vunpack.c.l.b16 %v2987
  %v3249 = vunpack.c.h.b16 %v2987
  %v3250 = vunpack.c.l.b16 %v2988
  %v3251 = vunpack.c.h.b16 %v2988
  %v3252 = vunpack.c.l.b16 %v2989
  %v3253 = vunpack.c.h.b16 %v2989
  %v3254 = vunpack.c.l.b16 %v2990
  %v3255 = vunpack.c.h.b16 %v2990
  %v3256 = vunpack.c.l.b16 %v2991
  %v3257 = vunpack.c.h.b16 %v2991
  %v3258 = vunpack.c.l.b16 %v2992
  %v3259 = vunpack.c.h.b16 %v2992
  %v3260 = vunpack.c.l.b16 %v2993
  %v3261 = vunpack.c.h.b16 %v2993
  %v3262 = vunpack.c.l.b16 %v2994
  %v3263 = vunpack.c.h.b16 %v2994
  %v3264 = vunpack.c.l.b16 %v2995
  %v3265 = vunpack.c.h.b16 %v2995
  %v3266 = vunpack.c.l.b16 %v2996
  %v3267 = vunpack.c.h.b16 %v2996
  %v3268 = vunpack.c.l.b16 %v2997
  %v3269 = vunpack.c.h.b16 %v2997
  %v3270 = vunpack.c.l.b16 %v2998
  %v3271 = vunpack.c.h.b16 %v2998
  %v3272 = vunpack.c.l.b16 %v2999
  %v3273 = vunpack.c.h.b16 %v2999
  %v3274 = vunpack.c.l.b16 %v3000
  %v3275 = vunpack.c.h.b16 %v3000
  %v3276 = vunpack.c.l.b16 %v3001
  %v3277 = vunpack.c.h.b16 %v3001
  %v3278 = vunpack.c.l.b16 %v3002
  %v3279 = vunpack.c.h.b16 %v3002
  %v3280 = vunpack.c.l.b16 %v3003
  %v3281 = vunpack.c.h.b16 %v3003
  %v3282 = vunpack.c.l.b16 %v3004
  %v3283 = vunpack.c.h.b16 %v3004
  %v3284 = vunpack.c.l.b16 %v3005
  %v3285 = vunpack.c.h.b16 %v3005
  %v3286 = vunpack.c.l.b16 %v3006
  %v3287 = vunpack.c.h.b16 %v3006
  %v3288 = vunpack.c.l.b16 %v3007
  %v3289 = vunpack.c.h.b16 %v3007
  %v3290 = vunpack.c.l.b16 %v3008
  %v3291 = vunpack.c.h.b16 %v3008
  %v3292 = vunpack.c.l.b16 %v3009
  %v3293 = vunpack.c.h.b16 %v3009
  %v3294 = vunpack.c.l.b16 %v3010
  %v3295 = vunpack.c.h.b16 %v3010
  %v3296 = vunpack.c.l.b16 %v3011
  %v3297 = vunpack.c.h.b16 %v3011
  %v3298 = vunpack.c.l.b16 %v3012
  %v3299 = vunpack.c.h.b16 %v3012
  %v3300 = vunpack.c.l.b16 %v3013
  %v3301 = vunpack.c.h.b16 %v3013
  %v3302 = vunpack.c.l.b16 %v3014
  %v3303 = vunpack.c.h.b16 %v3014
  %v3304 = vunpack.c.l.b16 %v3015
  %v3305 = vunpack.c.h.b16 %v3015
  %v3306 = vunpack.c.l.b16 %v3016
  %v3307 = vunpack.c.h.b16 %v3016
  %v3308 = vunpack.c.l.b16 %v3017
  %v3309 = vunpack.c.h.b16 %v3017
  %v3310 = vunpack.c.l.b16 %v3018
  %v3311 = vunpack.c.h.b16 %v3018
  %v3312 = vunpack.c.l.b16 %v3019
  %v3313 = vunpack.c.h.b16 %v3019
  %v3314 = vunpack.c.l.b16 %v3020
  %v3315 = vunpack.c.h.b16 %v3020
  %v3316 = vunpack.c.l.b16 %v3021
  %v3317 = vunpack.c.h.b16 %v3021
  %v3318 = vunpack.c.l.b16 %v3022
  %v3319 = vunpack.c.h.b16 %v3022
  %v3320 = vunpack.c.l.b16 %v3023
  %v3321 = vunpack.c.h.b16 %v3023
  %v3322 = vunpack.c.l.b16 %v3024
  %v3323 = vunpack.c.h.b16 %v3024
  %v3324 = vunpack.c.l.b16 %v3025
  %v3325 = vunpack.c.h.b16 %v3025
  %v3326 = vunpack.c.l.b16 %v3026
  %v3327 = vunpack.c.h.b16 %v3026
  %v3328 = vunpack.c.l.b16 %v3027
  %v3329 = vunpack.c.h.b16 %v3027
  %v3330 = vunpack.c.l.b16 %v3028
  %v3331 = vunpack.c.h.b16 %v3028
  %v3332 = vunpack.c.l.b16 %v3029
  %v3333 = vunpack.c.h.b16 %v3029
  %v3334 = vunpack.c.l.b16 %v3030
  %v3335 = vunpack.c.h.b16 %v3030
  %v3336 = vunpack.c.l.b16 %v3031
  %v3337 = vunpack.c.h.b16 %v3031
  %v3338 = vunpack.c.l.b16 %v3032
  %v3339 = vunpack.c.h.b16 %v3032
  %v3340 = vunpack.c.l.b16 %v3033
  %v3341 = vunpack.c.h.b16 %v3033
  %v3342 = vunpack.c.l.b16 %v3034
  %v3343 = vunpack.c.h.b16 %v3034
  %v3344 = vunpack.c.l.b16 %v3035
  %v3345 = vunpack.c.h.b16 %v3035
  %v3346 = vunpack.c.l.b16 %v3036
  %v3347 = vunpack.c.h.b16 %v3036
  %v3348 = vunpack.c.l.b16 %v3037
  %v3349 = vunpack.c.h.b16 %v3037
  %v3350 = vunpack.c.l.b16 %v3038
  %v3351 = vunpack.c.h.b16 %v3038
  %v3352 = vunpack.c.l.b16 %v3039
  %v3353 = vunpack.c.h.b16 %v3039
  %v3354 = vunpack.c.l.b16 %v3040
  %v3355 = vunpack.c.h.b16 %v3040
  %v3356 = vunpack.c.l.b16 %v3041
  %v3357 = vunpack.c.h.b16 %v3041
  %v3358 = vunpack.c.l.b16 %v3042
  %v3359 = vunpack.c.h.b16 %v3042
  %v3360 = vunpack.c.l.b16 %v3043
  %v3361 = vunpack.c.h.b16 %v3043
  %v3362 = vunpack.c.l.b16 %v3044
  %v3363 = vunpack.c.h.b16 %v3044
  %v3364 = vunpack.c.l.b16 %v3045
  %v3365 = vunpack.c.h.b16 %v3045
  %v3366 = vunpack.c.l.b16 %v3046
  %v3367 = vunpack.c.h.b16 %v3046
  %v3368 = vunpack.c.l.b16 %v3047
  %v3369 = vunpack.c.h.b16 %v3047
  %v3370 = vunpack.c.l.b16 %v3048
  %v3371 = vunpack.c.h.b16 %v3048
  %v3372 = vunpack.c.l.b16 %v3049
  %v3373 = vunpack.c.h.b16 %v3049
  %v3374 = vunpack.c.l.b16 %v3050
  %v3375 = vunpack.c.h.b16 %v3050
  %v3376 = vunpack.c.l.b16 %v3051
  %v3377 = vunpack.c.h.b16 %v3051
  %v3378 = vunpack.c.l.b16 %v3052
  %v3379 = vunpack.c.h.b16 %v3052
  %v3380 = vunpack.c.l.b16 %v3053
  %v3381 = vunpack.c.h.b16 %v3053
  %v3382 = vunpack.c.l.b16 %v3054
  %v3383 = vunpack.c.h.b16 %v3054
  %v3384 = vunpack.c.l.b16 %v3055
  %v3385 = vunpack.c.h.b16 %v3055
  %v3386 = vunpack.c.l.b16 %v3056
  %v3387 = vunpack.c.h.b16 %v3056
  %v3388 = vunpack.c.l.b16 %v3057
  %v3389 = vunpack.c.h.b16 %v3057
  %v3390 = vunpack.c.l.b16 %v3058
  %v3391 = vunpack.c.h.b16 %v3058
  %v3392 = vunpack.c.l.b16 %v3059
  %v3393 = vunpack.c.h.b16 %v3059
  %v3394 = vunpack.c.l.b16 %v3060
  %v3395 = vunpack.c.h.b16 %v3060
  %v3396 = vunpack.c.l.b16 %v3061
  %v3397 = vunpack.c.h.b16 %v3061
  %v3398 = vunpack.c.l.b16 %v3062
  %v3399 = vunpack.c.h.b16 %v3062
  %v3400 = vunpack.c.l.b16 %v3063
  %v3401 = vunpack.c.h.b16 %v3063
  %v3402 = vunpack.c.l.b16 %v3064
  %v3403 = vunpack.c.h.b16 %v3064
  %v3404 = vunpack.c.l.b16 %v3065
  %v3405 = vunpack.c.h.b16 %v3065
  %v3406 = vunpack.c.l.b16 %v3066
  %v3407 = vunpack.c.h.b16 %v3066
  %v3408 = vunpack.c.l.b16 %v3067
  %v3409 = vunpack.c.h.b16 %v3067
  %v3410 = vunpack.c.l.b16 %v3068
  %v3411 = vunpack.c.h.b16 %v3068
  %v3412 = vunpack.c.l.b16 %v3069
  %v3413 = vunpack.c.h.b16 %v3069
  %v3414 = vunpack.c.l.b16 %v3070
  %v3415 = vunpack.c.h.b16 %v3070
  %v3416 = vunpack.c.l.b16 %v3071
  %v3417 = vunpack.c.h.b16 %v3071
  %v3418 = vunpack.c.l.b16 %v3072
  %v3419 = vunpack.c.h.b16 %v3072
  %v3420 = vunpack.c.l.b16 %v3073
  %v3421 = vunpack.c.h.b16 %v3073
  %v3422 = vunpack.c.l.b16 %v3074
  %v3423 = vunpack.c.h.b16 %v3074
  %v3424 = vunpack.c.l.b16 %v3075
  %v3425 = vunpack.c.h.b16 %v3075
  %v3426 = vunpack.c.l.b16 %v3076
  %v3427 = vunpack.c.h.b16 %v3076
  %v3428 = vunpack.c.l.b16 %v3077
  %v3429 = vunpack.c.h.b16 %v3077
  %v3430 = vunpack.c.l.b16 %v3078
  %v3431 = vunpack.c.h.b16 %v3078
  %v3432 = vunpack.c.l.b16 %v3079
  %v3433 = vunpack.c.h.b16 %v3079
  %v3434 = vunpack.c.l.b16 %v3080
  %v3435 = vunpack.c.h.b16 %v3080
  %v3436 = vunpack.c.l.b16 %v3081
  %v3437 = vunpack.c.h.b16 %v3081
  %v3438 = vunpack.c.l.b16 %v3082
  %v3439 = vunpack.c.h.b16 %v3082
  %v3440 = vunpack.c.l.b16 %v3083
  %v3441 = vunpack.c.h.b16 %v3083
  %v3442 = vunpack.c.l.b16 %v3084
  %v3443 = vunpack.c.h.b16 %v3084
  %v3444 = vunpack.c.l.b16 %v3085
  %v3445 = vunpack.c.h.b16 %v3085
  %v3446 = vunpack.c.l.b16 %v3086
  %v3447 = vunpack.c.h.b16 %v3086
  %v3448 = vunpack.c.l.b16 %v3087
  %v3449 = vunpack.c.h.b16 %v3087
  %v3450 = vunpack.c.l.b16 %v3088
  %v3451 = vunpack.c.h.b16 %v3088
  %v3452 = vunpack.c.l.b16 %v3089
  %v3453 = vunpack.c.h.b16 %v3089
  %v3454 = vunpack.c.l.b16 %v3090
  %v3455 = vunpack.c.h.b16 %v3090
  %v3456 = vunpack.c.l.b16 %v3091
  %v3457 = vunpack.c.h.b16 %v3091
  %v3458 = vunpack.c.l.b16 %v3092
  %v3459 = vunpack.c.h.b16 %v3092
  %v3460 = vunpack.c.l.b16 %v3093
  %v3461 = vunpack.c.h.b16 %v3093
  %v3462 = vunpack.c.l.b16 %v3094
  %v3463 = vunpack.c.h.b16 %v3094
  %v3464 = vunpack.c.l.b16 %v3095
  %v3465 = vunpack.c.h.b16 %v3095
  %v3466 = vunpack.c.l.b16 %v3096
  %v3467 = vunpack.c.h.b16 %v3096
  %v3468 = vunpack.c.l.b16 %v3097
  %v3469 = vunpack.c.h.b16 %v3097
  %v3470 = vunpack.c.l.b16 %v3098
  %v3471 = vunpack.c.h.b16 %v3098
  %v3472 = vunpack.c.l.b16 %v3099
  %v3473 = vunpack.c.h.b16 %v3099
  %v3474 = vunpack.c.l.b16 %v3100
  %v3475 = vunpack.c.h.b16 %v3100
  %v3476 = vunpack.c.l.b16 %v3101
  %v3477 = vunpack.c.h.b16 %v3101
  %v3478 = vunpack.c.l.b16 %v3102
  %v3479 = vunpack.c.h.b16 %v3102
  %v3480 = vunpack.c.l.b16 %v3103
  %v3481 = vunpack.c.h.b16 %v3103
  %v3482 = vunpack.c.l.b16 %v3104
  %v3483 = vunpack.c.h.b16 %v3104
  %v3484 = vunpack.c.l.b16 %v3105
  %v3485 = vunpack.c.h.b16 %v3105
  %v3486 = vunpack.c.l.b16 %v3106
  %v3487 = vunpack.c.h.b16 %v3106
  %v3488 = vunpack.c.l.b16 %v3107
  %v3489 = vunpack.c.h.b16 %v3107
  %v3490 = vunpack.c.l.b16 %v3108
  %v3491 = vunpack.c.h.b16 %v3108
  %v3492 = vunpack.c.l.b16 %v3109
  %v3493 = vunpack.c.h.b16 %v3109
  %v3494 = vpack.c.b16 %v3242, %v3238
  %v3495 = vpack.c.b16 %v3243, %v3239
  %v3496 = vpack.c.b16 %v3244, %v3240
  %v3497 = vpack.c.b16 %v3245, %v3241
  %v3498 = vpack.c.b16 %v3250, %v3246
  %v3499 = vpack.c.b16 %v3251, %v3247
  %v3500 = vpack.c.b16 %v3252, %v3248
  %v3501 = vpack.c.b16 %v3253, %v3249
  %v3502 = vpack.c.b16 %v3258, %v3254
  %v3503 = vpack.c.b16 %v3259, %v3255
  %v3504 = vpack.c.b16 %v3260, %v3256
  %v3505 = vpack.c.b16 %v3261, %v3257
  %v3506 = vpack.c.b16 %v3266, %v3262
  %v3507 = vpack.c.b16 %v3267, %v3263
  %v3508 = vpack.c.b16 %v3268, %v3264
  %v3509 = vpack.c.b16 %v3269, %v3265
  %v3510 = vpack.c.b16 %v3274, %v3270
  %v3511 = vpack.c.b16 %v3275, %v3271
  %v3512 = vpack.c.b16 %v3276, %v3272
  %v3513 = vpack.c.b16 %v3277, %v3273
  %v3514 = vpack.c.b16 %v3282, %v3278
  %v3515 = vpack.c.b16 %v3283, %v3279
  %v3516 = vpack.c.b16 %v3284, %v3280
  %v3517 = vpack.c.b16 %v3285, %v3281
  %v3518 = vpack.c.b16 %v3290, %v3286
  %v3519 = vpack.c.b16 %v3291, %v3287
  %v3520 = vpack.c.b16 %v3292, %v3288
  %v3521 = vpack.c.b16 %v3293, %v3289
  %v3522 = vpack.c.b16 %v3298, %v3294
  %v3523 = vpack.c.b16 %v3299, %v3295
  %v3524 = vpack.c.b16 %v3300, %v3296
  %v3525 = vpack.c.b16 %v3301, %v3297
  %v3526 = vpack.c.b16 %v3306, %v3302
  %v3527 = vpack.c.b16 %v3307, %v3303
  %v3528 = vpack.c.b16 %v3308, %v3304
  %v3529 = vpack.c.b16 %v3309, %v3305
  %v3530 = vpack.c.b16 %v3314, %v3310
  %v3531 = vpack.c.b16 %v3315, %v3311
  %v3532 = vpack.c.b16 %v3316, %v3312
  %v3533 = vpack.c.b16 %v3317, %v3313
  %v3534 = vpack.c.b16 %v3322, %v3318
  %v3535 = vpack.c.b16 %v3323, %v3319
  %v3536 = vpack.c.b16 %v3324, %v3320
  %v3537 = vpack.c.b16 %v3325, %v3321
  %v3538 = vpack.c.b16 %v3330, %v3326
  %v3539 = vpack.c.b16 %v3331, %v3327
  %v3540 = vpack.c.b16 %v3332, %v3328
  %v3541 = vpack.c.b16 %v3333, %v3329
  %v3542 = vpack.c.b16 %v3338, %v3334
  %v3543 = vpack.c.b16 %v3339, %v3335
  %v3544 = vpack.c.b16 %v3340, %v3336
  %v3545 = vpack.c.b16 %v3341, %v3337
  %v3546 = vpack.c.b16 %v3346, %v3342
  %v3547 = vpack.c.b16 %v3347, %v3343
  %v3548 = vpack.c.b16 %v3348, %v3344
  %v3549 = vpack.c.b16 %v3349, %v3345
  %v3550 = vpack.c.b16 %v3354, %v3350
  %v3551 = vpack.c.b16 %v3355, %v3351
  %v3552 = vpack.c.b16 %v3356, %v3352
  %v3553 = vpack.c.b16 %v3357, %v3353
  %v3554 = vpack.c.b16 %v3362, %v3358
  %v3555 = vpack.c.b16 %v3363, %v3359
  %v3556 = vpack.c.b16 %v3364, %v3360
  %v3557 = vpack.c.b16 %v3365, %v3361
  %v3558 = vpack.c.b16 %v3370, %v3366
  %v3559 = vpack.c.b16 %v3371, %v3367
  %v3560 = vpack.c.b16 %v3372, %v3368
  %v3561 = vpack.c.b16 %v3373, %v3369
  %v3562 = vpack.c.b16 %v3378, %v3374
  %v3563 = vpack.c.b16 %v3379, %v3375
  %v3564 = vpack.c.b16 %v3380, %v3376
  %v3565 = vpack.c.b16 %v3381, %v3377
  %v3566 = vpack.c.b16 %v3386, %v3382
  %v3567 = vpack.c.b16 %v3387, %v3383
  %v3568 = vpack.c.b16 %v3388, %v3384
  %v3569 = vpack.c.b16 %v3389, %v3385
  %v3570 = vpack.c.b16 %v3394, %v3390
  %v3571 = vpack.c.b16 %v3395, %v3391
  %v3572 = vpack.c.b16 %v3396, %v3392
  %v3573 = vpack.c.b16 %v3397, %v3393
  %v3574 = vpack.c.b16 %v3402, %v3398
  %v3575 = vpack.c.b16 %v3403, %v3399
  %v3576 = vpack.c.b16 %v3404, %v3400
  %v3577 = vpack.c.b16 %v3405, %v3401
  %v3578 = vpack.c.b16 %v3410, %v3406
  %v3579 = vpack.c.b16 %v3411, %v3407
  %v3580 = vpack.c.b16 %v3412, %v3408
  %v3581 = vpack.c.b16 %v3413, %v3409
  %v3582 = vpack.c.b16 %v3418, %v3414
  %v3583 = vpack.c.b16 %v3419, %v3415
  %v3584 = vpack.c.b16 %v3420, %v3416
  %v3585 = vpack.c.b16 %v3421, %v3417
  %v3586 = vpack.c.b16 %v3426, %v3422
  %v3587 = vpack.c.b16 %v3427, %v3423
  %v3588 = vpack.c.b16 %v3428, %v3424
  %v3589 = vpack.c.b16 %v3429, %v3425
  %v3590 = vpack.c.b16 %v3434, %v3430
  %v3591 = vpack.c.b16 %v3435, %v3431
  %v3592 = vpack.c.b16 %v3436, %v3432
  %v3593 = vpack.c.b16 %v3437, %v3433
  %v3594 = vpack.c.b16 %v3442, %v3438
  %v3595 = vpack.c.b16 %v3443, %v3439
  %v3596 = vpack.c.b16 %v3444, %v3440
  %v3597 = vpack.c.b16 %v3445, %v3441
  %v3598 = vpack.c.b16 %v3450, %v3446
  %v3599 = vpack.c.b16 %v3451, %v3447
  %v3600 = vpack.c.b16 %v3452, %v3448
  %v3601 = vpack.c.b16 %v3453, %v3449
  %v3602 = vpack.c.b16 %v3458, %v3454
  %v3603 = vpack.c.b16 %v3459, %v3455
  %v3604 = vpack.c.b16 %v3460, %v3456
  %v3605 = vpack.c.b16 %v3461, %v3457
  %v3606 = vpack.c.b16 %v3466, %v3462
  %v3607 = vpack.c.b16 %v3467, %v3463
  %v3608 = vpack.c.b16 %v3468, %v3464
  %v3609 = vpack.c.b16 %v3469, %v3465
  %v3610 = vpack.c.b16 %v3474, %v3470
  %v3611 = vpack.c.b16 %v3475, %v3471
  %v3612 = vpack.c.b16 %v3476, %v3472
  %v3613 = vpack.c.b16 %v3477, %v3473
  %v3614 = vpack.c.b16 %v3482, %v3478
  %v3615 = vpack.c.b16 %v3483, %v3479
  %v3616 = vpack.c.b16 %v3484, %v3480
  %v3617 = vpack.c.b16 %v3485, %v3481
  %v3618 = vpack.c.b16 %v3490, %v3486
  %v3619 = vpack.c.b16 %v3491, %v3487
  %v3620 = vpack.c.b16 %v3492, %v3488
  %v3621 = vpack.c.b16 %v3493, %v3489
  %3750 = vmatprep.subr.bf16.mxu0 %v3495
  %3751 = vmatpush1.bf16.msra.mxu0 %v3494
  %3752 = vmatprep.subr.bf16.mxu0 %v3499
  %3753 = vmatpush1.bf16.msra.mxu0 %v3498
  %3754 = vmatprep.subr.bf16.mxu0 %v3503
  %3755 = vmatpush1.bf16.msra.mxu0 %v3502
  %3756 = vmatprep.subr.bf16.mxu0 %v3507
  %3757 = vmatpush1.bf16.msra.mxu0 %v3506
  %3758 = vmatprep.subr.bf16.mxu0 %v3511
  %3759 = vmatpush1.bf16.msra.mxu0 %v3510
  %3760 = vmatprep.subr.bf16.mxu0 %v3515
  %3761 = vmatpush1.bf16.msra.mxu0 %v3514
  %3762 = vmatprep.subr.bf16.mxu0 %v3519
  %3763 = vmatpush1.bf16.msra.mxu0 %v3518
  %3764 = vmatprep.subr.bf16.mxu0 %v3523
  %3765 = vmatpush1.bf16.msra.mxu0 %v3522
  %3766 = vmatprep.subr.bf16.mxu0 %v3527
  %3767 = vmatpush1.bf16.msra.mxu0 %v3526
  %3768 = vmatprep.subr.bf16.mxu0 %v3531
  %3769 = vmatpush1.bf16.msra.mxu0 %v3530
  %3770 = vmatprep.subr.bf16.mxu0 %v3535
  %3771 = vmatpush1.bf16.msra.mxu0 %v3534
  %3772 = vmatprep.subr.bf16.mxu0 %v3539
  %3773 = vmatpush1.bf16.msra.mxu0 %v3538
  %3774 = vmatprep.subr.bf16.mxu0 %v3543
  %3775 = vmatpush1.bf16.msra.mxu0 %v3542
  %3776 = vmatprep.subr.bf16.mxu0 %v3547
  %3777 = vmatpush1.bf16.msra.mxu0 %v3546
  %3778 = vmatprep.subr.bf16.mxu0 %v3551
  %3779 = vmatpush1.bf16.msra.mxu0 %v3550
  %3780 = vmatprep.subr.bf16.mxu0 %v3555
  %3781 = vmatpush1.bf16.msra.mxu0 %v3554
  %3782 = vmatprep.mubr.bf16.mxu0 %v1076
  %3783 = vmatmul.mubr.bf16.gmra.mrb[0].mxu0 %v1075
  %v3784 = vpop.f32.mrb[0].mxu0
  %v3785 = vadd.f32 0.0, %v3784
  %v3786 = vpop.f32.mrb[0].mxu0
  %v3787 = vadd.f32 0.0, %v3786
  %v3788 = vpop.f32.mrb[0].mxu0
  %v3789 = vpop.f32.mrb[0].mxu0
  %3790 = vdwg.mxu0
  %3791 = vmatprep.subr.bf16.mxu0 %v3559
  %3792 = vmatpush1.bf16.msra.mxu0 %v3558
  %3793 = vmatprep.subr.bf16.mxu0 %v3563
  %3794 = vmatpush1.bf16.msra.mxu0 %v3562
  %3795 = vmatprep.subr.bf16.mxu0 %v3567
  %3796 = vmatpush1.bf16.msra.mxu0 %v3566
  %3797 = vmatprep.subr.bf16.mxu0 %v3571
  %3798 = vmatpush1.bf16.msra.mxu0 %v3570
  %3799 = vmatprep.subr.bf16.mxu0 %v3575
  %3800 = vmatpush1.bf16.msra.mxu0 %v3574
  %3801 = vmatprep.subr.bf16.mxu0 %v3579
  %3802 = vmatpush1.bf16.msra.mxu0 %v3578
  %3803 = vmatprep.subr.bf16.mxu0 %v3583
  %3804 = vmatpush1.bf16.msra.mxu0 %v3582
  %3805 = vmatprep.subr.bf16.mxu0 %v3587
  %3806 = vmatpush1.bf16.msra.mxu0 %v3586
  %3807 = vmatprep.subr.bf16.mxu0 %v3591
  %3808 = vmatpush1.bf16.msra.mxu0 %v3590
  %3809 = vmatprep.subr.bf16.mxu0 %v3595
  %3810 = vmatpush1.bf16.msra.mxu0 %v3594
  %3811 = vmatprep.subr.bf16.mxu0 %v3599
  %3812 = vmatpush1.bf16.msra.mxu0 %v3598
  %3813 = vmatprep.subr.bf16.mxu0 %v3603
  %3814 = vmatpush1.bf16.msra.mxu0 %v3602
  %3815 = vmatprep.subr.bf16.mxu0 %v3607
  %3816 = vmatpush1.bf16.msra.mxu0 %v3606
  %3817 = vmatprep.subr.bf16.mxu0 %v3611
  %3818 = vmatpush1.bf16.msra.mxu0 %v3610
  %3819 = vmatprep.subr.bf16.mxu0 %v3615
  %3820 = vmatpush1.bf16.msra.mxu0 %v3614
  %3821 = vmatprep.subr.bf16.mxu0 %v3619
  %3822 = vmatpush1.bf16.msra.mxu0 %v3618
  %3823 = vmatprep.mubr.bf16.mxu0 %v1078
  %3824 = vmatmul.mubr.bf16.gmra.mrb[0].mxu0 %v1077
  %v3825 = vpop.f32.mrb[0].mxu0
  %v3826 = vadd.f32 %v3785, %v3825
  %v3827 = vpop.f32.mrb[0].mxu0
  %v3828 = vadd.f32 %v3787, %v3827
  %v3829 = vpop.f32.mrb[0].mxu0
  %v3830 = vpop.f32.mrb[0].mxu0
  %3831 = vdwg.mxu0
  %3832 = vmatprep.subr.bf16.mxu0 %v3497
  %3833 = vmatpush1.bf16.msra.mxu0 %v3496
  %3834 = vmatprep.subr.bf16.mxu0 %v3501
  %3835 = vmatpush1.bf16.msra.mxu0 %v3500
  %3836 = vmatprep.subr.bf16.mxu0 %v3505
  %3837 = vmatpush1.bf16.msra.mxu0 %v3504
  %3838 = vmatprep.subr.bf16.mxu0 %v3509
  %3839 = vmatpush1.bf16.msra.mxu0 %v3508
  %3840 = vmatprep.subr.bf16.mxu0 %v3513
  %3841 = vmatpush1.bf16.msra.mxu0 %v3512
  %3842 = vmatprep.subr.bf16.mxu0 %v3517
  %3843 = vmatpush1.bf16.msra.mxu0 %v3516
  %3844 = vmatprep.subr.bf16.mxu0 %v3521
  %3845 = vmatpush1.bf16.msra.mxu0 %v3520
  %3846 = vmatprep.subr.bf16.mxu0 %v3525
  %3847 = vmatpush1.bf16.msra.mxu0 %v3524
  %3848 = vmatprep.subr.bf16.mxu0 %v3529
  %3849 = vmatpush1.bf16.msra.mxu0 %v3528
  %3850 = vmatprep.subr.bf16.mxu0 %v3533
  %3851 = vmatpush1.bf16.msra.mxu0 %v3532
  %3852 = vmatprep.subr.bf16.mxu0 %v3537
  %3853 = vmatpush1.bf16.msra.mxu0 %v3536
  %3854 = vmatprep.subr.bf16.mxu0 %v3541
  %3855 = vmatpush1.bf16.msra.mxu0 %v3540
  %3856 = vmatprep.subr.bf16.mxu0 %v3545
  %3857 = vmatpush1.bf16.msra.mxu0 %v3544
  %3858 = vmatprep.subr.bf16.mxu0 %v3549
  %3859 = vmatpush1.bf16.msra.mxu0 %v3548
  %3860 = vmatprep.subr.bf16.mxu0 %v3553
  %3861 = vmatpush1.bf16.msra.mxu0 %v3552
  %3862 = vmatprep.subr.bf16.mxu0 %v3557
  %3863 = vmatpush1.bf16.msra.mxu0 %v3556
  %3864 = vmatprep.mubr.bf16.mxu0 %v1076
  %3865 = vmatmul.mubr.bf16.gmra.mrb[0].mxu0 %v1075
  %v3866 = vpop.f32.mrb[0].mxu0
  %v3867 = vadd.f32 0.0, %v3866
  %v3868 = vpop.f32.mrb[0].mxu0
  %v3869 = vadd.f32 0.0, %v3868
  %v3870 = vpop.f32.mrb[0].mxu0
  %v3871 = vpop.f32.mrb[0].mxu0
  %3872 = vdwg.mxu0
  %3873 = vmatprep.subr.bf16.mxu0 %v3561
  %3874 = vmatpush1.bf16.msra.mxu0 %v3560
  %3875 = vmatprep.subr.bf16.mxu0 %v3565
  %3876 = vmatpush1.bf16.msra.mxu0 %v3564
  %3877 = vmatprep.subr.bf16.mxu0 %v3569
  %3878 = vmatpush1.bf16.msra.mxu0 %v3568
  %3879 = vmatprep.subr.bf16.mxu0 %v3573
  %3880 = vmatpush1.bf16.msra.mxu0 %v3572
  %3881 = vmatprep.subr.bf16.mxu0 %v3577
  %3882 = vmatpush1.bf16.msra.mxu0 %v3576
  %3883 = vmatprep.subr.bf16.mxu0 %v3581
  %3884 = vmatpush1.bf16.msra.mxu0 %v3580
  %3885 = vmatprep.subr.bf16.mxu0 %v3585
  %3886 = vmatpush1.bf16.msra.mxu0 %v3584
  %3887 = vmatprep.subr.bf16.mxu0 %v3589
  %3888 = vmatpush1.bf16.msra.mxu0 %v3588
  %3889 = vmatprep.subr.bf16.mxu0 %v3593
  %3890 = vmatpush1.bf16.msra.mxu0 %v3592
  %3891 = vmatprep.subr.bf16.mxu0 %v3597
  %3892 = vmatpush1.bf16.msra.mxu0 %v3596
  %3893 = vmatprep.subr.bf16.mxu0 %v3601
  %3894 = vmatpush1.bf16.msra.mxu0 %v3600
  %3895 = vmatprep.subr.bf16.mxu0 %v3605
  %3896 = vmatpush1.bf16.msra.mxu0 %v3604
  %3897 = vmatprep.subr.bf16.mxu0 %v3609
  %3898 = vmatpush1.bf16.msra.mxu0 %v3608
  %3899 = vmatprep.subr.bf16.mxu0 %v3613
  %3900 = vmatpush1.bf16.msra.mxu0 %v3612
  %3901 = vmatprep.subr.bf16.mxu0 %v3617
  %3902 = vmatpush1.bf16.msra.mxu0 %v3616
  %3903 = vmatprep.subr.bf16.mxu0 %v3621
  %3904 = vmatpush1.bf16.msra.mxu0 %v3620
  %3905 = vmatprep.mubr.bf16.mxu0 %v1078
  %3906 = vmatmul.mubr.bf16.gmra.mrb[0].mxu0 %v1077
  %v3907 = vpop.f32.mrb[0].mxu0
  %v3908 = vadd.f32 %v3867, %v3907
  %v3909 = vpop.f32.mrb[0].mxu0
  %v3910 = vadd.f32 %v3869, %v3909
  %v3911 = vpop.f32.mrb[0].mxu0
  %v3912 = vpop.f32.mrb[0].mxu0
  %3913 = vdwg.mxu0
  %v3914 = vadd.f32 %v1086, %v2874
  %v3915 = vadd.f32 %v1087, %v2876
  %v3916 = vadd.f32 %v1088, %v2956
  %v3917 = vadd.f32 %v1089, %v2958
  %v3918 = vmul.f32 %v3914, 0.5
  %v3919 = vmul.f32 %v3915, 0.5
  %v3920 = vmul.f32 %v3916, 0.5
  %v3921 = vmul.f32 %v3917, 0.5
  %v3922 = vtanh.pop %v3918
  %v3923 = vtanh.pop %v3919
  %v3924 = vtanh.pop %v3920
  %v3925 = vtanh.pop %v3921
  %v3926 = vmul.f32 %v3922, 0.5
  %v3927 = vmul.f32 %v3923, 0.5
  %v3928 = vmul.f32 %v3924, 0.5
  %v3929 = vmul.f32 %v3925, 0.5
  %v3930 = vadd.f32 %v3926, 0.5
  %v3931 = vadd.f32 %v3927, 0.5
  %v3932 = vadd.f32 %v3928, 0.5
  %v3933 = vadd.f32 %v3929, 0.5
  %v3934 = vld [vmem:[%s2 + $0x30] sm:$0xff]
  %v3935 = vld [vmem:[%s2 + $0x38] sm:$0xff]
  %v3936 = vld [vmem:[%s2 + $0x70] sm:$0xff]
  %v3937 = vld [vmem:[%s2 + $0x78] sm:$0xff]
  %v3938 = vld [vmem:[%s2 + $0xb0] sm:$0xff]
  %v3939 = vld [vmem:[%s2 + $0xb8] sm:$0xff]
  %v3940 = vld [vmem:[%s2 + $0xf0] sm:$0xff]
  %v3941 = vld [vmem:[%s2 + $0xf8] sm:$0xff]
  %v3942 = vld [vmem:[%s2 + $0x130] sm:$0xff]
  %v3943 = vld [vmem:[%s2 + $0x138] sm:$0xff]
  %v3944 = vld [vmem:[%s2 + $0x170] sm:$0xff]
  %v3945 = vld [vmem:[%s2 + $0x178] sm:$0xff]
  %v3946 = vld [vmem:[%s2 + $0x1b0] sm:$0xff]
  %v3947 = vld [vmem:[%s2 + $0x1b8] sm:$0xff]
  %v3948 = vld [vmem:[%s2 + $0x1f0] sm:$0xff]
  %v3949 = vld [vmem:[%s2 + $0x1f8] sm:$0xff]
  %v3950 = vld [vmem:[%s2 + $0x230] sm:$0xff]
  %v3951 = vld [vmem:[%s2 + $0x238] sm:$0xff]
  %v3952 = vld [vmem:[%s2 + $0x270] sm:$0xff]
  %v3953 = vld [vmem:[%s2 + $0x278] sm:$0xff]
  %v3954 = vld [vmem:[%s2 + $0x2b0] sm:$0xff]
  %v3955 = vld [vmem:[%s2 + $0x2b8] sm:$0xff]
  %v3956 = vld [vmem:[%s2 + $0x2f0] sm:$0xff]
  %v3957 = vld [vmem:[%s2 + $0x2f8] sm:$0xff]
  %v3958 = vld [vmem:[%s2 + $0x330] sm:$0xff]
  %v3959 = vld [vmem:[%s2 + $0x338] sm:$0xff]
  %v3960 = vld [vmem:[%s2 + $0x370] sm:$0xff]
  %v3961 = vld [vmem:[%s2 + $0x378] sm:$0xff]
  %v3962 = vld [vmem:[%s2 + $0x3b0] sm:$0xff]
  %v3963 = vld [vmem:[%s2 + $0x3b8] sm:$0xff]
  %v3964 = vld [vmem:[%s2 + $0x3f0] sm:$0xff]
  %v3965 = vld [vmem:[%s2 + $0x3f8] sm:$0xff]
  %v3966 = vld [vmem:[%s2 + $0x430] sm:$0xff]
  %v3967 = vld [vmem:[%s2 + $0x438] sm:$0xff]
  %v3968 = vld [vmem:[%s2 + $0x470] sm:$0xff]
  %v3969 = vld [vmem:[%s2 + $0x478] sm:$0xff]
  %v3970 = vld [vmem:[%s2 + $0x4b0] sm:$0xff]
  %v3971 = vld [vmem:[%s2 + $0x4b8] sm:$0xff]
  %v3972 = vld [vmem:[%s2 + $0x4f0] sm:$0xff]
  %v3973 = vld [vmem:[%s2 + $0x4f8] sm:$0xff]
  %v3974 = vld [vmem:[%s2 + $0x530] sm:$0xff]
  %v3975 = vld [vmem:[%s2 + $0x538] sm:$0xff]
  %v3976 = vld [vmem:[%s2 + $0x570] sm:$0xff]
  %v3977 = vld [vmem:[%s2 + $0x578] sm:$0xff]
  %v3978 = vld [vmem:[%s2 + $0x5b0] sm:$0xff]
  %v3979 = vld [vmem:[%s2 + $0x5b8] sm:$0xff]
  %v3980 = vld [vmem:[%s2 + $0x5f0] sm:$0xff]
  %v3981 = vld [vmem:[%s2 + $0x5f8] sm:$0xff]
  %v3982 = vld [vmem:[%s2 + $0x630] sm:$0xff]
  %v3983 = vld [vmem:[%s2 + $0x638] sm:$0xff]
  %v3984 = vld [vmem:[%s2 + $0x670] sm:$0xff]
  %v3985 = vld [vmem:[%s2 + $0x678] sm:$0xff]
  %v3986 = vld [vmem:[%s2 + $0x6b0] sm:$0xff]
  %v3987 = vld [vmem:[%s2 + $0x6b8] sm:$0xff]
  %v3988 = vld [vmem:[%s2 + $0x6f0] sm:$0xff]
  %v3989 = vld [vmem:[%s2 + $0x6f8] sm:$0xff]
  %v3990 = vld [vmem:[%s2 + $0x730] sm:$0xff]
  %v3991 = vld [vmem:[%s2 + $0x738] sm:$0xff]
  %v3992 = vld [vmem:[%s2 + $0x770] sm:$0xff]
  %v3993 = vld [vmem:[%s2 + $0x778] sm:$0xff]
  %v3994 = vld [vmem:[%s2 + $0x7b0] sm:$0xff]
  %v3995 = vld [vmem:[%s2 + $0x7b8] sm:$0xff]
  %v3996 = vld [vmem:[%s2 + $0x7f0] sm:$0xff]
  %v3997 = vld [vmem:[%s2 + $0x7f8] sm:$0xff]
  %v3998 = vld [vmem:[%s2 + $0x830] sm:$0xff]
  %v3999 = vld [vmem:[%s2 + $0x838] sm:$0xff]
  %v4000 = vld [vmem:[%s2 + $0x870] sm:$0xff]
  %v4001 = vld [vmem:[%s2 + $0x878] sm:$0xff]
  %v4002 = vld [vmem:[%s2 + $0x8b0] sm:$0xff]
  %v4003 = vld [vmem:[%s2 + $0x8b8] sm:$0xff]
  %v4004 = vld [vmem:[%s2 + $0x8f0] sm:$0xff]
  %v4005 = vld [vmem:[%s2 + $0x8f8] sm:$0xff]
  %v4006 = vld [vmem:[%s2 + $0x930] sm:$0xff]
  %v4007 = vld [vmem:[%s2 + $0x938] sm:$0xff]
  %v4008 = vld [vmem:[%s2 + $0x970] sm:$0xff]
  %v4009 = vld [vmem:[%s2 + $0x978] sm:$0xff]
  %v4010 = vld [vmem:[%s2 + $0x9b0] sm:$0xff]
  %v4011 = vld [vmem:[%s2 + $0x9b8] sm:$0xff]
  %v4012 = vld [vmem:[%s2 + $0x9f0] sm:$0xff]
  %v4013 = vld [vmem:[%s2 + $0x9f8] sm:$0xff]
  %v4014 = vld [vmem:[%s2 + $0xa30] sm:$0xff]
  %v4015 = vld [vmem:[%s2 + $0xa38] sm:$0xff]
  %v4016 = vld [vmem:[%s2 + $0xa70] sm:$0xff]
  %v4017 = vld [vmem:[%s2 + $0xa78] sm:$0xff]
  %v4018 = vld [vmem:[%s2 + $0xab0] sm:$0xff]
  %v4019 = vld [vmem:[%s2 + $0xab8] sm:$0xff]
  %v4020 = vld [vmem:[%s2 + $0xaf0] sm:$0xff]
  %v4021 = vld [vmem:[%s2 + $0xaf8] sm:$0xff]
  %v4022 = vld [vmem:[%s2 + $0xb30] sm:$0xff]
  %v4023 = vld [vmem:[%s2 + $0xb38] sm:$0xff]
  %v4024 = vld [vmem:[%s2 + $0xb70] sm:$0xff]
  %v4025 = vld [vmem:[%s2 + $0xb78] sm:$0xff]
  %v4026 = vld [vmem:[%s2 + $0xbb0] sm:$0xff]
  %v4027 = vld [vmem:[%s2 + $0xbb8] sm:$0xff]
  %v4028 = vld [vmem:[%s2 + $0xbf0] sm:$0xff]
  %v4029 = vld [vmem:[%s2 + $0xbf8] sm:$0xff]
  %v4030 = vld [vmem:[%s2 + $0xc30] sm:$0xff]
  %v4031 = vld [vmem:[%s2 + $0xc38] sm:$0xff]
  %v4032 = vld [vmem:[%s2 + $0xc70] sm:$0xff]
  %v4033 = vld [vmem:[%s2 + $0xc78] sm:$0xff]
  %v4034 = vld [vmem:[%s2 + $0xcb0] sm:$0xff]
  %v4035 = vld [vmem:[%s2 + $0xcb8] sm:$0xff]
  %v4036 = vld [vmem:[%s2 + $0xcf0] sm:$0xff]
  %v4037 = vld [vmem:[%s2 + $0xcf8] sm:$0xff]
  %v4038 = vld [vmem:[%s2 + $0xd30] sm:$0xff]
  %v4039 = vld [vmem:[%s2 + $0xd38] sm:$0xff]
  %v4040 = vld [vmem:[%s2 + $0xd70] sm:$0xff]
  %v4041 = vld [vmem:[%s2 + $0xd78] sm:$0xff]
  %v4042 = vld [vmem:[%s2 + $0xdb0] sm:$0xff]
  %v4043 = vld [vmem:[%s2 + $0xdb8] sm:$0xff]
  %v4044 = vld [vmem:[%s2 + $0xdf0] sm:$0xff]
  %v4045 = vld [vmem:[%s2 + $0xdf8] sm:$0xff]
  %v4046 = vld [vmem:[%s2 + $0xe30] sm:$0xff]
  %v4047 = vld [vmem:[%s2 + $0xe38] sm:$0xff]
  %v4048 = vld [vmem:[%s2 + $0xe70] sm:$0xff]
  %v4049 = vld [vmem:[%s2 + $0xe78] sm:$0xff]
  %v4050 = vld [vmem:[%s2 + $0xeb0] sm:$0xff]
  %v4051 = vld [vmem:[%s2 + $0xeb8] sm:$0xff]
  %v4052 = vld [vmem:[%s2 + $0xef0] sm:$0xff]
  %v4053 = vld [vmem:[%s2 + $0xef8] sm:$0xff]
  %v4054 = vld [vmem:[%s2 + $0xf30] sm:$0xff]
  %v4055 = vld [vmem:[%s2 + $0xf38] sm:$0xff]
  %v4056 = vld [vmem:[%s2 + $0xf70] sm:$0xff]
  %v4057 = vld [vmem:[%s2 + $0xf78] sm:$0xff]
  %v4058 = vld [vmem:[%s2 + $0xfb0] sm:$0xff]
  %v4059 = vld [vmem:[%s2 + $0xfb8] sm:$0xff]
  %v4060 = vld [vmem:[%s2 + $0xff0] sm:$0xff]
  %v4061 = vld [vmem:[%s2 + $0xff8] sm:$0xff]
  %v4190 = vunpack.c.l.b16 %v3934
  %v4191 = vunpack.c.h.b16 %v3934
  %v4192 = vunpack.c.l.b16 %v3935
  %v4193 = vunpack.c.h.b16 %v3935
  %v4194 = vunpack.c.l.b16 %v3936
  %v4195 = vunpack.c.h.b16 %v3936
  %v4196 = vunpack.c.l.b16 %v3937
  %v4197 = vunpack.c.h.b16 %v3937
  %v4198 = vunpack.c.l.b16 %v3938
  %v4199 = vunpack.c.h.b16 %v3938
  %v4200 = vunpack.c.l.b16 %v3939
  %v4201 = vunpack.c.h.b16 %v3939
  %v4202 = vunpack.c.l.b16 %v3940
  %v4203 = vunpack.c.h.b16 %v3940
  %v4204 = vunpack.c.l.b16 %v3941
  %v4205 = vunpack.c.h.b16 %v3941
  %v4206 = vunpack.c.l.b16 %v3942
  %v4207 = vunpack.c.h.b16 %v3942
  %v4208 = vunpack.c.l.b16 %v3943
  %v4209 = vunpack.c.h.b16 %v3943
  %v4210 = vunpack.c.l.b16 %v3944
  %v4211 = vunpack.c.h.b16 %v3944
  %v4212 = vunpack.c.l.b16 %v3945
  %v4213 = vunpack.c.h.b16 %v3945
  %v4214 = vunpack.c.l.b16 %v3946
  %v4215 = vunpack.c.h.b16 %v3946
  %v4216 = vunpack.c.l.b16 %v3947
  %v4217 = vunpack.c.h.b16 %v3947
  %v4218 = vunpack.c.l.b16 %v3948
  %v4219 = vunpack.c.h.b16 %v3948
  %v4220 = vunpack.c.l.b16 %v3949
  %v4221 = vunpack.c.h.b16 %v3949
  %v4222 = vunpack.c.l.b16 %v3950
  %v4223 = vunpack.c.h.b16 %v3950
  %v4224 = vunpack.c.l.b16 %v3951
  %v4225 = vunpack.c.h.b16 %v3951
  %v4226 = vunpack.c.l.b16 %v3952
  %v4227 = vunpack.c.h.b16 %v3952
  %v4228 = vunpack.c.l.b16 %v3953
  %v4229 = vunpack.c.h.b16 %v3953
  %v4230 = vunpack.c.l.b16 %v3954
  %v4231 = vunpack.c.h.b16 %v3954
  %v4232 = vunpack.c.l.b16 %v3955
  %v4233 = vunpack.c.h.b16 %v3955
  %v4234 = vunpack.c.l.b16 %v3956
  %v4235 = vunpack.c.h.b16 %v3956
  %v4236 = vunpack.c.l.b16 %v3957
  %v4237 = vunpack.c.h.b16 %v3957
  %v4238 = vunpack.c.l.b16 %v3958
  %v4239 = vunpack.c.h.b16 %v3958
  %v4240 = vunpack.c.l.b16 %v3959
  %v4241 = vunpack.c.h.b16 %v3959
  %v4242 = vunpack.c.l.b16 %v3960
  %v4243 = vunpack.c.h.b16 %v3960
  %v4244 = vunpack.c.l.b16 %v3961
  %v4245 = vunpack.c.h.b16 %v3961
  %v4246 = vunpack.c.l.b16 %v3962
  %v4247 = vunpack.c.h.b16 %v3962
  %v4248 = vunpack.c.l.b16 %v3963
  %v4249 = vunpack.c.h.b16 %v3963
  %v4250 = vunpack.c.l.b16 %v3964
  %v4251 = vunpack.c.h.b16 %v3964
  %v4252 = vunpack.c.l.b16 %v3965
  %v4253 = vunpack.c.h.b16 %v3965
  %v4254 = vunpack.c.l.b16 %v3966
  %v4255 = vunpack.c.h.b16 %v3966
  %v4256 = vunpack.c.l.b16 %v3967
  %v4257 = vunpack.c.h.b16 %v3967
  %v4258 = vunpack.c.l.b16 %v3968
  %v4259 = vunpack.c.h.b16 %v3968
  %v4260 = vunpack.c.l.b16 %v3969
  %v4261 = vunpack.c.h.b16 %v3969
  %v4262 = vunpack.c.l.b16 %v3970
  %v4263 = vunpack.c.h.b16 %v3970
  %v4264 = vunpack.c.l.b16 %v3971
  %v4265 = vunpack.c.h.b16 %v3971
  %v4266 = vunpack.c.l.b16 %v3972
  %v4267 = vunpack.c.h.b16 %v3972
  %v4268 = vunpack.c.l.b16 %v3973
  %v4269 = vunpack.c.h.b16 %v3973
  %v4270 = vunpack.c.l.b16 %v3974
  %v4271 = vunpack.c.h.b16 %v3974
  %v4272 = vunpack.c.l.b16 %v3975
  %v4273 = vunpack.c.h.b16 %v3975
  %v4274 = vunpack.c.l.b16 %v3976
  %v4275 = vunpack.c.h.b16 %v3976
  %v4276 = vunpack.c.l.b16 %v3977
  %v4277 = vunpack.c.h.b16 %v3977
  %v4278 = vunpack.c.l.b16 %v3978
  %v4279 = vunpack.c.h.b16 %v3978
  %v4280 = vunpack.c.l.b16 %v3979
  %v4281 = vunpack.c.h.b16 %v3979
  %v4282 = vunpack.c.l.b16 %v3980
  %v4283 = vunpack.c.h.b16 %v3980
  %v4284 = vunpack.c.l.b16 %v3981
  %v4285 = vunpack.c.h.b16 %v3981
  %v4286 = vunpack.c.l.b16 %v3982
  %v4287 = vunpack.c.h.b16 %v3982
  %v4288 = vunpack.c.l.b16 %v3983
  %v4289 = vunpack.c.h.b16 %v3983
  %v4290 = vunpack.c.l.b16 %v3984
  %v4291 = vunpack.c.h.b16 %v3984
  %v4292 = vunpack.c.l.b16 %v3985
  %v4293 = vunpack.c.h.b16 %v3985
  %v4294 = vunpack.c.l.b16 %v3986
  %v4295 = vunpack.c.h.b16 %v3986
  %v4296 = vunpack.c.l.b16 %v3987
  %v4297 = vunpack.c.h.b16 %v3987
  %v4298 = vunpack.c.l.b16 %v3988
  %v4299 = vunpack.c.h.b16 %v3988
  %v4300 = vunpack.c.l.b16 %v3989
  %v4301 = vunpack.c.h.b16 %v3989
  %v4302 = vunpack.c.l.b16 %v3990
  %v4303 = vunpack.c.h.b16 %v3990
  %v4304 = vunpack.c.l.b16 %v3991
  %v4305 = vunpack.c.h.b16 %v3991
  %v4306 = vunpack.c.l.b16 %v3992
  %v4307 = vunpack.c.h.b16 %v3992
  %v4308 = vunpack.c.l.b16 %v3993
  %v4309 = vunpack.c.h.b16 %v3993
  %v4310 = vunpack.c.l.b16 %v3994
  %v4311 = vunpack.c.h.b16 %v3994
  %v4312 = vunpack.c.l.b16 %v3995
  %v4313 = vunpack.c.h.b16 %v3995
  %v4314 = vunpack.c.l.b16 %v3996
  %v4315 = vunpack.c.h.b16 %v3996
  %v4316 = vunpack.c.l.b16 %v3997
  %v4317 = vunpack.c.h.b16 %v3997
  %v4318 = vunpack.c.l.b16 %v3998
  %v4319 = vunpack.c.h.b16 %v3998
  %v4320 = vunpack.c.l.b16 %v3999
  %v4321 = vunpack.c.h.b16 %v3999
  %v4322 = vunpack.c.l.b16 %v4000
  %v4323 = vunpack.c.h.b16 %v4000
  %v4324 = vunpack.c.l.b16 %v4001
  %v4325 = vunpack.c.h.b16 %v4001
  %v4326 = vunpack.c.l.b16 %v4002
  %v4327 = vunpack.c.h.b16 %v4002
  %v4328 = vunpack.c.l.b16 %v4003
  %v4329 = vunpack.c.h.b16 %v4003
  %v4330 = vunpack.c.l.b16 %v4004
  %v4331 = vunpack.c.h.b16 %v4004
  %v4332 = vunpack.c.l.b16 %v4005
  %v4333 = vunpack.c.h.b16 %v4005
  %v4334 = vunpack.c.l.b16 %v4006
  %v4335 = vunpack.c.h.b16 %v4006
  %v4336 = vunpack.c.l.b16 %v4007
  %v4337 = vunpack.c.h.b16 %v4007
  %v4338 = vunpack.c.l.b16 %v4008
  %v4339 = vunpack.c.h.b16 %v4008
  %v4340 = vunpack.c.l.b16 %v4009
  %v4341 = vunpack.c.h.b16 %v4009
  %v4342 = vunpack.c.l.b16 %v4010
  %v4343 = vunpack.c.h.b16 %v4010
  %v4344 = vunpack.c.l.b16 %v4011
  %v4345 = vunpack.c.h.b16 %v4011
  %v4346 = vunpack.c.l.b16 %v4012
  %v4347 = vunpack.c.h.b16 %v4012
  %v4348 = vunpack.c.l.b16 %v4013
  %v4349 = vunpack.c.h.b16 %v4013
  %v4350 = vunpack.c.l.b16 %v4014
  %v4351 = vunpack.c.h.b16 %v4014
  %v4352 = vunpack.c.l.b16 %v4015
  %v4353 = vunpack.c.h.b16 %v4015
  %v4354 = vunpack.c.l.b16 %v4016
  %v4355 = vunpack.c.h.b16 %v4016
  %v4356 = vunpack.c.l.b16 %v4017
  %v4357 = vunpack.c.h.b16 %v4017
  %v4358 = vunpack.c.l.b16 %v4018
  %v4359 = vunpack.c.h.b16 %v4018
  %v4360 = vunpack.c.l.b16 %v4019
  %v4361 = vunpack.c.h.b16 %v4019
  %v4362 = vunpack.c.l.b16 %v4020
  %v4363 = vunpack.c.h.b16 %v4020
  %v4364 = vunpack.c.l.b16 %v4021
  %v4365 = vunpack.c.h.b16 %v4021
  %v4366 = vunpack.c.l.b16 %v4022
  %v4367 = vunpack.c.h.b16 %v4022
  %v4368 = vunpack.c.l.b16 %v4023
  %v4369 = vunpack.c.h.b16 %v4023
  %v4370 = vunpack.c.l.b16 %v4024
  %v4371 = vunpack.c.h.b16 %v4024
  %v4372 = vunpack.c.l.b16 %v4025
  %v4373 = vunpack.c.h.b16 %v4025
  %v4374 = vunpack.c.l.b16 %v4026
  %v4375 = vunpack.c.h.b16 %v4026
  %v4376 = vunpack.c.l.b16 %v4027
  %v4377 = vunpack.c.h.b16 %v4027
  %v4378 = vunpack.c.l.b16 %v4028
  %v4379 = vunpack.c.h.b16 %v4028
  %v4380 = vunpack.c.l.b16 %v4029
  %v4381 = vunpack.c.h.b16 %v4029
  %v4382 = vunpack.c.l.b16 %v4030
  %v4383 = vunpack.c.h.b16 %v4030
  %v4384 = vunpack.c.l.b16 %v4031
  %v4385 = vunpack.c.h.b16 %v4031
  %v4386 = vunpack.c.l.b16 %v4032
  %v4387 = vunpack.c.h.b16 %v4032
  %v4388 = vunpack.c.l.b16 %v4033
  %v4389 = vunpack.c.h.b16 %v4033
  %v4390 = vunpack.c.l.b16 %v4034
  %v4391 = vunpack.c.h.b16 %v4034
  %v4392 = vunpack.c.l.b16 %v4035
  %v4393 = vunpack.c.h.b16 %v4035
  %v4394 = vunpack.c.l.b16 %v4036
  %v4395 = vunpack.c.h.b16 %v4036
  %v4396 = vunpack.c.l.b16 %v4037
  %v4397 = vunpack.c.h.b16 %v4037
  %v4398 = vunpack.c.l.b16 %v4038
  %v4399 = vunpack.c.h.b16 %v4038
  %v4400 = vunpack.c.l.b16 %v4039
  %v4401 = vunpack.c.h.b16 %v4039
  %v4402 = vunpack.c.l.b16 %v4040
  %v4403 = vunpack.c.h.b16 %v4040
  %v4404 = vunpack.c.l.b16 %v4041
  %v4405 = vunpack.c.h.b16 %v4041
  %v4406 = vunpack.c.l.b16 %v4042
  %v4407 = vunpack.c.h.b16 %v4042
  %v4408 = vunpack.c.l.b16 %v4043
  %v4409 = vunpack.c.h.b16 %v4043
  %v4410 = vunpack.c.l.b16 %v4044
  %v4411 = vunpack.c.h.b16 %v4044
  %v4412 = vunpack.c.l.b16 %v4045
  %v4413 = vunpack.c.h.b16 %v4045
  %v4414 = vunpack.c.l.b16 %v4046
  %v4415 = vunpack.c.h.b16 %v4046
  %v4416 = vunpack.c.l.b16 %v4047
  %v4417 = vunpack.c.h.b16 %v4047
  %v4418 = vunpack.c.l.b16 %v4048
  %v4419 = vunpack.c.h.b16 %v4048
  %v4420 = vunpack.c.l.b16 %v4049
  %v4421 = vunpack.c.h.b16 %v4049
  %v4422 = vunpack.c.l.b16 %v4050
  %v4423 = vunpack.c.h.b16 %v4050
  %v4424 = vunpack.c.l.b16 %v4051
  %v4425 = vunpack.c.h.b16 %v4051
  %v4426 = vunpack.c.l.b16 %v4052
  %v4427 = vunpack.c.h.b16 %v4052
  %v4428 = vunpack.c.l.b16 %v4053
  %v4429 = vunpack.c.h.b16 %v4053
  %v4430 = vunpack.c.l.b16 %v4054
  %v4431 = vunpack.c.h.b16 %v4054
  %v4432 = vunpack.c.l.b16 %v4055
  %v4433 = vunpack.c.h.b16 %v4055
  %v4434 = vunpack.c.l.b16 %v4056
  %v4435 = vunpack.c.h.b16 %v4056
  %v4436 = vunpack.c.l.b16 %v4057
  %v4437 = vunpack.c.h.b16 %v4057
  %v4438 = vunpack.c.l.b16 %v4058
  %v4439 = vunpack.c.h.b16 %v4058
  %v4440 = vunpack.c.l.b16 %v4059
  %v4441 = vunpack.c.h.b16 %v4059
  %v4442 = vunpack.c.l.b16 %v4060
  %v4443 = vunpack.c.h.b16 %v4060
  %v4444 = vunpack.c.l.b16 %v4061
  %v4445 = vunpack.c.h.b16 %v4061
  %v4446 = vpack.c.b16 %v4194, %v4190
  %v4447 = vpack.c.b16 %v4195, %v4191
  %v4448 = vpack.c.b16 %v4196, %v4192
  %v4449 = vpack.c.b16 %v4197, %v4193
  %v4450 = vpack.c.b16 %v4202, %v4198
  %v4451 = vpack.c.b16 %v4203, %v4199
  %v4452 = vpack.c.b16 %v4204, %v4200
  %v4453 = vpack.c.b16 %v4205, %v4201
  %v4454 = vpack.c.b16 %v4210, %v4206
  %v4455 = vpack.c.b16 %v4211, %v4207
  %v4456 = vpack.c.b16 %v4212, %v4208
  %v4457 = vpack.c.b16 %v4213, %v4209
  %v4458 = vpack.c.b16 %v4218, %v4214
  %v4459 = vpack.c.b16 %v4219, %v4215
  %v4460 = vpack.c.b16 %v4220, %v4216
  %v4461 = vpack.c.b16 %v4221, %v4217
  %v4462 = vpack.c.b16 %v4226, %v4222
  %v4463 = vpack.c.b16 %v4227, %v4223
  %v4464 = vpack.c.b16 %v4228, %v4224
  %v4465 = vpack.c.b16 %v4229, %v4225
  %v4466 = vpack.c.b16 %v4234, %v4230
  %v4467 = vpack.c.b16 %v4235, %v4231
  %v4468 = vpack.c.b16 %v4236, %v4232
  %v4469 = vpack.c.b16 %v4237, %v4233
  %v4470 = vpack.c.b16 %v4242, %v4238
  %v4471 = vpack.c.b16 %v4243, %v4239
  %v4472 = vpack.c.b16 %v4244, %v4240
  %v4473 = vpack.c.b16 %v4245, %v4241
  %v4474 = vpack.c.b16 %v4250, %v4246
  %v4475 = vpack.c.b16 %v4251, %v4247
  %v4476 = vpack.c.b16 %v4252, %v4248
  %v4477 = vpack.c.b16 %v4253, %v4249
  %v4478 = vpack.c.b16 %v4258, %v4254
  %v4479 = vpack.c.b16 %v4259, %v4255
  %v4480 = vpack.c.b16 %v4260, %v4256
  %v4481 = vpack.c.b16 %v4261, %v4257
  %v4482 = vpack.c.b16 %v4266, %v4262
  %v4483 = vpack.c.b16 %v4267, %v4263
  %v4484 = vpack.c.b16 %v4268, %v4264
  %v4485 = vpack.c.b16 %v4269, %v4265
  %v4486 = vpack.c.b16 %v4274, %v4270
  %v4487 = vpack.c.b16 %v4275, %v4271
  %v4488 = vpack.c.b16 %v4276, %v4272
  %v4489 = vpack.c.b16 %v4277, %v4273
  %v4490 = vpack.c.b16 %v4282, %v4278
  %v4491 = vpack.c.b16 %v4283, %v4279
  %v4492 = vpack.c.b16 %v4284, %v4280
  %v4493 = vpack.c.b16 %v4285, %v4281
  %v4494 = vpack.c.b16 %v4290, %v4286
  %v4495 = vpack.c.b16 %v4291, %v4287
  %v4496 = vpack.c.b16 %v4292, %v4288
  %v4497 = vpack.c.b16 %v4293, %v4289
  %v4498 = vpack.c.b16 %v4298, %v4294
  %v4499 = vpack.c.b16 %v4299, %v4295
  %v4500 = vpack.c.b16 %v4300, %v4296
  %v4501 = vpack.c.b16 %v4301, %v4297
  %v4502 = vpack.c.b16 %v4306, %v4302
  %v4503 = vpack.c.b16 %v4307, %v4303
  %v4504 = vpack.c.b16 %v4308, %v4304
  %v4505 = vpack.c.b16 %v4309, %v4305
  %v4506 = vpack.c.b16 %v4314, %v4310
  %v4507 = vpack.c.b16 %v4315, %v4311
  %v4508 = vpack.c.b16 %v4316, %v4312
  %v4509 = vpack.c.b16 %v4317, %v4313
  %v4510 = vpack.c.b16 %v4322, %v4318
  %v4511 = vpack.c.b16 %v4323, %v4319
  %v4512 = vpack.c.b16 %v4324, %v4320
  %v4513 = vpack.c.b16 %v4325, %v4321
  %v4514 = vpack.c.b16 %v4330, %v4326
  %v4515 = vpack.c.b16 %v4331, %v4327
  %v4516 = vpack.c.b16 %v4332, %v4328
  %v4517 = vpack.c.b16 %v4333, %v4329
  %v4518 = vpack.c.b16 %v4338, %v4334
  %v4519 = vpack.c.b16 %v4339, %v4335
  %v4520 = vpack.c.b16 %v4340, %v4336
  %v4521 = vpack.c.b16 %v4341, %v4337
  %v4522 = vpack.c.b16 %v4346, %v4342
  %v4523 = vpack.c.b16 %v4347, %v4343
  %v4524 = vpack.c.b16 %v4348, %v4344
  %v4525 = vpack.c.b16 %v4349, %v4345
  %v4526 = vpack.c.b16 %v4354, %v4350
  %v4527 = vpack.c.b16 %v4355, %v4351
  %v4528 = vpack.c.b16 %v4356, %v4352
  %v4529 = vpack.c.b16 %v4357, %v4353
  %v4530 = vpack.c.b16 %v4362, %v4358
  %v4531 = vpack.c.b16 %v4363, %v4359
  %v4532 = vpack.c.b16 %v4364, %v4360
  %v4533 = vpack.c.b16 %v4365, %v4361
  %v4534 = vpack.c.b16 %v4370, %v4366
  %v4535 = vpack.c.b16 %v4371, %v4367
  %v4536 = vpack.c.b16 %v4372, %v4368
  %v4537 = vpack.c.b16 %v4373, %v4369
  %v4538 = vpack.c.b16 %v4378, %v4374
  %v4539 = vpack.c.b16 %v4379, %v4375
  %v4540 = vpack.c.b16 %v4380, %v4376
  %v4541 = vpack.c.b16 %v4381, %v4377
  %v4542 = vpack.c.b16 %v4386, %v4382
  %v4543 = vpack.c.b16 %v4387, %v4383
  %v4544 = vpack.c.b16 %v4388, %v4384
  %v4545 = vpack.c.b16 %v4389, %v4385
  %v4546 = vpack.c.b16 %v4394, %v4390
  %v4547 = vpack.c.b16 %v4395, %v4391
  %v4548 = vpack.c.b16 %v4396, %v4392
  %v4549 = vpack.c.b16 %v4397, %v4393
  %v4550 = vpack.c.b16 %v4402, %v4398
  %v4551 = vpack.c.b16 %v4403, %v4399
  %v4552 = vpack.c.b16 %v4404, %v4400
  %v4553 = vpack.c.b16 %v4405, %v4401
  %v4554 = vpack.c.b16 %v4410, %v4406
  %v4555 = vpack.c.b16 %v4411, %v4407
  %v4556 = vpack.c.b16 %v4412, %v4408
  %v4557 = vpack.c.b16 %v4413, %v4409
  %v4558 = vpack.c.b16 %v4418, %v4414
  %v4559 = vpack.c.b16 %v4419, %v4415
  %v4560 = vpack.c.b16 %v4420, %v4416
  %v4561 = vpack.c.b16 %v4421, %v4417
  %v4562 = vpack.c.b16 %v4426, %v4422
  %v4563 = vpack.c.b16 %v4427, %v4423
  %v4564 = vpack.c.b16 %v4428, %v4424
  %v4565 = vpack.c.b16 %v4429, %v4425
  %v4566 = vpack.c.b16 %v4434, %v4430
  %v4567 = vpack.c.b16 %v4435, %v4431
  %v4568 = vpack.c.b16 %v4436, %v4432
  %v4569 = vpack.c.b16 %v4437, %v4433
  %v4570 = vpack.c.b16 %v4442, %v4438
  %v4571 = vpack.c.b16 %v4443, %v4439
  %v4572 = vpack.c.b16 %v4444, %v4440
  %v4573 = vpack.c.b16 %v4445, %v4441
  %4702 = vmatprep.subr.bf16.mxu0 %v4447
  %4703 = vmatpush1.bf16.msra.mxu0 %v4446
  %4704 = vmatprep.subr.bf16.mxu0 %v4451
  %4705 = vmatpush1.bf16.msra.mxu0 %v4450
  %4706 = vmatprep.subr.bf16.mxu0 %v4455
  %4707 = vmatpush1.bf16.msra.mxu0 %v4454
  %4708 = vmatprep.subr.bf16.mxu0 %v4459
  %4709 = vmatpush1.bf16.msra.mxu0 %v4458
  %4710 = vmatprep.subr.bf16.mxu0 %v4463
  %4711 = vmatpush1.bf16.msra.mxu0 %v4462
  %4712 = vmatprep.subr.bf16.mxu0 %v4467
  %4713 = vmatpush1.bf16.msra.mxu0 %v4466
  %4714 = vmatprep.subr.bf16.mxu0 %v4471
  %4715 = vmatpush1.bf16.msra.mxu0 %v4470
  %4716 = vmatprep.subr.bf16.mxu0 %v4475
  %4717 = vmatpush1.bf16.msra.mxu0 %v4474
  %4718 = vmatprep.subr.bf16.mxu0 %v4479
  %4719 = vmatpush1.bf16.msra.mxu0 %v4478
  %4720 = vmatprep.subr.bf16.mxu0 %v4483
  %4721 = vmatpush1.bf16.msra.mxu0 %v4482
  %4722 = vmatprep.subr.bf16.mxu0 %v4487
  %4723 = vmatpush1.bf16.msra.mxu0 %v4486
  %4724 = vmatprep.subr.bf16.mxu0 %v4491
  %4725 = vmatpush1.bf16.msra.mxu0 %v4490
  %4726 = vmatprep.subr.bf16.mxu0 %v4495
  %4727 = vmatpush1.bf16.msra.mxu0 %v4494
  %4728 = vmatprep.subr.bf16.mxu0 %v4499
  %4729 = vmatpush1.bf16.msra.mxu0 %v4498
  %4730 = vmatprep.subr.bf16.mxu0 %v4503
  %4731 = vmatpush1.bf16.msra.mxu0 %v4502
  %4732 = vmatprep.subr.bf16.mxu0 %v4507
  %4733 = vmatpush1.bf16.msra.mxu0 %v4506
  %4734 = vmatprep.mubr.bf16.mxu0 %v1076
  %4735 = vmatmul.mubr.bf16.gmra.mrb[0].mxu0 %v1075
  %v4736 = vpop.f32.mrb[0].mxu0
  %v4737 = vadd.f32 0.0, %v4736
  %v4738 = vpop.f32.mrb[0].mxu0
  %v4739 = vadd.f32 0.0, %v4738
  %v4740 = vpop.f32.mrb[0].mxu0
  %v4741 = vpop.f32.mrb[0].mxu0
  %4742 = vdwg.mxu0
  %4743 = vmatprep.subr.bf16.mxu0 %v4511
  %4744 = vmatpush1.bf16.msra.mxu0 %v4510
  %4745 = vmatprep.subr.bf16.mxu0 %v4515
  %4746 = vmatpush1.bf16.msra.mxu0 %v4514
  %4747 = vmatprep.subr.bf16.mxu0 %v4519
  %4748 = vmatpush1.bf16.msra.mxu0 %v4518
  %4749 = vmatprep.subr.bf16.mxu0 %v4523
  %4750 = vmatpush1.bf16.msra.mxu0 %v4522
  %4751 = vmatprep.subr.bf16.mxu0 %v4527
  %4752 = vmatpush1.bf16.msra.mxu0 %v4526
  %4753 = vmatprep.subr.bf16.mxu0 %v4531
  %4754 = vmatpush1.bf16.msra.mxu0 %v4530
  %4755 = vmatprep.subr.bf16.mxu0 %v4535
  %4756 = vmatpush1.bf16.msra.mxu0 %v4534
  %4757 = vmatprep.subr.bf16.mxu0 %v4539
  %4758 = vmatpush1.bf16.msra.mxu0 %v4538
  %4759 = vmatprep.subr.bf16.mxu0 %v4543
  %4760 = vmatpush1.bf16.msra.mxu0 %v4542
  %4761 = vmatprep.subr.bf16.mxu0 %v4547
  %4762 = vmatpush1.bf16.msra.mxu0 %v4546
  %4763 = vmatprep.subr.bf16.mxu0 %v4551
  %4764 = vmatpush1.bf16.msra.mxu0 %v4550
  %4765 = vmatprep.subr.bf16.mxu0 %v4555
  %4766 = vmatpush1.bf16.msra.mxu0 %v4554
  %4767 = vmatprep.subr.bf16.mxu0 %v4559
  %4768 = vmatpush1.bf16.msra.mxu0 %v4558
  %4769 = vmatprep.subr.bf16.mxu0 %v4563
  %4770 = vmatpush1.bf16.msra.mxu0 %v4562
  %4771 = vmatprep.subr.bf16.mxu0 %v4567
  %4772 = vmatpush1.bf16.msra.mxu0 %v4566
  %4773 = vmatprep.subr.bf16.mxu0 %v4571
  %4774 = vmatpush1.bf16.msra.mxu0 %v4570
  %4775 = vmatprep.mubr.bf16.mxu0 %v1078
  %4776 = vmatmul.mubr.bf16.gmra.mrb[0].mxu0 %v1077
  %v4777 = vpop.f32.mrb[0].mxu0
  %v4778 = vadd.f32 %v4737, %v4777
  %v4779 = vpop.f32.mrb[0].mxu0
  %v4780 = vadd.f32 %v4739, %v4779
  %v4781 = vpop.f32.mrb[0].mxu0
  %v4782 = vpop.f32.mrb[0].mxu0
  %4783 = vdwg.mxu0
  %4784 = vmatprep.subr.bf16.mxu0 %v4449
  %4785 = vmatpush1.bf16.msra.mxu0 %v4448
  %4786 = vmatprep.subr.bf16.mxu0 %v4453
  %4787 = vmatpush1.bf16.msra.mxu0 %v4452
  %4788 = vmatprep.subr.bf16.mxu0 %v4457
  %4789 = vmatpush1.bf16.msra.mxu0 %v4456
  %4790 = vmatprep.subr.bf16.mxu0 %v4461
  %4791 = vmatpush1.bf16.msra.mxu0 %v4460
  %4792 = vmatprep.subr.bf16.mxu0 %v4465
  %4793 = vmatpush1.bf16.msra.mxu0 %v4464
  %4794 = vmatprep.subr.bf16.mxu0 %v4469
  %4795 = vmatpush1.bf16.msra.mxu0 %v4468
  %4796 = vmatprep.subr.bf16.mxu0 %v4473
  %4797 = vmatpush1.bf16.msra.mxu0 %v4472
  %4798 = vmatprep.subr.bf16.mxu0 %v4477
  %4799 = vmatpush1.bf16.msra.mxu0 %v4476
  %4800 = vmatprep.subr.bf16.mxu0 %v4481
  %4801 = vmatpush1.bf16.msra.mxu0 %v4480
  %4802 = vmatprep.subr.bf16.mxu0 %v4485
  %4803 = vmatpush1.bf16.msra.mxu0 %v4484
  %4804 = vmatprep.subr.bf16.mxu0 %v4489
  %4805 = vmatpush1.bf16.msra.mxu0 %v4488
  %4806 = vmatprep.subr.bf16.mxu0 %v4493
  %4807 = vmatpush1.bf16.msra.mxu0 %v4492
  %4808 = vmatprep.subr.bf16.mxu0 %v4497
  %4809 = vmatpush1.bf16.msra.mxu0 %v4496
  %4810 = vmatprep.subr.bf16.mxu0 %v4501
  %4811 = vmatpush1.bf16.msra.mxu0 %v4500
  %4812 = vmatprep.subr.bf16.mxu0 %v4505
  %4813 = vmatpush1.bf16.msra.mxu0 %v4504
  %4814 = vmatprep.subr.bf16.mxu0 %v4509
  %4815 = vmatpush1.bf16.msra.mxu0 %v4508
  %4816 = vmatprep.mubr.bf16.mxu0 %v1076
  %4817 = vmatmul.mubr.bf16.gmra.mrb[0].mxu0 %v1075
  %v4818 = vpop.f32.mrb[0].mxu0
  %v4819 = vadd.f32 0.0, %v4818
  %v4820 = vpop.f32.mrb[0].mxu0
  %v4821 = vadd.f32 0.0, %v4820
  %v4822 = vpop.f32.mrb[0].mxu0
  %v4823 = vpop.f32.mrb[0].mxu0
  %4824 = vdwg.mxu0
  %4825 = vmatprep.subr.bf16.mxu0 %v4513
  %4826 = vmatpush1.bf16.msra.mxu0 %v4512
  %4827 = vmatprep.subr.bf16.mxu0 %v4517
  %4828 = vmatpush1.bf16.msra.mxu0 %v4516
  %4829 = vmatprep.subr.bf16.mxu0 %v4521
  %4830 = vmatpush1.bf16.msra.mxu0 %v4520
  %4831 = vmatprep.subr.bf16.mxu0 %v4525
  %4832 = vmatpush1.bf16.msra.mxu0 %v4524
  %4833 = vmatprep.subr.bf16.mxu0 %v4529
  %4834 = vmatpush1.bf16.msra.mxu0 %v4528
  %4835 = vmatprep.subr.bf16.mxu0 %v4533
  %4836 = vmatpush1.bf16.msra.mxu0 %v4532
  %4837 = vmatprep.subr.bf16.mxu0 %v4537
  %4838 = vmatpush1.bf16.msra.mxu0 %v4536
  %4839 = vmatprep.subr.bf16.mxu0 %v4541
  %4840 = vmatpush1.bf16.msra.mxu0 %v4540
  %4841 = vmatprep.subr.bf16.mxu0 %v4545
  %4842 = vmatpush1.bf16.msra.mxu0 %v4544
  %4843 = vmatprep.subr.bf16.mxu0 %v4549
  %4844 = vmatpush1.bf16.msra.mxu0 %v4548
  %4845 = vmatprep.subr.bf16.mxu0 %v4553
  %4846 = vmatpush1.bf16.msra.mxu0 %v4552
  %4847 = vmatprep.subr.bf16.mxu0 %v4557
  %4848 = vmatpush1.bf16.msra.mxu0 %v4556
  %4849 = vmatprep.subr.bf16.mxu0 %v4561
  %4850 = vmatpush1.bf16.msra.mxu0 %v4560
  %4851 = vmatprep.subr.bf16.mxu0 %v4565
  %4852 = vmatpush1.bf16.msra.mxu0 %v4564
  %4853 = vmatprep.subr.bf16.mxu0 %v4569
  %4854 = vmatpush1.bf16.msra.mxu0 %v4568
  %4855 = vmatprep.subr.bf16.mxu0 %v4573
  %4856 = vmatpush1.bf16.msra.mxu0 %v4572
  %4857 = vmatprep.mubr.bf16.mxu0 %v1078
  %4858 = vmatmul.mubr.bf16.gmra.mrb[0].mxu0 %v1077
  %v4859 = vpop.f32.mrb[0].mxu0
  %v4860 = vadd.f32 %v4819, %v4859
  %v4861 = vpop.f32.mrb[0].mxu0
  %v4862 = vadd.f32 %v4821, %v4861
  %v4863 = vpop.f32.mrb[0].mxu0
  %v4864 = vpop.f32.mrb[0].mxu0
  %4865 = vdwg.mxu0
  %v4866 = vadd.f32 %v1090, %v3826
  %v4867 = vadd.f32 %v1091, %v3828
  %v4868 = vadd.f32 %v1092, %v3908
  %v4869 = vadd.f32 %v1093, %v3910
  %v4870 = vtanh.pop %v4866
  %v4871 = vtanh.pop %v4867
  %v4872 = vtanh.pop %v4868
  %v4873 = vtanh.pop %v4869
  %v4874 = vadd.f32 %v1094, %v4778
  %v4875 = vadd.f32 %v1095, %v4780
  %v4876 = vadd.f32 %v1096, %v4860
  %v4877 = vadd.f32 %v1097, %v4862
  %v4878 = vmul.f32 %v4874, 0.5
  %v4879 = vmul.f32 %v4875, 0.5
  %v4880 = vmul.f32 %v4876, 0.5
  %v4881 = vmul.f32 %v4877, 0.5
  %v4882 = vtanh.pop %v4878
  %v4883 = vtanh.pop %v4879
  %v4884 = vtanh.pop %v4880
  %v4885 = vtanh.pop %v4881
  %v4886 = vmul.f32 %v4882, 0.5
  %v4887 = vmul.f32 %v4883, 0.5
  %v4888 = vmul.f32 %v4884, 0.5
  %v4889 = vmul.f32 %v4885, 0.5
  %v4890 = vadd.f32 %v4886, 0.5
  %v4891 = vadd.f32 %v4887, 0.5
  %v4892 = vadd.f32 %v4888, 0.5
  %v4893 = vadd.f32 %v4889, 0.5
  %v4894 = vmul.f32 %v3930, %v1071
  %v4895 = vmul.f32 %v3931, %v1072
  %v4896 = vmul.f32 %v3932, %v1073
  %v4897 = vmul.f32 %v3933, %v1074
  %v4898 = vmul.f32 %v2978, %v4870
  %v4899 = vmul.f32 %v2979, %v4871
  %v4900 = vmul.f32 %v2980, %v4872
  %v4901 = vmul.f32 %v2981, %v4873
  %v4902 = vadd.f32 %v4894, %v4898
  %v4903 = vadd.f32 %v4895, %v4899
  %v4904 = vadd.f32 %v4896, %v4900
  %v4905 = vadd.f32 %v4897, %v4901
  %v4906 = vtanh.pop %v4902
  %v4907 = vtanh.pop %v4903
  %v4908 = vtanh.pop %v4904
  %v4909 = vtanh.pop %v4905
  %v4910 = vmul.f32 %v4890, %v4906
  %v4911 = vmul.f32 %v4891, %v4907
  %v4912 = vmul.f32 %v4892, %v4908
  %v4913 = vmul.f32 %v4893, %v4909
  %v4914 = vpack.c.bf16 %v4910, %v4910
  %v4915 = vpack.c.bf16 %v4911, %v4911
  %v4916 = vpack.c.bf16 %v4912, %v4912
  %v4917 = vpack.c.bf16 %v4913, %v4913
  %s4918 = smul.u32 1, 16
  %s4919 = smul.addr %s4918, 8
  %s4920 = scalar_lea.vmem [#allocation2], %s4919
  %v4921 = vld [vmem:[%s4920] sm:$0xff]
  %v4922 = vld [vmem:[%s4920 + $0x8] sm:$0xff]
  %v4923 = vld [vmem:[%s4920 + $0x10] sm:$0xff]
  %v4924 = vld [vmem:[%s4920 + $0x18] sm:$0xff]
  %v4925 = vld [vmem:[%s4920 + $0x20] sm:$0xff]
  %v4926 = vld [vmem:[%s4920 + $0x28] sm:$0xff]
  %v4927 = vld [vmem:[%s4920 + $0x30] sm:$0xff]
  %v4928 = vld [vmem:[%s4920 + $0x38] sm:$0xff]
  %v4929 = vld [vmem:[%s4920 + $0x40] sm:$0xff]
  %v4930 = vld [vmem:[%s4920 + $0x48] sm:$0xff]
  %v4931 = vld [vmem:[%s4920 + $0x50] sm:$0xff]
  %v4932 = vld [vmem:[%s4920 + $0x58] sm:$0xff]
  %v4933 = vld [vmem:[%s4920 + $0x60] sm:$0xff]
  %v4934 = vld [vmem:[%s4920 + $0x68] sm:$0xff]
  %v4935 = vld [vmem:[%s4920 + $0x70] sm:$0xff]
  %v4936 = vld [vmem:[%s4920 + $0x78] sm:$0xff]
  %4937 = vmatprep.subr.bf16.mxu0 %v1611
  %4938 = vmatpush1.bf16.msra.mxu0 %v1610
  %4939 = vmatprep.subr.bf16.mxu0 %v1615
  %4940 = vmatpush1.bf16.msra.mxu0 %v1614
  %4941 = vmatprep.subr.bf16.mxu0 %v1619
  %4942 = vmatpush1.bf16.msra.mxu0 %v1618
  %4943 = vmatprep.subr.bf16.mxu0 %v1623
  %4944 = vmatpush1.bf16.msra.mxu0 %v1622
  %4945 = vmatprep.subr.bf16.mxu0 %v1627
  %4946 = vmatpush1.bf16.msra.mxu0 %v1626
  %4947 = vmatprep.subr.bf16.mxu0 %v1631
  %4948 = vmatpush1.bf16.msra.mxu0 %v1630
  %4949 = vmatprep.subr.bf16.mxu0 %v1635
  %4950 = vmatpush1.bf16.msra.mxu0 %v1634
  %4951 = vmatprep.subr.bf16.mxu0 %v1639
  %4952 = vmatpush1.bf16.msra.mxu0 %v1638
  %4953 = vmatprep.subr.bf16.mxu0 %v1643
  %4954 = vmatpush1.bf16.msra.mxu0 %v1642
  %4955 = vmatprep.subr.bf16.mxu0 %v1647
  %4956 = vmatpush1.bf16.msra.mxu0 %v1646
  %4957 = vmatprep.subr.bf16.mxu0 %v1651
  %4958 = vmatpush1.bf16.msra.mxu0 %v1650
  %4959 = vmatprep.subr.bf16.mxu0 %v1655
  %4960 = vmatpush1.bf16.msra.mxu0 %v1654
  %4961 = vmatprep.subr.bf16.mxu0 %v1659
  %4962 = vmatpush1.bf16.msra.mxu0 %v1658
  %4963 = vmatprep.subr.bf16.mxu0 %v1663
  %4964 = vmatpush1.bf16.msra.mxu0 %v1662
  %4965 = vmatprep.subr.bf16.mxu0 %v1667
  %4966 = vmatpush1.bf16.msra.mxu0 %v1666
  %4967 = vmatprep.subr.bf16.mxu0 %v1671
  %4968 = vmatpush1.bf16.msra.mxu0 %v1670
  %4969 = vmatprep.mubr.bf16.mxu0 %v4915
  %4970 = vmatmul.mubr.bf16.gmra.mrb[0].mxu0 %v4914
  %v4971 = vpop.f32.mrb[0].mxu0
  %v4972 = vadd.f32 0.0, %v4971
  %v4973 = vpop.f32.mrb[0].mxu0
  %v4974 = vadd.f32 0.0, %v4973
  %v4975 = vpop.f32.mrb[0].mxu0
  %v4976 = vpop.f32.mrb[0].mxu0
  %4977 = vdwg.mxu0
  %4978 = vmatprep.subr.bf16.mxu0 %v1675
  %4979 = vmatpush1.bf16.msra.mxu0 %v1674
  %4980 = vmatprep.subr.bf16.mxu0 %v1679
  %4981 = vmatpush1.bf16.msra.mxu0 %v1678
  %4982 = vmatprep.subr.bf16.mxu0 %v1683
  %4983 = vmatpush1.bf16.msra.mxu0 %v1682
  %4984 = vmatprep.subr.bf16.mxu0 %v1687
  %4985 = vmatpush1.bf16.msra.mxu0 %v1686
  %4986 = vmatprep.subr.bf16.mxu0 %v1691
  %4987 = vmatpush1.bf16.msra.mxu0 %v1690
  %4988 = vmatprep.subr.bf16.mxu0 %v1695
  %4989 = vmatpush1.bf16.msra.mxu0 %v1694
  %4990 = vmatprep.subr.bf16.mxu0 %v1699
  %4991 = vmatpush1.bf16.msra.mxu0 %v1698
  %4992 = vmatprep.subr.bf16.mxu0 %v1703
  %4993 = vmatpush1.bf16.msra.mxu0 %v1702
  %4994 = vmatprep.subr.bf16.mxu0 %v1707
  %4995 = vmatpush1.bf16.msra.mxu0 %v1706
  %4996 = vmatprep.subr.bf16.mxu0 %v1711
  %4997 = vmatpush1.bf16.msra.mxu0 %v1710
  %4998 = vmatprep.subr.bf16.mxu0 %v1715
  %4999 = vmatpush1.bf16.msra.mxu0 %v1714
  %5000 = vmatprep.subr.bf16.mxu0 %v1719
  %5001 = vmatpush1.bf16.msra.mxu0 %v1718
  %5002 = vmatprep.subr.bf16.mxu0 %v1723
  %5003 = vmatpush1.bf16.msra.mxu0 %v1722
  %5004 = vmatprep.subr.bf16.mxu0 %v1727
  %5005 = vmatpush1.bf16.msra.mxu0 %v1726
  %5006 = vmatprep.subr.bf16.mxu0 %v1731
  %5007 = vmatpush1.bf16.msra.mxu0 %v1730
  %5008 = vmatprep.subr.bf16.mxu0 %v1735
  %5009 = vmatpush1.bf16.msra.mxu0 %v1734
  %5010 = vmatprep.mubr.bf16.mxu0 %v4917
  %5011 = vmatmul.mubr.bf16.gmra.mrb[0].mxu0 %v4916
  %v5012 = vpop.f32.mrb[0].mxu0
  %v5013 = vadd.f32 %v4972, %v5012
  %v5014 = vpop.f32.mrb[0].mxu0
  %v5015 = vadd.f32 %v4974, %v5014
  %v5016 = vpop.f32.mrb[0].mxu0
  %v5017 = vpop.f32.mrb[0].mxu0
  %5018 = vdwg.mxu0
  %5019 = vmatprep.subr.bf16.mxu0 %v1613
  %5020 = vmatpush1.bf16.msra.mxu0 %v1612
  %5021 = vmatprep.subr.bf16.mxu0 %v1617
  %5022 = vmatpush1.bf16.msra.mxu0 %v1616
  %5023 = vmatprep.subr.bf16.mxu0 %v1621
  %5024 = vmatpush1.bf16.msra.mxu0 %v1620
  %5025 = vmatprep.subr.bf16.mxu0 %v1625
  %5026 = vmatpush1.bf16.msra.mxu0 %v1624
  %5027 = vmatprep.subr.bf16.mxu0 %v1629
  %5028 = vmatpush1.bf16.msra.mxu0 %v1628
  %5029 = vmatprep.subr.bf16.mxu0 %v1633
  %5030 = vmatpush1.bf16.msra.mxu0 %v1632
  %5031 = vmatprep.subr.bf16.mxu0 %v1637
  %5032 = vmatpush1.bf16.msra.mxu0 %v1636
  %5033 = vmatprep.subr.bf16.mxu0 %v1641
  %5034 = vmatpush1.bf16.msra.mxu0 %v1640
  %5035 = vmatprep.subr.bf16.mxu0 %v1645
  %5036 = vmatpush1.bf16.msra.mxu0 %v1644
  %5037 = vmatprep.subr.bf16.mxu0 %v1649
  %5038 = vmatpush1.bf16.msra.mxu0 %v1648
  %5039 = vmatprep.subr.bf16.mxu0 %v1653
  %5040 = vmatpush1.bf16.msra.mxu0 %v1652
  %5041 = vmatprep.subr.bf16.mxu0 %v1657
  %5042 = vmatpush1.bf16.msra.mxu0 %v1656
  %5043 = vmatprep.subr.bf16.mxu0 %v1661
  %5044 = vmatpush1.bf16.msra.mxu0 %v1660
  %5045 = vmatprep.subr.bf16.mxu0 %v1665
  %5046 = vmatpush1.bf16.msra.mxu0 %v1664
  %5047 = vmatprep.subr.bf16.mxu0 %v1669
  %5048 = vmatpush1.bf16.msra.mxu0 %v1668
  %5049 = vmatprep.subr.bf16.mxu0 %v1673
  %5050 = vmatpush1.bf16.msra.mxu0 %v1672
  %5051 = vmatprep.mubr.bf16.mxu0 %v4915
  %5052 = vmatmul.mubr.bf16.gmra.mrb[0].mxu0 %v4914
  %v5053 = vpop.f32.mrb[0].mxu0
  %v5054 = vadd.f32 0.0, %v5053
  %v5055 = vpop.f32.mrb[0].mxu0
  %v5056 = vadd.f32 0.0, %v5055
  %v5057 = vpop.f32.mrb[0].mxu0
  %v5058 = vpop.f32.mrb[0].mxu0
  %5059 = vdwg.mxu0
  %5060 = vmatprep.subr.bf16.mxu0 %v1677
  %5061 = vmatpush1.bf16.msra.mxu0 %v1676
  %5062 = vmatprep.subr.bf16.mxu0 %v1681
  %5063 = vmatpush1.bf16.msra.mxu0 %v1680
  %5064 = vmatprep.subr.bf16.mxu0 %v1685
  %5065 = vmatpush1.bf16.msra.mxu0 %v1684
  %5066 = vmatprep.subr.bf16.mxu0 %v1689
  %5067 = vmatpush1.bf16.msra.mxu0 %v1688
  %5068 = vmatprep.subr.bf16.mxu0 %v1693
  %5069 = vmatpush1.bf16.msra.mxu0 %v1692
  %5070 = vmatprep.subr.bf16.mxu0 %v1697
  %5071 = vmatpush1.bf16.msra.mxu0 %v1696
  %5072 = vmatprep.subr.bf16.mxu0 %v1701
  %5073 = vmatpush1.bf16.msra.mxu0 %v1700
  %5074 = vmatprep.subr.bf16.mxu0 %v1705
  %5075 = vmatpush1.bf16.msra.mxu0 %v1704
  %5076 = vmatprep.subr.bf16.mxu0 %v1709
  %5077 = vmatpush1.bf16.msra.mxu0 %v1708
  %5078 = vmatprep.subr.bf16.mxu0 %v1713
  %5079 = vmatpush1.bf16.msra.mxu0 %v1712
  %5080 = vmatprep.subr.bf16.mxu0 %v1717
  %5081 = vmatpush1.bf16.msra.mxu0 %v1716
  %5082 = vmatprep.subr.bf16.mxu0 %v1721
  %5083 = vmatpush1.bf16.msra.mxu0 %v1720
  %5084 = vmatprep.subr.bf16.mxu0 %v1725
  %5085 = vmatpush1.bf16.msra.mxu0 %v1724
  %5086 = vmatprep.subr.bf16.mxu0 %v1729
  %5087 = vmatpush1.bf16.msra.mxu0 %v1728
  %5088 = vmatprep.subr.bf16.mxu0 %v1733
  %5089 = vmatpush1.bf16.msra.mxu0 %v1732
  %5090 = vmatprep.subr.bf16.mxu0 %v1737
  %5091 = vmatpush1.bf16.msra.mxu0 %v1736
  %5092 = vmatprep.mubr.bf16.mxu0 %v4917
  %5093 = vmatmul.mubr.bf16.gmra.mrb[0].mxu0 %v4916
  %v5094 = vpop.f32.mrb[0].mxu0
  %v5095 = vadd.f32 %v5054, %v5094
  %v5096 = vpop.f32.mrb[0].mxu0
  %v5097 = vadd.f32 %v5056, %v5096
  %v5098 = vpop.f32.mrb[0].mxu0
  %v5099 = vpop.f32.mrb[0].mxu0
  %5100 = vdwg.mxu0
  %5101 = vmatprep.subr.bf16.mxu0 %v2543
  %5102 = vmatpush1.bf16.msra.mxu0 %v2542
  %5103 = vmatprep.subr.bf16.mxu0 %v2547
  %5104 = vmatpush1.bf16.msra.mxu0 %v2546
  %5105 = vmatprep.subr.bf16.mxu0 %v2551
  %5106 = vmatpush1.bf16.msra.mxu0 %v2550
  %5107 = vmatprep.subr.bf16.mxu0 %v2555
  %5108 = vmatpush1.bf16.msra.mxu0 %v2554
  %5109 = vmatprep.subr.bf16.mxu0 %v2559
  %5110 = vmatpush1.bf16.msra.mxu0 %v2558
  %5111 = vmatprep.subr.bf16.mxu0 %v2563
  %5112 = vmatpush1.bf16.msra.mxu0 %v2562
  %5113 = vmatprep.subr.bf16.mxu0 %v2567
  %5114 = vmatpush1.bf16.msra.mxu0 %v2566
  %5115 = vmatprep.subr.bf16.mxu0 %v2571
  %5116 = vmatpush1.bf16.msra.mxu0 %v2570
  %5117 = vmatprep.subr.bf16.mxu0 %v2575
  %5118 = vmatpush1.bf16.msra.mxu0 %v2574
  %5119 = vmatprep.subr.bf16.mxu0 %v2579
  %5120 = vmatpush1.bf16.msra.mxu0 %v2578
  %5121 = vmatprep.subr.bf16.mxu0 %v2583
  %5122 = vmatpush1.bf16.msra.mxu0 %v2582
  %5123 = vmatprep.subr.bf16.mxu0 %v2587
  %5124 = vmatpush1.bf16.msra.mxu0 %v2586
  %5125 = vmatprep.subr.bf16.mxu0 %v2591
  %5126 = vmatpush1.bf16.msra.mxu0 %v2590
  %5127 = vmatprep.subr.bf16.mxu0 %v2595
  %5128 = vmatpush1.bf16.msra.mxu0 %v2594
  %5129 = vmatprep.subr.bf16.mxu0 %v2599
  %5130 = vmatpush1.bf16.msra.mxu0 %v2598
  %5131 = vmatprep.subr.bf16.mxu0 %v2603
  %5132 = vmatpush1.bf16.msra.mxu0 %v2602
  %5133 = vmatprep.mubr.bf16.mxu0 %v4915
  %5134 = vmatmul.mubr.bf16.gmra.mrb[0].mxu0 %v4914
  %v5135 = vpop.f32.mrb[0].mxu0
  %v5136 = vadd.f32 0.0, %v5135
  %v5137 = vpop.f32.mrb[0].mxu0
  %v5138 = vadd.f32 0.0, %v5137
  %v5139 = vpop.f32.mrb[0].mxu0
  %v5140 = vpop.f32.mrb[0].mxu0
  %5141 = vdwg.mxu0
  %5142 = vmatprep.subr.bf16.mxu0 %v2607
  %5143 = vmatpush1.bf16.msra.mxu0 %v2606
  %5144 = vmatprep.subr.bf16.mxu0 %v2611
  %5145 = vmatpush1.bf16.msra.mxu0 %v2610
  %5146 = vmatprep.subr.bf16.mxu0 %v2615
  %5147 = vmatpush1.bf16.msra.mxu0 %v2614
  %5148 = vmatprep.subr.bf16.mxu0 %v2619
  %5149 = vmatpush1.bf16.msra.mxu0 %v2618
  %5150 = vmatprep.subr.bf16.mxu0 %v2623
  %5151 = vmatpush1.bf16.msra.mxu0 %v2622
  %5152 = vmatprep.subr.bf16.mxu0 %v2627
  %5153 = vmatpush1.bf16.msra.mxu0 %v2626
  %5154 = vmatprep.subr.bf16.mxu0 %v2631
  %5155 = vmatpush1.bf16.msra.mxu0 %v2630
  %5156 = vmatprep.subr.bf16.mxu0 %v2635
  %5157 = vmatpush1.bf16.msra.mxu0 %v2634
  %5158 = vmatprep.subr.bf16.mxu0 %v2639
  %5159 = vmatpush1.bf16.msra.mxu0 %v2638
  %5160 = vmatprep.subr.bf16.mxu0 %v2643
  %5161 = vmatpush1.bf16.msra.mxu0 %v2642
  %5162 = vmatprep.subr.bf16.mxu0 %v2647
  %5163 = vmatpush1.bf16.msra.mxu0 %v2646
  %5164 = vmatprep.subr.bf16.mxu0 %v2651
  %5165 = vmatpush1.bf16.msra.mxu0 %v2650
  %5166 = vmatprep.subr.bf16.mxu0 %v2655
  %5167 = vmatpush1.bf16.msra.mxu0 %v2654
  %5168 = vmatprep.subr.bf16.mxu0 %v2659
  %5169 = vmatpush1.bf16.msra.mxu0 %v2658
  %5170 = vmatprep.subr.bf16.mxu0 %v2663
  %5171 = vmatpush1.bf16.msra.mxu0 %v2662
  %5172 = vmatprep.subr.bf16.mxu0 %v2667
  %5173 = vmatpush1.bf16.msra.mxu0 %v2666
  %5174 = vmatprep.mubr.bf16.mxu0 %v4917
  %5175 = vmatmul.mubr.bf16.gmra.mrb[0].mxu0 %v4916
  %v5176 = vpop.f32.mrb[0].mxu0
  %v5177 = vadd.f32 %v5136, %v5176
  %v5178 = vpop.f32.mrb[0].mxu0
  %v5179 = vadd.f32 %v5138, %v5178
  %v5180 = vpop.f32.mrb[0].mxu0
  %v5181 = vpop.f32.mrb[0].mxu0
  %5182 = vdwg.mxu0
  %5183 = vmatprep.subr.bf16.mxu0 %v2545
  %5184 = vmatpush1.bf16.msra.mxu0 %v2544
  %5185 = vmatprep.subr.bf16.mxu0 %v2549
  %5186 = vmatpush1.bf16.msra.mxu0 %v2548
  %5187 = vmatprep.subr.bf16.mxu0 %v2553
  %5188 = vmatpush1.bf16.msra.mxu0 %v2552
  %5189 = vmatprep.subr.bf16.mxu0 %v2557
  %5190 = vmatpush1.bf16.msra.mxu0 %v2556
  %5191 = vmatprep.subr.bf16.mxu0 %v2561
  %5192 = vmatpush1.bf16.msra.mxu0 %v2560
  %5193 = vmatprep.subr.bf16.mxu0 %v2565
  %5194 = vmatpush1.bf16.msra.mxu0 %v2564
  %5195 = vmatprep.subr.bf16.mxu0 %v2569
  %5196 = vmatpush1.bf16.msra.mxu0 %v2568
  %5197 = vmatprep.subr.bf16.mxu0 %v2573
  %5198 = vmatpush1.bf16.msra.mxu0 %v2572
  %5199 = vmatprep.subr.bf16.mxu0 %v2577
  %5200 = vmatpush1.bf16.msra.mxu0 %v2576
  %5201 = vmatprep.subr.bf16.mxu0 %v2581
  %5202 = vmatpush1.bf16.msra.mxu0 %v2580
  %5203 = vmatprep.subr.bf16.mxu0 %v2585
  %5204 = vmatpush1.bf16.msra.mxu0 %v2584
  %5205 = vmatprep.subr.bf16.mxu0 %v2589
  %5206 = vmatpush1.bf16.msra.mxu0 %v2588
  %5207 = vmatprep.subr.bf16.mxu0 %v2593
  %5208 = vmatpush1.bf16.msra.mxu0 %v2592
  %5209 = vmatprep.subr.bf16.mxu0 %v2597
  %5210 = vmatpush1.bf16.msra.mxu0 %v2596
  %5211 = vmatprep.subr.bf16.mxu0 %v2601
  %5212 = vmatpush1.bf16.msra.mxu0 %v2600
  %5213 = vmatprep.subr.bf16.mxu0 %v2605
  %5214 = vmatpush1.bf16.msra.mxu0 %v2604
  %5215 = vmatprep.mubr.bf16.mxu0 %v4915
  %5216 = vmatmul.mubr.bf16.gmra.mrb[0].mxu0 %v4914
  %v5217 = vpop.f32.mrb[0].mxu0
  %v5218 = vadd.f32 0.0, %v5217
  %v5219 = vpop.f32.mrb[0].mxu0
  %v5220 = vadd.f32 0.0, %v5219
  %v5221 = vpop.f32.mrb[0].mxu0
  %v5222 = vpop.f32.mrb[0].mxu0
  %5223 = vdwg.mxu0
  %5224 = vmatprep.subr.bf16.mxu0 %v2609
  %5225 = vmatpush1.bf16.msra.mxu0 %v2608
  %5226 = vmatprep.subr.bf16.mxu0 %v2613
  %5227 = vmatpush1.bf16.msra.mxu0 %v2612
  %5228 = vmatprep.subr.bf16.mxu0 %v2617
  %5229 = vmatpush1.bf16.msra.mxu0 %v2616
  %5230 = vmatprep.subr.bf16.mxu0 %v2621
  %5231 = vmatpush1.bf16.msra.mxu0 %v2620
  %5232 = vmatprep.subr.bf16.mxu0 %v2625
  %5233 = vmatpush1.bf16.msra.mxu0 %v2624
  %5234 = vmatprep.subr.bf16.mxu0 %v2629
  %5235 = vmatpush1.bf16.msra.mxu0 %v2628
  %5236 = vmatprep.subr.bf16.mxu0 %v2633
  %5237 = vmatpush1.bf16.msra.mxu0 %v2632
  %5238 = vmatprep.subr.bf16.mxu0 %v2637
  %5239 = vmatpush1.bf16.msra.mxu0 %v2636
  %5240 = vmatprep.subr.bf16.mxu0 %v2641
  %5241 = vmatpush1.bf16.msra.mxu0 %v2640
  %5242 = vmatprep.subr.bf16.mxu0 %v2645
  %5243 = vmatpush1.bf16.msra.mxu0 %v2644
  %5244 = vmatprep.subr.bf16.mxu0 %v2649
  %5245 = vmatpush1.bf16.msra.mxu0 %v2648
  %5246 = vmatprep.subr.bf16.mxu0 %v2653
  %5247 = vmatpush1.bf16.msra.mxu0 %v2652
  %5248 = vmatprep.subr.bf16.mxu0 %v2657
  %5249 = vmatpush1.bf16.msra.mxu0 %v2656
  %5250 = vmatprep.subr.bf16.mxu0 %v2661
  %5251 = vmatpush1.bf16.msra.mxu0 %v2660
  %5252 = vmatprep.subr.bf16.mxu0 %v2665
  %5253 = vmatpush1.bf16.msra.mxu0 %v2664
  %5254 = vmatprep.subr.bf16.mxu0 %v2669
  %5255 = vmatpush1.bf16.msra.mxu0 %v2668
  %5256 = vmatprep.mubr.bf16.mxu0 %v4917
  %5257 = vmatmul.mubr.bf16.gmra.mrb[0].mxu0 %v4916
  %v5258 = vpop.f32.mrb[0].mxu0
  %v5259 = vadd.f32 %v5218, %v5258
  %v5260 = vpop.f32.mrb[0].mxu0
  %v5261 = vadd.f32 %v5220, %v5260
  %v5262 = vpop.f32.mrb[0].mxu0
  %v5263 = vpop.f32.mrb[0].mxu0
  %5264 = vdwg.mxu0
  %v5265 = vadd.f32 %v4921, %v5013
  %v5266 = vadd.f32 %v4922, %v5015
  %v5267 = vadd.f32 %v4923, %v5095
  %v5268 = vadd.f32 %v4924, %v5097
  %v5269 = vmul.f32 %v5265, 0.5
  %v5270 = vmul.f32 %v5266, 0.5
  %v5271 = vmul.f32 %v5267, 0.5
  %v5272 = vmul.f32 %v5268, 0.5
  %v5273 = vtanh.pop %v5269
  %v5274 = vtanh.pop %v5270
  %v5275 = vtanh.pop %v5271
  %v5276 = vtanh.pop %v5272
  %v5277 = vmul.f32 %v5273, 0.5
  %v5278 = vmul.f32 %v5274, 0.5
  %v5279 = vmul.f32 %v5275, 0.5
  %v5280 = vmul.f32 %v5276, 0.5
  %v5281 = vadd.f32 %v5277, 0.5
  %v5282 = vadd.f32 %v5278, 0.5
  %v5283 = vadd.f32 %v5279, 0.5
  %v5284 = vadd.f32 %v5280, 0.5
  %5285 = vmatprep.subr.bf16.mxu0 %v3495
  %5286 = vmatpush1.bf16.msra.mxu0 %v3494
  %5287 = vmatprep.subr.bf16.mxu0 %v3499
  %5288 = vmatpush1.bf16.msra.mxu0 %v3498
  %5289 = vmatprep.subr.bf16.mxu0 %v3503
  %5290 = vmatpush1.bf16.msra.mxu0 %v3502
  %5291 = vmatprep.subr.bf16.mxu0 %v3507
  %5292 = vmatpush1.bf16.msra.mxu0 %v3506
  %5293 = vmatprep.subr.bf16.mxu0 %v3511
  %5294 = vmatpush1.bf16.msra.mxu0 %v3510
  %5295 = vmatprep.subr.bf16.mxu0 %v3515
  %5296 = vmatpush1.bf16.msra.mxu0 %v3514
  %5297 = vmatprep.subr.bf16.mxu0 %v3519
  %5298 = vmatpush1.bf16.msra.mxu0 %v3518
  %5299 = vmatprep.subr.bf16.mxu0 %v3523
  %5300 = vmatpush1.bf16.msra.mxu0 %v3522
  %5301 = vmatprep.subr.bf16.mxu0 %v3527
  %5302 = vmatpush1.bf16.msra.mxu0 %v3526
  %5303 = vmatprep.subr.bf16.mxu0 %v3531
  %5304 = vmatpush1.bf16.msra.mxu0 %v3530
  %5305 = vmatprep.subr.bf16.mxu0 %v3535
  %5306 = vmatpush1.bf16.msra.mxu0 %v3534
  %5307 = vmatprep.subr.bf16.mxu0 %v3539
  %5308 = vmatpush1.bf16.msra.mxu0 %v3538
  %5309 = vmatprep.subr.bf16.mxu0 %v3543
  %5310 = vmatpush1.bf16.msra.mxu0 %v3542
  %5311 = vmatprep.subr.bf16.mxu0 %v3547
  %5312 = vmatpush1.bf16.msra.mxu0 %v3546
  %5313 = vmatprep.subr.bf16.mxu0 %v3551
  %5314 = vmatpush1.bf16.msra.mxu0 %v3550
  %5315 = vmatprep.subr.bf16.mxu0 %v3555
  %5316 = vmatpush1.bf16.msra.mxu0 %v3554
  %5317 = vmatprep.mubr.bf16.mxu0 %v4915
  %5318 = vmatmul.mubr.bf16.gmra.mrb[0].mxu0 %v4914
  %v5319 = vpop.f32.mrb[0].mxu0
  %v5320 = vadd.f32 0.0, %v5319
  %v5321 = vpop.f32.mrb[0].mxu0
  %v5322 = vadd.f32 0.0, %v5321
  %v5323 = vpop.f32.mrb[0].mxu0
  %v5324 = vpop.f32.mrb[0].mxu0
  %5325 = vdwg.mxu0
  %5326 = vmatprep.subr.bf16.mxu0 %v3559
  %5327 = vmatpush1.bf16.msra.mxu0 %v3558
  %5328 = vmatprep.subr.bf16.mxu0 %v3563
  %5329 = vmatpush1.bf16.msra.mxu0 %v3562
  %5330 = vmatprep.subr.bf16.mxu0 %v3567
  %5331 = vmatpush1.bf16.msra.mxu0 %v3566
  %5332 = vmatprep.subr.bf16.mxu0 %v3571
  %5333 = vmatpush1.bf16.msra.mxu0 %v3570
  %5334 = vmatprep.subr.bf16.mxu0 %v3575
  %5335 = vmatpush1.bf16.msra.mxu0 %v3574
  %5336 = vmatprep.subr.bf16.mxu0 %v3579
  %5337 = vmatpush1.bf16.msra.mxu0 %v3578
  %5338 = vmatprep.subr.bf16.mxu0 %v3583
  %5339 = vmatpush1.bf16.msra.mxu0 %v3582
  %5340 = vmatprep.subr.bf16.mxu0 %v3587
  %5341 = vmatpush1.bf16.msra.mxu0 %v3586
  %5342 = vmatprep.subr.bf16.mxu0 %v3591
  %5343 = vmatpush1.bf16.msra.mxu0 %v3590
  %5344 = vmatprep.subr.bf16.mxu0 %v3595
  %5345 = vmatpush1.bf16.msra.mxu0 %v3594
  %5346 = vmatprep.subr.bf16.mxu0 %v3599
  %5347 = vmatpush1.bf16.msra.mxu0 %v3598
  %5348 = vmatprep.subr.bf16.mxu0 %v3603
  %5349 = vmatpush1.bf16.msra.mxu0 %v3602
  %5350 = vmatprep.subr.bf16.mxu0 %v3607
  %5351 = vmatpush1.bf16.msra.mxu0 %v3606
  %5352 = vmatprep.subr.bf16.mxu0 %v3611
  %5353 = vmatpush1.bf16.msra.mxu0 %v3610
  %5354 = vmatprep.subr.bf16.mxu0 %v3615
  %5355 = vmatpush1.bf16.msra.mxu0 %v3614
  %5356 = vmatprep.subr.bf16.mxu0 %v3619
  %5357 = vmatpush1.bf16.msra.mxu0 %v3618
  %5358 = vmatprep.mubr.bf16.mxu0 %v4917
  %5359 = vmatmul.mubr.bf16.gmra.mrb[0].mxu0 %v4916
  %v5360 = vpop.f32.mrb[0].mxu0
  %v5361 = vadd.f32 %v5320, %v5360
  %v5362 = vpop.f32.mrb[0].mxu0
  %v5363 = vadd.f32 %v5322, %v5362
  %v5364 = vpop.f32.mrb[0].mxu0
  %v5365 = vpop.f32.mrb[0].mxu0
  %5366 = vdwg.mxu0
  %5367 = vmatprep.subr.bf16.mxu0 %v3497
  %5368 = vmatpush1.bf16.msra.mxu0 %v3496
  %5369 = vmatprep.subr.bf16.mxu0 %v3501
  %5370 = vmatpush1.bf16.msra.mxu0 %v3500
  %5371 = vmatprep.subr.bf16.mxu0 %v3505
  %5372 = vmatpush1.bf16.msra.mxu0 %v3504
  %5373 = vmatprep.subr.bf16.mxu0 %v3509
  %5374 = vmatpush1.bf16.msra.mxu0 %v3508
  %5375 = vmatprep.subr.bf16.mxu0 %v3513
  %5376 = vmatpush1.bf16.msra.mxu0 %v3512
  %5377 = vmatprep.subr.bf16.mxu0 %v3517
  %5378 = vmatpush1.bf16.msra.mxu0 %v3516
  %5379 = vmatprep.subr.bf16.mxu0 %v3521
  %5380 = vmatpush1.bf16.msra.mxu0 %v3520
  %5381 = vmatprep.subr.bf16.mxu0 %v3525
  %5382 = vmatpush1.bf16.msra.mxu0 %v3524
  %5383 = vmatprep.subr.bf16.mxu0 %v3529
  %5384 = vmatpush1.bf16.msra.mxu0 %v3528
  %5385 = vmatprep.subr.bf16.mxu0 %v3533
  %5386 = vmatpush1.bf16.msra.mxu0 %v3532
  %5387 = vmatprep.subr.bf16.mxu0 %v3537
  %5388 = vmatpush1.bf16.msra.mxu0 %v3536
  %5389 = vmatprep.subr.bf16.mxu0 %v3541
  %5390 = vmatpush1.bf16.msra.mxu0 %v3540
  %5391 = vmatprep.subr.bf16.mxu0 %v3545
  %5392 = vmatpush1.bf16.msra.mxu0 %v3544
  %5393 = vmatprep.subr.bf16.mxu0 %v3549
  %5394 = vmatpush1.bf16.msra.mxu0 %v3548
  %5395 = vmatprep.subr.bf16.mxu0 %v3553
  %5396 = vmatpush1.bf16.msra.mxu0 %v3552
  %5397 = vmatprep.subr.bf16.mxu0 %v3557
  %5398 = vmatpush1.bf16.msra.mxu0 %v3556
  %5399 = vmatprep.mubr.bf16.mxu0 %v4915
  %5400 = vmatmul.mubr.bf16.gmra.mrb[0].mxu0 %v4914
  %v5401 = vpop.f32.mrb[0].mxu0
  %v5402 = vadd.f32 0.0, %v5401
  %v5403 = vpop.f32.mrb[0].mxu0
  %v5404 = vadd.f32 0.0, %v5403
  %v5405 = vpop.f32.mrb[0].mxu0
  %v5406 = vpop.f32.mrb[0].mxu0
  %5407 = vdwg.mxu0
  %5408 = vmatprep.subr.bf16.mxu0 %v3561
  %5409 = vmatpush1.bf16.msra.mxu0 %v3560
  %5410 = vmatprep.subr.bf16.mxu0 %v3565
  %5411 = vmatpush1.bf16.msra.mxu0 %v3564
  %5412 = vmatprep.subr.bf16.mxu0 %v3569
  %5413 = vmatpush1.bf16.msra.mxu0 %v3568
  %5414 = vmatprep.subr.bf16.mxu0 %v3573
  %5415 = vmatpush1.bf16.msra.mxu0 %v3572
  %5416 = vmatprep.subr.bf16.mxu0 %v3577
  %5417 = vmatpush1.bf16.msra.mxu0 %v3576
  %5418 = vmatprep.subr.bf16.mxu0 %v3581
  %5419 = vmatpush1.bf16.msra.mxu0 %v3580
  %5420 = vmatprep.subr.bf16.mxu0 %v3585
  %5421 = vmatpush1.bf16.msra.mxu0 %v3584
  %5422 = vmatprep.subr.bf16.mxu0 %v3589
  %5423 = vmatpush1.bf16.msra.mxu0 %v3588
  %5424 = vmatprep.subr.bf16.mxu0 %v3593
  %5425 = vmatpush1.bf16.msra.mxu0 %v3592
  %5426 = vmatprep.subr.bf16.mxu0 %v3597
  %5427 = vmatpush1.bf16.msra.mxu0 %v3596
  %5428 = vmatprep.subr.bf16.mxu0 %v3601
  %5429 = vmatpush1.bf16.msra.mxu0 %v3600
  %5430 = vmatprep.subr.bf16.mxu0 %v3605
  %5431 = vmatpush1.bf16.msra.mxu0 %v3604
  %5432 = vmatprep.subr.bf16.mxu0 %v3609
  %5433 = vmatpush1.bf16.msra.mxu0 %v3608
  %5434 = vmatprep.subr.bf16.mxu0 %v3613
  %5435 = vmatpush1.bf16.msra.mxu0 %v3612
  %5436 = vmatprep.subr.bf16.mxu0 %v3617
  %5437 = vmatpush1.bf16.msra.mxu0 %v3616
  %5438 = vmatprep.subr.bf16.mxu0 %v3621
  %5439 = vmatpush1.bf16.msra.mxu0 %v3620
  %5440 = vmatprep.mubr.bf16.mxu0 %v4917
  %5441 = vmatmul.mubr.bf16.gmra.mrb[0].mxu0 %v4916
  %v5442 = vpop.f32.mrb[0].mxu0
  %v5443 = vadd.f32 %v5402, %v5442
  %v5444 = vpop.f32.mrb[0].mxu0
  %v5445 = vadd.f32 %v5404, %v5444
  %v5446 = vpop.f32.mrb[0].mxu0
  %v5447 = vpop.f32.mrb[0].mxu0
  %5448 = vdwg.mxu0
  %v5449 = vadd.f32 %v4925, %v5177
  %v5450 = vadd.f32 %v4926, %v5179
  %v5451 = vadd.f32 %v4927, %v5259
  %v5452 = vadd.f32 %v4928, %v5261
  %v5453 = vmul.f32 %v5449, 0.5
  %v5454 = vmul.f32 %v5450, 0.5
  %v5455 = vmul.f32 %v5451, 0.5
  %v5456 = vmul.f32 %v5452, 0.5
  %v5457 = vtanh.pop %v5453
  %v5458 = vtanh.pop %v5454
  %v5459 = vtanh.pop %v5455
  %v5460 = vtanh.pop %v5456
  %v5461 = vmul.f32 %v5457, 0.5
  %v5462 = vmul.f32 %v5458, 0.5
  %v5463 = vmul.f32 %v5459, 0.5
  %v5464 = vmul.f32 %v5460, 0.5
  %v5465 = vadd.f32 %v5461, 0.5
  %v5466 = vadd.f32 %v5462, 0.5
  %v5467 = vadd.f32 %v5463, 0.5
  %v5468 = vadd.f32 %v5464, 0.5
  %5469 = vmatprep.subr.bf16.mxu0 %v4447
  %5470 = vmatpush1.bf16.msra.mxu0 %v4446
  %5471 = vmatprep.subr.bf16.mxu0 %v4451
  %5472 = vmatpush1.bf16.msra.mxu0 %v4450
  %5473 = vmatprep.subr.bf16.mxu0 %v4455
  %5474 = vmatpush1.bf16.msra.mxu0 %v4454
  %5475 = vmatprep.subr.bf16.mxu0 %v4459
  %5476 = vmatpush1.bf16.msra.mxu0 %v4458
  %5477 = vmatprep.subr.bf16.mxu0 %v4463
  %5478 = vmatpush1.bf16.msra.mxu0 %v4462
  %5479 = vmatprep.subr.bf16.mxu0 %v4467
  %5480 = vmatpush1.bf16.msra.mxu0 %v4466
  %5481 = vmatprep.subr.bf16.mxu0 %v4471
  %5482 = vmatpush1.bf16.msra.mxu0 %v4470
  %5483 = vmatprep.subr.bf16.mxu0 %v4475
  %5484 = vmatpush1.bf16.msra.mxu0 %v4474
  %5485 = vmatprep.subr.bf16.mxu0 %v4479
  %5486 = vmatpush1.bf16.msra.mxu0 %v4478
  %5487 = vmatprep.subr.bf16.mxu0 %v4483
  %5488 = vmatpush1.bf16.msra.mxu0 %v4482
  %5489 = vmatprep.subr.bf16.mxu0 %v4487
  %5490 = vmatpush1.bf16.msra.mxu0 %v4486
  %5491 = vmatprep.subr.bf16.mxu0 %v4491
  %5492 = vmatpush1.bf16.msra.mxu0 %v4490
  %5493 = vmatprep.subr.bf16.mxu0 %v4495
  %5494 = vmatpush1.bf16.msra.mxu0 %v4494
  %5495 = vmatprep.subr.bf16.mxu0 %v4499
  %5496 = vmatpush1.bf16.msra.mxu0 %v4498
  %5497 = vmatprep.subr.bf16.mxu0 %v4503
  %5498 = vmatpush1.bf16.msra.mxu0 %v4502
  %5499 = vmatprep.subr.bf16.mxu0 %v4507
  %5500 = vmatpush1.bf16.msra.mxu0 %v4506
  %5501 = vmatprep.mubr.bf16.mxu0 %v4915
  %5502 = vmatmul.mubr.bf16.gmra.mrb[0].mxu0 %v4914
  %v5503 = vpop.f32.mrb[0].mxu0
  %v5504 = vadd.f32 0.0, %v5503
  %v5505 = vpop.f32.mrb[0].mxu0
  %v5506 = vadd.f32 0.0, %v5505
  %v5507 = vpop.f32.mrb[0].mxu0
  %v5508 = vpop.f32.mrb[0].mxu0
  %5509 = vdwg.mxu0
  %5510 = vmatprep.subr.bf16.mxu0 %v4511
  %5511 = vmatpush1.bf16.msra.mxu0 %v4510
  %5512 = vmatprep.subr.bf16.mxu0 %v4515
  %5513 = vmatpush1.bf16.msra.mxu0 %v4514
  %5514 = vmatprep.subr.bf16.mxu0 %v4519
  %5515 = vmatpush1.bf16.msra.mxu0 %v4518
  %5516 = vmatprep.subr.bf16.mxu0 %v4523
  %5517 = vmatpush1.bf16.msra.mxu0 %v4522
  %5518 = vmatprep.subr.bf16.mxu0 %v4527
  %5519 = vmatpush1.bf16.msra.mxu0 %v4526
  %5520 = vmatprep.subr.bf16.mxu0 %v4531
  %5521 = vmatpush1.bf16.msra.mxu0 %v4530
  %5522 = vmatprep.subr.bf16.mxu0 %v4535
  %5523 = vmatpush1.bf16.msra.mxu0 %v4534
  %5524 = vmatprep.subr.bf16.mxu0 %v4539
  %5525 = vmatpush1.bf16.msra.mxu0 %v4538
  %5526 = vmatprep.subr.bf16.mxu0 %v4543
  %5527 = vmatpush1.bf16.msra.mxu0 %v4542
  %5528 = vmatprep.subr.bf16.mxu0 %v4547
  %5529 = vmatpush1.bf16.msra.mxu0 %v4546
  %5530 = vmatprep.subr.bf16.mxu0 %v4551
  %5531 = vmatpush1.bf16.msra.mxu0 %v4550
  %5532 = vmatprep.subr.bf16.mxu0 %v4555
  %5533 = vmatpush1.bf16.msra.mxu0 %v4554
  %5534 = vmatprep.subr.bf16.mxu0 %v4559
  %5535 = vmatpush1.bf16.msra.mxu0 %v4558
  %5536 = vmatprep.subr.bf16.mxu0 %v4563
  %5537 = vmatpush1.bf16.msra.mxu0 %v4562
  %5538 = vmatprep.subr.bf16.mxu0 %v4567
  %5539 = vmatpush1.bf16.msra.mxu0 %v4566
  %5540 = vmatprep.subr.bf16.mxu0 %v4571
  %5541 = vmatpush1.bf16.msra.mxu0 %v4570
  %5542 = vmatprep.mubr.bf16.mxu0 %v4917
  %5543 = vmatmul.mubr.bf16.gmra.mrb[0].mxu0 %v4916
  %v5544 = vpop.f32.mrb[0].mxu0
  %v5545 = vadd.f32 %v5504, %v5544
  %v5546 = vpop.f32.mrb[0].mxu0
  %v5547 = vadd.f32 %v5506, %v5546
  %v5548 = vpop.f32.mrb[0].mxu0
  %v5549 = vpop.f32.mrb[0].mxu0
  %5550 = vdwg.mxu0
  %5551 = vmatprep.subr.bf16.mxu0 %v4449
  %5552 = vmatpush1.bf16.msra.mxu0 %v4448
  %5553 = vmatprep.subr.bf16.mxu0 %v4453
  %5554 = vmatpush1.bf16.msra.mxu0 %v4452
  %5555 = vmatprep.subr.bf16.mxu0 %v4457
  %5556 = vmatpush1.bf16.msra.mxu0 %v4456
  %5557 = vmatprep.subr.bf16.mxu0 %v4461
  %5558 = vmatpush1.bf16.msra.mxu0 %v4460
  %5559 = vmatprep.subr.bf16.mxu0 %v4465
  %5560 = vmatpush1.bf16.msra.mxu0 %v4464
  %5561 = vmatprep.subr.bf16.mxu0 %v4469
  %5562 = vmatpush1.bf16.msra.mxu0 %v4468
  %5563 = vmatprep.subr.bf16.mxu0 %v4473
  %5564 = vmatpush1.bf16.msra.mxu0 %v4472
  %5565 = vmatprep.subr.bf16.mxu0 %v4477
  %5566 = vmatpush1.bf16.msra.mxu0 %v4476
  %5567 = vmatprep.subr.bf16.mxu0 %v4481
  %5568 = vmatpush1.bf16.msra.mxu0 %v4480
  %5569 = vmatprep.subr.bf16.mxu0 %v4485
  %5570 = vmatpush1.bf16.msra.mxu0 %v4484
  %5571 = vmatprep.subr.bf16.mxu0 %v4489
  %5572 = vmatpush1.bf16.msra.mxu0 %v4488
  %5573 = vmatprep.subr.bf16.mxu0 %v4493
  %5574 = vmatpush1.bf16.msra.mxu0 %v4492
  %5575 = vmatprep.subr.bf16.mxu0 %v4497
  %5576 = vmatpush1.bf16.msra.mxu0 %v4496
  %5577 = vmatprep.subr.bf16.mxu0 %v4501
  %5578 = vmatpush1.bf16.msra.mxu0 %v4500
  %5579 = vmatprep.subr.bf16.mxu0 %v4505
  %5580 = vmatpush1.bf16.msra.mxu0 %v4504
  %5581 = vmatprep.subr.bf16.mxu0 %v4509
  %5582 = vmatpush1.bf16.msra.mxu0 %v4508
  %5583 = vmatprep.mubr.bf16.mxu0 %v4915
  %5584 = vmatmul.mubr.bf16.gmra.mrb[0].mxu0 %v4914
  %v5585 = vpop.f32.mrb[0].mxu0
  %v5586 = vadd.f32 0.0, %v5585
  %v5587 = vpop.f32.mrb[0].mxu0
  %v5588 = vadd.f32 0.0, %v5587
  %v5589 = vpop.f32.mrb[0].mxu0
  %v5590 = vpop.f32.mrb[0].mxu0
  %5591 = vdwg.mxu0
  %5592 = vmatprep.subr.bf16.mxu0 %v4513
  %5593 = vmatpush1.bf16.msra.mxu0 %v4512
  %5594 = vmatprep.subr.bf16.mxu0 %v4517
  %5595 = vmatpush1.bf16.msra.mxu0 %v4516
  %5596 = vmatprep.subr.bf16.mxu0 %v4521
  %5597 = vmatpush1.bf16.msra.mxu0 %v4520
  %5598 = vmatprep.subr.bf16.mxu0 %v4525
  %5599 = vmatpush1.bf16.msra.mxu0 %v4524
  %5600 = vmatprep.subr.bf16.mxu0 %v4529
  %5601 = vmatpush1.bf16.msra.mxu0 %v4528
  %5602 = vmatprep.subr.bf16.mxu0 %v4533
  %5603 = vmatpush1.bf16.msra.mxu0 %v4532
  %5604 = vmatprep.subr.bf16.mxu0 %v4537
  %5605 = vmatpush1.bf16.msra.mxu0 %v4536
  %5606 = vmatprep.subr.bf16.mxu0 %v4541
  %5607 = vmatpush1.bf16.msra.mxu0 %v4540
  %5608 = vmatprep.subr.bf16.mxu0 %v4545
  %5609 = vmatpush1.bf16.msra.mxu0 %v4544
  %5610 = vmatprep.subr.bf16.mxu0 %v4549
  %5611 = vmatpush1.bf16.msra.mxu0 %v4548
  %5612 = vmatprep.subr.bf16.mxu0 %v4553
  %5613 = vmatpush1.bf16.msra.mxu0 %v4552
  %5614 = vmatprep.subr.bf16.mxu0 %v4557
  %5615 = vmatpush1.bf16.msra.mxu0 %v4556
  %5616 = vmatprep.subr.bf16.mxu0 %v4561
  %5617 = vmatpush1.bf16.msra.mxu0 %v4560
  %5618 = vmatprep.subr.bf16.mxu0 %v4565
  %5619 = vmatpush1.bf16.msra.mxu0 %v4564
  %5620 = vmatprep.subr.bf16.mxu0 %v4569
  %5621 = vmatpush1.bf16.msra.mxu0 %v4568
  %5622 = vmatprep.subr.bf16.mxu0 %v4573
  %5623 = vmatpush1.bf16.msra.mxu0 %v4572
  %5624 = vmatprep.mubr.bf16.mxu0 %v4917
  %5625 = vmatmul.mubr.bf16.gmra.mrb[0].mxu0 %v4916
  %v5626 = vpop.f32.mrb[0].mxu0
  %v5627 = vadd.f32 %v5586, %v5626
  %v5628 = vpop.f32.mrb[0].mxu0
  %v5629 = vadd.f32 %v5588, %v5628
  %v5630 = vpop.f32.mrb[0].mxu0
  %v5631 = vpop.f32.mrb[0].mxu0
  %5632 = vdwg.mxu0
  %v5633 = vadd.f32 %v4929, %v5361
  %v5634 = vadd.f32 %v4930, %v5363
  %v5635 = vadd.f32 %v4931, %v5443
  %v5636 = vadd.f32 %v4932, %v5445
  %v5637 = vtanh.pop %v5633
  %v5638 = vtanh.pop %v5634
  %v5639 = vtanh.pop %v5635
  %v5640 = vtanh.pop %v5636
  %v5641 = vadd.f32 %v4933, %v5545
  %v5642 = vadd.f32 %v4934, %v5547
  %v5643 = vadd.f32 %v4935, %v5627
  %v5644 = vadd.f32 %v4936, %v5629
  %v5645 = vmul.f32 %v5641, 0.5
  %v5646 = vmul.f32 %v5642, 0.5
  %v5647 = vmul.f32 %v5643, 0.5
  %v5648 = vmul.f32 %v5644, 0.5
  %v5649 = vtanh.pop %v5645
  %v5650 = vtanh.pop %v5646
  %v5651 = vtanh.pop %v5647
  %v5652 = vtanh.pop %v5648
  %v5653 = vmul.f32 %v5649, 0.5
  %v5654 = vmul.f32 %v5650, 0.5
  %v5655 = vmul.f32 %v5651, 0.5
  %v5656 = vmul.f32 %v5652, 0.5
  %v5657 = vadd.f32 %v5653, 0.5
  %v5658 = vadd.f32 %v5654, 0.5
  %v5659 = vadd.f32 %v5655, 0.5
  %v5660 = vadd.f32 %v5656, 0.5
  %v5661 = vmul.f32 %v5465, %v4902
  %v5662 = vmul.f32 %v5466, %v4903
  %v5663 = vmul.f32 %v5467, %v4904
  %v5664 = vmul.f32 %v5468, %v4905
  %v5665 = vmul.f32 %v5281, %v5637
  %v5666 = vmul.f32 %v5282, %v5638
  %v5667 = vmul.f32 %v5283, %v5639
  %v5668 = vmul.f32 %v5284, %v5640
  %v5669 = vadd.f32 %v5661, %v5665
  %v5670 = vadd.f32 %v5662, %v5666
  %v5671 = vadd.f32 %v5663, %v5667
  %v5672 = vadd.f32 %v5664, %v5668
  %v5673 = vtanh.pop %v5669
  %v5674 = vtanh.pop %v5670
  %v5675 = vtanh.pop %v5671
  %v5676 = vtanh.pop %v5672
  %v5677 = vmul.f32 %v5657, %v5673
  %v5678 = vmul.f32 %v5658, %v5674
  %v5679 = vmul.f32 %v5659, %v5675
  %v5680 = vmul.f32 %v5660, %v5676
  %v5681 = vpack.c.bf16 %v5677, %v5677
  %v5682 = vpack.c.bf16 %v5678, %v5678
  %v5683 = vpack.c.bf16 %v5679, %v5679
  %v5684 = vpack.c.bf16 %v5680, %v5680
  %s5685 = smul.u32 2, 16
  %s5686 = smul.addr %s5685, 8
  %s5687 = scalar_lea.vmem [#allocation2], %s5686
  %v5688 = vld [vmem:[%s5687] sm:$0xff]
  %v5689 = vld [vmem:[%s5687 + $0x8] sm:$0xff]
  %v5690 = vld [vmem:[%s5687 + $0x10] sm:$0xff]
  %v5691 = vld [vmem:[%s5687 + $0x18] sm:$0xff]
  %v5692 = vld [vmem:[%s5687 + $0x20] sm:$0xff]
  %v5693 = vld [vmem:[%s5687 + $0x28] sm:$0xff]
  %v5694 = vld [vmem:[%s5687 + $0x30] sm:$0xff]
  %v5695 = vld [vmem:[%s5687 + $0x38] sm:$0xff]
  %v5696 = vld [vmem:[%s5687 + $0x40] sm:$0xff]
  %v5697 = vld [vmem:[%s5687 + $0x48] sm:$0xff]
  %v5698 = vld [vmem:[%s5687 + $0x50] sm:$0xff]
  %v5699 = vld [vmem:[%s5687 + $0x58] sm:$0xff]
  %v5700 = vld [vmem:[%s5687 + $0x60] sm:$0xff]
  %v5701 = vld [vmem:[%s5687 + $0x68] sm:$0xff]
  %v5702 = vld [vmem:[%s5687 + $0x70] sm:$0xff]
  %v5703 = vld [vmem:[%s5687 + $0x78] sm:$0xff]
  %5704 = vmatprep.subr.bf16.mxu0 %v1611
  %5705 = vmatpush1.bf16.msra.mxu0 %v1610
  %5706 = vmatprep.subr.bf16.mxu0 %v1615
  %5707 = vmatpush1.bf16.msra.mxu0 %v1614
  %5708 = vmatprep.subr.bf16.mxu0 %v1619
  %5709 = vmatpush1.bf16.msra.mxu0 %v1618
  %5710 = vmatprep.subr.bf16.mxu0 %v1623
  %5711 = vmatpush1.bf16.msra.mxu0 %v1622
  %5712 = vmatprep.subr.bf16.mxu0 %v1627
  %5713 = vmatpush1.bf16.msra.mxu0 %v1626
  %5714 = vmatprep.subr.bf16.mxu0 %v1631
  %5715 = vmatpush1.bf16.msra.mxu0 %v1630
  %5716 = vmatprep.subr.bf16.mxu0 %v1635
  %5717 = vmatpush1.bf16.msra.mxu0 %v1634
  %5718 = vmatprep.subr.bf16.mxu0 %v1639
  %5719 = vmatpush1.bf16.msra.mxu0 %v1638
  %5720 = vmatprep.subr.bf16.mxu0 %v1643
  %5721 = vmatpush1.bf16.msra.mxu0 %v1642
  %5722 = vmatprep.subr.bf16.mxu0 %v1647
  %5723 = vmatpush1.bf16.msra.mxu0 %v1646
  %5724 = vmatprep.subr.bf16.mxu0 %v1651
  %5725 = vmatpush1.bf16.msra.mxu0 %v1650
  %5726 = vmatprep.subr.bf16.mxu0 %v1655
  %5727 = vmatpush1.bf16.msra.mxu0 %v1654
  %5728 = vmatprep.subr.bf16.mxu0 %v1659
  %5729 = vmatpush1.bf16.msra.mxu0 %v1658
  %5730 = vmatprep.subr.bf16.mxu0 %v1663
  %5731 = vmatpush1.bf16.msra.mxu0 %v1662
  %5732 = vmatprep.subr.bf16.mxu0 %v1667
  %5733 = vmatpush1.bf16.msra.mxu0 %v1666
  %5734 = vmatprep.subr.bf16.mxu0 %v1671
  %5735 = vmatpush1.bf16.msra.mxu0 %v1670
  %5736 = vmatprep.mubr.bf16.mxu0 %v5682
  %5737 = vmatmul.mubr.bf16.gmra.mrb[0].mxu0 %v5681
  %v5738 = vpop.f32.mrb[0].mxu0
  %v5739 = vadd.f32 0.0, %v5738
  %v5740 = vpop.f32.mrb[0].mxu0
  %v5741 = vadd.f32 0.0, %v5740
  %v5742 = vpop.f32.mrb[0].mxu0
  %v5743 = vpop.f32.mrb[0].mxu0
  %5744 = vdwg.mxu0
  %5745 = vmatprep.subr.bf16.mxu0 %v1675
  %5746 = vmatpush1.bf16.msra.mxu0 %v1674
  %5747 = vmatprep.subr.bf16.mxu0 %v1679
  %5748 = vmatpush1.bf16.msra.mxu0 %v1678
  %5749 = vmatprep.subr.bf16.mxu0 %v1683
  %5750 = vmatpush1.bf16.msra.mxu0 %v1682
  %5751 = vmatprep.subr.bf16.mxu0 %v1687
  %5752 = vmatpush1.bf16.msra.mxu0 %v1686
  %5753 = vmatprep.subr.bf16.mxu0 %v1691
  %5754 = vmatpush1.bf16.msra.mxu0 %v1690
  %5755 = vmatprep.subr.bf16.mxu0 %v1695
  %5756 = vmatpush1.bf16.msra.mxu0 %v1694
  %5757 = vmatprep.subr.bf16.mxu0 %v1699
  %5758 = vmatpush1.bf16.msra.mxu0 %v1698
  %5759 = vmatprep.subr.bf16.mxu0 %v1703
  %5760 = vmatpush1.bf16.msra.mxu0 %v1702
  %5761 = vmatprep.subr.bf16.mxu0 %v1707
  %5762 = vmatpush1.bf16.msra.mxu0 %v1706
  %5763 = vmatprep.subr.bf16.mxu0 %v1711
  %5764 = vmatpush1.bf16.msra.mxu0 %v1710
  %5765 = vmatprep.subr.bf16.mxu0 %v1715
  %5766 = vmatpush1.bf16.msra.mxu0 %v1714
  %5767 = vmatprep.subr.bf16.mxu0 %v1719
  %5768 = vmatpush1.bf16.msra.mxu0 %v1718
  %5769 = vmatprep.subr.bf16.mxu0 %v1723
  %5770 = vmatpush1.bf16.msra.mxu0 %v1722
  %5771 = vmatprep.subr.bf16.mxu0 %v1727
  %5772 = vmatpush1.bf16.msra.mxu0 %v1726
  %5773 = vmatprep.subr.bf16.mxu0 %v1731
  %5774 = vmatpush1.bf16.msra.mxu0 %v1730
  %5775 = vmatprep.subr.bf16.mxu0 %v1735
  %5776 = vmatpush1.bf16.msra.mxu0 %v1734
  %5777 = vmatprep.mubr.bf16.mxu0 %v5684
  %5778 = vmatmul.mubr.bf16.gmra.mrb[0].mxu0 %v5683
  %v5779 = vpop.f32.mrb[0].mxu0
  %v5780 = vadd.f32 %v5739, %v5779
  %v5781 = vpop.f32.mrb[0].mxu0
  %v5782 = vadd.f32 %v5741, %v5781
  %v5783 = vpop.f32.mrb[0].mxu0
  %v5784 = vpop.f32.mrb[0].mxu0
  %5785 = vdwg.mxu0
  %5786 = vmatprep.subr.bf16.mxu0 %v1613
  %5787 = vmatpush1.bf16.msra.mxu0 %v1612
  %5788 = vmatprep.subr.bf16.mxu0 %v1617
  %5789 = vmatpush1.bf16.msra.mxu0 %v1616
  %5790 = vmatprep.subr.bf16.mxu0 %v1621
  %5791 = vmatpush1.bf16.msra.mxu0 %v1620
  %5792 = vmatprep.subr.bf16.mxu0 %v1625
  %5793 = vmatpush1.bf16.msra.mxu0 %v1624
  %5794 = vmatprep.subr.bf16.mxu0 %v1629
  %5795 = vmatpush1.bf16.msra.mxu0 %v1628
  %5796 = vmatprep.subr.bf16.mxu0 %v1633
  %5797 = vmatpush1.bf16.msra.mxu0 %v1632
  %5798 = vmatprep.subr.bf16.mxu0 %v1637
  %5799 = vmatpush1.bf16.msra.mxu0 %v1636
  %5800 = vmatprep.subr.bf16.mxu0 %v1641
  %5801 = vmatpush1.bf16.msra.mxu0 %v1640
  %5802 = vmatprep.subr.bf16.mxu0 %v1645
  %5803 = vmatpush1.bf16.msra.mxu0 %v1644
  %5804 = vmatprep.subr.bf16.mxu0 %v1649
  %5805 = vmatpush1.bf16.msra.mxu0 %v1648
  %5806 = vmatprep.subr.bf16.mxu0 %v1653
  %5807 = vmatpush1.bf16.msra.mxu0 %v1652
  %5808 = vmatprep.subr.bf16.mxu0 %v1657
  %5809 = vmatpush1.bf16.msra.mxu0 %v1656
  %5810 = vmatprep.subr.bf16.mxu0 %v1661
  %5811 = vmatpush1.bf16.msra.mxu0 %v1660
  %5812 = vmatprep.subr.bf16.mxu0 %v1665
  %5813 = vmatpush1.bf16.msra.mxu0 %v1664
  %5814 = vmatprep.subr.bf16.mxu0 %v1669
  %5815 = vmatpush1.bf16.msra.mxu0 %v1668
  %5816 = vmatprep.subr.bf16.mxu0 %v1673
  %5817 = vmatpush1.bf16.msra.mxu0 %v1672
  %5818 = vmatprep.mubr.bf16.mxu0 %v5682
  %5819 = vmatmul.mubr.bf16.gmra.mrb[0].mxu0 %v5681
  %v5820 = vpop.f32.mrb[0].mxu0
  %v5821 = vadd.f32 0.0, %v5820
  %v5822 = vpop.f32.mrb[0].mxu0
  %v5823 = vadd.f32 0.0, %v5822
  %v5824 = vpop.f32.mrb[0].mxu0
  %v5825 = vpop.f32.mrb[0].mxu0
  %5826 = vdwg.mxu0
  %5827 = vmatprep.subr.bf16.mxu0 %v1677
  %5828 = vmatpush1.bf16.msra.mxu0 %v1676
  %5829 = vmatprep.subr.bf16.mxu0 %v1681
  %5830 = vmatpush1.bf16.msra.mxu0 %v1680
  %5831 = vmatprep.subr.bf16.mxu0 %v1685
  %5832 = vmatpush1.bf16.msra.mxu0 %v1684
  %5833 = vmatprep.subr.bf16.mxu0 %v1689
  %5834 = vmatpush1.bf16.msra.mxu0 %v1688
  %5835 = vmatprep.subr.bf16.mxu0 %v1693
  %5836 = vmatpush1.bf16.msra.mxu0 %v1692
  %5837 = vmatprep.subr.bf16.mxu0 %v1697
  %5838 = vmatpush1.bf16.msra.mxu0 %v1696
  %5839 = vmatprep.subr.bf16.mxu0 %v1701
  %5840 = vmatpush1.bf16.msra.mxu0 %v1700
  %5841 = vmatprep.subr.bf16.mxu0 %v1705
  %5842 = vmatpush1.bf16.msra.mxu0 %v1704
  %5843 = vmatprep.subr.bf16.mxu0 %v1709
  %5844 = vmatpush1.bf16.msra.mxu0 %v1708
  %5845 = vmatprep.subr.bf16.mxu0 %v1713
  %5846 = vmatpush1.bf16.msra.mxu0 %v1712
  %5847 = vmatprep.subr.bf16.mxu0 %v1717
  %5848 = vmatpush1.bf16.msra.mxu0 %v1716
  %5849 = vmatprep.subr.bf16.mxu0 %v1721
  %5850 = vmatpush1.bf16.msra.mxu0 %v1720
  %5851 = vmatprep.subr.bf16.mxu0 %v1725
  %5852 = vmatpush1.bf16.msra.mxu0 %v1724
  %5853 = vmatprep.subr.bf16.mxu0 %v1729
  %5854 = vmatpush1.bf16.msra.mxu0 %v1728
  %5855 = vmatprep.subr.bf16.mxu0 %v1733
  %5856 = vmatpush1.bf16.msra.mxu0 %v1732
  %5857 = vmatprep.subr.bf16.mxu0 %v1737
  %5858 = vmatpush1.bf16.msra.mxu0 %v1736
  %5859 = vmatprep.mubr.bf16.mxu0 %v5684
  %5860 = vmatmul.mubr.bf16.gmra.mrb[0].mxu0 %v5683
  %v5861 = vpop.f32.mrb[0].mxu0
  %v5862 = vadd.f32 %v5821, %v5861
  %v5863 = vpop.f32.mrb[0].mxu0
  %v5864 = vadd.f32 %v5823, %v5863
  %v5865 = vpop.f32.mrb[0].mxu0
  %v5866 = vpop.f32.mrb[0].mxu0
  %5867 = vdwg.mxu0
  %5868 = vmatprep.subr.bf16.mxu0 %v2543
  %5869 = vmatpush1.bf16.msra.mxu0 %v2542
  %5870 = vmatprep.subr.bf16.mxu0 %v2547
  %5871 = vmatpush1.bf16.msra.mxu0 %v2546
  %5872 = vmatprep.subr.bf16.mxu0 %v2551
  %5873 = vmatpush1.bf16.msra.mxu0 %v2550
  %5874 = vmatprep.subr.bf16.mxu0 %v2555
  %5875 = vmatpush1.bf16.msra.mxu0 %v2554
  %5876 = vmatprep.subr.bf16.mxu0 %v2559
  %5877 = vmatpush1.bf16.msra.mxu0 %v2558
  %5878 = vmatprep.subr.bf16.mxu0 %v2563
  %5879 = vmatpush1.bf16.msra.mxu0 %v2562
  %5880 = vmatprep.subr.bf16.mxu0 %v2567
  %5881 = vmatpush1.bf16.msra.mxu0 %v2566
  %5882 = vmatprep.subr.bf16.mxu0 %v2571
  %5883 = vmatpush1.bf16.msra.mxu0 %v2570
  %5884 = vmatprep.subr.bf16.mxu0 %v2575
  %5885 = vmatpush1.bf16.msra.mxu0 %v2574
  %5886 = vmatprep.subr.bf16.mxu0 %v2579
  %5887 = vmatpush1.bf16.msra.mxu0 %v2578
  %5888 = vmatprep.subr.bf16.mxu0 %v2583
  %5889 = vmatpush1.bf16.msra.mxu0 %v2582
  %5890 = vmatprep.subr.bf16.mxu0 %v2587
  %5891 = vmatpush1.bf16.msra.mxu0 %v2586
  %5892 = vmatprep.subr.bf16.mxu0 %v2591
  %5893 = vmatpush1.bf16.msra.mxu0 %v2590
  %5894 = vmatprep.subr.bf16.mxu0 %v2595
  %5895 = vmatpush1.bf16.msra.mxu0 %v2594
  %5896 = vmatprep.subr.bf16.mxu0 %v2599
  %5897 = vmatpush1.bf16.msra.mxu0 %v2598
  %5898 = vmatprep.subr.bf16.mxu0 %v2603
  %5899 = vmatpush1.bf16.msra.mxu0 %v2602
  %5900 = vmatprep.mubr.bf16.mxu0 %v5682
  %5901 = vmatmul.mubr.bf16.gmra.mrb[0].mxu0 %v5681
  %v5902 = vpop.f32.mrb[0].mxu0
  %v5903 = vadd.f32 0.0, %v5902
  %v5904 = vpop.f32.mrb[0].mxu0
  %v5905 = vadd.f32 0.0, %v5904
  %v5906 = vpop.f32.mrb[0].mxu0
  %v5907 = vpop.f32.mrb[0].mxu0
  %5908 = vdwg.mxu0
  %5909 = vmatprep.subr.bf16.mxu0 %v2607
  %5910 = vmatpush1.bf16.msra.mxu0 %v2606
  %5911 = vmatprep.subr.bf16.mxu0 %v2611
  %5912 = vmatpush1.bf16.msra.mxu0 %v2610
  %5913 = vmatprep.subr.bf16.mxu0 %v2615
  %5914 = vmatpush1.bf16.msra.mxu0 %v2614
  %5915 = vmatprep.subr.bf16.mxu0 %v2619
  %5916 = vmatpush1.bf16.msra.mxu0 %v2618
  %5917 = vmatprep.subr.bf16.mxu0 %v2623
  %5918 = vmatpush1.bf16.msra.mxu0 %v2622
  %5919 = vmatprep.subr.bf16.mxu0 %v2627
  %5920 = vmatpush1.bf16.msra.mxu0 %v2626
  %5921 = vmatprep.subr.bf16.mxu0 %v2631
  %5922 = vmatpush1.bf16.msra.mxu0 %v2630
  %5923 = vmatprep.subr.bf16.mxu0 %v2635
  %5924 = vmatpush1.bf16.msra.mxu0 %v2634
  %5925 = vmatprep.subr.bf16.mxu0 %v2639
  %5926 = vmatpush1.bf16.msra.mxu0 %v2638
  %5927 = vmatprep.subr.bf16.mxu0 %v2643
  %5928 = vmatpush1.bf16.msra.mxu0 %v2642
  %5929 = vmatprep.subr.bf16.mxu0 %v2647
  %5930 = vmatpush1.bf16.msra.mxu0 %v2646
  %5931 = vmatprep.subr.bf16.mxu0 %v2651
  %5932 = vmatpush1.bf16.msra.mxu0 %v2650
  %5933 = vmatprep.subr.bf16.mxu0 %v2655
  %5934 = vmatpush1.bf16.msra.mxu0 %v2654
  %5935 = vmatprep.subr.bf16.mxu0 %v2659
  %5936 = vmatpush1.bf16.msra.mxu0 %v2658
  %5937 = vmatprep.subr.bf16.mxu0 %v2663
  %5938 = vmatpush1.bf16.msra.mxu0 %v2662
  %5939 = vmatprep.subr.bf16.mxu0 %v2667
  %5940 = vmatpush1.bf16.msra.mxu0 %v2666
  %5941 = vmatprep.mubr.bf16.mxu0 %v5684
  %5942 = vmatmul.mubr.bf16.gmra.mrb[0].mxu0 %v5683
  %v5943 = vpop.f32.mrb[0].mxu0
  %v5944 = vadd.f32 %v5903, %v5943
  %v5945 = vpop.f32.mrb[0].mxu0
  %v5946 = vadd.f32 %v5905, %v5945
  %v5947 = vpop.f32.mrb[0].mxu0
  %v5948 = vpop.f32.mrb[0].mxu0
  %5949 = vdwg.mxu0
  %5950 = vmatprep.subr.bf16.mxu0 %v2545
  %5951 = vmatpush1.bf16.msra.mxu0 %v2544
  %5952 = vmatprep.subr.bf16.mxu0 %v2549
  %5953 = vmatpush1.bf16.msra.mxu0 %v2548
  %5954 = vmatprep.subr.bf16.mxu0 %v2553
  %5955 = vmatpush1.bf16.msra.mxu0 %v2552
  %5956 = vmatprep.subr.bf16.mxu0 %v2557
  %5957 = vmatpush1.bf16.msra.mxu0 %v2556
  %5958 = vmatprep.subr.bf16.mxu0 %v2561
  %5959 = vmatpush1.bf16.msra.mxu0 %v2560
  %5960 = vmatprep.subr.bf16.mxu0 %v2565
  %5961 = vmatpush1.bf16.msra.mxu0 %v2564
  %5962 = vmatprep.subr.bf16.mxu0 %v2569
  %5963 = vmatpush1.bf16.msra.mxu0 %v2568
  %5964 = vmatprep.subr.bf16.mxu0 %v2573
  %5965 = vmatpush1.bf16.msra.mxu0 %v2572
  %5966 = vmatprep.subr.bf16.mxu0 %v2577
  %5967 = vmatpush1.bf16.msra.mxu0 %v2576
  %5968 = vmatprep.subr.bf16.mxu0 %v2581
  %5969 = vmatpush1.bf16.msra.mxu0 %v2580
  %5970 = vmatprep.subr.bf16.mxu0 %v2585
  %5971 = vmatpush1.bf16.msra.mxu0 %v2584
  %5972 = vmatprep.subr.bf16.mxu0 %v2589
  %5973 = vmatpush1.bf16.msra.mxu0 %v2588
  %5974 = vmatprep.subr.bf16.mxu0 %v2593
  %5975 = vmatpush1.bf16.msra.mxu0 %v2592
  %5976 = vmatprep.subr.bf16.mxu0 %v2597
  %5977 = vmatpush1.bf16.msra.mxu0 %v2596
  %5978 = vmatprep.subr.bf16.mxu0 %v2601
  %5979 = vmatpush1.bf16.msra.mxu0 %v2600
  %5980 = vmatprep.subr.bf16.mxu0 %v2605
  %5981 = vmatpush1.bf16.msra.mxu0 %v2604
  %5982 = vmatprep.mubr.bf16.mxu0 %v5682
  %5983 = vmatmul.mubr.bf16.gmra.mrb[0].mxu0 %v5681
  %v5984 = vpop.f32.mrb[0].mxu0
  %v5985 = vadd.f32 0.0, %v5984
  %v5986 = vpop.f32.mrb[0].mxu0
  %v5987 = vadd.f32 0.0, %v5986
  %v5988 = vpop.f32.mrb[0].mxu0
  %v5989 = vpop.f32.mrb[0].mxu0
  %5990 = vdwg.mxu0
  %5991 = vmatprep.subr.bf16.mxu0 %v2609
  %5992 = vmatpush1.bf16.msra.mxu0 %v2608
  %5993 = vmatprep.subr.bf16.mxu0 %v2613
  %5994 = vmatpush1.bf16.msra.mxu0 %v2612
  %5995 = vmatprep.subr.bf16.mxu0 %v2617
  %5996 = vmatpush1.bf16.msra.mxu0 %v2616
  %5997 = vmatprep.subr.bf16.mxu0 %v2621
  %5998 = vmatpush1.bf16.msra.mxu0 %v2620
  %5999 = vmatprep.subr.bf16.mxu0 %v2625
  %6000 = vmatpush1.bf16.msra.mxu0 %v2624
  %6001 = vmatprep.subr.bf16.mxu0 %v2629
  %6002 = vmatpush1.bf16.msra.mxu0 %v2628
  %6003 = vmatprep.subr.bf16.mxu0 %v2633
  %6004 = vmatpush1.bf16.msra.mxu0 %v2632
  %6005 = vmatprep.subr.bf16.mxu0 %v2637
  %6006 = vmatpush1.bf16.msra.mxu0 %v2636
  %6007 = vmatprep.subr.bf16.mxu0 %v2641
  %6008 = vmatpush1.bf16.msra.mxu0 %v2640
  %6009 = vmatprep.subr.bf16.mxu0 %v2645
  %6010 = vmatpush1.bf16.msra.mxu0 %v2644
  %6011 = vmatprep.subr.bf16.mxu0 %v2649
  %6012 = vmatpush1.bf16.msra.mxu0 %v2648
  %6013 = vmatprep.subr.bf16.mxu0 %v2653
  %6014 = vmatpush1.bf16.msra.mxu0 %v2652
  %6015 = vmatprep.subr.bf16.mxu0 %v2657
  %6016 = vmatpush1.bf16.msra.mxu0 %v2656
  %6017 = vmatprep.subr.bf16.mxu0 %v2661
  %6018 = vmatpush1.bf16.msra.mxu0 %v2660
  %6019 = vmatprep.subr.bf16.mxu0 %v2665
  %6020 = vmatpush1.bf16.msra.mxu0 %v2664
  %6021 = vmatprep.subr.bf16.mxu0 %v2669
  %6022 = vmatpush1.bf16.msra.mxu0 %v2668
  %6023 = vmatprep.mubr.bf16.mxu0 %v5684
  %6024 = vmatmul.mubr.bf16.gmra.mrb[0].mxu0 %v5683
  %v6025 = vpop.f32.mrb[0].mxu0
  %v6026 = vadd.f32 %v5985, %v6025
  %v6027 = vpop.f32.mrb[0].mxu0
  %v6028 = vadd.f32 %v5987, %v6027
  %v6029 = vpop.f32.mrb[0].mxu0
  %v6030 = vpop.f32.mrb[0].mxu0
  %6031 = vdwg.mxu0
  %v6032 = vadd.f32 %v5688, %v5780
  %v6033 = vadd.f32 %v5689, %v5782
  %v6034 = vadd.f32 %v5690, %v5862
  %v6035 = vadd.f32 %v5691, %v5864
  %v6036 = vmul.f32 %v6032, 0.5
  %v6037 = vmul.f32 %v6033, 0.5
  %v6038 = vmul.f32 %v6034, 0.5
  %v6039 = vmul.f32 %v6035, 0.5
  %v6040 = vtanh.pop %v6036
  %v6041 = vtanh.pop %v6037
  %v6042 = vtanh.pop %v6038
  %v6043 = vtanh.pop %v6039
  %v6044 = vmul.f32 %v6040, 0.5
  %v6045 = vmul.f32 %v6041, 0.5
  %v6046 = vmul.f32 %v6042, 0.5
  %v6047 = vmul.f32 %v6043, 0.5
  %v6048 = vadd.f32 %v6044, 0.5
  %v6049 = vadd.f32 %v6045, 0.5
  %v6050 = vadd.f32 %v6046, 0.5
  %v6051 = vadd.f32 %v6047, 0.5
  %6052 = vmatprep.subr.bf16.mxu0 %v3495
  %6053 = vmatpush1.bf16.msra.mxu0 %v3494
  %6054 = vmatprep.subr.bf16.mxu0 %v3499
  %6055 = vmatpush1.bf16.msra.mxu0 %v3498
  %6056 = vmatprep.subr.bf16.mxu0 %v3503
  %6057 = vmatpush1.bf16.msra.mxu0 %v3502
  %6058 = vmatprep.subr.bf16.mxu0 %v3507
  %6059 = vmatpush1.bf16.msra.mxu0 %v3506
  %6060 = vmatprep.subr.bf16.mxu0 %v3511
  %6061 = vmatpush1.bf16.msra.mxu0 %v3510
  %6062 = vmatprep.subr.bf16.mxu0 %v3515
  %6063 = vmatpush1.bf16.msra.mxu0 %v3514
  %6064 = vmatprep.subr.bf16.mxu0 %v3519
  %6065 = vmatpush1.bf16.msra.mxu0 %v3518
  %6066 = vmatprep.subr.bf16.mxu0 %v3523
  %6067 = vmatpush1.bf16.msra.mxu0 %v3522
  %6068 = vmatprep.subr.bf16.mxu0 %v3527
  %6069 = vmatpush1.bf16.msra.mxu0 %v3526
  %6070 = vmatprep.subr.bf16.mxu0 %v3531
  %6071 = vmatpush1.bf16.msra.mxu0 %v3530
  %6072 = vmatprep.subr.bf16.mxu0 %v3535
  %6073 = vmatpush1.bf16.msra.mxu0 %v3534
  %6074 = vmatprep.subr.bf16.mxu0 %v3539
  %6075 = vmatpush1.bf16.msra.mxu0 %v3538
  %6076 = vmatprep.subr.bf16.mxu0 %v3543
  %6077 = vmatpush1.bf16.msra.mxu0 %v3542
  %6078 = vmatprep.subr.bf16.mxu0 %v3547
  %6079 = vmatpush1.bf16.msra.mxu0 %v3546
  %6080 = vmatprep.subr.bf16.mxu0 %v3551
  %6081 = vmatpush1.bf16.msra.mxu0 %v3550
  %6082 = vmatprep.subr.bf16.mxu0 %v3555
  %6083 = vmatpush1.bf16.msra.mxu0 %v3554
  %6084 = vmatprep.mubr.bf16.mxu0 %v5682
  %6085 = vmatmul.mubr.bf16.gmra.mrb[0].mxu0 %v5681
  %v6086 = vpop.f32.mrb[0].mxu0
  %v6087 = vadd.f32 0.0, %v6086
  %v6088 = vpop.f32.mrb[0].mxu0
  %v6089 = vadd.f32 0.0, %v6088
  %v6090 = vpop.f32.mrb[0].mxu0
  %v6091 = vpop.f32.mrb[0].mxu0
  %6092 = vdwg.mxu0
  %6093 = vmatprep.subr.bf16.mxu0 %v3559
  %6094 = vmatpush1.bf16.msra.mxu0 %v3558
  %6095 = vmatprep.subr.bf16.mxu0 %v3563
  %6096 = vmatpush1.bf16.msra.mxu0 %v3562
  %6097 = vmatprep.subr.bf16.mxu0 %v3567
  %6098 = vmatpush1.bf16.msra.mxu0 %v3566
  %6099 = vmatprep.subr.bf16.mxu0 %v3571
  %6100 = vmatpush1.bf16.msra.mxu0 %v3570
  %6101 = vmatprep.subr.bf16.mxu0 %v3575
  %6102 = vmatpush1.bf16.msra.mxu0 %v3574
  %6103 = vmatprep.subr.bf16.mxu0 %v3579
  %6104 = vmatpush1.bf16.msra.mxu0 %v3578
  %6105 = vmatprep.subr.bf16.mxu0 %v3583
  %6106 = vmatpush1.bf16.msra.mxu0 %v3582
  %6107 = vmatprep.subr.bf16.mxu0 %v3587
  %6108 = vmatpush1.bf16.msra.mxu0 %v3586
  %6109 = vmatprep.subr.bf16.mxu0 %v3591
  %6110 = vmatpush1.bf16.msra.mxu0 %v3590
  %6111 = vmatprep.subr.bf16.mxu0 %v3595
  %6112 = vmatpush1.bf16.msra.mxu0 %v3594
  %6113 = vmatprep.subr.bf16.mxu0 %v3599
  %6114 = vmatpush1.bf16.msra.mxu0 %v3598
  %6115 = vmatprep.subr.bf16.mxu0 %v3603
  %6116 = vmatpush1.bf16.msra.mxu0 %v3602
  %6117 = vmatprep.subr.bf16.mxu0 %v3607
  %6118 = vmatpush1.bf16.msra.mxu0 %v3606
  %6119 = vmatprep.subr.bf16.mxu0 %v3611
  %6120 = vmatpush1.bf16.msra.mxu0 %v3610
  %6121 = vmatprep.subr.bf16.mxu0 %v3615
  %6122 = vmatpush1.bf16.msra.mxu0 %v3614
  %6123 = vmatprep.subr.bf16.mxu0 %v3619
  %6124 = vmatpush1.bf16.msra.mxu0 %v3618
  %6125 = vmatprep.mubr.bf16.mxu0 %v5684
  %6126 = vmatmul.mubr.bf16.gmra.mrb[0].mxu0 %v5683
  %v6127 = vpop.f32.mrb[0].mxu0
  %v6128 = vadd.f32 %v6087, %v6127
  %v6129 = vpop.f32.mrb[0].mxu0
  %v6130 = vadd.f32 %v6089, %v6129
  %v6131 = vpop.f32.mrb[0].mxu0
  %v6132 = vpop.f32.mrb[0].mxu0
  %6133 = vdwg.mxu0
  %6134 = vmatprep.subr.bf16.mxu0 %v3497
  %6135 = vmatpush1.bf16.msra.mxu0 %v3496
  %6136 = vmatprep.subr.bf16.mxu0 %v3501
  %6137 = vmatpush1.bf16.msra.mxu0 %v3500
  %6138 = vmatprep.subr.bf16.mxu0 %v3505
  %6139 = vmatpush1.bf16.msra.mxu0 %v3504
  %6140 = vmatprep.subr.bf16.mxu0 %v3509
  %6141 = vmatpush1.bf16.msra.mxu0 %v3508
  %6142 = vmatprep.subr.bf16.mxu0 %v3513
  %6143 = vmatpush1.bf16.msra.mxu0 %v3512
  %6144 = vmatprep.subr.bf16.mxu0 %v3517
  %6145 = vmatpush1.bf16.msra.mxu0 %v3516
  %6146 = vmatprep.subr.bf16.mxu0 %v3521
  %6147 = vmatpush1.bf16.msra.mxu0 %v3520
  %6148 = vmatprep.subr.bf16.mxu0 %v3525
  %6149 = vmatpush1.bf16.msra.mxu0 %v3524
  %6150 = vmatprep.subr.bf16.mxu0 %v3529
  %6151 = vmatpush1.bf16.msra.mxu0 %v3528
  %6152 = vmatprep.subr.bf16.mxu0 %v3533
  %6153 = vmatpush1.bf16.msra.mxu0 %v3532
  %6154 = vmatprep.subr.bf16.mxu0 %v3537
  %6155 = vmatpush1.bf16.msra.mxu0 %v3536
  %6156 = vmatprep.subr.bf16.mxu0 %v3541
  %6157 = vmatpush1.bf16.msra.mxu0 %v3540
  %6158 = vmatprep.subr.bf16.mxu0 %v3545
  %6159 = vmatpush1.bf16.msra.mxu0 %v3544
  %6160 = vmatprep.subr.bf16.mxu0 %v3549
  %6161 = vmatpush1.bf16.msra.mxu0 %v3548
  %6162 = vmatprep.subr.bf16.mxu0 %v3553
  %6163 = vmatpush1.bf16.msra.mxu0 %v3552
  %6164 = vmatprep.subr.bf16.mxu0 %v3557
  %6165 = vmatpush1.bf16.msra.mxu0 %v3556
  %6166 = vmatprep.mubr.bf16.mxu0 %v5682
  %6167 = vmatmul.mubr.bf16.gmra.mrb[0].mxu0 %v5681
  %v6168 = vpop.f32.mrb[0].mxu0
  %v6169 = vadd.f32 0.0, %v6168
  %v6170 = vpop.f32.mrb[0].mxu0
  %v6171 = vadd.f32 0.0, %v6170
  %v6172 = vpop.f32.mrb[0].mxu0
  %v6173 = vpop.f32.mrb[0].mxu0
  %6174 = vdwg.mxu0
  %6175 = vmatprep.subr.bf16.mxu0 %v3561
  %6176 = vmatpush1.bf16.msra.mxu0 %v3560
  %6177 = vmatprep.subr.bf16.mxu0 %v3565
  %6178 = vmatpush1.bf16.msra.mxu0 %v3564
  %6179 = vmatprep.subr.bf16.mxu0 %v3569
  %6180 = vmatpush1.bf16.msra.mxu0 %v3568
  %6181 = vmatprep.subr.bf16.mxu0 %v3573
  %6182 = vmatpush1.bf16.msra.mxu0 %v3572
  %6183 = vmatprep.subr.bf16.mxu0 %v3577
  %6184 = vmatpush1.bf16.msra.mxu0 %v3576
  %6185 = vmatprep.subr.bf16.mxu0 %v3581
  %6186 = vmatpush1.bf16.msra.mxu0 %v3580
  %6187 = vmatprep.subr.bf16.mxu0 %v3585
  %6188 = vmatpush1.bf16.msra.mxu0 %v3584
  %6189 = vmatprep.subr.bf16.mxu0 %v3589
  %6190 = vmatpush1.bf16.msra.mxu0 %v3588
  %6191 = vmatprep.subr.bf16.mxu0 %v3593
  %6192 = vmatpush1.bf16.msra.mxu0 %v3592
  %6193 = vmatprep.subr.bf16.mxu0 %v3597
  %6194 = vmatpush1.bf16.msra.mxu0 %v3596
  %6195 = vmatprep.subr.bf16.mxu0 %v3601
  %6196 = vmatpush1.bf16.msra.mxu0 %v3600
  %6197 = vmatprep.subr.bf16.mxu0 %v3605
  %6198 = vmatpush1.bf16.msra.mxu0 %v3604
  %6199 = vmatprep.subr.bf16.mxu0 %v3609
  %6200 = vmatpush1.bf16.msra.mxu0 %v3608
  %6201 = vmatprep.subr.bf16.mxu0 %v3613
  %6202 = vmatpush1.bf16.msra.mxu0 %v3612
  %6203 = vmatprep.subr.bf16.mxu0 %v3617
  %6204 = vmatpush1.bf16.msra.mxu0 %v3616
  %6205 = vmatprep.subr.bf16.mxu0 %v3621
  %6206 = vmatpush1.bf16.msra.mxu0 %v3620
  %6207 = vmatprep.mubr.bf16.mxu0 %v5684
  %6208 = vmatmul.mubr.bf16.gmra.mrb[0].mxu0 %v5683
  %v6209 = vpop.f32.mrb[0].mxu0
  %v6210 = vadd.f32 %v6169, %v6209
  %v6211 = vpop.f32.mrb[0].mxu0
  %v6212 = vadd.f32 %v6171, %v6211
  %v6213 = vpop.f32.mrb[0].mxu0
  %v6214 = vpop.f32.mrb[0].mxu0
  %6215 = vdwg.mxu0
  %v6216 = vadd.f32 %v5692, %v5944
  %v6217 = vadd.f32 %v5693, %v5946
  %v6218 = vadd.f32 %v5694, %v6026
  %v6219 = vadd.f32 %v5695, %v6028
  %v6220 = vmul.f32 %v6216, 0.5
  %v6221 = vmul.f32 %v6217, 0.5
  %v6222 = vmul.f32 %v6218, 0.5
  %v6223 = vmul.f32 %v6219, 0.5
  %v6224 = vtanh.pop %v6220
  %v6225 = vtanh.pop %v6221
  %v6226 = vtanh.pop %v6222
  %v6227 = vtanh.pop %v6223
  %v6228 = vmul.f32 %v6224, 0.5
  %v6229 = vmul.f32 %v6225, 0.5
  %v6230 = vmul.f32 %v6226, 0.5
  %v6231 = vmul.f32 %v6227, 0.5
  %v6232 = vadd.f32 %v6228, 0.5
  %v6233 = vadd.f32 %v6229, 0.5
  %v6234 = vadd.f32 %v6230, 0.5
  %v6235 = vadd.f32 %v6231, 0.5
  %6236 = vmatprep.subr.bf16.mxu0 %v4447
  %6237 = vmatpush1.bf16.msra.mxu0 %v4446
  %6238 = vmatprep.subr.bf16.mxu0 %v4451
  %6239 = vmatpush1.bf16.msra.mxu0 %v4450
  %6240 = vmatprep.subr.bf16.mxu0 %v4455
  %6241 = vmatpush1.bf16.msra.mxu0 %v4454
  %6242 = vmatprep.subr.bf16.mxu0 %v4459
  %6243 = vmatpush1.bf16.msra.mxu0 %v4458
  %6244 = vmatprep.subr.bf16.mxu0 %v4463
  %6245 = vmatpush1.bf16.msra.mxu0 %v4462
  %6246 = vmatprep.subr.bf16.mxu0 %v4467
  %6247 = vmatpush1.bf16.msra.mxu0 %v4466
  %6248 = vmatprep.subr.bf16.mxu0 %v4471
  %6249 = vmatpush1.bf16.msra.mxu0 %v4470
  %6250 = vmatprep.subr.bf16.mxu0 %v4475
  %6251 = vmatpush1.bf16.msra.mxu0 %v4474
  %6252 = vmatprep.subr.bf16.mxu0 %v4479
  %6253 = vmatpush1.bf16.msra.mxu0 %v4478
  %6254 = vmatprep.subr.bf16.mxu0 %v4483
  %6255 = vmatpush1.bf16.msra.mxu0 %v4482
  %6256 = vmatprep.subr.bf16.mxu0 %v4487
  %6257 = vmatpush1.bf16.msra.mxu0 %v4486
  %6258 = vmatprep.subr.bf16.mxu0 %v4491
  %6259 = vmatpush1.bf16.msra.mxu0 %v4490
  %6260 = vmatprep.subr.bf16.mxu0 %v4495
  %6261 = vmatpush1.bf16.msra.mxu0 %v4494
  %6262 = vmatprep.subr.bf16.mxu0 %v4499
  %6263 = vmatpush1.bf16.msra.mxu0 %v4498
  %6264 = vmatprep.subr.bf16.mxu0 %v4503
  %6265 = vmatpush1.bf16.msra.mxu0 %v4502
  %6266 = vmatprep.subr.bf16.mxu0 %v4507
  %6267 = vmatpush1.bf16.msra.mxu0 %v4506
  %6268 = vmatprep.mubr.bf16.mxu0 %v5682
  %6269 = vmatmul.mubr.bf16.gmra.mrb[0].mxu0 %v5681
  %v6270 = vpop.f32.mrb[0].mxu0
  %v6271 = vadd.f32 0.0, %v6270
  %v6272 = vpop.f32.mrb[0].mxu0
  %v6273 = vadd.f32 0.0, %v6272
  %v6274 = vpop.f32.mrb[0].mxu0
  %v6275 = vpop.f32.mrb[0].mxu0
  %6276 = vdwg.mxu0
  %6277 = vmatprep.subr.bf16.mxu0 %v4511
  %6278 = vmatpush1.bf16.msra.mxu0 %v4510
  %6279 = vmatprep.subr.bf16.mxu0 %v4515
  %6280 = vmatpush1.bf16.msra.mxu0 %v4514
  %6281 = vmatprep.subr.bf16.mxu0 %v4519
  %6282 = vmatpush1.bf16.msra.mxu0 %v4518
  %6283 = vmatprep.subr.bf16.mxu0 %v4523
  %6284 = vmatpush1.bf16.msra.mxu0 %v4522
  %6285 = vmatprep.subr.bf16.mxu0 %v4527
  %6286 = vmatpush1.bf16.msra.mxu0 %v4526
  %6287 = vmatprep.subr.bf16.mxu0 %v4531
  %6288 = vmatpush1.bf16.msra.mxu0 %v4530
  %6289 = vmatprep.subr.bf16.mxu0 %v4535
  %6290 = vmatpush1.bf16.msra.mxu0 %v4534
  %6291 = vmatprep.subr.bf16.mxu0 %v4539
  %6292 = vmatpush1.bf16.msra.mxu0 %v4538
  %6293 = vmatprep.subr.bf16.mxu0 %v4543
  %6294 = vmatpush1.bf16.msra.mxu0 %v4542
  %6295 = vmatprep.subr.bf16.mxu0 %v4547
  %6296 = vmatpush1.bf16.msra.mxu0 %v4546
  %6297 = vmatprep.subr.bf16.mxu0 %v4551
  %6298 = vmatpush1.bf16.msra.mxu0 %v4550
  %6299 = vmatprep.subr.bf16.mxu0 %v4555
  %6300 = vmatpush1.bf16.msra.mxu0 %v4554
  %6301 = vmatprep.subr.bf16.mxu0 %v4559
  %6302 = vmatpush1.bf16.msra.mxu0 %v4558
  %6303 = vmatprep.subr.bf16.mxu0 %v4563
  %6304 = vmatpush1.bf16.msra.mxu0 %v4562
  %6305 = vmatprep.subr.bf16.mxu0 %v4567
  %6306 = vmatpush1.bf16.msra.mxu0 %v4566
  %6307 = vmatprep.subr.bf16.mxu0 %v4571
  %6308 = vmatpush1.bf16.msra.mxu0 %v4570
  %6309 = vmatprep.mubr.bf16.mxu0 %v5684
  %6310 = vmatmul.mubr.bf16.gmra.mrb[0].mxu0 %v5683
  %v6311 = vpop.f32.mrb[0].mxu0
  %v6312 = vadd.f32 %v6271, %v6311
  %v6313 = vpop.f32.mrb[0].mxu0
  %v6314 = vadd.f32 %v6273, %v6313
  %v6315 = vpop.f32.mrb[0].mxu0
  %v6316 = vpop.f32.mrb[0].mxu0
  %6317 = vdwg.mxu0
  %6318 = vmatprep.subr.bf16.mxu0 %v4449
  %6319 = vmatpush1.bf16.msra.mxu0 %v4448
  %6320 = vmatprep.subr.bf16.mxu0 %v4453
  %6321 = vmatpush1.bf16.msra.mxu0 %v4452
  %6322 = vmatprep.subr.bf16.mxu0 %v4457
  %6323 = vmatpush1.bf16.msra.mxu0 %v4456
  %6324 = vmatprep.subr.bf16.mxu0 %v4461
  %6325 = vmatpush1.bf16.msra.mxu0 %v4460
  %6326 = vmatprep.subr.bf16.mxu0 %v4465
  %6327 = vmatpush1.bf16.msra.mxu0 %v4464
  %6328 = vmatprep.subr.bf16.mxu0 %v4469
  %6329 = vmatpush1.bf16.msra.mxu0 %v4468
  %6330 = vmatprep.subr.bf16.mxu0 %v4473
  %6331 = vmatpush1.bf16.msra.mxu0 %v4472
  %6332 = vmatprep.subr.bf16.mxu0 %v4477
  %6333 = vmatpush1.bf16.msra.mxu0 %v4476
  %6334 = vmatprep.subr.bf16.mxu0 %v4481
  %6335 = vmatpush1.bf16.msra.mxu0 %v4480
  %6336 = vmatprep.subr.bf16.mxu0 %v4485
  %6337 = vmatpush1.bf16.msra.mxu0 %v4484
  %6338 = vmatprep.subr.bf16.mxu0 %v4489
  %6339 = vmatpush1.bf16.msra.mxu0 %v4488
  %6340 = vmatprep.subr.bf16.mxu0 %v4493
  %6341 = vmatpush1.bf16.msra.mxu0 %v4492
  %6342 = vmatprep.subr.bf16.mxu0 %v4497
  %6343 = vmatpush1.bf16.msra.mxu0 %v4496
  %6344 = vmatprep.subr.bf16.mxu0 %v4501
  %6345 = vmatpush1.bf16.msra.mxu0 %v4500
  %6346 = vmatprep.subr.bf16.mxu0 %v4505
  %6347 = vmatpush1.bf16.msra.mxu0 %v4504
  %6348 = vmatprep.subr.bf16.mxu0 %v4509
  %6349 = vmatpush1.bf16.msra.mxu0 %v4508
  %6350 = vmatprep.mubr.bf16.mxu0 %v5682
  %6351 = vmatmul.mubr.bf16.gmra.mrb[0].mxu0 %v5681
  %v6352 = vpop.f32.mrb[0].mxu0
  %v6353 = vadd.f32 0.0, %v6352
  %v6354 = vpop.f32.mrb[0].mxu0
  %v6355 = vadd.f32 0.0, %v6354
  %v6356 = vpop.f32.mrb[0].mxu0
  %v6357 = vpop.f32.mrb[0].mxu0
  %6358 = vdwg.mxu0
  %6359 = vmatprep.subr.bf16.mxu0 %v4513
  %6360 = vmatpush1.bf16.msra.mxu0 %v4512
  %6361 = vmatprep.subr.bf16.mxu0 %v4517
  %6362 = vmatpush1.bf16.msra.mxu0 %v4516
  %6363 = vmatprep.subr.bf16.mxu0 %v4521
  %6364 = vmatpush1.bf16.msra.mxu0 %v4520
  %6365 = vmatprep.subr.bf16.mxu0 %v4525
  %6366 = vmatpush1.bf16.msra.mxu0 %v4524
  %6367 = vmatprep.subr.bf16.mxu0 %v4529
  %6368 = vmatpush1.bf16.msra.mxu0 %v4528
  %6369 = vmatprep.subr.bf16.mxu0 %v4533
  %6370 = vmatpush1.bf16.msra.mxu0 %v4532
  %6371 = vmatprep.subr.bf16.mxu0 %v4537
  %6372 = vmatpush1.bf16.msra.mxu0 %v4536
  %6373 = vmatprep.subr.bf16.mxu0 %v4541
  %6374 = vmatpush1.bf16.msra.mxu0 %v4540
  %6375 = vmatprep.subr.bf16.mxu0 %v4545
  %6376 = vmatpush1.bf16.msra.mxu0 %v4544
  %6377 = vmatprep.subr.bf16.mxu0 %v4549
  %6378 = vmatpush1.bf16.msra.mxu0 %v4548
  %6379 = vmatprep.subr.bf16.mxu0 %v4553
  %6380 = vmatpush1.bf16.msra.mxu0 %v4552
  %6381 = vmatprep.subr.bf16.mxu0 %v4557
  %6382 = vmatpush1.bf16.msra.mxu0 %v4556
  %6383 = vmatprep.subr.bf16.mxu0 %v4561
  %6384 = vmatpush1.bf16.msra.mxu0 %v4560
  %6385 = vmatprep.subr.bf16.mxu0 %v4565
  %6386 = vmatpush1.bf16.msra.mxu0 %v4564
  %6387 = vmatprep.subr.bf16.mxu0 %v4569
  %6388 = vmatpush1.bf16.msra.mxu0 %v4568
  %6389 = vmatprep.subr.bf16.mxu0 %v4573
  %6390 = vmatpush1.bf16.msra.mxu0 %v4572
  %6391 = vmatprep.mubr.bf16.mxu0 %v5684
  %6392 = vmatmul.mubr.bf16.gmra.mrb[0].mxu0 %v5683
  %v6393 = vpop.f32.mrb[0].mxu0
  %v6394 = vadd.f32 %v6353, %v6393
  %v6395 = vpop.f32.mrb[0].mxu0
  %v6396 = vadd.f32 %v6355, %v6395
  %v6397 = vpop.f32.mrb[0].mxu0
  %v6398 = vpop.f32.mrb[0].mxu0
  %6399 = vdwg.mxu0
  %v6400 = vadd.f32 %v5696, %v6128
  %v6401 = vadd.f32 %v5697, %v6130
  %v6402 = vadd.f32 %v5698, %v6210
  %v6403 = vadd.f32 %v5699, %v6212
  %v6404 = vtanh.pop %v6400
  %v6405 = vtanh.pop %v6401
  %v6406 = vtanh.pop %v6402
  %v6407 = vtanh.pop %v6403
  %v6408 = vadd.f32 %v5700, %v6312
  %v6409 = vadd.f32 %v5701, %v6314
  %v6410 = vadd.f32 %v5702, %v6394
  %v6411 = vadd.f32 %v5703, %v6396
  %v6412 = vmul.f32 %v6408, 0.5
  %v6413 = vmul.f32 %v6409, 0.5
  %v6414 = vmul.f32 %v6410, 0.5
  %v6415 = vmul.f32 %v6411, 0.5
  %v6416 = vtanh.pop %v6412
  %v6417 = vtanh.pop %v6413
  %v6418 = vtanh.pop %v6414
  %v6419 = vtanh.pop %v6415
  %v6420 = vmul.f32 %v6416, 0.5
  %v6421 = vmul.f32 %v6417, 0.5
  %v6422 = vmul.f32 %v6418, 0.5
  %v6423 = vmul.f32 %v6419, 0.5
  %v6424 = vadd.f32 %v6420, 0.5
  %v6425 = vadd.f32 %v6421, 0.5
  %v6426 = vadd.f32 %v6422, 0.5
  %v6427 = vadd.f32 %v6423, 0.5
  %v6428 = vmul.f32 %v6232, %v5669
  %v6429 = vmul.f32 %v6233, %v5670
  %v6430 = vmul.f32 %v6234, %v5671
  %v6431 = vmul.f32 %v6235, %v5672
  %v6432 = vmul.f32 %v6048, %v6404
  %v6433 = vmul.f32 %v6049, %v6405
  %v6434 = vmul.f32 %v6050, %v6406
  %v6435 = vmul.f32 %v6051, %v6407
  %v6436 = vadd.f32 %v6428, %v6432
  %v6437 = vadd.f32 %v6429, %v6433
  %v6438 = vadd.f32 %v6430, %v6434
  %v6439 = vadd.f32 %v6431, %v6435
  %v6440 = vtanh.pop %v6436
  %v6441 = vtanh.pop %v6437
  %v6442 = vtanh.pop %v6438
  %v6443 = vtanh.pop %v6439
  %v6444 = vmul.f32 %v6424, %v6440
  %v6445 = vmul.f32 %v6425, %v6441
  %v6446 = vmul.f32 %v6426, %v6442
  %v6447 = vmul.f32 %v6427, %v6443
  %v6448 = vpack.c.bf16 %v6444, %v6444
  %v6449 = vpack.c.bf16 %v6445, %v6445
  %v6450 = vpack.c.bf16 %v6446, %v6446
  %v6451 = vpack.c.bf16 %v6447, %v6447
  %s6452 = smul.u32 3, 16
  %s6453 = smul.addr %s6452, 8
  %s6454 = scalar_lea.vmem [#allocation2], %s6453
  %v6455 = vld [vmem:[%s6454] sm:$0xff]
  %v6456 = vld [vmem:[%s6454 + $0x8] sm:$0xff]
  %v6457 = vld [vmem:[%s6454 + $0x10] sm:$0xff]
  %v6458 = vld [vmem:[%s6454 + $0x18] sm:$0xff]
  %v6459 = vld [vmem:[%s6454 + $0x20] sm:$0xff]
  %v6460 = vld [vmem:[%s6454 + $0x28] sm:$0xff]
  %v6461 = vld [vmem:[%s6454 + $0x30] sm:$0xff]
  %v6462 = vld [vmem:[%s6454 + $0x38] sm:$0xff]
  %v6463 = vld [vmem:[%s6454 + $0x40] sm:$0xff]
  %v6464 = vld [vmem:[%s6454 + $0x48] sm:$0xff]
  %v6465 = vld [vmem:[%s6454 + $0x50] sm:$0xff]
  %v6466 = vld [vmem:[%s6454 + $0x58] sm:$0xff]
  %v6467 = vld [vmem:[%s6454 + $0x60] sm:$0xff]
  %v6468 = vld [vmem:[%s6454 + $0x68] sm:$0xff]
  %v6469 = vld [vmem:[%s6454 + $0x70] sm:$0xff]
  %v6470 = vld [vmem:[%s6454 + $0x78] sm:$0xff]
  %6471 = vmatprep.subr.bf16.mxu0 %v1611
  %6472 = vmatpush1.bf16.msra.mxu0 %v1610
  %6473 = vmatprep.subr.bf16.mxu0 %v1615
  %6474 = vmatpush1.bf16.msra.mxu0 %v1614
  %6475 = vmatprep.subr.bf16.mxu0 %v1619
  %6476 = vmatpush1.bf16.msra.mxu0 %v1618
  %6477 = vmatprep.subr.bf16.mxu0 %v1623
  %6478 = vmatpush1.bf16.msra.mxu0 %v1622
  %6479 = vmatprep.subr.bf16.mxu0 %v1627
  %6480 = vmatpush1.bf16.msra.mxu0 %v1626
  %6481 = vmatprep.subr.bf16.mxu0 %v1631
  %6482 = vmatpush1.bf16.msra.mxu0 %v1630
  %6483 = vmatprep.subr.bf16.mxu0 %v1635
  %6484 = vmatpush1.bf16.msra.mxu0 %v1634
  %6485 = vmatprep.subr.bf16.mxu0 %v1639
  %6486 = vmatpush1.bf16.msra.mxu0 %v1638
  %6487 = vmatprep.subr.bf16.mxu0 %v1643
  %6488 = vmatpush1.bf16.msra.mxu0 %v1642
  %6489 = vmatprep.subr.bf16.mxu0 %v1647
  %6490 = vmatpush1.bf16.msra.mxu0 %v1646
  %6491 = vmatprep.subr.bf16.mxu0 %v1651
  %6492 = vmatpush1.bf16.msra.mxu0 %v1650
  %6493 = vmatprep.subr.bf16.mxu0 %v1655
  %6494 = vmatpush1.bf16.msra.mxu0 %v1654
  %6495 = vmatprep.subr.bf16.mxu0 %v1659
  %6496 = vmatpush1.bf16.msra.mxu0 %v1658
  %6497 = vmatprep.subr.bf16.mxu0 %v1663
  %6498 = vmatpush1.bf16.msra.mxu0 %v1662
  %6499 = vmatprep.subr.bf16.mxu0 %v1667
  %6500 = vmatpush1.bf16.msra.mxu0 %v1666
  %6501 = vmatprep.subr.bf16.mxu0 %v1671
  %6502 = vmatpush1.bf16.msra.mxu0 %v1670
  %6503 = vmatprep.mubr.bf16.mxu0 %v6449
  %6504 = vmatmul.mubr.bf16.gmra.mrb[0].mxu0 %v6448
  %v6505 = vpop.f32.mrb[0].mxu0
  %v6506 = vadd.f32 0.0, %v6505
  %v6507 = vpop.f32.mrb[0].mxu0
  %v6508 = vadd.f32 0.0, %v6507
  %v6509 = vpop.f32.mrb[0].mxu0
  %v6510 = vpop.f32.mrb[0].mxu0
  %6511 = vdwg.mxu0
  %6512 = vmatprep.subr.bf16.mxu0 %v1675
  %6513 = vmatpush1.bf16.msra.mxu0 %v1674
  %6514 = vmatprep.subr.bf16.mxu0 %v1679
  %6515 = vmatpush1.bf16.msra.mxu0 %v1678
  %6516 = vmatprep.subr.bf16.mxu0 %v1683
  %6517 = vmatpush1.bf16.msra.mxu0 %v1682
  %6518 = vmatprep.subr.bf16.mxu0 %v1687
  %6519 = vmatpush1.bf16.msra.mxu0 %v1686
  %6520 = vmatprep.subr.bf16.mxu0 %v1691
  %6521 = vmatpush1.bf16.msra.mxu0 %v1690
  %6522 = vmatprep.subr.bf16.mxu0 %v1695
  %6523 = vmatpush1.bf16.msra.mxu0 %v1694
  %6524 = vmatprep.subr.bf16.mxu0 %v1699
  %6525 = vmatpush1.bf16.msra.mxu0 %v1698
  %6526 = vmatprep.subr.bf16.mxu0 %v1703
  %6527 = vmatpush1.bf16.msra.mxu0 %v1702
  %6528 = vmatprep.subr.bf16.mxu0 %v1707
  %6529 = vmatpush1.bf16.msra.mxu0 %v1706
  %6530 = vmatprep.subr.bf16.mxu0 %v1711
  %6531 = vmatpush1.bf16.msra.mxu0 %v1710
  %6532 = vmatprep.subr.bf16.mxu0 %v1715
  %6533 = vmatpush1.bf16.msra.mxu0 %v1714
  %6534 = vmatprep.subr.bf16.mxu0 %v1719
  %6535 = vmatpush1.bf16.msra.mxu0 %v1718
  %6536 = vmatprep.subr.bf16.mxu0 %v1723
  %6537 = vmatpush1.bf16.msra.mxu0 %v1722
  %6538 = vmatprep.subr.bf16.mxu0 %v1727
  %6539 = vmatpush1.bf16.msra.mxu0 %v1726
  %6540 = vmatprep.subr.bf16.mxu0 %v1731
  %6541 = vmatpush1.bf16.msra.mxu0 %v1730
  %6542 = vmatprep.subr.bf16.mxu0 %v1735
  %6543 = vmatpush1.bf16.msra.mxu0 %v1734
  %6544 = vmatprep.mubr.bf16.mxu0 %v6451
  %6545 = vmatmul.mubr.bf16.gmra.mrb[0].mxu0 %v6450
  %v6546 = vpop.f32.mrb[0].mxu0
  %v6547 = vadd.f32 %v6506, %v6546
  %v6548 = vpop.f32.mrb[0].mxu0
  %v6549 = vadd.f32 %v6508, %v6548
  %v6550 = vpop.f32.mrb[0].mxu0
  %v6551 = vpop.f32.mrb[0].mxu0
  %6552 = vdwg.mxu0
  %6553 = vmatprep.subr.bf16.mxu0 %v1613
  %6554 = vmatpush1.bf16.msra.mxu0 %v1612
  %6555 = vmatprep.subr.bf16.mxu0 %v1617
  %6556 = vmatpush1.bf16.msra.mxu0 %v1616
  %6557 = vmatprep.subr.bf16.mxu0 %v1621
  %6558 = vmatpush1.bf16.msra.mxu0 %v1620
  %6559 = vmatprep.subr.bf16.mxu0 %v1625
  %6560 = vmatpush1.bf16.msra.mxu0 %v1624
  %6561 = vmatprep.subr.bf16.mxu0 %v1629
  %6562 = vmatpush1.bf16.msra.mxu0 %v1628
  %6563 = vmatprep.subr.bf16.mxu0 %v1633
  %6564 = vmatpush1.bf16.msra.mxu0 %v1632
  %6565 = vmatprep.subr.bf16.mxu0 %v1637
  %6566 = vmatpush1.bf16.msra.mxu0 %v1636
  %6567 = vmatprep.subr.bf16.mxu0 %v1641
  %6568 = vmatpush1.bf16.msra.mxu0 %v1640
  %6569 = vmatprep.subr.bf16.mxu0 %v1645
  %6570 = vmatpush1.bf16.msra.mxu0 %v1644
  %6571 = vmatprep.subr.bf16.mxu0 %v1649
  %6572 = vmatpush1.bf16.msra.mxu0 %v1648
  %6573 = vmatprep.subr.bf16.mxu0 %v1653
  %6574 = vmatpush1.bf16.msra.mxu0 %v1652
  %6575 = vmatprep.subr.bf16.mxu0 %v1657
  %6576 = vmatpush1.bf16.msra.mxu0 %v1656
  %6577 = vmatprep.subr.bf16.mxu0 %v1661
  %6578 = vmatpush1.bf16.msra.mxu0 %v1660
  %6579 = vmatprep.subr.bf16.mxu0 %v1665
  %6580 = vmatpush1.bf16.msra.mxu0 %v1664
  %6581 = vmatprep.subr.bf16.mxu0 %v1669
  %6582 = vmatpush1.bf16.msra.mxu0 %v1668
  %6583 = vmatprep.subr.bf16.mxu0 %v1673
  %6584 = vmatpush1.bf16.msra.mxu0 %v1672
  %6585 = vmatprep.mubr.bf16.mxu0 %v6449
  %6586 = vmatmul.mubr.bf16.gmra.mrb[0].mxu0 %v6448
  %v6587 = vpop.f32.mrb[0].mxu0
  %v6588 = vadd.f32 0.0, %v6587
  %v6589 = vpop.f32.mrb[0].mxu0
  %v6590 = vadd.f32 0.0, %v6589
  %v6591 = vpop.f32.mrb[0].mxu0
  %v6592 = vpop.f32.mrb[0].mxu0
  %6593 = vdwg.mxu0
  %6594 = vmatprep.subr.bf16.mxu0 %v1677
  %6595 = vmatpush1.bf16.msra.mxu0 %v1676
  %6596 = vmatprep.subr.bf16.mxu0 %v1681
  %6597 = vmatpush1.bf16.msra.mxu0 %v1680
  %6598 = vmatprep.subr.bf16.mxu0 %v1685
  %6599 = vmatpush1.bf16.msra.mxu0 %v1684
  %6600 = vmatprep.subr.bf16.mxu0 %v1689
  %6601 = vmatpush1.bf16.msra.mxu0 %v1688
  %6602 = vmatprep.subr.bf16.mxu0 %v1693
  %6603 = vmatpush1.bf16.msra.mxu0 %v1692
  %6604 = vmatprep.subr.bf16.mxu0 %v1697
  %6605 = vmatpush1.bf16.msra.mxu0 %v1696
  %6606 = vmatprep.subr.bf16.mxu0 %v1701
  %6607 = vmatpush1.bf16.msra.mxu0 %v1700
  %6608 = vmatprep.subr.bf16.mxu0 %v1705
  %6609 = vmatpush1.bf16.msra.mxu0 %v1704
  %6610 = vmatprep.subr.bf16.mxu0 %v1709
  %6611 = vmatpush1.bf16.msra.mxu0 %v1708
  %6612 = vmatprep.subr.bf16.mxu0 %v1713
  %6613 = vmatpush1.bf16.msra.mxu0 %v1712
  %6614 = vmatprep.subr.bf16.mxu0 %v1717
  %6615 = vmatpush1.bf16.msra.mxu0 %v1716
  %6616 = vmatprep.subr.bf16.mxu0 %v1721
  %6617 = vmatpush1.bf16.msra.mxu0 %v1720
  %6618 = vmatprep.subr.bf16.mxu0 %v1725
  %6619 = vmatpush1.bf16.msra.mxu0 %v1724
  %6620 = vmatprep.subr.bf16.mxu0 %v1729
  %6621 = vmatpush1.bf16.msra.mxu0 %v1728
  %6622 = vmatprep.subr.bf16.mxu0 %v1733
  %6623 = vmatpush1.bf16.msra.mxu0 %v1732
  %6624 = vmatprep.subr.bf16.mxu0 %v1737
  %6625 = vmatpush1.bf16.msra.mxu0 %v1736
  %6626 = vmatprep.mubr.bf16.mxu0 %v6451
  %6627 = vmatmul.mubr.bf16.gmra.mrb[0].mxu0 %v6450
  %v6628 = vpop.f32.mrb[0].mxu0
  %v6629 = vadd.f32 %v6588, %v6628
  %v6630 = vpop.f32.mrb[0].mxu0
  %v6631 = vadd.f32 %v6590, %v6630
  %v6632 = vpop.f32.mrb[0].mxu0
  %v6633 = vpop.f32.mrb[0].mxu0
  %6634 = vdwg.mxu0
  %6635 = vmatprep.subr.bf16.mxu0 %v2543
  %6636 = vmatpush1.bf16.msra.mxu0 %v2542
  %6637 = vmatprep.subr.bf16.mxu0 %v2547
  %6638 = vmatpush1.bf16.msra.mxu0 %v2546
  %6639 = vmatprep.subr.bf16.mxu0 %v2551
  %6640 = vmatpush1.bf16.msra.mxu0 %v2550
  %6641 = vmatprep.subr.bf16.mxu0 %v2555
  %6642 = vmatpush1.bf16.msra.mxu0 %v2554
  %6643 = vmatprep.subr.bf16.mxu0 %v2559
  %6644 = vmatpush1.bf16.msra.mxu0 %v2558
  %6645 = vmatprep.subr.bf16.mxu0 %v2563
  %6646 = vmatpush1.bf16.msra.mxu0 %v2562
  %6647 = vmatprep.subr.bf16.mxu0 %v2567
  %6648 = vmatpush1.bf16.msra.mxu0 %v2566
  %6649 = vmatprep.subr.bf16.mxu0 %v2571
  %6650 = vmatpush1.bf16.msra.mxu0 %v2570
  %6651 = vmatprep.subr.bf16.mxu0 %v2575
  %6652 = vmatpush1.bf16.msra.mxu0 %v2574
  %6653 = vmatprep.subr.bf16.mxu0 %v2579
  %6654 = vmatpush1.bf16.msra.mxu0 %v2578
  %6655 = vmatprep.subr.bf16.mxu0 %v2583
  %6656 = vmatpush1.bf16.msra.mxu0 %v2582
  %6657 = vmatprep.subr.bf16.mxu0 %v2587
  %6658 = vmatpush1.bf16.msra.mxu0 %v2586
  %6659 = vmatprep.subr.bf16.mxu0 %v2591
  %6660 = vmatpush1.bf16.msra.mxu0 %v2590
  %6661 = vmatprep.subr.bf16.mxu0 %v2595
  %6662 = vmatpush1.bf16.msra.mxu0 %v2594
  %6663 = vmatprep.subr.bf16.mxu0 %v2599
  %6664 = vmatpush1.bf16.msra.mxu0 %v2598
  %6665 = vmatprep.subr.bf16.mxu0 %v2603
  %6666 = vmatpush1.bf16.msra.mxu0 %v2602
  %6667 = vmatprep.mubr.bf16.mxu0 %v6449
  %6668 = vmatmul.mubr.bf16.gmra.mrb[0].mxu0 %v6448
  %v6669 = vpop.f32.mrb[0].mxu0
  %v6670 = vadd.f32 0.0, %v6669
  %v6671 = vpop.f32.mrb[0].mxu0
  %v6672 = vadd.f32 0.0, %v6671
  %v6673 = vpop.f32.mrb[0].mxu0
  %v6674 = vpop.f32.mrb[0].mxu0
  %6675 = vdwg.mxu0
  %6676 = vmatprep.subr.bf16.mxu0 %v2607
  %6677 = vmatpush1.bf16.msra.mxu0 %v2606
  %6678 = vmatprep.subr.bf16.mxu0 %v2611
  %6679 = vmatpush1.bf16.msra.mxu0 %v2610
  %6680 = vmatprep.subr.bf16.mxu0 %v2615
  %6681 = vmatpush1.bf16.msra.mxu0 %v2614
  %6682 = vmatprep.subr.bf16.mxu0 %v2619
  %6683 = vmatpush1.bf16.msra.mxu0 %v2618
  %6684 = vmatprep.subr.bf16.mxu0 %v2623
  %6685 = vmatpush1.bf16.msra.mxu0 %v2622
  %6686 = vmatprep.subr.bf16.mxu0 %v2627
  %6687 = vmatpush1.bf16.msra.mxu0 %v2626
  %6688 = vmatprep.subr.bf16.mxu0 %v2631
  %6689 = vmatpush1.bf16.msra.mxu0 %v2630
  %6690 = vmatprep.subr.bf16.mxu0 %v2635
  %6691 = vmatpush1.bf16.msra.mxu0 %v2634
  %6692 = vmatprep.subr.bf16.mxu0 %v2639
  %6693 = vmatpush1.bf16.msra.mxu0 %v2638
  %6694 = vmatprep.subr.bf16.mxu0 %v2643
  %6695 = vmatpush1.bf16.msra.mxu0 %v2642
  %6696 = vmatprep.subr.bf16.mxu0 %v2647
  %6697 = vmatpush1.bf16.msra.mxu0 %v2646
  %6698 = vmatprep.subr.bf16.mxu0 %v2651
  %6699 = vmatpush1.bf16.msra.mxu0 %v2650
  %6700 = vmatprep.subr.bf16.mxu0 %v2655
  %6701 = vmatpush1.bf16.msra.mxu0 %v2654
  %6702 = vmatprep.subr.bf16.mxu0 %v2659
  %6703 = vmatpush1.bf16.msra.mxu0 %v2658
  %6704 = vmatprep.subr.bf16.mxu0 %v2663
  %6705 = vmatpush1.bf16.msra.mxu0 %v2662
  %6706 = vmatprep.subr.bf16.mxu0 %v2667
  %6707 = vmatpush1.bf16.msra.mxu0 %v2666
  %6708 = vmatprep.mubr.bf16.mxu0 %v6451
  %6709 = vmatmul.mubr.bf16.gmra.mrb[0].mxu0 %v6450
  %v6710 = vpop.f32.mrb[0].mxu0
  %v6711 = vadd.f32 %v6670, %v6710
  %v6712 = vpop.f32.mrb[0].mxu0
  %v6713 = vadd.f32 %v6672, %v6712
  %v6714 = vpop.f32.mrb[0].mxu0
  %v6715 = vpop.f32.mrb[0].mxu0
  %6716 = vdwg.mxu0
  %6717 = vmatprep.subr.bf16.mxu0 %v2545
  %6718 = vmatpush1.bf16.msra.mxu0 %v2544
  %6719 = vmatprep.subr.bf16.mxu0 %v2549
  %6720 = vmatpush1.bf16.msra.mxu0 %v2548
  %6721 = vmatprep.subr.bf16.mxu0 %v2553
  %6722 = vmatpush1.bf16.msra.mxu0 %v2552
  %6723 = vmatprep.subr.bf16.mxu0 %v2557
  %6724 = vmatpush1.bf16.msra.mxu0 %v2556
  %6725 = vmatprep.subr.bf16.mxu0 %v2561
  %6726 = vmatpush1.bf16.msra.mxu0 %v2560
  %6727 = vmatprep.subr.bf16.mxu0 %v2565
  %6728 = vmatpush1.bf16.msra.mxu0 %v2564
  %6729 = vmatprep.subr.bf16.mxu0 %v2569
  %6730 = vmatpush1.bf16.msra.mxu0 %v2568
  %6731 = vmatprep.subr.bf16.mxu0 %v2573
  %6732 = vmatpush1.bf16.msra.mxu0 %v2572
  %6733 = vmatprep.subr.bf16.mxu0 %v2577
  %6734 = vmatpush1.bf16.msra.mxu0 %v2576
  %6735 = vmatprep.subr.bf16.mxu0 %v2581
  %6736 = vmatpush1.bf16.msra.mxu0 %v2580
  %6737 = vmatprep.subr.bf16.mxu0 %v2585
  %6738 = vmatpush1.bf16.msra.mxu0 %v2584
  %6739 = vmatprep.subr.bf16.mxu0 %v2589
  %6740 = vmatpush1.bf16.msra.mxu0 %v2588
  %6741 = vmatprep.subr.bf16.mxu0 %v2593
  %6742 = vmatpush1.bf16.msra.mxu0 %v2592
  %6743 = vmatprep.subr.bf16.mxu0 %v2597
  %6744 = vmatpush1.bf16.msra.mxu0 %v2596
  %6745 = vmatprep.subr.bf16.mxu0 %v2601
  %6746 = vmatpush1.bf16.msra.mxu0 %v2600
  %6747 = vmatprep.subr.bf16.mxu0 %v2605
  %6748 = vmatpush1.bf16.msra.mxu0 %v2604
  %6749 = vmatprep.mubr.bf16.mxu0 %v6449
  %6750 = vmatmul.mubr.bf16.gmra.mrb[0].mxu0 %v6448
  %v6751 = vpop.f32.mrb[0].mxu0
  %v6752 = vadd.f32 0.0, %v6751
  %v6753 = vpop.f32.mrb[0].mxu0
  %v6754 = vadd.f32 0.0, %v6753
  %v6755 = vpop.f32.mrb[0].mxu0
  %v6756 = vpop.f32.mrb[0].mxu0
  %6757 = vdwg.mxu0
  %6758 = vmatprep.subr.bf16.mxu0 %v2609
  %6759 = vmatpush1.bf16.msra.mxu0 %v2608
  %6760 = vmatprep.subr.bf16.mxu0 %v2613
  %6761 = vmatpush1.bf16.msra.mxu0 %v2612
  %6762 = vmatprep.subr.bf16.mxu0 %v2617
  %6763 = vmatpush1.bf16.msra.mxu0 %v2616
  %6764 = vmatprep.subr.bf16.mxu0 %v2621
  %6765 = vmatpush1.bf16.msra.mxu0 %v2620
  %6766 = vmatprep.subr.bf16.mxu0 %v2625
  %6767 = vmatpush1.bf16.msra.mxu0 %v2624
  %6768 = vmatprep.subr.bf16.mxu0 %v2629
  %6769 = vmatpush1.bf16.msra.mxu0 %v2628
  %6770 = vmatprep.subr.bf16.mxu0 %v2633
  %6771 = vmatpush1.bf16.msra.mxu0 %v2632
  %6772 = vmatprep.subr.bf16.mxu0 %v2637
  %6773 = vmatpush1.bf16.msra.mxu0 %v2636
  %6774 = vmatprep.subr.bf16.mxu0 %v2641
  %6775 = vmatpush1.bf16.msra.mxu0 %v2640
  %6776 = vmatprep.subr.bf16.mxu0 %v2645
  %6777 = vmatpush1.bf16.msra.mxu0 %v2644
  %6778 = vmatprep.subr.bf16.mxu0 %v2649
  %6779 = vmatpush1.bf16.msra.mxu0 %v2648
  %6780 = vmatprep.subr.bf16.mxu0 %v2653
  %6781 = vmatpush1.bf16.msra.mxu0 %v2652
  %6782 = vmatprep.subr.bf16.mxu0 %v2657
  %6783 = vmatpush1.bf16.msra.mxu0 %v2656
  %6784 = vmatprep.subr.bf16.mxu0 %v2661
  %6785 = vmatpush1.bf16.msra.mxu0 %v2660
  %6786 = vmatprep.subr.bf16.mxu0 %v2665
  %6787 = vmatpush1.bf16.msra.mxu0 %v2664
  %6788 = vmatprep.subr.bf16.mxu0 %v2669
  %6789 = vmatpush1.bf16.msra.mxu0 %v2668
  %6790 = vmatprep.mubr.bf16.mxu0 %v6451
  %6791 = vmatmul.mubr.bf16.gmra.mrb[0].mxu0 %v6450
  %v6792 = vpop.f32.mrb[0].mxu0
  %v6793 = vadd.f32 %v6752, %v6792
  %v6794 = vpop.f32.mrb[0].mxu0
  %v6795 = vadd.f32 %v6754, %v6794
  %v6796 = vpop.f32.mrb[0].mxu0
  %v6797 = vpop.f32.mrb[0].mxu0
  %6798 = vdwg.mxu0
  %v6799 = vadd.f32 %v6455, %v6547
  %v6800 = vadd.f32 %v6456, %v6549
  %v6801 = vadd.f32 %v6457, %v6629
  %v6802 = vadd.f32 %v6458, %v6631
  %v6803 = vmul.f32 %v6799, 0.5
  %v6804 = vmul.f32 %v6800, 0.5
  %v6805 = vmul.f32 %v6801, 0.5
  %v6806 = vmul.f32 %v6802, 0.5
  %v6807 = vtanh.pop %v6803
  %v6808 = vtanh.pop %v6804
  %v6809 = vtanh.pop %v6805
  %v6810 = vtanh.pop %v6806
  %v6811 = vmul.f32 %v6807, 0.5
  %v6812 = vmul.f32 %v6808, 0.5
  %v6813 = vmul.f32 %v6809, 0.5
  %v6814 = vmul.f32 %v6810, 0.5
  %v6815 = vadd.f32 %v6811, 0.5
  %v6816 = vadd.f32 %v6812, 0.5
  %v6817 = vadd.f32 %v6813, 0.5
  %v6818 = vadd.f32 %v6814, 0.5
  %6819 = vmatprep.subr.bf16.mxu0 %v3495
  %6820 = vmatpush1.bf16.msra.mxu0 %v3494
  %6821 = vmatprep.subr.bf16.mxu0 %v3499
  %6822 = vmatpush1.bf16.msra.mxu0 %v3498
  %6823 = vmatprep.subr.bf16.mxu0 %v3503
  %6824 = vmatpush1.bf16.msra.mxu0 %v3502
  %6825 = vmatprep.subr.bf16.mxu0 %v3507
  %6826 = vmatpush1.bf16.msra.mxu0 %v3506
  %6827 = vmatprep.subr.bf16.mxu0 %v3511
  %6828 = vmatpush1.bf16.msra.mxu0 %v3510
  %6829 = vmatprep.subr.bf16.mxu0 %v3515
  %6830 = vmatpush1.bf16.msra.mxu0 %v3514
  %6831 = vmatprep.subr.bf16.mxu0 %v3519
  %6832 = vmatpush1.bf16.msra.mxu0 %v3518
  %6833 = vmatprep.subr.bf16.mxu0 %v3523
  %6834 = vmatpush1.bf16.msra.mxu0 %v3522
  %6835 = vmatprep.subr.bf16.mxu0 %v3527
  %6836 = vmatpush1.bf16.msra.mxu0 %v3526
  %6837 = vmatprep.subr.bf16.mxu0 %v3531
  %6838 = vmatpush1.bf16.msra.mxu0 %v3530
  %6839 = vmatprep.subr.bf16.mxu0 %v3535
  %6840 = vmatpush1.bf16.msra.mxu0 %v3534
  %6841 = vmatprep.subr.bf16.mxu0 %v3539
  %6842 = vmatpush1.bf16.msra.mxu0 %v3538
  %6843 = vmatprep.subr.bf16.mxu0 %v3543
  %6844 = vmatpush1.bf16.msra.mxu0 %v3542
  %6845 = vmatprep.subr.bf16.mxu0 %v3547
  %6846 = vmatpush1.bf16.msra.mxu0 %v3546
  %6847 = vmatprep.subr.bf16.mxu0 %v3551
  %6848 = vmatpush1.bf16.msra.mxu0 %v3550
  %6849 = vmatprep.subr.bf16.mxu0 %v3555
  %6850 = vmatpush1.bf16.msra.mxu0 %v3554
  %6851 = vmatprep.mubr.bf16.mxu0 %v6449
  %6852 = vmatmul.mubr.bf16.gmra.mrb[0].mxu0 %v6448
  %v6853 = vpop.f32.mrb[0].mxu0
  %v6854 = vadd.f32 0.0, %v6853
  %v6855 = vpop.f32.mrb[0].mxu0
  %v6856 = vadd.f32 0.0, %v6855
  %v6857 = vpop.f32.mrb[0].mxu0
  %v6858 = vpop.f32.mrb[0].mxu0
  %6859 = vdwg.mxu0
  %6860 = vmatprep.subr.bf16.mxu0 %v3559
  %6861 = vmatpush1.bf16.msra.mxu0 %v3558
  %6862 = vmatprep.subr.bf16.mxu0 %v3563
  %6863 = vmatpush1.bf16.msra.mxu0 %v3562
  %6864 = vmatprep.subr.bf16.mxu0 %v3567
  %6865 = vmatpush1.bf16.msra.mxu0 %v3566
  %6866 = vmatprep.subr.bf16.mxu0 %v3571
  %6867 = vmatpush1.bf16.msra.mxu0 %v3570
  %6868 = vmatprep.subr.bf16.mxu0 %v3575
  %6869 = vmatpush1.bf16.msra.mxu0 %v3574
  %6870 = vmatprep.subr.bf16.mxu0 %v3579
  %6871 = vmatpush1.bf16.msra.mxu0 %v3578
  %6872 = vmatprep.subr.bf16.mxu0 %v3583
  %6873 = vmatpush1.bf16.msra.mxu0 %v3582
  %6874 = vmatprep.subr.bf16.mxu0 %v3587
  %6875 = vmatpush1.bf16.msra.mxu0 %v3586
  %6876 = vmatprep.subr.bf16.mxu0 %v3591
  %6877 = vmatpush1.bf16.msra.mxu0 %v3590
  %6878 = vmatprep.subr.bf16.mxu0 %v3595
  %6879 = vmatpush1.bf16.msra.mxu0 %v3594
  %6880 = vmatprep.subr.bf16.mxu0 %v3599
  %6881 = vmatpush1.bf16.msra.mxu0 %v3598
  %6882 = vmatprep.subr.bf16.mxu0 %v3603
  %6883 = vmatpush1.bf16.msra.mxu0 %v3602
  %6884 = vmatprep.subr.bf16.mxu0 %v3607
  %6885 = vmatpush1.bf16.msra.mxu0 %v3606
  %6886 = vmatprep.subr.bf16.mxu0 %v3611
  %6887 = vmatpush1.bf16.msra.mxu0 %v3610
  %6888 = vmatprep.subr.bf16.mxu0 %v3615
  %6889 = vmatpush1.bf16.msra.mxu0 %v3614
  %6890 = vmatprep.subr.bf16.mxu0 %v3619
  %6891 = vmatpush1.bf16.msra.mxu0 %v3618
  %6892 = vmatprep.mubr.bf16.mxu0 %v6451
  %6893 = vmatmul.mubr.bf16.gmra.mrb[0].mxu0 %v6450
  %v6894 = vpop.f32.mrb[0].mxu0
  %v6895 = vadd.f32 %v6854, %v6894
  %v6896 = vpop.f32.mrb[0].mxu0
  %v6897 = vadd.f32 %v6856, %v6896
  %v6898 = vpop.f32.mrb[0].mxu0
  %v6899 = vpop.f32.mrb[0].mxu0
  %6900 = vdwg.mxu0
  %6901 = vmatprep.subr.bf16.mxu0 %v3497
  %6902 = vmatpush1.bf16.msra.mxu0 %v3496
  %6903 = vmatprep.subr.bf16.mxu0 %v3501
  %6904 = vmatpush1.bf16.msra.mxu0 %v3500
  %6905 = vmatprep.subr.bf16.mxu0 %v3505
  %6906 = vmatpush1.bf16.msra.mxu0 %v3504
  %6907 = vmatprep.subr.bf16.mxu0 %v3509
  %6908 = vmatpush1.bf16.msra.mxu0 %v3508
  %6909 = vmatprep.subr.bf16.mxu0 %v3513
  %6910 = vmatpush1.bf16.msra.mxu0 %v3512
  %6911 = vmatprep.subr.bf16.mxu0 %v3517
  %6912 = vmatpush1.bf16.msra.mxu0 %v3516
  %6913 = vmatprep.subr.bf16.mxu0 %v3521
  %6914 = vmatpush1.bf16.msra.mxu0 %v3520
  %6915 = vmatprep.subr.bf16.mxu0 %v3525
  %6916 = vmatpush1.bf16.msra.mxu0 %v3524
  %6917 = vmatprep.subr.bf16.mxu0 %v3529
  %6918 = vmatpush1.bf16.msra.mxu0 %v3528
  %6919 = vmatprep.subr.bf16.mxu0 %v3533
  %6920 = vmatpush1.bf16.msra.mxu0 %v3532
  %6921 = vmatprep.subr.bf16.mxu0 %v3537
  %6922 = vmatpush1.bf16.msra.mxu0 %v3536
  %6923 = vmatprep.subr.bf16.mxu0 %v3541
  %6924 = vmatpush1.bf16.msra.mxu0 %v3540
  %6925 = vmatprep.subr.bf16.mxu0 %v3545
  %6926 = vmatpush1.bf16.msra.mxu0 %v3544
  %6927 = vmatprep.subr.bf16.mxu0 %v3549
  %6928 = vmatpush1.bf16.msra.mxu0 %v3548
  %6929 = vmatprep.subr.bf16.mxu0 %v3553
  %6930 = vmatpush1.bf16.msra.mxu0 %v3552
  %6931 = vmatprep.subr.bf16.mxu0 %v3557
  %6932 = vmatpush1.bf16.msra.mxu0 %v3556
  %6933 = vmatprep.mubr.bf16.mxu0 %v6449
  %6934 = vmatmul.mubr.bf16.gmra.mrb[0].mxu0 %v6448
  %v6935 = vpop.f32.mrb[0].mxu0
  %v6936 = vadd.f32 0.0, %v6935
  %v6937 = vpop.f32.mrb[0].mxu0
  %v6938 = vadd.f32 0.0, %v6937
  %v6939 = vpop.f32.mrb[0].mxu0
  %v6940 = vpop.f32.mrb[0].mxu0
  %6941 = vdwg.mxu0
  %6942 = vmatprep.subr.bf16.mxu0 %v3561
  %6943 = vmatpush1.bf16.msra.mxu0 %v3560
  %6944 = vmatprep.subr.bf16.mxu0 %v3565
  %6945 = vmatpush1.bf16.msra.mxu0 %v3564
  %6946 = vmatprep.subr.bf16.mxu0 %v3569
  %6947 = vmatpush1.bf16.msra.mxu0 %v3568
  %6948 = vmatprep.subr.bf16.mxu0 %v3573
  %6949 = vmatpush1.bf16.msra.mxu0 %v3572
  %6950 = vmatprep.subr.bf16.mxu0 %v3577
  %6951 = vmatpush1.bf16.msra.mxu0 %v3576
  %6952 = vmatprep.subr.bf16.mxu0 %v3581
  %6953 = vmatpush1.bf16.msra.mxu0 %v3580
  %6954 = vmatprep.subr.bf16.mxu0 %v3585
  %6955 = vmatpush1.bf16.msra.mxu0 %v3584
  %6956 = vmatprep.subr.bf16.mxu0 %v3589
  %6957 = vmatpush1.bf16.msra.mxu0 %v3588
  %6958 = vmatprep.subr.bf16.mxu0 %v3593
  %6959 = vmatpush1.bf16.msra.mxu0 %v3592
  %6960 = vmatprep.subr.bf16.mxu0 %v3597
  %6961 = vmatpush1.bf16.msra.mxu0 %v3596
  %6962 = vmatprep.subr.bf16.mxu0 %v3601
  %6963 = vmatpush1.bf16.msra.mxu0 %v3600
  %6964 = vmatprep.subr.bf16.mxu0 %v3605
  %6965 = vmatpush1.bf16.msra.mxu0 %v3604
  %6966 = vmatprep.subr.bf16.mxu0 %v3609
  %6967 = vmatpush1.bf16.msra.mxu0 %v3608
  %6968 = vmatprep.subr.bf16.mxu0 %v3613
  %6969 = vmatpush1.bf16.msra.mxu0 %v3612
  %6970 = vmatprep.subr.bf16.mxu0 %v3617
  %6971 = vmatpush1.bf16.msra.mxu0 %v3616
  %6972 = vmatprep.subr.bf16.mxu0 %v3621
  %6973 = vmatpush1.bf16.msra.mxu0 %v3620
  %6974 = vmatprep.mubr.bf16.mxu0 %v6451
  %6975 = vmatmul.mubr.bf16.gmra.mrb[0].mxu0 %v6450
  %v6976 = vpop.f32.mrb[0].mxu0
  %v6977 = vadd.f32 %v6936, %v6976
  %v6978 = vpop.f32.mrb[0].mxu0
  %v6979 = vadd.f32 %v6938, %v6978
  %v6980 = vpop.f32.mrb[0].mxu0
  %v6981 = vpop.f32.mrb[0].mxu0
  %6982 = vdwg.mxu0
  %v6983 = vadd.f32 %v6459, %v6711
  %v6984 = vadd.f32 %v6460, %v6713
  %v6985 = vadd.f32 %v6461, %v6793
  %v6986 = vadd.f32 %v6462, %v6795
  %v6987 = vmul.f32 %v6983, 0.5
  %v6988 = vmul.f32 %v6984, 0.5
  %v6989 = vmul.f32 %v6985, 0.5
  %v6990 = vmul.f32 %v6986, 0.5
  %v6991 = vtanh.pop %v6987
  %v6992 = vtanh.pop %v6988
  %v6993 = vtanh.pop %v6989
  %v6994 = vtanh.pop %v6990
  %v6995 = vmul.f32 %v6991, 0.5
  %v6996 = vmul.f32 %v6992, 0.5
  %v6997 = vmul.f32 %v6993, 0.5
  %v6998 = vmul.f32 %v6994, 0.5
  %v6999 = vadd.f32 %v6995, 0.5
  %v7000 = vadd.f32 %v6996, 0.5
  %v7001 = vadd.f32 %v6997, 0.5
  %v7002 = vadd.f32 %v6998, 0.5
  %7003 = vmatprep.subr.bf16.mxu0 %v4447
  %7004 = vmatpush1.bf16.msra.mxu0 %v4446
  %7005 = vmatprep.subr.bf16.mxu0 %v4451
  %7006 = vmatpush1.bf16.msra.mxu0 %v4450
  %7007 = vmatprep.subr.bf16.mxu0 %v4455
  %7008 = vmatpush1.bf16.msra.mxu0 %v4454
  %7009 = vmatprep.subr.bf16.mxu0 %v4459
  %7010 = vmatpush1.bf16.msra.mxu0 %v4458
  %7011 = vmatprep.subr.bf16.mxu0 %v4463
  %7012 = vmatpush1.bf16.msra.mxu0 %v4462
  %7013 = vmatprep.subr.bf16.mxu0 %v4467
  %7014 = vmatpush1.bf16.msra.mxu0 %v4466
  %7015 = vmatprep.subr.bf16.mxu0 %v4471
  %7016 = vmatpush1.bf16.msra.mxu0 %v4470
  %7017 = vmatprep.subr.bf16.mxu0 %v4475
  %7018 = vmatpush1.bf16.msra.mxu0 %v4474
  %7019 = vmatprep.subr.bf16.mxu0 %v4479
  %7020 = vmatpush1.bf16.msra.mxu0 %v4478
  %7021 = vmatprep.subr.bf16.mxu0 %v4483
  %7022 = vmatpush1.bf16.msra.mxu0 %v4482
  %7023 = vmatprep.subr.bf16.mxu0 %v4487
  %7024 = vmatpush1.bf16.msra.mxu0 %v4486
  %7025 = vmatprep.subr.bf16.mxu0 %v4491
  %7026 = vmatpush1.bf16.msra.mxu0 %v4490
  %7027 = vmatprep.subr.bf16.mxu0 %v4495
  %7028 = vmatpush1.bf16.msra.mxu0 %v4494
  %7029 = vmatprep.subr.bf16.mxu0 %v4499
  %7030 = vmatpush1.bf16.msra.mxu0 %v4498
  %7031 = vmatprep.subr.bf16.mxu0 %v4503
  %7032 = vmatpush1.bf16.msra.mxu0 %v4502
  %7033 = vmatprep.subr.bf16.mxu0 %v4507
  %7034 = vmatpush1.bf16.msra.mxu0 %v4506
  %7035 = vmatprep.mubr.bf16.mxu0 %v6449
  %7036 = vmatmul.mubr.bf16.gmra.mrb[0].mxu0 %v6448
  %v7037 = vpop.f32.mrb[0].mxu0
  %v7038 = vadd.f32 0.0, %v7037
  %v7039 = vpop.f32.mrb[0].mxu0
  %v7040 = vadd.f32 0.0, %v7039
  %v7041 = vpop.f32.mrb[0].mxu0
  %v7042 = vpop.f32.mrb[0].mxu0
  %7043 = vdwg.mxu0
  %7044 = vmatprep.subr.bf16.mxu0 %v4511
  %7045 = vmatpush1.bf16.msra.mxu0 %v4510
  %7046 = vmatprep.subr.bf16.mxu0 %v4515
  %7047 = vmatpush1.bf16.msra.mxu0 %v4514
  %7048 = vmatprep.subr.bf16.mxu0 %v4519
  %7049 = vmatpush1.bf16.msra.mxu0 %v4518
  %7050 = vmatprep.subr.bf16.mxu0 %v4523
  %7051 = vmatpush1.bf16.msra.mxu0 %v4522
  %7052 = vmatprep.subr.bf16.mxu0 %v4527
  %7053 = vmatpush1.bf16.msra.mxu0 %v4526
  %7054 = vmatprep.subr.bf16.mxu0 %v4531
  %7055 = vmatpush1.bf16.msra.mxu0 %v4530
  %7056 = vmatprep.subr.bf16.mxu0 %v4535
  %7057 = vmatpush1.bf16.msra.mxu0 %v4534
  %7058 = vmatprep.subr.bf16.mxu0 %v4539
  %7059 = vmatpush1.bf16.msra.mxu0 %v4538
  %7060 = vmatprep.subr.bf16.mxu0 %v4543
  %7061 = vmatpush1.bf16.msra.mxu0 %v4542
  %7062 = vmatprep.subr.bf16.mxu0 %v4547
  %7063 = vmatpush1.bf16.msra.mxu0 %v4546
  %7064 = vmatprep.subr.bf16.mxu0 %v4551
  %7065 = vmatpush1.bf16.msra.mxu0 %v4550
  %7066 = vmatprep.subr.bf16.mxu0 %v4555
  %7067 = vmatpush1.bf16.msra.mxu0 %v4554
  %7068 = vmatprep.subr.bf16.mxu0 %v4559
  %7069 = vmatpush1.bf16.msra.mxu0 %v4558
  %7070 = vmatprep.subr.bf16.mxu0 %v4563
  %7071 = vmatpush1.bf16.msra.mxu0 %v4562
  %7072 = vmatprep.subr.bf16.mxu0 %v4567
  %7073 = vmatpush1.bf16.msra.mxu0 %v4566
  %7074 = vmatprep.subr.bf16.mxu0 %v4571
  %7075 = vmatpush1.bf16.msra.mxu0 %v4570
  %7076 = vmatprep.mubr.bf16.mxu0 %v6451
  %7077 = vmatmul.mubr.bf16.gmra.mrb[0].mxu0 %v6450
  %v7078 = vpop.f32.mrb[0].mxu0
  %v7079 = vadd.f32 %v7038, %v7078
  %v7080 = vpop.f32.mrb[0].mxu0
  %v7081 = vadd.f32 %v7040, %v7080
  %v7082 = vpop.f32.mrb[0].mxu0
  %v7083 = vpop.f32.mrb[0].mxu0
  %7084 = vdwg.mxu0
  %7085 = vmatprep.subr.bf16.mxu0 %v4449
  %7086 = vmatpush1.bf16.msra.mxu0 %v4448
  %7087 = vmatprep.subr.bf16.mxu0 %v4453
  %7088 = vmatpush1.bf16.msra.mxu0 %v4452
  %7089 = vmatprep.subr.bf16.mxu0 %v4457
  %7090 = vmatpush1.bf16.msra.mxu0 %v4456
  %7091 = vmatprep.subr.bf16.mxu0 %v4461
  %7092 = vmatpush1.bf16.msra.mxu0 %v4460
  %7093 = vmatprep.subr.bf16.mxu0 %v4465
  %7094 = vmatpush1.bf16.msra.mxu0 %v4464
  %7095 = vmatprep.subr.bf16.mxu0 %v4469
  %7096 = vmatpush1.bf16.msra.mxu0 %v4468
  %7097 = vmatprep.subr.bf16.mxu0 %v4473
  %7098 = vmatpush1.bf16.msra.mxu0 %v4472
  %7099 = vmatprep.subr.bf16.mxu0 %v4477
  %7100 = vmatpush1.bf16.msra.mxu0 %v4476
  %7101 = vmatprep.subr.bf16.mxu0 %v4481
  %7102 = vmatpush1.bf16.msra.mxu0 %v4480
  %7103 = vmatprep.subr.bf16.mxu0 %v4485
  %7104 = vmatpush1.bf16.msra.mxu0 %v4484
  %7105 = vmatprep.subr.bf16.mxu0 %v4489
  %7106 = vmatpush1.bf16.msra.mxu0 %v4488
  %7107 = vmatprep.subr.bf16.mxu0 %v4493
  %7108 = vmatpush1.bf16.msra.mxu0 %v4492
  %7109 = vmatprep.subr.bf16.mxu0 %v4497
  %7110 = vmatpush1.bf16.msra.mxu0 %v4496
  %7111 = vmatprep.subr.bf16.mxu0 %v4501
  %7112 = vmatpush1.bf16.msra.mxu0 %v4500
  %7113 = vmatprep.subr.bf16.mxu0 %v4505
  %7114 = vmatpush1.bf16.msra.mxu0 %v4504
  %7115 = vmatprep.subr.bf16.mxu0 %v4509
  %7116 = vmatpush1.bf16.msra.mxu0 %v4508
  %7117 = vmatprep.mubr.bf16.mxu0 %v6449
  %7118 = vmatmul.mubr.bf16.gmra.mrb[0].mxu0 %v6448
  %v7119 = vpop.f32.mrb[0].mxu0
  %v7120 = vadd.f32 0.0, %v7119
  %v7121 = vpop.f32.mrb[0].mxu0
  %v7122 = vadd.f32 0.0, %v7121
  %v7123 = vpop.f32.mrb[0].mxu0
  %v7124 = vpop.f32.mrb[0].mxu0
  %7125 = vdwg.mxu0
  %7126 = vmatprep.subr.bf16.mxu0 %v4513
  %7127 = vmatpush1.bf16.msra.mxu0 %v4512
  %7128 = vmatprep.subr.bf16.mxu0 %v4517
  %7129 = vmatpush1.bf16.msra.mxu0 %v4516
  %7130 = vmatprep.subr.bf16.mxu0 %v4521
  %7131 = vmatpush1.bf16.msra.mxu0 %v4520
  %7132 = vmatprep.subr.bf16.mxu0 %v4525
  %7133 = vmatpush1.bf16.msra.mxu0 %v4524
  %7134 = vmatprep.subr.bf16.mxu0 %v4529
  %7135 = vmatpush1.bf16.msra.mxu0 %v4528
  %7136 = vmatprep.subr.bf16.mxu0 %v4533
  %7137 = vmatpush1.bf16.msra.mxu0 %v4532
  %7138 = vmatprep.subr.bf16.mxu0 %v4537
  %7139 = vmatpush1.bf16.msra.mxu0 %v4536
  %7140 = vmatprep.subr.bf16.mxu0 %v4541
  %7141 = vmatpush1.bf16.msra.mxu0 %v4540
  %7142 = vmatprep.subr.bf16.mxu0 %v4545
  %7143 = vmatpush1.bf16.msra.mxu0 %v4544
  %7144 = vmatprep.subr.bf16.mxu0 %v4549
  %7145 = vmatpush1.bf16.msra.mxu0 %v4548
  %7146 = vmatprep.subr.bf16.mxu0 %v4553
  %7147 = vmatpush1.bf16.msra.mxu0 %v4552
  %7148 = vmatprep.subr.bf16.mxu0 %v4557
  %7149 = vmatpush1.bf16.msra.mxu0 %v4556
  %7150 = vmatprep.subr.bf16.mxu0 %v4561
  %7151 = vmatpush1.bf16.msra.mxu0 %v4560
  %7152 = vmatprep.subr.bf16.mxu0 %v4565
  %7153 = vmatpush1.bf16.msra.mxu0 %v4564
  %7154 = vmatprep.subr.bf16.mxu0 %v4569
  %7155 = vmatpush1.bf16.msra.mxu0 %v4568
  %7156 = vmatprep.subr.bf16.mxu0 %v4573
  %7157 = vmatpush1.bf16.msra.mxu0 %v4572
  %7158 = vmatprep.mubr.bf16.mxu0 %v6451
  %7159 = vmatmul.mubr.bf16.gmra.mrb[0].mxu0 %v6450
  %v7160 = vpop.f32.mrb[0].mxu0
  %v7161 = vadd.f32 %v7120, %v7160
  %v7162 = vpop.f32.mrb[0].mxu0
  %v7163 = vadd.f32 %v7122, %v7162
  %v7164 = vpop.f32.mrb[0].mxu0
  %v7165 = vpop.f32.mrb[0].mxu0
  %7166 = vdwg.mxu0
  %v7167 = vadd.f32 %v6463, %v6895
  %v7168 = vadd.f32 %v6464, %v6897
  %v7169 = vadd.f32 %v6465, %v6977
  %v7170 = vadd.f32 %v6466, %v6979
  %v7171 = vtanh.pop %v7167
  %v7172 = vtanh.pop %v7168
  %v7173 = vtanh.pop %v7169
  %v7174 = vtanh.pop %v7170
  %v7175 = vadd.f32 %v6467, %v7079
  %v7176 = vadd.f32 %v6468, %v7081
  %v7177 = vadd.f32 %v6469, %v7161
  %v7178 = vadd.f32 %v6470, %v7163
  %v7179 = vmul.f32 %v7175, 0.5
  %v7180 = vmul.f32 %v7176, 0.5
  %v7181 = vmul.f32 %v7177, 0.5
  %v7182 = vmul.f32 %v7178, 0.5
  %v7183 = vtanh.pop %v7179
  %v7184 = vtanh.pop %v7180
  %v7185 = vtanh.pop %v7181
  %v7186 = vtanh.pop %v7182
  %v7187 = vmul.f32 %v7183, 0.5
  %v7188 = vmul.f32 %v7184, 0.5
  %v7189 = vmul.f32 %v7185, 0.5
  %v7190 = vmul.f32 %v7186, 0.5
  %v7191 = vadd.f32 %v7187, 0.5
  %v7192 = vadd.f32 %v7188, 0.5
  %v7193 = vadd.f32 %v7189, 0.5
  %v7194 = vadd.f32 %v7190, 0.5
  %v7195 = vmul.f32 %v6999, %v6436
  %v7196 = vmul.f32 %v7000, %v6437
  %v7197 = vmul.f32 %v7001, %v6438
  %v7198 = vmul.f32 %v7002, %v6439
  %v7199 = vmul.f32 %v6815, %v7171
  %v7200 = vmul.f32 %v6816, %v7172
  %v7201 = vmul.f32 %v6817, %v7173
  %v7202 = vmul.f32 %v6818, %v7174
  %v7203 = vadd.f32 %v7195, %v7199
  %v7204 = vadd.f32 %v7196, %v7200
  %v7205 = vadd.f32 %v7197, %v7201
  %v7206 = vadd.f32 %v7198, %v7202
  %v7207 = vtanh.pop %v7203
  %v7208 = vtanh.pop %v7204
  %v7209 = vtanh.pop %v7205
  %v7210 = vtanh.pop %v7206
  %v7211 = vmul.f32 %v7191, %v7207
  %v7212 = vmul.f32 %v7192, %v7208
  %v7213 = vmul.f32 %v7193, %v7209
  %v7214 = vmul.f32 %v7194, %v7210
  %v7215 = vpack.c.bf16 %v7211, %v7211
  %v7216 = vpack.c.bf16 %v7212, %v7212
  %v7217 = vpack.c.bf16 %v7213, %v7213
  %v7218 = vpack.c.bf16 %v7214, %v7214
  %s7219 = smul.u32 4, 16
  %s7220 = smul.addr %s7219, 8
  %s7221 = scalar_lea.vmem [#allocation2], %s7220
  %v7222 = vld [vmem:[%s7221] sm:$0xff]
  %v7223 = vld [vmem:[%s7221 + $0x8] sm:$0xff]
  %v7224 = vld [vmem:[%s7221 + $0x10] sm:$0xff]
  %v7225 = vld [vmem:[%s7221 + $0x18] sm:$0xff]
  %v7226 = vld [vmem:[%s7221 + $0x20] sm:$0xff]
  %v7227 = vld [vmem:[%s7221 + $0x28] sm:$0xff]
  %v7228 = vld [vmem:[%s7221 + $0x30] sm:$0xff]
  %v7229 = vld [vmem:[%s7221 + $0x38] sm:$0xff]
  %v7230 = vld [vmem:[%s7221 + $0x40] sm:$0xff]
  %v7231 = vld [vmem:[%s7221 + $0x48] sm:$0xff]
  %v7232 = vld [vmem:[%s7221 + $0x50] sm:$0xff]
  %v7233 = vld [vmem:[%s7221 + $0x58] sm:$0xff]
  %v7234 = vld [vmem:[%s7221 + $0x60] sm:$0xff]
  %v7235 = vld [vmem:[%s7221 + $0x68] sm:$0xff]
  %v7236 = vld [vmem:[%s7221 + $0x70] sm:$0xff]
  %v7237 = vld [vmem:[%s7221 + $0x78] sm:$0xff]
  %7238 = vmatprep.subr.bf16.mxu0 %v1611
  %7239 = vmatpush1.bf16.msra.mxu0 %v1610
  %7240 = vmatprep.subr.bf16.mxu0 %v1615
  %7241 = vmatpush1.bf16.msra.mxu0 %v1614
  %7242 = vmatprep.subr.bf16.mxu0 %v1619
  %7243 = vmatpush1.bf16.msra.mxu0 %v1618
  %7244 = vmatprep.subr.bf16.mxu0 %v1623
  %7245 = vmatpush1.bf16.msra.mxu0 %v1622
  %7246 = vmatprep.subr.bf16.mxu0 %v1627
  %7247 = vmatpush1.bf16.msra.mxu0 %v1626
  %7248 = vmatprep.subr.bf16.mxu0 %v1631
  %7249 = vmatpush1.bf16.msra.mxu0 %v1630
  %7250 = vmatprep.subr.bf16.mxu0 %v1635
  %7251 = vmatpush1.bf16.msra.mxu0 %v1634
  %7252 = vmatprep.subr.bf16.mxu0 %v1639
  %7253 = vmatpush1.bf16.msra.mxu0 %v1638
  %7254 = vmatprep.subr.bf16.mxu0 %v1643
  %7255 = vmatpush1.bf16.msra.mxu0 %v1642
  %7256 = vmatprep.subr.bf16.mxu0 %v1647
  %7257 = vmatpush1.bf16.msra.mxu0 %v1646
  %7258 = vmatprep.subr.bf16.mxu0 %v1651
  %7259 = vmatpush1.bf16.msra.mxu0 %v1650
  %7260 = vmatprep.subr.bf16.mxu0 %v1655
  %7261 = vmatpush1.bf16.msra.mxu0 %v1654
  %7262 = vmatprep.subr.bf16.mxu0 %v1659
  %7263 = vmatpush1.bf16.msra.mxu0 %v1658
  %7264 = vmatprep.subr.bf16.mxu0 %v1663
  %7265 = vmatpush1.bf16.msra.mxu0 %v1662
  %7266 = vmatprep.subr.bf16.mxu0 %v1667
  %7267 = vmatpush1.bf16.msra.mxu0 %v1666
  %7268 = vmatprep.subr.bf16.mxu0 %v1671
  %7269 = vmatpush1.bf16.msra.mxu0 %v1670
  %7270 = vmatprep.mubr.bf16.mxu0 %v7216
  %7271 = vmatmul.mubr.bf16.gmra.mrb[0].mxu0 %v7215
  %v7272 = vpop.f32.mrb[0].mxu0
  %v7273 = vadd.f32 0.0, %v7272
  %v7274 = vpop.f32.mrb[0].mxu0
  %v7275 = vadd.f32 0.0, %v7274
  %v7276 = vpop.f32.mrb[0].mxu0
  %v7277 = vpop.f32.mrb[0].mxu0
  %7278 = vdwg.mxu0
  %7279 = vmatprep.subr.bf16.mxu0 %v1675
  %7280 = vmatpush1.bf16.msra.mxu0 %v1674
  %7281 = vmatprep.subr.bf16.mxu0 %v1679
  %7282 = vmatpush1.bf16.msra.mxu0 %v1678
  %7283 = vmatprep.subr.bf16.mxu0 %v1683
  %7284 = vmatpush1.bf16.msra.mxu0 %v1682
  %7285 = vmatprep.subr.bf16.mxu0 %v1687
  %7286 = vmatpush1.bf16.msra.mxu0 %v1686
  %7287 = vmatprep.subr.bf16.mxu0 %v1691
  %7288 = vmatpush1.bf16.msra.mxu0 %v1690
  %7289 = vmatprep.subr.bf16.mxu0 %v1695
  %7290 = vmatpush1.bf16.msra.mxu0 %v1694
  %7291 = vmatprep.subr.bf16.mxu0 %v1699
  %7292 = vmatpush1.bf16.msra.mxu0 %v1698
  %7293 = vmatprep.subr.bf16.mxu0 %v1703
  %7294 = vmatpush1.bf16.msra.mxu0 %v1702
  %7295 = vmatprep.subr.bf16.mxu0 %v1707
  %7296 = vmatpush1.bf16.msra.mxu0 %v1706
  %7297 = vmatprep.subr.bf16.mxu0 %v1711
  %7298 = vmatpush1.bf16.msra.mxu0 %v1710
  %7299 = vmatprep.subr.bf16.mxu0 %v1715
  %7300 = vmatpush1.bf16.msra.mxu0 %v1714
  %7301 = vmatprep.subr.bf16.mxu0 %v1719
  %7302 = vmatpush1.bf16.msra.mxu0 %v1718
  %7303 = vmatprep.subr.bf16.mxu0 %v1723
  %7304 = vmatpush1.bf16.msra.mxu0 %v1722
  %7305 = vmatprep.subr.bf16.mxu0 %v1727
  %7306 = vmatpush1.bf16.msra.mxu0 %v1726
  %7307 = vmatprep.subr.bf16.mxu0 %v1731
  %7308 = vmatpush1.bf16.msra.mxu0 %v1730
  %7309 = vmatprep.subr.bf16.mxu0 %v1735
  %7310 = vmatpush1.bf16.msra.mxu0 %v1734
  %7311 = vmatprep.mubr.bf16.mxu0 %v7218
  %7312 = vmatmul.mubr.bf16.gmra.mrb[0].mxu0 %v7217
  %v7313 = vpop.f32.mrb[0].mxu0
  %v7314 = vadd.f32 %v7273, %v7313
  %v7315 = vpop.f32.mrb[0].mxu0
  %v7316 = vadd.f32 %v7275, %v7315
  %v7317 = vpop.f32.mrb[0].mxu0
  %v7318 = vpop.f32.mrb[0].mxu0
  %7319 = vdwg.mxu0
  %7320 = vmatprep.subr.bf16.mxu0 %v1613
  %7321 = vmatpush1.bf16.msra.mxu0 %v1612
  %7322 = vmatprep.subr.bf16.mxu0 %v1617
  %7323 = vmatpush1.bf16.msra.mxu0 %v1616
  %7324 = vmatprep.subr.bf16.mxu0 %v1621
  %7325 = vmatpush1.bf16.msra.mxu0 %v1620
  %7326 = vmatprep.subr.bf16.mxu0 %v1625
  %7327 = vmatpush1.bf16.msra.mxu0 %v1624
  %7328 = vmatprep.subr.bf16.mxu0 %v1629
  %7329 = vmatpush1.bf16.msra.mxu0 %v1628
  %7330 = vmatprep.subr.bf16.mxu0 %v1633
  %7331 = vmatpush1.bf16.msra.mxu0 %v1632
  %7332 = vmatprep.subr.bf16.mxu0 %v1637
  %7333 = vmatpush1.bf16.msra.mxu0 %v1636
  %7334 = vmatprep.subr.bf16.mxu0 %v1641
  %7335 = vmatpush1.bf16.msra.mxu0 %v1640
  %7336 = vmatprep.subr.bf16.mxu0 %v1645
  %7337 = vmatpush1.bf16.msra.mxu0 %v1644
  %7338 = vmatprep.subr.bf16.mxu0 %v1649
  %7339 = vmatpush1.bf16.msra.mxu0 %v1648
  %7340 = vmatprep.subr.bf16.mxu0 %v1653
  %7341 = vmatpush1.bf16.msra.mxu0 %v1652
  %7342 = vmatprep.subr.bf16.mxu0 %v1657
  %7343 = vmatpush1.bf16.msra.mxu0 %v1656
  %7344 = vmatprep.subr.bf16.mxu0 %v1661
  %7345 = vmatpush1.bf16.msra.mxu0 %v1660
  %7346 = vmatprep.subr.bf16.mxu0 %v1665
  %7347 = vmatpush1.bf16.msra.mxu0 %v1664
  %7348 = vmatprep.subr.bf16.mxu0 %v1669
  %7349 = vmatpush1.bf16.msra.mxu0 %v1668
  %7350 = vmatprep.subr.bf16.mxu0 %v1673
  %7351 = vmatpush1.bf16.msra.mxu0 %v1672
  %7352 = vmatprep.mubr.bf16.mxu0 %v7216
  %7353 = vmatmul.mubr.bf16.gmra.mrb[0].mxu0 %v7215
  %v7354 = vpop.f32.mrb[0].mxu0
  %v7355 = vadd.f32 0.0, %v7354
  %v7356 = vpop.f32.mrb[0].mxu0
  %v7357 = vadd.f32 0.0, %v7356
  %v7358 = vpop.f32.mrb[0].mxu0
  %v7359 = vpop.f32.mrb[0].mxu0
  %7360 = vdwg.mxu0
  %7361 = vmatprep.subr.bf16.mxu0 %v1677
  %7362 = vmatpush1.bf16.msra.mxu0 %v1676
  %7363 = vmatprep.subr.bf16.mxu0 %v1681
  %7364 = vmatpush1.bf16.msra.mxu0 %v1680
  %7365 = vmatprep.subr.bf16.mxu0 %v1685
  %7366 = vmatpush1.bf16.msra.mxu0 %v1684
  %7367 = vmatprep.subr.bf16.mxu0 %v1689
  %7368 = vmatpush1.bf16.msra.mxu0 %v1688
  %7369 = vmatprep.subr.bf16.mxu0 %v1693
  %7370 = vmatpush1.bf16.msra.mxu0 %v1692
  %7371 = vmatprep.subr.bf16.mxu0 %v1697
  %7372 = vmatpush1.bf16.msra.mxu0 %v1696
  %7373 = vmatprep.subr.bf16.mxu0 %v1701
  %7374 = vmatpush1.bf16.msra.mxu0 %v1700
  %7375 = vmatprep.subr.bf16.mxu0 %v1705
  %7376 = vmatpush1.bf16.msra.mxu0 %v1704
  %7377 = vmatprep.subr.bf16.mxu0 %v1709
  %7378 = vmatpush1.bf16.msra.mxu0 %v1708
  %7379 = vmatprep.subr.bf16.mxu0 %v1713
  %7380 = vmatpush1.bf16.msra.mxu0 %v1712
  %7381 = vmatprep.subr.bf16.mxu0 %v1717
  %7382 = vmatpush1.bf16.msra.mxu0 %v1716
  %7383 = vmatprep.subr.bf16.mxu0 %v1721
  %7384 = vmatpush1.bf16.msra.mxu0 %v1720
  %7385 = vmatprep.subr.bf16.mxu0 %v1725
  %7386 = vmatpush1.bf16.msra.mxu0 %v1724
  %7387 = vmatprep.subr.bf16.mxu0 %v1729
  %7388 = vmatpush1.bf16.msra.mxu0 %v1728
  %7389 = vmatprep.subr.bf16.mxu0 %v1733
  %7390 = vmatpush1.bf16.msra.mxu0 %v1732
  %7391 = vmatprep.subr.bf16.mxu0 %v1737
  %7392 = vmatpush1.bf16.msra.mxu0 %v1736
  %7393 = vmatprep.mubr.bf16.mxu0 %v7218
  %7394 = vmatmul.mubr.bf16.gmra.mrb[0].mxu0 %v7217
  %v7395 = vpop.f32.mrb[0].mxu0
  %v7396 = vadd.f32 %v7355, %v7395
  %v7397 = vpop.f32.mrb[0].mxu0
  %v7398 = vadd.f32 %v7357, %v7397
  %v7399 = vpop.f32.mrb[0].mxu0
  %v7400 = vpop.f32.mrb[0].mxu0
  %7401 = vdwg.mxu0
  %7402 = vmatprep.subr.bf16.mxu0 %v2543
  %7403 = vmatpush1.bf16.msra.mxu0 %v2542
  %7404 = vmatprep.subr.bf16.mxu0 %v2547
  %7405 = vmatpush1.bf16.msra.mxu0 %v2546
  %7406 = vmatprep.subr.bf16.mxu0 %v2551
  %7407 = vmatpush1.bf16.msra.mxu0 %v2550
  %7408 = vmatprep.subr.bf16.mxu0 %v2555
  %7409 = vmatpush1.bf16.msra.mxu0 %v2554
  %7410 = vmatprep.subr.bf16.mxu0 %v2559
  %7411 = vmatpush1.bf16.msra.mxu0 %v2558
  %7412 = vmatprep.subr.bf16.mxu0 %v2563
  %7413 = vmatpush1.bf16.msra.mxu0 %v2562
  %7414 = vmatprep.subr.bf16.mxu0 %v2567
  %7415 = vmatpush1.bf16.msra.mxu0 %v2566
  %7416 = vmatprep.subr.bf16.mxu0 %v2571
  %7417 = vmatpush1.bf16.msra.mxu0 %v2570
  %7418 = vmatprep.subr.bf16.mxu0 %v2575
  %7419 = vmatpush1.bf16.msra.mxu0 %v2574
  %7420 = vmatprep.subr.bf16.mxu0 %v2579
  %7421 = vmatpush1.bf16.msra.mxu0 %v2578
  %7422 = vmatprep.subr.bf16.mxu0 %v2583
  %7423 = vmatpush1.bf16.msra.mxu0 %v2582
  %7424 = vmatprep.subr.bf16.mxu0 %v2587
  %7425 = vmatpush1.bf16.msra.mxu0 %v2586
  %7426 = vmatprep.subr.bf16.mxu0 %v2591
  %7427 = vmatpush1.bf16.msra.mxu0 %v2590
  %7428 = vmatprep.subr.bf16.mxu0 %v2595
  %7429 = vmatpush1.bf16.msra.mxu0 %v2594
  %7430 = vmatprep.subr.bf16.mxu0 %v2599
  %7431 = vmatpush1.bf16.msra.mxu0 %v2598
  %7432 = vmatprep.subr.bf16.mxu0 %v2603
  %7433 = vmatpush1.bf16.msra.mxu0 %v2602
  %7434 = vmatprep.mubr.bf16.mxu0 %v7216
  %7435 = vmatmul.mubr.bf16.gmra.mrb[0].mxu0 %v7215
  %v7436 = vpop.f32.mrb[0].mxu0
  %v7437 = vadd.f32 0.0, %v7436
  %v7438 = vpop.f32.mrb[0].mxu0
  %v7439 = vadd.f32 0.0, %v7438
  %v7440 = vpop.f32.mrb[0].mxu0
  %v7441 = vpop.f32.mrb[0].mxu0
  %7442 = vdwg.mxu0
  %7443 = vmatprep.subr.bf16.mxu0 %v2607
  %7444 = vmatpush1.bf16.msra.mxu0 %v2606
  %7445 = vmatprep.subr.bf16.mxu0 %v2611
  %7446 = vmatpush1.bf16.msra.mxu0 %v2610
  %7447 = vmatprep.subr.bf16.mxu0 %v2615
  %7448 = vmatpush1.bf16.msra.mxu0 %v2614
  %7449 = vmatprep.subr.bf16.mxu0 %v2619
  %7450 = vmatpush1.bf16.msra.mxu0 %v2618
  %7451 = vmatprep.subr.bf16.mxu0 %v2623
  %7452 = vmatpush1.bf16.msra.mxu0 %v2622
  %7453 = vmatprep.subr.bf16.mxu0 %v2627
  %7454 = vmatpush1.bf16.msra.mxu0 %v2626
  %7455 = vmatprep.subr.bf16.mxu0 %v2631
  %7456 = vmatpush1.bf16.msra.mxu0 %v2630
  %7457 = vmatprep.subr.bf16.mxu0 %v2635
  %7458 = vmatpush1.bf16.msra.mxu0 %v2634
  %7459 = vmatprep.subr.bf16.mxu0 %v2639
  %7460 = vmatpush1.bf16.msra.mxu0 %v2638
  %7461 = vmatprep.subr.bf16.mxu0 %v2643
  %7462 = vmatpush1.bf16.msra.mxu0 %v2642
  %7463 = vmatprep.subr.bf16.mxu0 %v2647
  %7464 = vmatpush1.bf16.msra.mxu0 %v2646
  %7465 = vmatprep.subr.bf16.mxu0 %v2651
  %7466 = vmatpush1.bf16.msra.mxu0 %v2650
  %7467 = vmatprep.subr.bf16.mxu0 %v2655
  %7468 = vmatpush1.bf16.msra.mxu0 %v2654
  %7469 = vmatprep.subr.bf16.mxu0 %v2659
  %7470 = vmatpush1.bf16.msra.mxu0 %v2658
  %7471 = vmatprep.subr.bf16.mxu0 %v2663
  %7472 = vmatpush1.bf16.msra.mxu0 %v2662
  %7473 = vmatprep.subr.bf16.mxu0 %v2667
  %7474 = vmatpush1.bf16.msra.mxu0 %v2666
  %7475 = vmatprep.mubr.bf16.mxu0 %v7218
  %7476 = vmatmul.mubr.bf16.gmra.mrb[0].mxu0 %v7217
  %v7477 = vpop.f32.mrb[0].mxu0
  %v7478 = vadd.f32 %v7437, %v7477
  %v7479 = vpop.f32.mrb[0].mxu0
  %v7480 = vadd.f32 %v7439, %v7479
  %v7481 = vpop.f32.mrb[0].mxu0
  %v7482 = vpop.f32.mrb[0].mxu0
  %7483 = vdwg.mxu0
  %7484 = vmatprep.subr.bf16.mxu0 %v2545
  %7485 = vmatpush1.bf16.msra.mxu0 %v2544
  %7486 = vmatprep.subr.bf16.mxu0 %v2549
  %7487 = vmatpush1.bf16.msra.mxu0 %v2548
  %7488 = vmatprep.subr.bf16.mxu0 %v2553
  %7489 = vmatpush1.bf16.msra.mxu0 %v2552
  %7490 = vmatprep.subr.bf16.mxu0 %v2557
  %7491 = vmatpush1.bf16.msra.mxu0 %v2556
  %7492 = vmatprep.subr.bf16.mxu0 %v2561
  %7493 = vmatpush1.bf16.msra.mxu0 %v2560
  %7494 = vmatprep.subr.bf16.mxu0 %v2565
  %7495 = vmatpush1.bf16.msra.mxu0 %v2564
  %7496 = vmatprep.subr.bf16.mxu0 %v2569
  %7497 = vmatpush1.bf16.msra.mxu0 %v2568
  %7498 = vmatprep.subr.bf16.mxu0 %v2573
  %7499 = vmatpush1.bf16.msra.mxu0 %v2572
  %7500 = vmatprep.subr.bf16.mxu0 %v2577
  %7501 = vmatpush1.bf16.msra.mxu0 %v2576
  %7502 = vmatprep.subr.bf16.mxu0 %v2581
  %7503 = vmatpush1.bf16.msra.mxu0 %v2580
  %7504 = vmatprep.subr.bf16.mxu0 %v2585
  %7505 = vmatpush1.bf16.msra.mxu0 %v2584
  %7506 = vmatprep.subr.bf16.mxu0 %v2589
  %7507 = vmatpush1.bf16.msra.mxu0 %v2588
  %7508 = vmatprep.subr.bf16.mxu0 %v2593
  %7509 = vmatpush1.bf16.msra.mxu0 %v2592
  %7510 = vmatprep.subr.bf16.mxu0 %v2597
  %7511 = vmatpush1.bf16.msra.mxu0 %v2596
  %7512 = vmatprep.subr.bf16.mxu0 %v2601
  %7513 = vmatpush1.bf16.msra.mxu0 %v2600
  %7514 = vmatprep.subr.bf16.mxu0 %v2605
  %7515 = vmatpush1.bf16.msra.mxu0 %v2604
  %7516 = vmatprep.mubr.bf16.mxu0 %v7216
  %7517 = vmatmul.mubr.bf16.gmra.mrb[0].mxu0 %v7215
  %v7518 = vpop.f32.mrb[0].mxu0
  %v7519 = vadd.f32 0.0, %v7518
  %v7520 = vpop.f32.mrb[0].mxu0
  %v7521 = vadd.f32 0.0, %v7520
  %v7522 = vpop.f32.mrb[0].mxu0
  %v7523 = vpop.f32.mrb[0].mxu0
  %7524 = vdwg.mxu0
  %7525 = vmatprep.subr.bf16.mxu0 %v2609
  %7526 = vmatpush1.bf16.msra.mxu0 %v2608
  %7527 = vmatprep.subr.bf16.mxu0 %v2613
  %7528 = vmatpush1.bf16.msra.mxu0 %v2612
  %7529 = vmatprep.subr.bf16.mxu0 %v2617
  %7530 = vmatpush1.bf16.msra.mxu0 %v2616
  %7531 = vmatprep.subr.bf16.mxu0 %v2621
  %7532 = vmatpush1.bf16.msra.mxu0 %v2620
  %7533 = vmatprep.subr.bf16.mxu0 %v2625
  %7534 = vmatpush1.bf16.msra.mxu0 %v2624
  %7535 = vmatprep.subr.bf16.mxu0 %v2629
  %7536 = vmatpush1.bf16.msra.mxu0 %v2628
  %7537 = vmatprep.subr.bf16.mxu0 %v2633
  %7538 = vmatpush1.bf16.msra.mxu0 %v2632
  %7539 = vmatprep.subr.bf16.mxu0 %v2637
  %7540 = vmatpush1.bf16.msra.mxu0 %v2636
  %7541 = vmatprep.subr.bf16.mxu0 %v2641
  %7542 = vmatpush1.bf16.msra.mxu0 %v2640
  %7543 = vmatprep.subr.bf16.mxu0 %v2645
  %7544 = vmatpush1.bf16.msra.mxu0 %v2644
  %7545 = vmatprep.subr.bf16.mxu0 %v2649
  %7546 = vmatpush1.bf16.msra.mxu0 %v2648
  %7547 = vmatprep.subr.bf16.mxu0 %v2653
  %7548 = vmatpush1.bf16.msra.mxu0 %v2652
  %7549 = vmatprep.subr.bf16.mxu0 %v2657
  %7550 = vmatpush1.bf16.msra.mxu0 %v2656
  %7551 = vmatprep.subr.bf16.mxu0 %v2661
  %7552 = vmatpush1.bf16.msra.mxu0 %v2660
  %7553 = vmatprep.subr.bf16.mxu0 %v2665
  %7554 = vmatpush1.bf16.msra.mxu0 %v2664
  %7555 = vmatprep.subr.bf16.mxu0 %v2669
  %7556 = vmatpush1.bf16.msra.mxu0 %v2668
  %7557 = vmatprep.mubr.bf16.mxu0 %v7218
  %7558 = vmatmul.mubr.bf16.gmra.mrb[0].mxu0 %v7217
  %v7559 = vpop.f32.mrb[0].mxu0
  %v7560 = vadd.f32 %v7519, %v7559
  %v7561 = vpop.f32.mrb[0].mxu0
  %v7562 = vadd.f32 %v7521, %v7561
  %v7563 = vpop.f32.mrb[0].mxu0
  %v7564 = vpop.f32.mrb[0].mxu0
  %7565 = vdwg.mxu0
  %v7566 = vadd.f32 %v7222, %v7314
  %v7567 = vadd.f32 %v7223, %v7316
  %v7568 = vadd.f32 %v7224, %v7396
  %v7569 = vadd.f32 %v7225, %v7398
  %v7570 = vmul.f32 %v7566, 0.5
  %v7571 = vmul.f32 %v7567, 0.5
  %v7572 = vmul.f32 %v7568, 0.5
  %v7573 = vmul.f32 %v7569, 0.5
  %v7574 = vtanh.pop %v7570
  %v7575 = vtanh.pop %v7571
  %v7576 = vtanh.pop %v7572
  %v7577 = vtanh.pop %v7573
  %v7578 = vmul.f32 %v7574, 0.5
  %v7579 = vmul.f32 %v7575, 0.5
  %v7580 = vmul.f32 %v7576, 0.5
  %v7581 = vmul.f32 %v7577, 0.5
  %v7582 = vadd.f32 %v7578, 0.5
  %v7583 = vadd.f32 %v7579, 0.5
  %v7584 = vadd.f32 %v7580, 0.5
  %v7585 = vadd.f32 %v7581, 0.5
  %7586 = vmatprep.subr.bf16.mxu0 %v3495
  %7587 = vmatpush1.bf16.msra.mxu0 %v3494
  %7588 = vmatprep.subr.bf16.mxu0 %v3499
  %7589 = vmatpush1.bf16.msra.mxu0 %v3498
  %7590 = vmatprep.subr.bf16.mxu0 %v3503
  %7591 = vmatpush1.bf16.msra.mxu0 %v3502
  %7592 = vmatprep.subr.bf16.mxu0 %v3507
  %7593 = vmatpush1.bf16.msra.mxu0 %v3506
  %7594 = vmatprep.subr.bf16.mxu0 %v3511
  %7595 = vmatpush1.bf16.msra.mxu0 %v3510
  %7596 = vmatprep.subr.bf16.mxu0 %v3515
  %7597 = vmatpush1.bf16.msra.mxu0 %v3514
  %7598 = vmatprep.subr.bf16.mxu0 %v3519
  %7599 = vmatpush1.bf16.msra.mxu0 %v3518
  %7600 = vmatprep.subr.bf16.mxu0 %v3523
  %7601 = vmatpush1.bf16.msra.mxu0 %v3522
  %7602 = vmatprep.subr.bf16.mxu0 %v3527
  %7603 = vmatpush1.bf16.msra.mxu0 %v3526
  %7604 = vmatprep.subr.bf16.mxu0 %v3531
  %7605 = vmatpush1.bf16.msra.mxu0 %v3530
  %7606 = vmatprep.subr.bf16.mxu0 %v3535
  %7607 = vmatpush1.bf16.msra.mxu0 %v3534
  %7608 = vmatprep.subr.bf16.mxu0 %v3539
  %7609 = vmatpush1.bf16.msra.mxu0 %v3538
  %7610 = vmatprep.subr.bf16.mxu0 %v3543
  %7611 = vmatpush1.bf16.msra.mxu0 %v3542
  %7612 = vmatprep.subr.bf16.mxu0 %v3547
  %7613 = vmatpush1.bf16.msra.mxu0 %v3546
  %7614 = vmatprep.subr.bf16.mxu0 %v3551
  %7615 = vmatpush1.bf16.msra.mxu0 %v3550
  %7616 = vmatprep.subr.bf16.mxu0 %v3555
  %7617 = vmatpush1.bf16.msra.mxu0 %v3554
  %7618 = vmatprep.mubr.bf16.mxu0 %v7216
  %7619 = vmatmul.mubr.bf16.gmra.mrb[0].mxu0 %v7215
  %v7620 = vpop.f32.mrb[0].mxu0
  %v7621 = vadd.f32 0.0, %v7620
  %v7622 = vpop.f32.mrb[0].mxu0
  %v7623 = vadd.f32 0.0, %v7622
  %v7624 = vpop.f32.mrb[0].mxu0
  %v7625 = vpop.f32.mrb[0].mxu0
  %7626 = vdwg.mxu0
  %7627 = vmatprep.subr.bf16.mxu0 %v3559
  %7628 = vmatpush1.bf16.msra.mxu0 %v3558
  %7629 = vmatprep.subr.bf16.mxu0 %v3563
  %7630 = vmatpush1.bf16.msra.mxu0 %v3562
  %7631 = vmatprep.subr.bf16.mxu0 %v3567
  %7632 = vmatpush1.bf16.msra.mxu0 %v3566
  %7633 = vmatprep.subr.bf16.mxu0 %v3571
  %7634 = vmatpush1.bf16.msra.mxu0 %v3570
  %7635 = vmatprep.subr.bf16.mxu0 %v3575
  %7636 = vmatpush1.bf16.msra.mxu0 %v3574
  %7637 = vmatprep.subr.bf16.mxu0 %v3579
  %7638 = vmatpush1.bf16.msra.mxu0 %v3578
  %7639 = vmatprep.subr.bf16.mxu0 %v3583
  %7640 = vmatpush1.bf16.msra.mxu0 %v3582
  %7641 = vmatprep.subr.bf16.mxu0 %v3587
  %7642 = vmatpush1.bf16.msra.mxu0 %v3586
  %7643 = vmatprep.subr.bf16.mxu0 %v3591
  %7644 = vmatpush1.bf16.msra.mxu0 %v3590
  %7645 = vmatprep.subr.bf16.mxu0 %v3595
  %7646 = vmatpush1.bf16.msra.mxu0 %v3594
  %7647 = vmatprep.subr.bf16.mxu0 %v3599
  %7648 = vmatpush1.bf16.msra.mxu0 %v3598
  %7649 = vmatprep.subr.bf16.mxu0 %v3603
  %7650 = vmatpush1.bf16.msra.mxu0 %v3602
  %7651 = vmatprep.subr.bf16.mxu0 %v3607
  %7652 = vmatpush1.bf16.msra.mxu0 %v3606
  %7653 = vmatprep.subr.bf16.mxu0 %v3611
  %7654 = vmatpush1.bf16.msra.mxu0 %v3610
  %7655 = vmatprep.subr.bf16.mxu0 %v3615
  %7656 = vmatpush1.bf16.msra.mxu0 %v3614
  %7657 = vmatprep.subr.bf16.mxu0 %v3619
  %7658 = vmatpush1.bf16.msra.mxu0 %v3618
  %7659 = vmatprep.mubr.bf16.mxu0 %v7218
  %7660 = vmatmul.mubr.bf16.gmra.mrb[0].mxu0 %v7217
  %v7661 = vpop.f32.mrb[0].mxu0
  %v7662 = vadd.f32 %v7621, %v7661
  %v7663 = vpop.f32.mrb[0].mxu0
  %v7664 = vadd.f32 %v7623, %v7663
  %v7665 = vpop.f32.mrb[0].mxu0
  %v7666 = vpop.f32.mrb[0].mxu0
  %7667 = vdwg.mxu0
  %7668 = vmatprep.subr.bf16.mxu0 %v3497
  %7669 = vmatpush1.bf16.msra.mxu0 %v3496
  %7670 = vmatprep.subr.bf16.mxu0 %v3501
  %7671 = vmatpush1.bf16.msra.mxu0 %v3500
  %7672 = vmatprep.subr.bf16.mxu0 %v3505
  %7673 = vmatpush1.bf16.msra.mxu0 %v3504
  %7674 = vmatprep.subr.bf16.mxu0 %v3509
  %7675 = vmatpush1.bf16.msra.mxu0 %v3508
  %7676 = vmatprep.subr.bf16.mxu0 %v3513
  %7677 = vmatpush1.bf16.msra.mxu0 %v3512
  %7678 = vmatprep.subr.bf16.mxu0 %v3517
  %7679 = vmatpush1.bf16.msra.mxu0 %v3516
  %7680 = vmatprep.subr.bf16.mxu0 %v3521
  %7681 = vmatpush1.bf16.msra.mxu0 %v3520
  %7682 = vmatprep.subr.bf16.mxu0 %v3525
  %7683 = vmatpush1.bf16.msra.mxu0 %v3524
  %7684 = vmatprep.subr.bf16.mxu0 %v3529
  %7685 = vmatpush1.bf16.msra.mxu0 %v3528
  %7686 = vmatprep.subr.bf16.mxu0 %v3533
  %7687 = vmatpush1.bf16.msra.mxu0 %v3532
  %7688 = vmatprep.subr.bf16.mxu0 %v3537
  %7689 = vmatpush1.bf16.msra.mxu0 %v3536
  %7690 = vmatprep.subr.bf16.mxu0 %v3541
  %7691 = vmatpush1.bf16.msra.mxu0 %v3540
  %7692 = vmatprep.subr.bf16.mxu0 %v3545
  %7693 = vmatpush1.bf16.msra.mxu0 %v3544
  %7694 = vmatprep.subr.bf16.mxu0 %v3549
  %7695 = vmatpush1.bf16.msra.mxu0 %v3548
  %7696 = vmatprep.subr.bf16.mxu0 %v3553
  %7697 = vmatpush1.bf16.msra.mxu0 %v3552
  %7698 = vmatprep.subr.bf16.mxu0 %v3557
  %7699 = vmatpush1.bf16.msra.mxu0 %v3556
  %7700 = vmatprep.mubr.bf16.mxu0 %v7216
  %7701 = vmatmul.mubr.bf16.gmra.mrb[0].mxu0 %v7215
  %v7702 = vpop.f32.mrb[0].mxu0
  %v7703 = vadd.f32 0.0, %v7702
  %v7704 = vpop.f32.mrb[0].mxu0
  %v7705 = vadd.f32 0.0, %v7704
  %v7706 = vpop.f32.mrb[0].mxu0
  %v7707 = vpop.f32.mrb[0].mxu0
  %7708 = vdwg.mxu0
  %7709 = vmatprep.subr.bf16.mxu0 %v3561
  %7710 = vmatpush1.bf16.msra.mxu0 %v3560
  %7711 = vmatprep.subr.bf16.mxu0 %v3565
  %7712 = vmatpush1.bf16.msra.mxu0 %v3564
  %7713 = vmatprep.subr.bf16.mxu0 %v3569
  %7714 = vmatpush1.bf16.msra.mxu0 %v3568
  %7715 = vmatprep.subr.bf16.mxu0 %v3573
  %7716 = vmatpush1.bf16.msra.mxu0 %v3572
  %7717 = vmatprep.subr.bf16.mxu0 %v3577
  %7718 = vmatpush1.bf16.msra.mxu0 %v3576
  %7719 = vmatprep.subr.bf16.mxu0 %v3581
  %7720 = vmatpush1.bf16.msra.mxu0 %v3580
  %7721 = vmatprep.subr.bf16.mxu0 %v3585
  %7722 = vmatpush1.bf16.msra.mxu0 %v3584
  %7723 = vmatprep.subr.bf16.mxu0 %v3589
  %7724 = vmatpush1.bf16.msra.mxu0 %v3588
  %7725 = vmatprep.subr.bf16.mxu0 %v3593
  %7726 = vmatpush1.bf16.msra.mxu0 %v3592
  %7727 = vmatprep.subr.bf16.mxu0 %v3597
  %7728 = vmatpush1.bf16.msra.mxu0 %v3596
  %7729 = vmatprep.subr.bf16.mxu0 %v3601
  %7730 = vmatpush1.bf16.msra.mxu0 %v3600
  %7731 = vmatprep.subr.bf16.mxu0 %v3605
  %7732 = vmatpush1.bf16.msra.mxu0 %v3604
  %7733 = vmatprep.subr.bf16.mxu0 %v3609
  %7734 = vmatpush1.bf16.msra.mxu0 %v3608
  %7735 = vmatprep.subr.bf16.mxu0 %v3613
  %7736 = vmatpush1.bf16.msra.mxu0 %v3612
  %7737 = vmatprep.subr.bf16.mxu0 %v3617
  %7738 = vmatpush1.bf16.msra.mxu0 %v3616
  %7739 = vmatprep.subr.bf16.mxu0 %v3621
  %7740 = vmatpush1.bf16.msra.mxu0 %v3620
  %7741 = vmatprep.mubr.bf16.mxu0 %v7218
  %7742 = vmatmul.mubr.bf16.gmra.mrb[0].mxu0 %v7217
  %v7743 = vpop.f32.mrb[0].mxu0
  %v7744 = vadd.f32 %v7703, %v7743
  %v7745 = vpop.f32.mrb[0].mxu0
  %v7746 = vadd.f32 %v7705, %v7745
  %v7747 = vpop.f32.mrb[0].mxu0
  %v7748 = vpop.f32.mrb[0].mxu0
  %7749 = vdwg.mxu0
  %v7750 = vadd.f32 %v7226, %v7478
  %v7751 = vadd.f32 %v7227, %v7480
  %v7752 = vadd.f32 %v7228, %v7560
  %v7753 = vadd.f32 %v7229, %v7562
  %v7754 = vmul.f32 %v7750, 0.5
  %v7755 = vmul.f32 %v7751, 0.5
  %v7756 = vmul.f32 %v7752, 0.5
  %v7757 = vmul.f32 %v7753, 0.5
  %v7758 = vtanh.pop %v7754
  %v7759 = vtanh.pop %v7755
  %v7760 = vtanh.pop %v7756
  %v7761 = vtanh.pop %v7757
  %v7762 = vmul.f32 %v7758, 0.5
  %v7763 = vmul.f32 %v7759, 0.5
  %v7764 = vmul.f32 %v7760, 0.5
  %v7765 = vmul.f32 %v7761, 0.5
  %v7766 = vadd.f32 %v7762, 0.5
  %v7767 = vadd.f32 %v7763, 0.5
  %v7768 = vadd.f32 %v7764, 0.5
  %v7769 = vadd.f32 %v7765, 0.5
  %7770 = vmatprep.subr.bf16.mxu0 %v4447
  %7771 = vmatpush1.bf16.msra.mxu0 %v4446
  %7772 = vmatprep.subr.bf16.mxu0 %v4451
  %7773 = vmatpush1.bf16.msra.mxu0 %v4450
  %7774 = vmatprep.subr.bf16.mxu0 %v4455
  %7775 = vmatpush1.bf16.msra.mxu0 %v4454
  %7776 = vmatprep.subr.bf16.mxu0 %v4459
  %7777 = vmatpush1.bf16.msra.mxu0 %v4458
  %7778 = vmatprep.subr.bf16.mxu0 %v4463
  %7779 = vmatpush1.bf16.msra.mxu0 %v4462
  %7780 = vmatprep.subr.bf16.mxu0 %v4467
  %7781 = vmatpush1.bf16.msra.mxu0 %v4466
  %7782 = vmatprep.subr.bf16.mxu0 %v4471
  %7783 = vmatpush1.bf16.msra.mxu0 %v4470
  %7784 = vmatprep.subr.bf16.mxu0 %v4475
  %7785 = vmatpush1.bf16.msra.mxu0 %v4474
  %7786 = vmatprep.subr.bf16.mxu0 %v4479
  %7787 = vmatpush1.bf16.msra.mxu0 %v4478
  %7788 = vmatprep.subr.bf16.mxu0 %v4483
  %7789 = vmatpush1.bf16.msra.mxu0 %v4482
  %7790 = vmatprep.subr.bf16.mxu0 %v4487
  %7791 = vmatpush1.bf16.msra.mxu0 %v4486
  %7792 = vmatprep.subr.bf16.mxu0 %v4491
  %7793 = vmatpush1.bf16.msra.mxu0 %v4490
  %7794 = vmatprep.subr.bf16.mxu0 %v4495
  %7795 = vmatpush1.bf16.msra.mxu0 %v4494
  %7796 = vmatprep.subr.bf16.mxu0 %v4499
  %7797 = vmatpush1.bf16.msra.mxu0 %v4498
  %7798 = vmatprep.subr.bf16.mxu0 %v4503
  %7799 = vmatpush1.bf16.msra.mxu0 %v4502
  %7800 = vmatprep.subr.bf16.mxu0 %v4507
  %7801 = vmatpush1.bf16.msra.mxu0 %v4506
  %7802 = vmatprep.mubr.bf16.mxu0 %v7216
  %7803 = vmatmul.mubr.bf16.gmra.mrb[0].mxu0 %v7215
  %v7804 = vpop.f32.mrb[0].mxu0
  %v7805 = vadd.f32 0.0, %v7804
  %v7806 = vpop.f32.mrb[0].mxu0
  %v7807 = vadd.f32 0.0, %v7806
  %v7808 = vpop.f32.mrb[0].mxu0
  %v7809 = vpop.f32.mrb[0].mxu0
  %7810 = vdwg.mxu0
  %7811 = vmatprep.subr.bf16.mxu0 %v4511
  %7812 = vmatpush1.bf16.msra.mxu0 %v4510
  %7813 = vmatprep.subr.bf16.mxu0 %v4515
  %7814 = vmatpush1.bf16.msra.mxu0 %v4514
  %7815 = vmatprep.subr.bf16.mxu0 %v4519
  %7816 = vmatpush1.bf16.msra.mxu0 %v4518
  %7817 = vmatprep.subr.bf16.mxu0 %v4523
  %7818 = vmatpush1.bf16.msra.mxu0 %v4522
  %7819 = vmatprep.subr.bf16.mxu0 %v4527
  %7820 = vmatpush1.bf16.msra.mxu0 %v4526
  %7821 = vmatprep.subr.bf16.mxu0 %v4531
  %7822 = vmatpush1.bf16.msra.mxu0 %v4530
  %7823 = vmatprep.subr.bf16.mxu0 %v4535
  %7824 = vmatpush1.bf16.msra.mxu0 %v4534
  %7825 = vmatprep.subr.bf16.mxu0 %v4539
  %7826 = vmatpush1.bf16.msra.mxu0 %v4538
  %7827 = vmatprep.subr.bf16.mxu0 %v4543
  %7828 = vmatpush1.bf16.msra.mxu0 %v4542
  %7829 = vmatprep.subr.bf16.mxu0 %v4547
  %7830 = vmatpush1.bf16.msra.mxu0 %v4546
  %7831 = vmatprep.subr.bf16.mxu0 %v4551
  %7832 = vmatpush1.bf16.msra.mxu0 %v4550
  %7833 = vmatprep.subr.bf16.mxu0 %v4555
  %7834 = vmatpush1.bf16.msra.mxu0 %v4554
  %7835 = vmatprep.subr.bf16.mxu0 %v4559
  %7836 = vmatpush1.bf16.msra.mxu0 %v4558
  %7837 = vmatprep.subr.bf16.mxu0 %v4563
  %7838 = vmatpush1.bf16.msra.mxu0 %v4562
  %7839 = vmatprep.subr.bf16.mxu0 %v4567
  %7840 = vmatpush1.bf16.msra.mxu0 %v4566
  %7841 = vmatprep.subr.bf16.mxu0 %v4571
  %7842 = vmatpush1.bf16.msra.mxu0 %v4570
  %7843 = vmatprep.mubr.bf16.mxu0 %v7218
  %7844 = vmatmul.mubr.bf16.gmra.mrb[0].mxu0 %v7217
  %v7845 = vpop.f32.mrb[0].mxu0
  %v7846 = vadd.f32 %v7805, %v7845
  %v7847 = vpop.f32.mrb[0].mxu0
  %v7848 = vadd.f32 %v7807, %v7847
  %v7849 = vpop.f32.mrb[0].mxu0
  %v7850 = vpop.f32.mrb[0].mxu0
  %7851 = vdwg.mxu0
  %7852 = vmatprep.subr.bf16.mxu0 %v4449
  %7853 = vmatpush1.bf16.msra.mxu0 %v4448
  %7854 = vmatprep.subr.bf16.mxu0 %v4453
  %7855 = vmatpush1.bf16.msra.mxu0 %v4452
  %7856 = vmatprep.subr.bf16.mxu0 %v4457
  %7857 = vmatpush1.bf16.msra.mxu0 %v4456
  %7858 = vmatprep.subr.bf16.mxu0 %v4461
  %7859 = vmatpush1.bf16.msra.mxu0 %v4460
  %7860 = vmatprep.subr.bf16.mxu0 %v4465
  %7861 = vmatpush1.bf16.msra.mxu0 %v4464
  %7862 = vmatprep.subr.bf16.mxu0 %v4469
  %7863 = vmatpush1.bf16.msra.mxu0 %v4468
  %7864 = vmatprep.subr.bf16.mxu0 %v4473
  %7865 = vmatpush1.bf16.msra.mxu0 %v4472
  %7866 = vmatprep.subr.bf16.mxu0 %v4477
  %7867 = vmatpush1.bf16.msra.mxu0 %v4476
  %7868 = vmatprep.subr.bf16.mxu0 %v4481
  %7869 = vmatpush1.bf16.msra.mxu0 %v4480
  %7870 = vmatprep.subr.bf16.mxu0 %v4485
  %7871 = vmatpush1.bf16.msra.mxu0 %v4484
  %7872 = vmatprep.subr.bf16.mxu0 %v4489
  %7873 = vmatpush1.bf16.msra.mxu0 %v4488
  %7874 = vmatprep.subr.bf16.mxu0 %v4493
  %7875 = vmatpush1.bf16.msra.mxu0 %v4492
  %7876 = vmatprep.subr.bf16.mxu0 %v4497
  %7877 = vmatpush1.bf16.msra.mxu0 %v4496
  %7878 = vmatprep.subr.bf16.mxu0 %v4501
  %7879 = vmatpush1.bf16.msra.mxu0 %v4500
  %7880 = vmatprep.subr.bf16.mxu0 %v4505
  %7881 = vmatpush1.bf16.msra.mxu0 %v4504
  %7882 = vmatprep.subr.bf16.mxu0 %v4509
  %7883 = vmatpush1.bf16.msra.mxu0 %v4508
  %7884 = vmatprep.mubr.bf16.mxu0 %v7216
  %7885 = vmatmul.mubr.bf16.gmra.mrb[0].mxu0 %v7215
  %v7886 = vpop.f32.mrb[0].mxu0
  %v7887 = vadd.f32 0.0, %v7886
  %v7888 = vpop.f32.mrb[0].mxu0
  %v7889 = vadd.f32 0.0, %v7888
  %v7890 = vpop.f32.mrb[0].mxu0
  %v7891 = vpop.f32.mrb[0].mxu0
  %7892 = vdwg.mxu0
  %7893 = vmatprep.subr.bf16.mxu0 %v4513
  %7894 = vmatpush1.bf16.msra.mxu0 %v4512
  %7895 = vmatprep.subr.bf16.mxu0 %v4517
  %7896 = vmatpush1.bf16.msra.mxu0 %v4516
  %7897 = vmatprep.subr.bf16.mxu0 %v4521
  %7898 = vmatpush1.bf16.msra.mxu0 %v4520
  %7899 = vmatprep.subr.bf16.mxu0 %v4525
  %7900 = vmatpush1.bf16.msra.mxu0 %v4524
  %7901 = vmatprep.subr.bf16.mxu0 %v4529
  %7902 = vmatpush1.bf16.msra.mxu0 %v4528
  %7903 = vmatprep.subr.bf16.mxu0 %v4533
  %7904 = vmatpush1.bf16.msra.mxu0 %v4532
  %7905 = vmatprep.subr.bf16.mxu0 %v4537
  %7906 = vmatpush1.bf16.msra.mxu0 %v4536
  %7907 = vmatprep.subr.bf16.mxu0 %v4541
  %7908 = vmatpush1.bf16.msra.mxu0 %v4540
  %7909 = vmatprep.subr.bf16.mxu0 %v4545
  %7910 = vmatpush1.bf16.msra.mxu0 %v4544
  %7911 = vmatprep.subr.bf16.mxu0 %v4549
  %7912 = vmatpush1.bf16.msra.mxu0 %v4548
  %7913 = vmatprep.subr.bf16.mxu0 %v4553
  %7914 = vmatpush1.bf16.msra.mxu0 %v4552
  %7915 = vmatprep.subr.bf16.mxu0 %v4557
  %7916 = vmatpush1.bf16.msra.mxu0 %v4556
  %7917 = vmatprep.subr.bf16.mxu0 %v4561
  %7918 = vmatpush1.bf16.msra.mxu0 %v4560
  %7919 = vmatprep.subr.bf16.mxu0 %v4565
  %7920 = vmatpush1.bf16.msra.mxu0 %v4564
  %7921 = vmatprep.subr.bf16.mxu0 %v4569
  %7922 = vmatpush1.bf16.msra.mxu0 %v4568
  %7923 = vmatprep.subr.bf16.mxu0 %v4573
  %7924 = vmatpush1.bf16.msra.mxu0 %v4572
  %7925 = vmatprep.mubr.bf16.mxu0 %v7218
  %7926 = vmatmul.mubr.bf16.gmra.mrb[0].mxu0 %v7217
  %v7927 = vpop.f32.mrb[0].mxu0
  %v7928 = vadd.f32 %v7887, %v7927
  %v7929 = vpop.f32.mrb[0].mxu0
  %v7930 = vadd.f32 %v7889, %v7929
  %v7931 = vpop.f32.mrb[0].mxu0
  %v7932 = vpop.f32.mrb[0].mxu0
  %7933 = vdwg.mxu0
  %v7934 = vadd.f32 %v7230, %v7662
  %v7935 = vadd.f32 %v7231, %v7664
  %v7936 = vadd.f32 %v7232, %v7744
  %v7937 = vadd.f32 %v7233, %v7746
  %v7938 = vtanh.pop %v7934
  %v7939 = vtanh.pop %v7935
  %v7940 = vtanh.pop %v7936
  %v7941 = vtanh.pop %v7937
  %v7942 = vadd.f32 %v7234, %v7846
  %v7943 = vadd.f32 %v7235, %v7848
  %v7944 = vadd.f32 %v7236, %v7928
  %v7945 = vadd.f32 %v7237, %v7930
  %v7946 = vmul.f32 %v7942, 0.5
  %v7947 = vmul.f32 %v7943, 0.5
  %v7948 = vmul.f32 %v7944, 0.5
  %v7949 = vmul.f32 %v7945, 0.5
  %v7950 = vtanh.pop %v7946
  %v7951 = vtanh.pop %v7947
  %v7952 = vtanh.pop %v7948
  %v7953 = vtanh.pop %v7949
  %v7954 = vmul.f32 %v7950, 0.5
  %v7955 = vmul.f32 %v7951, 0.5
  %v7956 = vmul.f32 %v7952, 0.5
  %v7957 = vmul.f32 %v7953, 0.5
  %v7958 = vadd.f32 %v7954, 0.5
  %v7959 = vadd.f32 %v7955, 0.5
  %v7960 = vadd.f32 %v7956, 0.5
  %v7961 = vadd.f32 %v7957, 0.5
  %v7962 = vmul.f32 %v7766, %v7203
  %v7963 = vmul.f32 %v7767, %v7204
  %v7964 = vmul.f32 %v7768, %v7205
  %v7965 = vmul.f32 %v7769, %v7206
  %v7966 = vmul.f32 %v7582, %v7938
  %v7967 = vmul.f32 %v7583, %v7939
  %v7968 = vmul.f32 %v7584, %v7940
  %v7969 = vmul.f32 %v7585, %v7941
  %v7970 = vadd.f32 %v7962, %v7966
  %v7971 = vadd.f32 %v7963, %v7967
  %v7972 = vadd.f32 %v7964, %v7968
  %v7973 = vadd.f32 %v7965, %v7969
  %v7974 = vtanh.pop %v7970
  %v7975 = vtanh.pop %v7971
  %v7976 = vtanh.pop %v7972
  %v7977 = vtanh.pop %v7973
  %v7978 = vmul.f32 %v7958, %v7974
  %v7979 = vmul.f32 %v7959, %v7975
  %v7980 = vmul.f32 %v7960, %v7976
  %v7981 = vmul.f32 %v7961, %v7977
  %v7982 = vpack.c.bf16 %v7978, %v7978
  %v7983 = vpack.c.bf16 %v7979, %v7979
  %v7984 = vpack.c.bf16 %v7980, %v7980
  %v7985 = vpack.c.bf16 %v7981, %v7981
  %s7986 = smul.u32 5, 16
  %s7987 = smul.addr %s7986, 8
  %s7988 = scalar_lea.vmem [#allocation2], %s7987
  %v7989 = vld [vmem:[%s7988] sm:$0xff]
  %v7990 = vld [vmem:[%s7988 + $0x8] sm:$0xff]
  %v7991 = vld [vmem:[%s7988 + $0x10] sm:$0xff]
  %v7992 = vld [vmem:[%s7988 + $0x18] sm:$0xff]
  %v7993 = vld [vmem:[%s7988 + $0x20] sm:$0xff]
  %v7994 = vld [vmem:[%s7988 + $0x28] sm:$0xff]
  %v7995 = vld [vmem:[%s7988 + $0x30] sm:$0xff]
  %v7996 = vld [vmem:[%s7988 + $0x38] sm:$0xff]
  %v7997 = vld [vmem:[%s7988 + $0x40] sm:$0xff]
  %v7998 = vld [vmem:[%s7988 + $0x48] sm:$0xff]
  %v7999 = vld [vmem:[%s7988 + $0x50] sm:$0xff]
  %v8000 = vld [vmem:[%s7988 + $0x58] sm:$0xff]
  %v8001 = vld [vmem:[%s7988 + $0x60] sm:$0xff]
  %v8002 = vld [vmem:[%s7988 + $0x68] sm:$0xff]
  %v8003 = vld [vmem:[%s7988 + $0x70] sm:$0xff]
  %v8004 = vld [vmem:[%s7988 + $0x78] sm:$0xff]
  %8005 = vmatprep.subr.bf16.mxu0 %v1611
  %8006 = vmatpush1.bf16.msra.mxu0 %v1610
  %8007 = vmatprep.subr.bf16.mxu0 %v1615
  %8008 = vmatpush1.bf16.msra.mxu0 %v1614
  %8009 = vmatprep.subr.bf16.mxu0 %v1619
  %8010 = vmatpush1.bf16.msra.mxu0 %v1618
  %8011 = vmatprep.subr.bf16.mxu0 %v1623
  %8012 = vmatpush1.bf16.msra.mxu0 %v1622
  %8013 = vmatprep.subr.bf16.mxu0 %v1627
  %8014 = vmatpush1.bf16.msra.mxu0 %v1626
  %8015 = vmatprep.subr.bf16.mxu0 %v1631
  %8016 = vmatpush1.bf16.msra.mxu0 %v1630
  %8017 = vmatprep.subr.bf16.mxu0 %v1635
  %8018 = vmatpush1.bf16.msra.mxu0 %v1634
  %8019 = vmatprep.subr.bf16.mxu0 %v1639
  %8020 = vmatpush1.bf16.msra.mxu0 %v1638
  %8021 = vmatprep.subr.bf16.mxu0 %v1643
  %8022 = vmatpush1.bf16.msra.mxu0 %v1642
  %8023 = vmatprep.subr.bf16.mxu0 %v1647
  %8024 = vmatpush1.bf16.msra.mxu0 %v1646
  %8025 = vmatprep.subr.bf16.mxu0 %v1651
  %8026 = vmatpush1.bf16.msra.mxu0 %v1650
  %8027 = vmatprep.subr.bf16.mxu0 %v1655
  %8028 = vmatpush1.bf16.msra.mxu0 %v1654
  %8029 = vmatprep.subr.bf16.mxu0 %v1659
  %8030 = vmatpush1.bf16.msra.mxu0 %v1658
  %8031 = vmatprep.subr.bf16.mxu0 %v1663
  %8032 = vmatpush1.bf16.msra.mxu0 %v1662
  %8033 = vmatprep.subr.bf16.mxu0 %v1667
  %8034 = vmatpush1.bf16.msra.mxu0 %v1666
  %8035 = vmatprep.subr.bf16.mxu0 %v1671
  %8036 = vmatpush1.bf16.msra.mxu0 %v1670
  %8037 = vmatprep.mubr.bf16.mxu0 %v7983
  %8038 = vmatmul.mubr.bf16.gmra.mrb[0].mxu0 %v7982
  %v8039 = vpop.f32.mrb[0].mxu0
  %v8040 = vadd.f32 0.0, %v8039
  %v8041 = vpop.f32.mrb[0].mxu0
  %v8042 = vadd.f32 0.0, %v8041
  %v8043 = vpop.f32.mrb[0].mxu0
  %v8044 = vpop.f32.mrb[0].mxu0
  %8045 = vdwg.mxu0
  %8046 = vmatprep.subr.bf16.mxu0 %v1675
  %8047 = vmatpush1.bf16.msra.mxu0 %v1674
  %8048 = vmatprep.subr.bf16.mxu0 %v1679
  %8049 = vmatpush1.bf16.msra.mxu0 %v1678
  %8050 = vmatprep.subr.bf16.mxu0 %v1683
  %8051 = vmatpush1.bf16.msra.mxu0 %v1682
  %8052 = vmatprep.subr.bf16.mxu0 %v1687
  %8053 = vmatpush1.bf16.msra.mxu0 %v1686
  %8054 = vmatprep.subr.bf16.mxu0 %v1691
  %8055 = vmatpush1.bf16.msra.mxu0 %v1690
  %8056 = vmatprep.subr.bf16.mxu0 %v1695
  %8057 = vmatpush1.bf16.msra.mxu0 %v1694
  %8058 = vmatprep.subr.bf16.mxu0 %v1699
  %8059 = vmatpush1.bf16.msra.mxu0 %v1698
  %8060 = vmatprep.subr.bf16.mxu0 %v1703
  %8061 = vmatpush1.bf16.msra.mxu0 %v1702
  %8062 = vmatprep.subr.bf16.mxu0 %v1707
  %8063 = vmatpush1.bf16.msra.mxu0 %v1706
  %8064 = vmatprep.subr.bf16.mxu0 %v1711
  %8065 = vmatpush1.bf16.msra.mxu0 %v1710
  %8066 = vmatprep.subr.bf16.mxu0 %v1715
  %8067 = vmatpush1.bf16.msra.mxu0 %v1714
  %8068 = vmatprep.subr.bf16.mxu0 %v1719
  %8069 = vmatpush1.bf16.msra.mxu0 %v1718
  %8070 = vmatprep.subr.bf16.mxu0 %v1723
  %8071 = vmatpush1.bf16.msra.mxu0 %v1722
  %8072 = vmatprep.subr.bf16.mxu0 %v1727
  %8073 = vmatpush1.bf16.msra.mxu0 %v1726
  %8074 = vmatprep.subr.bf16.mxu0 %v1731
  %8075 = vmatpush1.bf16.msra.mxu0 %v1730
  %8076 = vmatprep.subr.bf16.mxu0 %v1735
  %8077 = vmatpush1.bf16.msra.mxu0 %v1734
  %8078 = vmatprep.mubr.bf16.mxu0 %v7985
  %8079 = vmatmul.mubr.bf16.gmra.mrb[0].mxu0 %v7984
  %v8080 = vpop.f32.mrb[0].mxu0
  %v8081 = vadd.f32 %v8040, %v8080
  %v8082 = vpop.f32.mrb[0].mxu0
  %v8083 = vadd.f32 %v8042, %v8082
  %v8084 = vpop.f32.mrb[0].mxu0
  %v8085 = vpop.f32.mrb[0].mxu0
  %8086 = vdwg.mxu0
  %8087 = vmatprep.subr.bf16.mxu0 %v1613
  %8088 = vmatpush1.bf16.msra.mxu0 %v1612
  %8089 = vmatprep.subr.bf16.mxu0 %v1617
  %8090 = vmatpush1.bf16.msra.mxu0 %v1616
  %8091 = vmatprep.subr.bf16.mxu0 %v1621
  %8092 = vmatpush1.bf16.msra.mxu0 %v1620
  %8093 = vmatprep.subr.bf16.mxu0 %v1625
  %8094 = vmatpush1.bf16.msra.mxu0 %v1624
  %8095 = vmatprep.subr.bf16.mxu0 %v1629
  %8096 = vmatpush1.bf16.msra.mxu0 %v1628
  %8097 = vmatprep.subr.bf16.mxu0 %v1633
  %8098 = vmatpush1.bf16.msra.mxu0 %v1632
  %8099 = vmatprep.subr.bf16.mxu0 %v1637
  %8100 = vmatpush1.bf16.msra.mxu0 %v1636
  %8101 = vmatprep.subr.bf16.mxu0 %v1641
  %8102 = vmatpush1.bf16.msra.mxu0 %v1640
  %8103 = vmatprep.subr.bf16.mxu0 %v1645
  %8104 = vmatpush1.bf16.msra.mxu0 %v1644
  %8105 = vmatprep.subr.bf16.mxu0 %v1649
  %8106 = vmatpush1.bf16.msra.mxu0 %v1648
  %8107 = vmatprep.subr.bf16.mxu0 %v1653
  %8108 = vmatpush1.bf16.msra.mxu0 %v1652
  %8109 = vmatprep.subr.bf16.mxu0 %v1657
  %8110 = vmatpush1.bf16.msra.mxu0 %v1656
  %8111 = vmatprep.subr.bf16.mxu0 %v1661
  %8112 = vmatpush1.bf16.msra.mxu0 %v1660
  %8113 = vmatprep.subr.bf16.mxu0 %v1665
  %8114 = vmatpush1.bf16.msra.mxu0 %v1664
  %8115 = vmatprep.subr.bf16.mxu0 %v1669
  %8116 = vmatpush1.bf16.msra.mxu0 %v1668
  %8117 = vmatprep.subr.bf16.mxu0 %v1673
  %8118 = vmatpush1.bf16.msra.mxu0 %v1672
  %8119 = vmatprep.mubr.bf16.mxu0 %v7983
  %8120 = vmatmul.mubr.bf16.gmra.mrb[0].mxu0 %v7982
  %v8121 = vpop.f32.mrb[0].mxu0
  %v8122 = vadd.f32 0.0, %v8121
  %v8123 = vpop.f32.mrb[0].mxu0
  %v8124 = vadd.f32 0.0, %v8123
  %v8125 = vpop.f32.mrb[0].mxu0
  %v8126 = vpop.f32.mrb[0].mxu0
  %8127 = vdwg.mxu0
  %8128 = vmatprep.subr.bf16.mxu0 %v1677
  %8129 = vmatpush1.bf16.msra.mxu0 %v1676
  %8130 = vmatprep.subr.bf16.mxu0 %v1681
  %8131 = vmatpush1.bf16.msra.mxu0 %v1680
  %8132 = vmatprep.subr.bf16.mxu0 %v1685
  %8133 = vmatpush1.bf16.msra.mxu0 %v1684
  %8134 = vmatprep.subr.bf16.mxu0 %v1689
  %8135 = vmatpush1.bf16.msra.mxu0 %v1688
  %8136 = vmatprep.subr.bf16.mxu0 %v1693
  %8137 = vmatpush1.bf16.msra.mxu0 %v1692
  %8138 = vmatprep.subr.bf16.mxu0 %v1697
  %8139 = vmatpush1.bf16.msra.mxu0 %v1696
  %8140 = vmatprep.subr.bf16.mxu0 %v1701
  %8141 = vmatpush1.bf16.msra.mxu0 %v1700
  %8142 = vmatprep.subr.bf16.mxu0 %v1705
  %8143 = vmatpush1.bf16.msra.mxu0 %v1704
  %8144 = vmatprep.subr.bf16.mxu0 %v1709
  %8145 = vmatpush1.bf16.msra.mxu0 %v1708
  %8146 = vmatprep.subr.bf16.mxu0 %v1713
  %8147 = vmatpush1.bf16.msra.mxu0 %v1712
  %8148 = vmatprep.subr.bf16.mxu0 %v1717
  %8149 = vmatpush1.bf16.msra.mxu0 %v1716
  %8150 = vmatprep.subr.bf16.mxu0 %v1721
  %8151 = vmatpush1.bf16.msra.mxu0 %v1720
  %8152 = vmatprep.subr.bf16.mxu0 %v1725
  %8153 = vmatpush1.bf16.msra.mxu0 %v1724
  %8154 = vmatprep.subr.bf16.mxu0 %v1729
  %8155 = vmatpush1.bf16.msra.mxu0 %v1728
  %8156 = vmatprep.subr.bf16.mxu0 %v1733
  %8157 = vmatpush1.bf16.msra.mxu0 %v1732
  %8158 = vmatprep.subr.bf16.mxu0 %v1737
  %8159 = vmatpush1.bf16.msra.mxu0 %v1736
  %8160 = vmatprep.mubr.bf16.mxu0 %v7985
  %8161 = vmatmul.mubr.bf16.gmra.mrb[0].mxu0 %v7984
  %v8162 = vpop.f32.mrb[0].mxu0
  %v8163 = vadd.f32 %v8122, %v8162
  %v8164 = vpop.f32.mrb[0].mxu0
  %v8165 = vadd.f32 %v8124, %v8164
  %v8166 = vpop.f32.mrb[0].mxu0
  %v8167 = vpop.f32.mrb[0].mxu0
  %8168 = vdwg.mxu0
  %8169 = vmatprep.subr.bf16.mxu0 %v2543
  %8170 = vmatpush1.bf16.msra.mxu0 %v2542
  %8171 = vmatprep.subr.bf16.mxu0 %v2547
  %8172 = vmatpush1.bf16.msra.mxu0 %v2546
  %8173 = vmatprep.subr.bf16.mxu0 %v2551
  %8174 = vmatpush1.bf16.msra.mxu0 %v2550
  %8175 = vmatprep.subr.bf16.mxu0 %v2555
  %8176 = vmatpush1.bf16.msra.mxu0 %v2554
  %8177 = vmatprep.subr.bf16.mxu0 %v2559
  %8178 = vmatpush1.bf16.msra.mxu0 %v2558
  %8179 = vmatprep.subr.bf16.mxu0 %v2563
  %8180 = vmatpush1.bf16.msra.mxu0 %v2562
  %8181 = vmatprep.subr.bf16.mxu0 %v2567
  %8182 = vmatpush1.bf16.msra.mxu0 %v2566
  %8183 = vmatprep.subr.bf16.mxu0 %v2571
  %8184 = vmatpush1.bf16.msra.mxu0 %v2570
  %8185 = vmatprep.subr.bf16.mxu0 %v2575
  %8186 = vmatpush1.bf16.msra.mxu0 %v2574
  %8187 = vmatprep.subr.bf16.mxu0 %v2579
  %8188 = vmatpush1.bf16.msra.mxu0 %v2578
  %8189 = vmatprep.subr.bf16.mxu0 %v2583
  %8190 = vmatpush1.bf16.msra.mxu0 %v2582
  %8191 = vmatprep.subr.bf16.mxu0 %v2587
  %8192 = vmatpush1.bf16.msra.mxu0 %v2586
  %8193 = vmatprep.subr.bf16.mxu0 %v2591
  %8194 = vmatpush1.bf16.msra.mxu0 %v2590
  %8195 = vmatprep.subr.bf16.mxu0 %v2595
  %8196 = vmatpush1.bf16.msra.mxu0 %v2594
  %8197 = vmatprep.subr.bf16.mxu0 %v2599
  %8198 = vmatpush1.bf16.msra.mxu0 %v2598
  %8199 = vmatprep.subr.bf16.mxu0 %v2603
  %8200 = vmatpush1.bf16.msra.mxu0 %v2602
  %8201 = vmatprep.mubr.bf16.mxu0 %v7983
  %8202 = vmatmul.mubr.bf16.gmra.mrb[0].mxu0 %v7982
  %v8203 = vpop.f32.mrb[0].mxu0
  %v8204 = vadd.f32 0.0, %v8203
  %v8205 = vpop.f32.mrb[0].mxu0
  %v8206 = vadd.f32 0.0, %v8205
  %v8207 = vpop.f32.mrb[0].mxu0
  %v8208 = vpop.f32.mrb[0].mxu0
  %8209 = vdwg.mxu0
  %8210 = vmatprep.subr.bf16.mxu0 %v2607
  %8211 = vmatpush1.bf16.msra.mxu0 %v2606
  %8212 = vmatprep.subr.bf16.mxu0 %v2611
  %8213 = vmatpush1.bf16.msra.mxu0 %v2610
  %8214 = vmatprep.subr.bf16.mxu0 %v2615
  %8215 = vmatpush1.bf16.msra.mxu0 %v2614
  %8216 = vmatprep.subr.bf16.mxu0 %v2619
  %8217 = vmatpush1.bf16.msra.mxu0 %v2618
  %8218 = vmatprep.subr.bf16.mxu0 %v2623
  %8219 = vmatpush1.bf16.msra.mxu0 %v2622
  %8220 = vmatprep.subr.bf16.mxu0 %v2627
  %8221 = vmatpush1.bf16.msra.mxu0 %v2626
  %8222 = vmatprep.subr.bf16.mxu0 %v2631
  %8223 = vmatpush1.bf16.msra.mxu0 %v2630
  %8224 = vmatprep.subr.bf16.mxu0 %v2635
  %8225 = vmatpush1.bf16.msra.mxu0 %v2634
  %8226 = vmatprep.subr.bf16.mxu0 %v2639
  %8227 = vmatpush1.bf16.msra.mxu0 %v2638
  %8228 = vmatprep.subr.bf16.mxu0 %v2643
  %8229 = vmatpush1.bf16.msra.mxu0 %v2642
  %8230 = vmatprep.subr.bf16.mxu0 %v2647
  %8231 = vmatpush1.bf16.msra.mxu0 %v2646
  %8232 = vmatprep.subr.bf16.mxu0 %v2651
  %8233 = vmatpush1.bf16.msra.mxu0 %v2650
  %8234 = vmatprep.subr.bf16.mxu0 %v2655
  %8235 = vmatpush1.bf16.msra.mxu0 %v2654
  %8236 = vmatprep.subr.bf16.mxu0 %v2659
  %8237 = vmatpush1.bf16.msra.mxu0 %v2658
  %8238 = vmatprep.subr.bf16.mxu0 %v2663
  %8239 = vmatpush1.bf16.msra.mxu0 %v2662
  %8240 = vmatprep.subr.bf16.mxu0 %v2667
  %8241 = vmatpush1.bf16.msra.mxu0 %v2666
  %8242 = vmatprep.mubr.bf16.mxu0 %v7985
  %8243 = vmatmul.mubr.bf16.gmra.mrb[0].mxu0 %v7984
  %v8244 = vpop.f32.mrb[0].mxu0
  %v8245 = vadd.f32 %v8204, %v8244
  %v8246 = vpop.f32.mrb[0].mxu0
  %v8247 = vadd.f32 %v8206, %v8246
  %v8248 = vpop.f32.mrb[0].mxu0
  %v8249 = vpop.f32.mrb[0].mxu0
  %8250 = vdwg.mxu0
  %8251 = vmatprep.subr.bf16.mxu0 %v2545
  %8252 = vmatpush1.bf16.msra.mxu0 %v2544
  %8253 = vmatprep.subr.bf16.mxu0 %v2549
  %8254 = vmatpush1.bf16.msra.mxu0 %v2548
  %8255 = vmatprep.subr.bf16.mxu0 %v2553
  %8256 = vmatpush1.bf16.msra.mxu0 %v2552
  %8257 = vmatprep.subr.bf16.mxu0 %v2557
  %8258 = vmatpush1.bf16.msra.mxu0 %v2556
  %8259 = vmatprep.subr.bf16.mxu0 %v2561
  %8260 = vmatpush1.bf16.msra.mxu0 %v2560
  %8261 = vmatprep.subr.bf16.mxu0 %v2565
  %8262 = vmatpush1.bf16.msra.mxu0 %v2564
  %8263 = vmatprep.subr.bf16.mxu0 %v2569
  %8264 = vmatpush1.bf16.msra.mxu0 %v2568
  %8265 = vmatprep.subr.bf16.mxu0 %v2573
  %8266 = vmatpush1.bf16.msra.mxu0 %v2572
  %8267 = vmatprep.subr.bf16.mxu0 %v2577
  %8268 = vmatpush1.bf16.msra.mxu0 %v2576
  %8269 = vmatprep.subr.bf16.mxu0 %v2581
  %8270 = vmatpush1.bf16.msra.mxu0 %v2580
  %8271 = vmatprep.subr.bf16.mxu0 %v2585
  %8272 = vmatpush1.bf16.msra.mxu0 %v2584
  %8273 = vmatprep.subr.bf16.mxu0 %v2589
  %8274 = vmatpush1.bf16.msra.mxu0 %v2588
  %8275 = vmatprep.subr.bf16.mxu0 %v2593
  %8276 = vmatpush1.bf16.msra.mxu0 %v2592
  %8277 = vmatprep.subr.bf16.mxu0 %v2597
  %8278 = vmatpush1.bf16.msra.mxu0 %v2596
  %8279 = vmatprep.subr.bf16.mxu0 %v2601
  %8280 = vmatpush1.bf16.msra.mxu0 %v2600
  %8281 = vmatprep.subr.bf16.mxu0 %v2605
  %8282 = vmatpush1.bf16.msra.mxu0 %v2604
  %8283 = vmatprep.mubr.bf16.mxu0 %v7983
  %8284 = vmatmul.mubr.bf16.gmra.mrb[0].mxu0 %v7982
  %v8285 = vpop.f32.mrb[0].mxu0
  %v8286 = vadd.f32 0.0, %v8285
  %v8287 = vpop.f32.mrb[0].mxu0
  %v8288 = vadd.f32 0.0, %v8287
  %v8289 = vpop.f32.mrb[0].mxu0
  %v8290 = vpop.f32.mrb[0].mxu0
  %8291 = vdwg.mxu0
  %8292 = vmatprep.subr.bf16.mxu0 %v2609
  %8293 = vmatpush1.bf16.msra.mxu0 %v2608
  %8294 = vmatprep.subr.bf16.mxu0 %v2613
  %8295 = vmatpush1.bf16.msra.mxu0 %v2612
  %8296 = vmatprep.subr.bf16.mxu0 %v2617
  %8297 = vmatpush1.bf16.msra.mxu0 %v2616
  %8298 = vmatprep.subr.bf16.mxu0 %v2621
  %8299 = vmatpush1.bf16.msra.mxu0 %v2620
  %8300 = vmatprep.subr.bf16.mxu0 %v2625
  %8301 = vmatpush1.bf16.msra.mxu0 %v2624
  %8302 = vmatprep.subr.bf16.mxu0 %v2629
  %8303 = vmatpush1.bf16.msra.mxu0 %v2628
  %8304 = vmatprep.subr.bf16.mxu0 %v2633
  %8305 = vmatpush1.bf16.msra.mxu0 %v2632
  %8306 = vmatprep.subr.bf16.mxu0 %v2637
  %8307 = vmatpush1.bf16.msra.mxu0 %v2636
  %8308 = vmatprep.subr.bf16.mxu0 %v2641
  %8309 = vmatpush1.bf16.msra.mxu0 %v2640
  %8310 = vmatprep.subr.bf16.mxu0 %v2645
  %8311 = vmatpush1.bf16.msra.mxu0 %v2644
  %8312 = vmatprep.subr.bf16.mxu0 %v2649
  %8313 = vmatpush1.bf16.msra.mxu0 %v2648
  %8314 = vmatprep.subr.bf16.mxu0 %v2653
  %8315 = vmatpush1.bf16.msra.mxu0 %v2652
  %8316 = vmatprep.subr.bf16.mxu0 %v2657
  %8317 = vmatpush1.bf16.msra.mxu0 %v2656
  %8318 = vmatprep.subr.bf16.mxu0 %v2661
  %8319 = vmatpush1.bf16.msra.mxu0 %v2660
  %8320 = vmatprep.subr.bf16.mxu0 %v2665
  %8321 = vmatpush1.bf16.msra.mxu0 %v2664
  %8322 = vmatprep.subr.bf16.mxu0 %v2669
  %8323 = vmatpush1.bf16.msra.mxu0 %v2668
  %8324 = vmatprep.mubr.bf16.mxu0 %v7985
  %8325 = vmatmul.mubr.bf16.gmra.mrb[0].mxu0 %v7984
  %v8326 = vpop.f32.mrb[0].mxu0
  %v8327 = vadd.f32 %v8286, %v8326
  %v8328 = vpop.f32.mrb[0].mxu0
  %v8329 = vadd.f32 %v8288, %v8328
  %v8330 = vpop.f32.mrb[0].mxu0
  %v8331 = vpop.f32.mrb[0].mxu0
  %8332 = vdwg.mxu0
  %v8333 = vadd.f32 %v7989, %v8081
  %v8334 = vadd.f32 %v7990, %v8083
  %v8335 = vadd.f32 %v7991, %v8163
  %v8336 = vadd.f32 %v7992, %v8165
  %v8337 = vmul.f32 %v8333, 0.5
  %v8338 = vmul.f32 %v8334, 0.5
  %v8339 = vmul.f32 %v8335, 0.5
  %v8340 = vmul.f32 %v8336, 0.5
  %v8341 = vtanh.pop %v8337
  %v8342 = vtanh.pop %v8338
  %v8343 = vtanh.pop %v8339
  %v8344 = vtanh.pop %v8340
  %v8345 = vmul.f32 %v8341, 0.5
  %v8346 = vmul.f32 %v8342, 0.5
  %v8347 = vmul.f32 %v8343, 0.5
  %v8348 = vmul.f32 %v8344, 0.5
  %v8349 = vadd.f32 %v8345, 0.5
  %v8350 = vadd.f32 %v8346, 0.5
  %v8351 = vadd.f32 %v8347, 0.5
  %v8352 = vadd.f32 %v8348, 0.5
  %8353 = vmatprep.subr.bf16.mxu0 %v3495
  %8354 = vmatpush1.bf16.msra.mxu0 %v3494
  %8355 = vmatprep.subr.bf16.mxu0 %v3499
  %8356 = vmatpush1.bf16.msra.mxu0 %v3498
  %8357 = vmatprep.subr.bf16.mxu0 %v3503
  %8358 = vmatpush1.bf16.msra.mxu0 %v3502
  %8359 = vmatprep.subr.bf16.mxu0 %v3507
  %8360 = vmatpush1.bf16.msra.mxu0 %v3506
  %8361 = vmatprep.subr.bf16.mxu0 %v3511
  %8362 = vmatpush1.bf16.msra.mxu0 %v3510
  %8363 = vmatprep.subr.bf16.mxu0 %v3515
  %8364 = vmatpush1.bf16.msra.mxu0 %v3514
  %8365 = vmatprep.subr.bf16.mxu0 %v3519
  %8366 = vmatpush1.bf16.msra.mxu0 %v3518
  %8367 = vmatprep.subr.bf16.mxu0 %v3523
  %8368 = vmatpush1.bf16.msra.mxu0 %v3522
  %8369 = vmatprep.subr.bf16.mxu0 %v3527
  %8370 = vmatpush1.bf16.msra.mxu0 %v3526
  %8371 = vmatprep.subr.bf16.mxu0 %v3531
  %8372 = vmatpush1.bf16.msra.mxu0 %v3530
  %8373 = vmatprep.subr.bf16.mxu0 %v3535
  %8374 = vmatpush1.bf16.msra.mxu0 %v3534
  %8375 = vmatprep.subr.bf16.mxu0 %v3539
  %8376 = vmatpush1.bf16.msra.mxu0 %v3538
  %8377 = vmatprep.subr.bf16.mxu0 %v3543
  %8378 = vmatpush1.bf16.msra.mxu0 %v3542
  %8379 = vmatprep.subr.bf16.mxu0 %v3547
  %8380 = vmatpush1.bf16.msra.mxu0 %v3546
  %8381 = vmatprep.subr.bf16.mxu0 %v3551
  %8382 = vmatpush1.bf16.msra.mxu0 %v3550
  %8383 = vmatprep.subr.bf16.mxu0 %v3555
  %8384 = vmatpush1.bf16.msra.mxu0 %v3554
  %8385 = vmatprep.mubr.bf16.mxu0 %v7983
  %8386 = vmatmul.mubr.bf16.gmra.mrb[0].mxu0 %v7982
  %v8387 = vpop.f32.mrb[0].mxu0
  %v8388 = vadd.f32 0.0, %v8387
  %v8389 = vpop.f32.mrb[0].mxu0
  %v8390 = vadd.f32 0.0, %v8389
  %v8391 = vpop.f32.mrb[0].mxu0
  %v8392 = vpop.f32.mrb[0].mxu0
  %8393 = vdwg.mxu0
  %8394 = vmatprep.subr.bf16.mxu0 %v3559
  %8395 = vmatpush1.bf16.msra.mxu0 %v3558
  %8396 = vmatprep.subr.bf16.mxu0 %v3563
  %8397 = vmatpush1.bf16.msra.mxu0 %v3562
  %8398 = vmatprep.subr.bf16.mxu0 %v3567
  %8399 = vmatpush1.bf16.msra.mxu0 %v3566
  %8400 = vmatprep.subr.bf16.mxu0 %v3571
  %8401 = vmatpush1.bf16.msra.mxu0 %v3570
  %8402 = vmatprep.subr.bf16.mxu0 %v3575
  %8403 = vmatpush1.bf16.msra.mxu0 %v3574
  %8404 = vmatprep.subr.bf16.mxu0 %v3579
  %8405 = vmatpush1.bf16.msra.mxu0 %v3578
  %8406 = vmatprep.subr.bf16.mxu0 %v3583
  %8407 = vmatpush1.bf16.msra.mxu0 %v3582
  %8408 = vmatprep.subr.bf16.mxu0 %v3587
  %8409 = vmatpush1.bf16.msra.mxu0 %v3586
  %8410 = vmatprep.subr.bf16.mxu0 %v3591
  %8411 = vmatpush1.bf16.msra.mxu0 %v3590
  %8412 = vmatprep.subr.bf16.mxu0 %v3595
  %8413 = vmatpush1.bf16.msra.mxu0 %v3594
  %8414 = vmatprep.subr.bf16.mxu0 %v3599
  %8415 = vmatpush1.bf16.msra.mxu0 %v3598
  %8416 = vmatprep.subr.bf16.mxu0 %v3603
  %8417 = vmatpush1.bf16.msra.mxu0 %v3602
  %8418 = vmatprep.subr.bf16.mxu0 %v3607
  %8419 = vmatpush1.bf16.msra.mxu0 %v3606
  %8420 = vmatprep.subr.bf16.mxu0 %v3611
  %8421 = vmatpush1.bf16.msra.mxu0 %v3610
  %8422 = vmatprep.subr.bf16.mxu0 %v3615
  %8423 = vmatpush1.bf16.msra.mxu0 %v3614
  %8424 = vmatprep.subr.bf16.mxu0 %v3619
  %8425 = vmatpush1.bf16.msra.mxu0 %v3618
  %8426 = vmatprep.mubr.bf16.mxu0 %v7985
  %8427 = vmatmul.mubr.bf16.gmra.mrb[0].mxu0 %v7984
  %v8428 = vpop.f32.mrb[0].mxu0
  %v8429 = vadd.f32 %v8388, %v8428
  %v8430 = vpop.f32.mrb[0].mxu0
  %v8431 = vadd.f32 %v8390, %v8430
  %v8432 = vpop.f32.mrb[0].mxu0
  %v8433 = vpop.f32.mrb[0].mxu0
  %8434 = vdwg.mxu0
  %8435 = vmatprep.subr.bf16.mxu0 %v3497
  %8436 = vmatpush1.bf16.msra.mxu0 %v3496
  %8437 = vmatprep.subr.bf16.mxu0 %v3501
  %8438 = vmatpush1.bf16.msra.mxu0 %v3500
  %8439 = vmatprep.subr.bf16.mxu0 %v3505
  %8440 = vmatpush1.bf16.msra.mxu0 %v3504
  %8441 = vmatprep.subr.bf16.mxu0 %v3509
  %8442 = vmatpush1.bf16.msra.mxu0 %v3508
  %8443 = vmatprep.subr.bf16.mxu0 %v3513
  %8444 = vmatpush1.bf16.msra.mxu0 %v3512
  %8445 = vmatprep.subr.bf16.mxu0 %v3517
  %8446 = vmatpush1.bf16.msra.mxu0 %v3516
  %8447 = vmatprep.subr.bf16.mxu0 %v3521
  %8448 = vmatpush1.bf16.msra.mxu0 %v3520
  %8449 = vmatprep.subr.bf16.mxu0 %v3525
  %8450 = vmatpush1.bf16.msra.mxu0 %v3524
  %8451 = vmatprep.subr.bf16.mxu0 %v3529
  %8452 = vmatpush1.bf16.msra.mxu0 %v3528
  %8453 = vmatprep.subr.bf16.mxu0 %v3533
  %8454 = vmatpush1.bf16.msra.mxu0 %v3532
  %8455 = vmatprep.subr.bf16.mxu0 %v3537
  %8456 = vmatpush1.bf16.msra.mxu0 %v3536
  %8457 = vmatprep.subr.bf16.mxu0 %v3541
  %8458 = vmatpush1.bf16.msra.mxu0 %v3540
  %8459 = vmatprep.subr.bf16.mxu0 %v3545
  %8460 = vmatpush1.bf16.msra.mxu0 %v3544
  %8461 = vmatprep.subr.bf16.mxu0 %v3549
  %8462 = vmatpush1.bf16.msra.mxu0 %v3548
  %8463 = vmatprep.subr.bf16.mxu0 %v3553
  %8464 = vmatpush1.bf16.msra.mxu0 %v3552
  %8465 = vmatprep.subr.bf16.mxu0 %v3557
  %8466 = vmatpush1.bf16.msra.mxu0 %v3556
  %8467 = vmatprep.mubr.bf16.mxu0 %v7983
  %8468 = vmatmul.mubr.bf16.gmra.mrb[0].mxu0 %v7982
  %v8469 = vpop.f32.mrb[0].mxu0
  %v8470 = vadd.f32 0.0, %v8469
  %v8471 = vpop.f32.mrb[0].mxu0
  %v8472 = vadd.f32 0.0, %v8471
  %v8473 = vpop.f32.mrb[0].mxu0
  %v8474 = vpop.f32.mrb[0].mxu0
  %8475 = vdwg.mxu0
  %8476 = vmatprep.subr.bf16.mxu0 %v3561
  %8477 = vmatpush1.bf16.msra.mxu0 %v3560
  %8478 = vmatprep.subr.bf16.mxu0 %v3565
  %8479 = vmatpush1.bf16.msra.mxu0 %v3564
  %8480 = vmatprep.subr.bf16.mxu0 %v3569
  %8481 = vmatpush1.bf16.msra.mxu0 %v3568
  %8482 = vmatprep.subr.bf16.mxu0 %v3573
  %8483 = vmatpush1.bf16.msra.mxu0 %v3572
  %8484 = vmatprep.subr.bf16.mxu0 %v3577
  %8485 = vmatpush1.bf16.msra.mxu0 %v3576
  %8486 = vmatprep.subr.bf16.mxu0 %v3581
  %8487 = vmatpush1.bf16.msra.mxu0 %v3580
  %8488 = vmatprep.subr.bf16.mxu0 %v3585
  %8489 = vmatpush1.bf16.msra.mxu0 %v3584
  %8490 = vmatprep.subr.bf16.mxu0 %v3589
  %8491 = vmatpush1.bf16.msra.mxu0 %v3588
  %8492 = vmatprep.subr.bf16.mxu0 %v3593
  %8493 = vmatpush1.bf16.msra.mxu0 %v3592
  %8494 = vmatprep.subr.bf16.mxu0 %v3597
  %8495 = vmatpush1.bf16.msra.mxu0 %v3596
  %8496 = vmatprep.subr.bf16.mxu0 %v3601
  %8497 = vmatpush1.bf16.msra.mxu0 %v3600
  %8498 = vmatprep.subr.bf16.mxu0 %v3605
  %8499 = vmatpush1.bf16.msra.mxu0 %v3604
  %8500 = vmatprep.subr.bf16.mxu0 %v3609
  %8501 = vmatpush1.bf16.msra.mxu0 %v3608
  %8502 = vmatprep.subr.bf16.mxu0 %v3613
  %8503 = vmatpush1.bf16.msra.mxu0 %v3612
  %8504 = vmatprep.subr.bf16.mxu0 %v3617
  %8505 = vmatpush1.bf16.msra.mxu0 %v3616
  %8506 = vmatprep.subr.bf16.mxu0 %v3621
  %8507 = vmatpush1.bf16.msra.mxu0 %v3620
  %8508 = vmatprep.mubr.bf16.mxu0 %v7985
  %8509 = vmatmul.mubr.bf16.gmra.mrb[0].mxu0 %v7984
  %v8510 = vpop.f32.mrb[0].mxu0
  %v8511 = vadd.f32 %v8470, %v8510
  %v8512 = vpop.f32.mrb[0].mxu0
  %v8513 = vadd.f32 %v8472, %v8512
  %v8514 = vpop.f32.mrb[0].mxu0
  %v8515 = vpop.f32.mrb[0].mxu0
  %8516 = vdwg.mxu0
  %v8517 = vadd.f32 %v7993, %v8245
  %v8518 = vadd.f32 %v7994, %v8247
  %v8519 = vadd.f32 %v7995, %v8327
  %v8520 = vadd.f32 %v7996, %v8329
  %v8521 = vmul.f32 %v8517, 0.5
  %v8522 = vmul.f32 %v8518, 0.5
  %v8523 = vmul.f32 %v8519, 0.5
  %v8524 = vmul.f32 %v8520, 0.5
  %v8525 = vtanh.pop %v8521
  %v8526 = vtanh.pop %v8522
  %v8527 = vtanh.pop %v8523
  %v8528 = vtanh.pop %v8524
  %v8529 = vmul.f32 %v8525, 0.5
  %v8530 = vmul.f32 %v8526, 0.5
  %v8531 = vmul.f32 %v8527, 0.5
  %v8532 = vmul.f32 %v8528, 0.5
  %v8533 = vadd.f32 %v8529, 0.5
  %v8534 = vadd.f32 %v8530, 0.5
  %v8535 = vadd.f32 %v8531, 0.5
  %v8536 = vadd.f32 %v8532, 0.5
  %8537 = vmatprep.subr.bf16.mxu0 %v4447
  %8538 = vmatpush1.bf16.msra.mxu0 %v4446
  %8539 = vmatprep.subr.bf16.mxu0 %v4451
  %8540 = vmatpush1.bf16.msra.mxu0 %v4450
  %8541 = vmatprep.subr.bf16.mxu0 %v4455
  %8542 = vmatpush1.bf16.msra.mxu0 %v4454
  %8543 = vmatprep.subr.bf16.mxu0 %v4459
  %8544 = vmatpush1.bf16.msra.mxu0 %v4458
  %8545 = vmatprep.subr.bf16.mxu0 %v4463
  %8546 = vmatpush1.bf16.msra.mxu0 %v4462
  %8547 = vmatprep.subr.bf16.mxu0 %v4467
  %8548 = vmatpush1.bf16.msra.mxu0 %v4466
  %8549 = vmatprep.subr.bf16.mxu0 %v4471
  %8550 = vmatpush1.bf16.msra.mxu0 %v4470
  %8551 = vmatprep.subr.bf16.mxu0 %v4475
  %8552 = vmatpush1.bf16.msra.mxu0 %v4474
  %8553 = vmatprep.subr.bf16.mxu0 %v4479
  %8554 = vmatpush1.bf16.msra.mxu0 %v4478
  %8555 = vmatprep.subr.bf16.mxu0 %v4483
  %8556 = vmatpush1.bf16.msra.mxu0 %v4482
  %8557 = vmatprep.subr.bf16.mxu0 %v4487
  %8558 = vmatpush1.bf16.msra.mxu0 %v4486
  %8559 = vmatprep.subr.bf16.mxu0 %v4491
  %8560 = vmatpush1.bf16.msra.mxu0 %v4490
  %8561 = vmatprep.subr.bf16.mxu0 %v4495
  %8562 = vmatpush1.bf16.msra.mxu0 %v4494
  %8563 = vmatprep.subr.bf16.mxu0 %v4499
  %8564 = vmatpush1.bf16.msra.mxu0 %v4498
  %8565 = vmatprep.subr.bf16.mxu0 %v4503
  %8566 = vmatpush1.bf16.msra.mxu0 %v4502
  %8567 = vmatprep.subr.bf16.mxu0 %v4507
  %8568 = vmatpush1.bf16.msra.mxu0 %v4506
  %8569 = vmatprep.mubr.bf16.mxu0 %v7983
  %8570 = vmatmul.mubr.bf16.gmra.mrb[0].mxu0 %v7982
  %v8571 = vpop.f32.mrb[0].mxu0
  %v8572 = vadd.f32 0.0, %v8571
  %v8573 = vpop.f32.mrb[0].mxu0
  %v8574 = vadd.f32 0.0, %v8573
  %v8575 = vpop.f32.mrb[0].mxu0
  %v8576 = vpop.f32.mrb[0].mxu0
  %8577 = vdwg.mxu0
  %8578 = vmatprep.subr.bf16.mxu0 %v4511
  %8579 = vmatpush1.bf16.msra.mxu0 %v4510
  %8580 = vmatprep.subr.bf16.mxu0 %v4515
  %8581 = vmatpush1.bf16.msra.mxu0 %v4514
  %8582 = vmatprep.subr.bf16.mxu0 %v4519
  %8583 = vmatpush1.bf16.msra.mxu0 %v4518
  %8584 = vmatprep.subr.bf16.mxu0 %v4523
  %8585 = vmatpush1.bf16.msra.mxu0 %v4522
  %8586 = vmatprep.subr.bf16.mxu0 %v4527
  %8587 = vmatpush1.bf16.msra.mxu0 %v4526
  %8588 = vmatprep.subr.bf16.mxu0 %v4531
  %8589 = vmatpush1.bf16.msra.mxu0 %v4530
  %8590 = vmatprep.subr.bf16.mxu0 %v4535
  %8591 = vmatpush1.bf16.msra.mxu0 %v4534
  %8592 = vmatprep.subr.bf16.mxu0 %v4539
  %8593 = vmatpush1.bf16.msra.mxu0 %v4538
  %8594 = vmatprep.subr.bf16.mxu0 %v4543
  %8595 = vmatpush1.bf16.msra.mxu0 %v4542
  %8596 = vmatprep.subr.bf16.mxu0 %v4547
  %8597 = vmatpush1.bf16.msra.mxu0 %v4546
  %8598 = vmatprep.subr.bf16.mxu0 %v4551
  %8599 = vmatpush1.bf16.msra.mxu0 %v4550
  %8600 = vmatprep.subr.bf16.mxu0 %v4555
  %8601 = vmatpush1.bf16.msra.mxu0 %v4554
  %8602 = vmatprep.subr.bf16.mxu0 %v4559
  %8603 = vmatpush1.bf16.msra.mxu0 %v4558
  %8604 = vmatprep.subr.bf16.mxu0 %v4563
  %8605 = vmatpush1.bf16.msra.mxu0 %v4562
  %8606 = vmatprep.subr.bf16.mxu0 %v4567
  %8607 = vmatpush1.bf16.msra.mxu0 %v4566
  %8608 = vmatprep.subr.bf16.mxu0 %v4571
  %8609 = vmatpush1.bf16.msra.mxu0 %v4570
  %8610 = vmatprep.mubr.bf16.mxu0 %v7985
  %8611 = vmatmul.mubr.bf16.gmra.mrb[0].mxu0 %v7984
  %v8612 = vpop.f32.mrb[0].mxu0
  %v8613 = vadd.f32 %v8572, %v8612
  %v8614 = vpop.f32.mrb[0].mxu0
  %v8615 = vadd.f32 %v8574, %v8614
  %v8616 = vpop.f32.mrb[0].mxu0
  %v8617 = vpop.f32.mrb[0].mxu0
  %8618 = vdwg.mxu0
  %8619 = vmatprep.subr.bf16.mxu0 %v4449
  %8620 = vmatpush1.bf16.msra.mxu0 %v4448
  %8621 = vmatprep.subr.bf16.mxu0 %v4453
  %8622 = vmatpush1.bf16.msra.mxu0 %v4452
  %8623 = vmatprep.subr.bf16.mxu0 %v4457
  %8624 = vmatpush1.bf16.msra.mxu0 %v4456
  %8625 = vmatprep.subr.bf16.mxu0 %v4461
  %8626 = vmatpush1.bf16.msra.mxu0 %v4460
  %8627 = vmatprep.subr.bf16.mxu0 %v4465
  %8628 = vmatpush1.bf16.msra.mxu0 %v4464
  %8629 = vmatprep.subr.bf16.mxu0 %v4469
  %8630 = vmatpush1.bf16.msra.mxu0 %v4468
  %8631 = vmatprep.subr.bf16.mxu0 %v4473
  %8632 = vmatpush1.bf16.msra.mxu0 %v4472
  %8633 = vmatprep.subr.bf16.mxu0 %v4477
  %8634 = vmatpush1.bf16.msra.mxu0 %v4476
  %8635 = vmatprep.subr.bf16.mxu0 %v4481
  %8636 = vmatpush1.bf16.msra.mxu0 %v4480
  %8637 = vmatprep.subr.bf16.mxu0 %v4485
  %8638 = vmatpush1.bf16.msra.mxu0 %v4484
  %8639 = vmatprep.subr.bf16.mxu0 %v4489
  %8640 = vmatpush1.bf16.msra.mxu0 %v4488
  %8641 = vmatprep.subr.bf16.mxu0 %v4493
  %8642 = vmatpush1.bf16.msra.mxu0 %v4492
  %8643 = vmatprep.subr.bf16.mxu0 %v4497
  %8644 = vmatpush1.bf16.msra.mxu0 %v4496
  %8645 = vmatprep.subr.bf16.mxu0 %v4501
  %8646 = vmatpush1.bf16.msra.mxu0 %v4500
  %8647 = vmatprep.subr.bf16.mxu0 %v4505
  %8648 = vmatpush1.bf16.msra.mxu0 %v4504
  %8649 = vmatprep.subr.bf16.mxu0 %v4509
  %8650 = vmatpush1.bf16.msra.mxu0 %v4508
  %8651 = vmatprep.mubr.bf16.mxu0 %v7983
  %8652 = vmatmul.mubr.bf16.gmra.mrb[0].mxu0 %v7982
  %v8653 = vpop.f32.mrb[0].mxu0
  %v8654 = vadd.f32 0.0, %v8653
  %v8655 = vpop.f32.mrb[0].mxu0
  %v8656 = vadd.f32 0.0, %v8655
  %v8657 = vpop.f32.mrb[0].mxu0
  %v8658 = vpop.f32.mrb[0].mxu0
  %8659 = vdwg.mxu0
  %8660 = vmatprep.subr.bf16.mxu0 %v4513
  %8661 = vmatpush1.bf16.msra.mxu0 %v4512
  %8662 = vmatprep.subr.bf16.mxu0 %v4517
  %8663 = vmatpush1.bf16.msra.mxu0 %v4516
  %8664 = vmatprep.subr.bf16.mxu0 %v4521
  %8665 = vmatpush1.bf16.msra.mxu0 %v4520
  %8666 = vmatprep.subr.bf16.mxu0 %v4525
  %8667 = vmatpush1.bf16.msra.mxu0 %v4524
  %8668 = vmatprep.subr.bf16.mxu0 %v4529
  %8669 = vmatpush1.bf16.msra.mxu0 %v4528
  %8670 = vmatprep.subr.bf16.mxu0 %v4533
  %8671 = vmatpush1.bf16.msra.mxu0 %v4532
  %8672 = vmatprep.subr.bf16.mxu0 %v4537
  %8673 = vmatpush1.bf16.msra.mxu0 %v4536
  %8674 = vmatprep.subr.bf16.mxu0 %v4541
  %8675 = vmatpush1.bf16.msra.mxu0 %v4540
  %8676 = vmatprep.subr.bf16.mxu0 %v4545
  %8677 = vmatpush1.bf16.msra.mxu0 %v4544
  %8678 = vmatprep.subr.bf16.mxu0 %v4549
  %8679 = vmatpush1.bf16.msra.mxu0 %v4548
  %8680 = vmatprep.subr.bf16.mxu0 %v4553
  %8681 = vmatpush1.bf16.msra.mxu0 %v4552
  %8682 = vmatprep.subr.bf16.mxu0 %v4557
  %8683 = vmatpush1.bf16.msra.mxu0 %v4556
  %8684 = vmatprep.subr.bf16.mxu0 %v4561
  %8685 = vmatpush1.bf16.msra.mxu0 %v4560
  %8686 = vmatprep.subr.bf16.mxu0 %v4565
  %8687 = vmatpush1.bf16.msra.mxu0 %v4564
  %8688 = vmatprep.subr.bf16.mxu0 %v4569
  %8689 = vmatpush1.bf16.msra.mxu0 %v4568
  %8690 = vmatprep.subr.bf16.mxu0 %v4573
  %8691 = vmatpush1.bf16.msra.mxu0 %v4572
  %8692 = vmatprep.mubr.bf16.mxu0 %v7985
  %8693 = vmatmul.mubr.bf16.gmra.mrb[0].mxu0 %v7984
  %v8694 = vpop.f32.mrb[0].mxu0
  %v8695 = vadd.f32 %v8654, %v8694
  %v8696 = vpop.f32.mrb[0].mxu0
  %v8697 = vadd.f32 %v8656, %v8696
  %v8698 = vpop.f32.mrb[0].mxu0
  %v8699 = vpop.f32.mrb[0].mxu0
  %8700 = vdwg.mxu0
  %v8701 = vadd.f32 %v7997, %v8429
  %v8702 = vadd.f32 %v7998, %v8431
  %v8703 = vadd.f32 %v7999, %v8511
  %v8704 = vadd.f32 %v8000, %v8513
  %v8705 = vtanh.pop %v8701
  %v8706 = vtanh.pop %v8702
  %v8707 = vtanh.pop %v8703
  %v8708 = vtanh.pop %v8704
  %v8709 = vadd.f32 %v8001, %v8613
  %v8710 = vadd.f32 %v8002, %v8615
  %v8711 = vadd.f32 %v8003, %v8695
  %v8712 = vadd.f32 %v8004, %v8697
  %v8713 = vmul.f32 %v8709, 0.5
  %v8714 = vmul.f32 %v8710, 0.5
  %v8715 = vmul.f32 %v8711, 0.5
  %v8716 = vmul.f32 %v8712, 0.5
  %v8717 = vtanh.pop %v8713
  %v8718 = vtanh.pop %v8714
  %v8719 = vtanh.pop %v8715
  %v8720 = vtanh.pop %v8716
  %v8721 = vmul.f32 %v8717, 0.5
  %v8722 = vmul.f32 %v8718, 0.5
  %v8723 = vmul.f32 %v8719, 0.5
  %v8724 = vmul.f32 %v8720, 0.5
  %v8725 = vadd.f32 %v8721, 0.5
  %v8726 = vadd.f32 %v8722, 0.5
  %v8727 = vadd.f32 %v8723, 0.5
  %v8728 = vadd.f32 %v8724, 0.5
  %v8729 = vmul.f32 %v8533, %v7970
  %v8730 = vmul.f32 %v8534, %v7971
  %v8731 = vmul.f32 %v8535, %v7972
  %v8732 = vmul.f32 %v8536, %v7973
  %v8733 = vmul.f32 %v8349, %v8705
  %v8734 = vmul.f32 %v8350, %v8706
  %v8735 = vmul.f32 %v8351, %v8707
  %v8736 = vmul.f32 %v8352, %v8708
  %v8737 = vadd.f32 %v8729, %v8733
  %v8738 = vadd.f32 %v8730, %v8734
  %v8739 = vadd.f32 %v8731, %v8735
  %v8740 = vadd.f32 %v8732, %v8736
  %v8741 = vtanh.pop %v8737
  %v8742 = vtanh.pop %v8738
  %v8743 = vtanh.pop %v8739
  %v8744 = vtanh.pop %v8740
  %v8745 = vmul.f32 %v8725, %v8741
  %v8746 = vmul.f32 %v8726, %v8742
  %v8747 = vmul.f32 %v8727, %v8743
  %v8748 = vmul.f32 %v8728, %v8744
  %v8749 = vpack.c.bf16 %v8745, %v8745
  %v8750 = vpack.c.bf16 %v8746, %v8746
  %v8751 = vpack.c.bf16 %v8747, %v8747
  %v8752 = vpack.c.bf16 %v8748, %v8748
  %s8753 = smul.u32 6, 16
  %s8754 = smul.addr %s8753, 8
  %s8755 = scalar_lea.vmem [#allocation2], %s8754
  %v8756 = vld [vmem:[%s8755] sm:$0xff]
  %v8757 = vld [vmem:[%s8755 + $0x8] sm:$0xff]
  %v8758 = vld [vmem:[%s8755 + $0x10] sm:$0xff]
  %v8759 = vld [vmem:[%s8755 + $0x18] sm:$0xff]
  %v8760 = vld [vmem:[%s8755 + $0x20] sm:$0xff]
  %v8761 = vld [vmem:[%s8755 + $0x28] sm:$0xff]
  %v8762 = vld [vmem:[%s8755 + $0x30] sm:$0xff]
  %v8763 = vld [vmem:[%s8755 + $0x38] sm:$0xff]
  %v8764 = vld [vmem:[%s8755 + $0x40] sm:$0xff]
  %v8765 = vld [vmem:[%s8755 + $0x48] sm:$0xff]
  %v8766 = vld [vmem:[%s8755 + $0x50] sm:$0xff]
  %v8767 = vld [vmem:[%s8755 + $0x58] sm:$0xff]
  %v8768 = vld [vmem:[%s8755 + $0x60] sm:$0xff]
  %v8769 = vld [vmem:[%s8755 + $0x68] sm:$0xff]
  %v8770 = vld [vmem:[%s8755 + $0x70] sm:$0xff]
  %v8771 = vld [vmem:[%s8755 + $0x78] sm:$0xff]
  %8772 = vmatprep.subr.bf16.mxu0 %v1611
  %8773 = vmatpush1.bf16.msra.mxu0 %v1610
  %8774 = vmatprep.subr.bf16.mxu0 %v1615
  %8775 = vmatpush1.bf16.msra.mxu0 %v1614
  %8776 = vmatprep.subr.bf16.mxu0 %v1619
  %8777 = vmatpush1.bf16.msra.mxu0 %v1618
  %8778 = vmatprep.subr.bf16.mxu0 %v1623
  %8779 = vmatpush1.bf16.msra.mxu0 %v1622
  %8780 = vmatprep.subr.bf16.mxu0 %v1627
  %8781 = vmatpush1.bf16.msra.mxu0 %v1626
  %8782 = vmatprep.subr.bf16.mxu0 %v1631
  %8783 = vmatpush1.bf16.msra.mxu0 %v1630
  %8784 = vmatprep.subr.bf16.mxu0 %v1635
  %8785 = vmatpush1.bf16.msra.mxu0 %v1634
  %8786 = vmatprep.subr.bf16.mxu0 %v1639
  %8787 = vmatpush1.bf16.msra.mxu0 %v1638
  %8788 = vmatprep.subr.bf16.mxu0 %v1643
  %8789 = vmatpush1.bf16.msra.mxu0 %v1642
  %8790 = vmatprep.subr.bf16.mxu0 %v1647
  %8791 = vmatpush1.bf16.msra.mxu0 %v1646
  %8792 = vmatprep.subr.bf16.mxu0 %v1651
  %8793 = vmatpush1.bf16.msra.mxu0 %v1650
  %8794 = vmatprep.subr.bf16.mxu0 %v1655
  %8795 = vmatpush1.bf16.msra.mxu0 %v1654
  %8796 = vmatprep.subr.bf16.mxu0 %v1659
  %8797 = vmatpush1.bf16.msra.mxu0 %v1658
  %8798 = vmatprep.subr.bf16.mxu0 %v1663
  %8799 = vmatpush1.bf16.msra.mxu0 %v1662
  %8800 = vmatprep.subr.bf16.mxu0 %v1667
  %8801 = vmatpush1.bf16.msra.mxu0 %v1666
  %8802 = vmatprep.subr.bf16.mxu0 %v1671
  %8803 = vmatpush1.bf16.msra.mxu0 %v1670
  %8804 = vmatprep.mubr.bf16.mxu0 %v8750
  %8805 = vmatmul.mubr.bf16.gmra.mrb[0].mxu0 %v8749
  %v8806 = vpop.f32.mrb[0].mxu0
  %v8807 = vadd.f32 0.0, %v8806
  %v8808 = vpop.f32.mrb[0].mxu0
  %v8809 = vadd.f32 0.0, %v8808
  %v8810 = vpop.f32.mrb[0].mxu0
  %v8811 = vpop.f32.mrb[0].mxu0
  %8812 = vdwg.mxu0
  %8813 = vmatprep.subr.bf16.mxu0 %v1675
  %8814 = vmatpush1.bf16.msra.mxu0 %v1674
  %8815 = vmatprep.subr.bf16.mxu0 %v1679
  %8816 = vmatpush1.bf16.msra.mxu0 %v1678
  %8817 = vmatprep.subr.bf16.mxu0 %v1683
  %8818 = vmatpush1.bf16.msra.mxu0 %v1682
  %8819 = vmatprep.subr.bf16.mxu0 %v1687
  %8820 = vmatpush1.bf16.msra.mxu0 %v1686
  %8821 = vmatprep.subr.bf16.mxu0 %v1691
  %8822 = vmatpush1.bf16.msra.mxu0 %v1690
  %8823 = vmatprep.subr.bf16.mxu0 %v1695
  %8824 = vmatpush1.bf16.msra.mxu0 %v1694
  %8825 = vmatprep.subr.bf16.mxu0 %v1699
  %8826 = vmatpush1.bf16.msra.mxu0 %v1698
  %8827 = vmatprep.subr.bf16.mxu0 %v1703
  %8828 = vmatpush1.bf16.msra.mxu0 %v1702
  %8829 = vmatprep.subr.bf16.mxu0 %v1707
  %8830 = vmatpush1.bf16.msra.mxu0 %v1706
  %8831 = vmatprep.subr.bf16.mxu0 %v1711
  %8832 = vmatpush1.bf16.msra.mxu0 %v1710
  %8833 = vmatprep.subr.bf16.mxu0 %v1715
  %8834 = vmatpush1.bf16.msra.mxu0 %v1714
  %8835 = vmatprep.subr.bf16.mxu0 %v1719
  %8836 = vmatpush1.bf16.msra.mxu0 %v1718
  %8837 = vmatprep.subr.bf16.mxu0 %v1723
  %8838 = vmatpush1.bf16.msra.mxu0 %v1722
  %8839 = vmatprep.subr.bf16.mxu0 %v1727
  %8840 = vmatpush1.bf16.msra.mxu0 %v1726
  %8841 = vmatprep.subr.bf16.mxu0 %v1731
  %8842 = vmatpush1.bf16.msra.mxu0 %v1730
  %8843 = vmatprep.subr.bf16.mxu0 %v1735
  %8844 = vmatpush1.bf16.msra.mxu0 %v1734
  %8845 = vmatprep.mubr.bf16.mxu0 %v8752
  %8846 = vmatmul.mubr.bf16.gmra.mrb[0].mxu0 %v8751
  %v8847 = vpop.f32.mrb[0].mxu0
  %v8848 = vadd.f32 %v8807, %v8847
  %v8849 = vpop.f32.mrb[0].mxu0
  %v8850 = vadd.f32 %v8809, %v8849
  %v8851 = vpop.f32.mrb[0].mxu0
  %v8852 = vpop.f32.mrb[0].mxu0
  %8853 = vdwg.mxu0
  %8854 = vmatprep.subr.bf16.mxu0 %v1613
  %8855 = vmatpush1.bf16.msra.mxu0 %v1612
  %8856 = vmatprep.subr.bf16.mxu0 %v1617
  %8857 = vmatpush1.bf16.msra.mxu0 %v1616
  %8858 = vmatprep.subr.bf16.mxu0 %v1621
  %8859 = vmatpush1.bf16.msra.mxu0 %v1620
  %8860 = vmatprep.subr.bf16.mxu0 %v1625
  %8861 = vmatpush1.bf16.msra.mxu0 %v1624
  %8862 = vmatprep.subr.bf16.mxu0 %v1629
  %8863 = vmatpush1.bf16.msra.mxu0 %v1628
  %8864 = vmatprep.subr.bf16.mxu0 %v1633
  %8865 = vmatpush1.bf16.msra.mxu0 %v1632
  %8866 = vmatprep.subr.bf16.mxu0 %v1637
  %8867 = vmatpush1.bf16.msra.mxu0 %v1636
  %8868 = vmatprep.subr.bf16.mxu0 %v1641
  %8869 = vmatpush1.bf16.msra.mxu0 %v1640
  %8870 = vmatprep.subr.bf16.mxu0 %v1645
  %8871 = vmatpush1.bf16.msra.mxu0 %v1644
  %8872 = vmatprep.subr.bf16.mxu0 %v1649
  %8873 = vmatpush1.bf16.msra.mxu0 %v1648
  %8874 = vmatprep.subr.bf16.mxu0 %v1653
  %8875 = vmatpush1.bf16.msra.mxu0 %v1652
  %8876 = vmatprep.subr.bf16.mxu0 %v1657
  %8877 = vmatpush1.bf16.msra.mxu0 %v1656
  %8878 = vmatprep.subr.bf16.mxu0 %v1661
  %8879 = vmatpush1.bf16.msra.mxu0 %v1660
  %8880 = vmatprep.subr.bf16.mxu0 %v1665
  %8881 = vmatpush1.bf16.msra.mxu0 %v1664
  %8882 = vmatprep.subr.bf16.mxu0 %v1669
  %8883 = vmatpush1.bf16.msra.mxu0 %v1668
  %8884 = vmatprep.subr.bf16.mxu0 %v1673
  %8885 = vmatpush1.bf16.msra.mxu0 %v1672
  %8886 = vmatprep.mubr.bf16.mxu0 %v8750
  %8887 = vmatmul.mubr.bf16.gmra.mrb[0].mxu0 %v8749
  %v8888 = vpop.f32.mrb[0].mxu0
  %v8889 = vadd.f32 0.0, %v8888
  %v8890 = vpop.f32.mrb[0].mxu0
  %v8891 = vadd.f32 0.0, %v8890
  %v8892 = vpop.f32.mrb[0].mxu0
  %v8893 = vpop.f32.mrb[0].mxu0
  %8894 = vdwg.mxu0
  %8895 = vmatprep.subr.bf16.mxu0 %v1677
  %8896 = vmatpush1.bf16.msra.mxu0 %v1676
  %8897 = vmatprep.subr.bf16.mxu0 %v1681
  %8898 = vmatpush1.bf16.msra.mxu0 %v1680
  %8899 = vmatprep.subr.bf16.mxu0 %v1685
  %8900 = vmatpush1.bf16.msra.mxu0 %v1684
  %8901 = vmatprep.subr.bf16.mxu0 %v1689
  %8902 = vmatpush1.bf16.msra.mxu0 %v1688
  %8903 = vmatprep.subr.bf16.mxu0 %v1693
  %8904 = vmatpush1.bf16.msra.mxu0 %v1692
  %8905 = vmatprep.subr.bf16.mxu0 %v1697
  %8906 = vmatpush1.bf16.msra.mxu0 %v1696
  %8907 = vmatprep.subr.bf16.mxu0 %v1701
  %8908 = vmatpush1.bf16.msra.mxu0 %v1700
  %8909 = vmatprep.subr.bf16.mxu0 %v1705
  %8910 = vmatpush1.bf16.msra.mxu0 %v1704
  %8911 = vmatprep.subr.bf16.mxu0 %v1709
  %8912 = vmatpush1.bf16.msra.mxu0 %v1708
  %8913 = vmatprep.subr.bf16.mxu0 %v1713
  %8914 = vmatpush1.bf16.msra.mxu0 %v1712
  %8915 = vmatprep.subr.bf16.mxu0 %v1717
  %8916 = vmatpush1.bf16.msra.mxu0 %v1716
  %8917 = vmatprep.subr.bf16.mxu0 %v1721
  %8918 = vmatpush1.bf16.msra.mxu0 %v1720
  %8919 = vmatprep.subr.bf16.mxu0 %v1725
  %8920 = vmatpush1.bf16.msra.mxu0 %v1724
  %8921 = vmatprep.subr.bf16.mxu0 %v1729
  %8922 = vmatpush1.bf16.msra.mxu0 %v1728
  %8923 = vmatprep.subr.bf16.mxu0 %v1733
  %8924 = vmatpush1.bf16.msra.mxu0 %v1732
  %8925 = vmatprep.subr.bf16.mxu0 %v1737
  %8926 = vmatpush1.bf16.msra.mxu0 %v1736
  %8927 = vmatprep.mubr.bf16.mxu0 %v8752
  %8928 = vmatmul.mubr.bf16.gmra.mrb[0].mxu0 %v8751
  %v8929 = vpop.f32.mrb[0].mxu0
  %v8930 = vadd.f32 %v8889, %v8929
  %v8931 = vpop.f32.mrb[0].mxu0
  %v8932 = vadd.f32 %v8891, %v8931
  %v8933 = vpop.f32.mrb[0].mxu0
  %v8934 = vpop.f32.mrb[0].mxu0
  %8935 = vdwg.mxu0
  %8936 = vmatprep.subr.bf16.mxu0 %v2543
  %8937 = vmatpush1.bf16.msra.mxu0 %v2542
  %8938 = vmatprep.subr.bf16.mxu0 %v2547
  %8939 = vmatpush1.bf16.msra.mxu0 %v2546
  %8940 = vmatprep.subr.bf16.mxu0 %v2551
  %8941 = vmatpush1.bf16.msra.mxu0 %v2550
  %8942 = vmatprep.subr.bf16.mxu0 %v2555
  %8943 = vmatpush1.bf16.msra.mxu0 %v2554
  %8944 = vmatprep.subr.bf16.mxu0 %v2559
  %8945 = vmatpush1.bf16.msra.mxu0 %v2558
  %8946 = vmatprep.subr.bf16.mxu0 %v2563
  %8947 = vmatpush1.bf16.msra.mxu0 %v2562
  %8948 = vmatprep.subr.bf16.mxu0 %v2567
  %8949 = vmatpush1.bf16.msra.mxu0 %v2566
  %8950 = vmatprep.subr.bf16.mxu0 %v2571
  %8951 = vmatpush1.bf16.msra.mxu0 %v2570
  %8952 = vmatprep.subr.bf16.mxu0 %v2575
  %8953 = vmatpush1.bf16.msra.mxu0 %v2574
  %8954 = vmatprep.subr.bf16.mxu0 %v2579
  %8955 = vmatpush1.bf16.msra.mxu0 %v2578
  %8956 = vmatprep.subr.bf16.mxu0 %v2583
  %8957 = vmatpush1.bf16.msra.mxu0 %v2582
  %8958 = vmatprep.subr.bf16.mxu0 %v2587
  %8959 = vmatpush1.bf16.msra.mxu0 %v2586
  %8960 = vmatprep.subr.bf16.mxu0 %v2591
  %8961 = vmatpush1.bf16.msra.mxu0 %v2590
  %8962 = vmatprep.subr.bf16.mxu0 %v2595
  %8963 = vmatpush1.bf16.msra.mxu0 %v2594
  %8964 = vmatprep.subr.bf16.mxu0 %v2599
  %8965 = vmatpush1.bf16.msra.mxu0 %v2598
  %8966 = vmatprep.subr.bf16.mxu0 %v2603
  %8967 = vmatpush1.bf16.msra.mxu0 %v2602
  %8968 = vmatprep.mubr.bf16.mxu0 %v8750
  %8969 = vmatmul.mubr.bf16.gmra.mrb[0].mxu0 %v8749
  %v8970 = vpop.f32.mrb[0].mxu0
  %v8971 = vadd.f32 0.0, %v8970
  %v8972 = vpop.f32.mrb[0].mxu0
  %v8973 = vadd.f32 0.0, %v8972
  %v8974 = vpop.f32.mrb[0].mxu0
  %v8975 = vpop.f32.mrb[0].mxu0
  %8976 = vdwg.mxu0
  %8977 = vmatprep.subr.bf16.mxu0 %v2607
  %8978 = vmatpush1.bf16.msra.mxu0 %v2606
  %8979 = vmatprep.subr.bf16.mxu0 %v2611
  %8980 = vmatpush1.bf16.msra.mxu0 %v2610
  %8981 = vmatprep.subr.bf16.mxu0 %v2615
  %8982 = vmatpush1.bf16.msra.mxu0 %v2614
  %8983 = vmatprep.subr.bf16.mxu0 %v2619
  %8984 = vmatpush1.bf16.msra.mxu0 %v2618
  %8985 = vmatprep.subr.bf16.mxu0 %v2623
  %8986 = vmatpush1.bf16.msra.mxu0 %v2622
  %8987 = vmatprep.subr.bf16.mxu0 %v2627
  %8988 = vmatpush1.bf16.msra.mxu0 %v2626
  %8989 = vmatprep.subr.bf16.mxu0 %v2631
  %8990 = vmatpush1.bf16.msra.mxu0 %v2630
  %8991 = vmatprep.subr.bf16.mxu0 %v2635
  %8992 = vmatpush1.bf16.msra.mxu0 %v2634
  %8993 = vmatprep.subr.bf16.mxu0 %v2639
  %8994 = vmatpush1.bf16.msra.mxu0 %v2638
  %8995 = vmatprep.subr.bf16.mxu0 %v2643
  %8996 = vmatpush1.bf16.msra.mxu0 %v2642
  %8997 = vmatprep.subr.bf16.mxu0 %v2647
  %8998 = vmatpush1.bf16.msra.mxu0 %v2646
  %8999 = vmatprep.subr.bf16.mxu0 %v2651
  %9000 = vmatpush1.bf16.msra.mxu0 %v2650
  %9001 = vmatprep.subr.bf16.mxu0 %v2655
  %9002 = vmatpush1.bf16.msra.mxu0 %v2654
  %9003 = vmatprep.subr.bf16.mxu0 %v2659
  %9004 = vmatpush1.bf16.msra.mxu0 %v2658
  %9005 = vmatprep.subr.bf16.mxu0 %v2663
  %9006 = vmatpush1.bf16.msra.mxu0 %v2662
  %9007 = vmatprep.subr.bf16.mxu0 %v2667
  %9008 = vmatpush1.bf16.msra.mxu0 %v2666
  %9009 = vmatprep.mubr.bf16.mxu0 %v8752
  %9010 = vmatmul.mubr.bf16.gmra.mrb[0].mxu0 %v8751
  %v9011 = vpop.f32.mrb[0].mxu0
  %v9012 = vadd.f32 %v8971, %v9011
  %v9013 = vpop.f32.mrb[0].mxu0
  %v9014 = vadd.f32 %v8973, %v9013
  %v9015 = vpop.f32.mrb[0].mxu0
  %v9016 = vpop.f32.mrb[0].mxu0
  %9017 = vdwg.mxu0
  %9018 = vmatprep.subr.bf16.mxu0 %v2545
  %9019 = vmatpush1.bf16.msra.mxu0 %v2544
  %9020 = vmatprep.subr.bf16.mxu0 %v2549
  %9021 = vmatpush1.bf16.msra.mxu0 %v2548
  %9022 = vmatprep.subr.bf16.mxu0 %v2553
  %9023 = vmatpush1.bf16.msra.mxu0 %v2552
  %9024 = vmatprep.subr.bf16.mxu0 %v2557
  %9025 = vmatpush1.bf16.msra.mxu0 %v2556
  %9026 = vmatprep.subr.bf16.mxu0 %v2561
  %9027 = vmatpush1.bf16.msra.mxu0 %v2560
  %9028 = vmatprep.subr.bf16.mxu0 %v2565
  %9029 = vmatpush1.bf16.msra.mxu0 %v2564
  %9030 = vmatprep.subr.bf16.mxu0 %v2569
  %9031 = vmatpush1.bf16.msra.mxu0 %v2568
  %9032 = vmatprep.subr.bf16.mxu0 %v2573
  %9033 = vmatpush1.bf16.msra.mxu0 %v2572
  %9034 = vmatprep.subr.bf16.mxu0 %v2577
  %9035 = vmatpush1.bf16.msra.mxu0 %v2576
  %9036 = vmatprep.subr.bf16.mxu0 %v2581
  %9037 = vmatpush1.bf16.msra.mxu0 %v2580
  %9038 = vmatprep.subr.bf16.mxu0 %v2585
  %9039 = vmatpush1.bf16.msra.mxu0 %v2584
  %9040 = vmatprep.subr.bf16.mxu0 %v2589
  %9041 = vmatpush1.bf16.msra.mxu0 %v2588
  %9042 = vmatprep.subr.bf16.mxu0 %v2593
  %9043 = vmatpush1.bf16.msra.mxu0 %v2592
  %9044 = vmatprep.subr.bf16.mxu0 %v2597
  %9045 = vmatpush1.bf16.msra.mxu0 %v2596
  %9046 = vmatprep.subr.bf16.mxu0 %v2601
  %9047 = vmatpush1.bf16.msra.mxu0 %v2600
  %9048 = vmatprep.subr.bf16.mxu0 %v2605
  %9049 = vmatpush1.bf16.msra.mxu0 %v2604
  %9050 = vmatprep.mubr.bf16.mxu0 %v8750
  %9051 = vmatmul.mubr.bf16.gmra.mrb[0].mxu0 %v8749
  %v9052 = vpop.f32.mrb[0].mxu0
  %v9053 = vadd.f32 0.0, %v9052
  %v9054 = vpop.f32.mrb[0].mxu0
  %v9055 = vadd.f32 0.0, %v9054
  %v9056 = vpop.f32.mrb[0].mxu0
  %v9057 = vpop.f32.mrb[0].mxu0
  %9058 = vdwg.mxu0
  %9059 = vmatprep.subr.bf16.mxu0 %v2609
  %9060 = vmatpush1.bf16.msra.mxu0 %v2608
  %9061 = vmatprep.subr.bf16.mxu0 %v2613
  %9062 = vmatpush1.bf16.msra.mxu0 %v2612
  %9063 = vmatprep.subr.bf16.mxu0 %v2617
  %9064 = vmatpush1.bf16.msra.mxu0 %v2616
  %9065 = vmatprep.subr.bf16.mxu0 %v2621
  %9066 = vmatpush1.bf16.msra.mxu0 %v2620
  %9067 = vmatprep.subr.bf16.mxu0 %v2625
  %9068 = vmatpush1.bf16.msra.mxu0 %v2624
  %9069 = vmatprep.subr.bf16.mxu0 %v2629
  %9070 = vmatpush1.bf16.msra.mxu0 %v2628
  %9071 = vmatprep.subr.bf16.mxu0 %v2633
  %9072 = vmatpush1.bf16.msra.mxu0 %v2632
  %9073 = vmatprep.subr.bf16.mxu0 %v2637
  %9074 = vmatpush1.bf16.msra.mxu0 %v2636
  %9075 = vmatprep.subr.bf16.mxu0 %v2641
  %9076 = vmatpush1.bf16.msra.mxu0 %v2640
  %9077 = vmatprep.subr.bf16.mxu0 %v2645
  %9078 = vmatpush1.bf16.msra.mxu0 %v2644
  %9079 = vmatprep.subr.bf16.mxu0 %v2649
  %9080 = vmatpush1.bf16.msra.mxu0 %v2648
  %9081 = vmatprep.subr.bf16.mxu0 %v2653
  %9082 = vmatpush1.bf16.msra.mxu0 %v2652
  %9083 = vmatprep.subr.bf16.mxu0 %v2657
  %9084 = vmatpush1.bf16.msra.mxu0 %v2656
  %9085 = vmatprep.subr.bf16.mxu0 %v2661
  %9086 = vmatpush1.bf16.msra.mxu0 %v2660
  %9087 = vmatprep.subr.bf16.mxu0 %v2665
  %9088 = vmatpush1.bf16.msra.mxu0 %v2664
  %9089 = vmatprep.subr.bf16.mxu0 %v2669
  %9090 = vmatpush1.bf16.msra.mxu0 %v2668
  %9091 = vmatprep.mubr.bf16.mxu0 %v8752
  %9092 = vmatmul.mubr.bf16.gmra.mrb[0].mxu0 %v8751
  %v9093 = vpop.f32.mrb[0].mxu0
  %v9094 = vadd.f32 %v9053, %v9093
  %v9095 = vpop.f32.mrb[0].mxu0
  %v9096 = vadd.f32 %v9055, %v9095
  %v9097 = vpop.f32.mrb[0].mxu0
  %v9098 = vpop.f32.mrb[0].mxu0
  %9099 = vdwg.mxu0
  %v9100 = vadd.f32 %v8756, %v8848
  %v9101 = vadd.f32 %v8757, %v8850
  %v9102 = vadd.f32 %v8758, %v8930
  %v9103 = vadd.f32 %v8759, %v8932
  %v9104 = vmul.f32 %v9100, 0.5
  %v9105 = vmul.f32 %v9101, 0.5
  %v9106 = vmul.f32 %v9102, 0.5
  %v9107 = vmul.f32 %v9103, 0.5
  %v9108 = vtanh.pop %v9104
  %v9109 = vtanh.pop %v9105
  %v9110 = vtanh.pop %v9106
  %v9111 = vtanh.pop %v9107
  %v9112 = vmul.f32 %v9108, 0.5
  %v9113 = vmul.f32 %v9109, 0.5
  %v9114 = vmul.f32 %v9110, 0.5
  %v9115 = vmul.f32 %v9111, 0.5
  %v9116 = vadd.f32 %v9112, 0.5
  %v9117 = vadd.f32 %v9113, 0.5
  %v9118 = vadd.f32 %v9114, 0.5
  %v9119 = vadd.f32 %v9115, 0.5
  %9120 = vmatprep.subr.bf16.mxu0 %v3495
  %9121 = vmatpush1.bf16.msra.mxu0 %v3494
  %9122 = vmatprep.subr.bf16.mxu0 %v3499
  %9123 = vmatpush1.bf16.msra.mxu0 %v3498
  %9124 = vmatprep.subr.bf16.mxu0 %v3503
  %9125 = vmatpush1.bf16.msra.mxu0 %v3502
  %9126 = vmatprep.subr.bf16.mxu0 %v3507
  %9127 = vmatpush1.bf16.msra.mxu0 %v3506
  %9128 = vmatprep.subr.bf16.mxu0 %v3511
  %9129 = vmatpush1.bf16.msra.mxu0 %v3510
  %9130 = vmatprep.subr.bf16.mxu0 %v3515
  %9131 = vmatpush1.bf16.msra.mxu0 %v3514
  %9132 = vmatprep.subr.bf16.mxu0 %v3519
  %9133 = vmatpush1.bf16.msra.mxu0 %v3518
  %9134 = vmatprep.subr.bf16.mxu0 %v3523
  %9135 = vmatpush1.bf16.msra.mxu0 %v3522
  %9136 = vmatprep.subr.bf16.mxu0 %v3527
  %9137 = vmatpush1.bf16.msra.mxu0 %v3526
  %9138 = vmatprep.subr.bf16.mxu0 %v3531
  %9139 = vmatpush1.bf16.msra.mxu0 %v3530
  %9140 = vmatprep.subr.bf16.mxu0 %v3535
  %9141 = vmatpush1.bf16.msra.mxu0 %v3534
  %9142 = vmatprep.subr.bf16.mxu0 %v3539
  %9143 = vmatpush1.bf16.msra.mxu0 %v3538
  %9144 = vmatprep.subr.bf16.mxu0 %v3543
  %9145 = vmatpush1.bf16.msra.mxu0 %v3542
  %9146 = vmatprep.subr.bf16.mxu0 %v3547
  %9147 = vmatpush1.bf16.msra.mxu0 %v3546
  %9148 = vmatprep.subr.bf16.mxu0 %v3551
  %9149 = vmatpush1.bf16.msra.mxu0 %v3550
  %9150 = vmatprep.subr.bf16.mxu0 %v3555
  %9151 = vmatpush1.bf16.msra.mxu0 %v3554
  %9152 = vmatprep.mubr.bf16.mxu0 %v8750
  %9153 = vmatmul.mubr.bf16.gmra.mrb[0].mxu0 %v8749
  %v9154 = vpop.f32.mrb[0].mxu0
  %v9155 = vadd.f32 0.0, %v9154
  %v9156 = vpop.f32.mrb[0].mxu0
  %v9157 = vadd.f32 0.0, %v9156
  %v9158 = vpop.f32.mrb[0].mxu0
  %v9159 = vpop.f32.mrb[0].mxu0
  %9160 = vdwg.mxu0
  %9161 = vmatprep.subr.bf16.mxu0 %v3559
  %9162 = vmatpush1.bf16.msra.mxu0 %v3558
  %9163 = vmatprep.subr.bf16.mxu0 %v3563
  %9164 = vmatpush1.bf16.msra.mxu0 %v3562
  %9165 = vmatprep.subr.bf16.mxu0 %v3567
  %9166 = vmatpush1.bf16.msra.mxu0 %v3566
  %9167 = vmatprep.subr.bf16.mxu0 %v3571
  %9168 = vmatpush1.bf16.msra.mxu0 %v3570
  %9169 = vmatprep.subr.bf16.mxu0 %v3575
  %9170 = vmatpush1.bf16.msra.mxu0 %v3574
  %9171 = vmatprep.subr.bf16.mxu0 %v3579
  %9172 = vmatpush1.bf16.msra.mxu0 %v3578
  %9173 = vmatprep.subr.bf16.mxu0 %v3583
  %9174 = vmatpush1.bf16.msra.mxu0 %v3582
  %9175 = vmatprep.subr.bf16.mxu0 %v3587
  %9176 = vmatpush1.bf16.msra.mxu0 %v3586
  %9177 = vmatprep.subr.bf16.mxu0 %v3591
  %9178 = vmatpush1.bf16.msra.mxu0 %v3590
  %9179 = vmatprep.subr.bf16.mxu0 %v3595
  %9180 = vmatpush1.bf16.msra.mxu0 %v3594
  %9181 = vmatprep.subr.bf16.mxu0 %v3599
  %9182 = vmatpush1.bf16.msra.mxu0 %v3598
  %9183 = vmatprep.subr.bf16.mxu0 %v3603
  %9184 = vmatpush1.bf16.msra.mxu0 %v3602
  %9185 = vmatprep.subr.bf16.mxu0 %v3607
  %9186 = vmatpush1.bf16.msra.mxu0 %v3606
  %9187 = vmatprep.subr.bf16.mxu0 %v3611
  %9188 = vmatpush1.bf16.msra.mxu0 %v3610
  %9189 = vmatprep.subr.bf16.mxu0 %v3615
  %9190 = vmatpush1.bf16.msra.mxu0 %v3614
  %9191 = vmatprep.subr.bf16.mxu0 %v3619
  %9192 = vmatpush1.bf16.msra.mxu0 %v3618
  %9193 = vmatprep.mubr.bf16.mxu0 %v8752
  %9194 = vmatmul.mubr.bf16.gmra.mrb[0].mxu0 %v8751
  %v9195 = vpop.f32.mrb[0].mxu0
  %v9196 = vadd.f32 %v9155, %v9195
  %v9197 = vpop.f32.mrb[0].mxu0
  %v9198 = vadd.f32 %v9157, %v9197
  %v9199 = vpop.f32.mrb[0].mxu0
  %v9200 = vpop.f32.mrb[0].mxu0
  %9201 = vdwg.mxu0
  %9202 = vmatprep.subr.bf16.mxu0 %v3497
  %9203 = vmatpush1.bf16.msra.mxu0 %v3496
  %9204 = vmatprep.subr.bf16.mxu0 %v3501
  %9205 = vmatpush1.bf16.msra.mxu0 %v3500
  %9206 = vmatprep.subr.bf16.mxu0 %v3505
  %9207 = vmatpush1.bf16.msra.mxu0 %v3504
  %9208 = vmatprep.subr.bf16.mxu0 %v3509
  %9209 = vmatpush1.bf16.msra.mxu0 %v3508
  %9210 = vmatprep.subr.bf16.mxu0 %v3513
  %9211 = vmatpush1.bf16.msra.mxu0 %v3512
  %9212 = vmatprep.subr.bf16.mxu0 %v3517
  %9213 = vmatpush1.bf16.msra.mxu0 %v3516
  %9214 = vmatprep.subr.bf16.mxu0 %v3521
  %9215 = vmatpush1.bf16.msra.mxu0 %v3520
  %9216 = vmatprep.subr.bf16.mxu0 %v3525
  %9217 = vmatpush1.bf16.msra.mxu0 %v3524
  %9218 = vmatprep.subr.bf16.mxu0 %v3529
  %9219 = vmatpush1.bf16.msra.mxu0 %v3528
  %9220 = vmatprep.subr.bf16.mxu0 %v3533
  %9221 = vmatpush1.bf16.msra.mxu0 %v3532
  %9222 = vmatprep.subr.bf16.mxu0 %v3537
  %9223 = vmatpush1.bf16.msra.mxu0 %v3536
  %9224 = vmatprep.subr.bf16.mxu0 %v3541
  %9225 = vmatpush1.bf16.msra.mxu0 %v3540
  %9226 = vmatprep.subr.bf16.mxu0 %v3545
  %9227 = vmatpush1.bf16.msra.mxu0 %v3544
  %9228 = vmatprep.subr.bf16.mxu0 %v3549
  %9229 = vmatpush1.bf16.msra.mxu0 %v3548
  %9230 = vmatprep.subr.bf16.mxu0 %v3553
  %9231 = vmatpush1.bf16.msra.mxu0 %v3552
  %9232 = vmatprep.subr.bf16.mxu0 %v3557
  %9233 = vmatpush1.bf16.msra.mxu0 %v3556
  %9234 = vmatprep.mubr.bf16.mxu0 %v8750
  %9235 = vmatmul.mubr.bf16.gmra.mrb[0].mxu0 %v8749
  %v9236 = vpop.f32.mrb[0].mxu0
  %v9237 = vadd.f32 0.0, %v9236
  %v9238 = vpop.f32.mrb[0].mxu0
  %v9239 = vadd.f32 0.0, %v9238
  %v9240 = vpop.f32.mrb[0].mxu0
  %v9241 = vpop.f32.mrb[0].mxu0
  %9242 = vdwg.mxu0
  %9243 = vmatprep.subr.bf16.mxu0 %v3561
  %9244 = vmatpush1.bf16.msra.mxu0 %v3560
  %9245 = vmatprep.subr.bf16.mxu0 %v3565
  %9246 = vmatpush1.bf16.msra.mxu0 %v3564
  %9247 = vmatprep.subr.bf16.mxu0 %v3569
  %9248 = vmatpush1.bf16.msra.mxu0 %v3568
  %9249 = vmatprep.subr.bf16.mxu0 %v3573
  %9250 = vmatpush1.bf16.msra.mxu0 %v3572
  %9251 = vmatprep.subr.bf16.mxu0 %v3577
  %9252 = vmatpush1.bf16.msra.mxu0 %v3576
  %9253 = vmatprep.subr.bf16.mxu0 %v3581
  %9254 = vmatpush1.bf16.msra.mxu0 %v3580
  %9255 = vmatprep.subr.bf16.mxu0 %v3585
  %9256 = vmatpush1.bf16.msra.mxu0 %v3584
  %9257 = vmatprep.subr.bf16.mxu0 %v3589
  %9258 = vmatpush1.bf16.msra.mxu0 %v3588
  %9259 = vmatprep.subr.bf16.mxu0 %v3593
  %9260 = vmatpush1.bf16.msra.mxu0 %v3592
  %9261 = vmatprep.subr.bf16.mxu0 %v3597
  %9262 = vmatpush1.bf16.msra.mxu0 %v3596
  %9263 = vmatprep.subr.bf16.mxu0 %v3601
  %9264 = vmatpush1.bf16.msra.mxu0 %v3600
  %9265 = vmatprep.subr.bf16.mxu0 %v3605
  %9266 = vmatpush1.bf16.msra.mxu0 %v3604
  %9267 = vmatprep.subr.bf16.mxu0 %v3609
  %9268 = vmatpush1.bf16.msra.mxu0 %v3608
  %9269 = vmatprep.subr.bf16.mxu0 %v3613
  %9270 = vmatpush1.bf16.msra.mxu0 %v3612
  %9271 = vmatprep.subr.bf16.mxu0 %v3617
  %9272 = vmatpush1.bf16.msra.mxu0 %v3616
  %9273 = vmatprep.subr.bf16.mxu0 %v3621
  %9274 = vmatpush1.bf16.msra.mxu0 %v3620
  %9275 = vmatprep.mubr.bf16.mxu0 %v8752
  %9276 = vmatmul.mubr.bf16.gmra.mrb[0].mxu0 %v8751
  %v9277 = vpop.f32.mrb[0].mxu0
  %v9278 = vadd.f32 %v9237, %v9277
  %v9279 = vpop.f32.mrb[0].mxu0
  %v9280 = vadd.f32 %v9239, %v9279
  %v9281 = vpop.f32.mrb[0].mxu0
  %v9282 = vpop.f32.mrb[0].mxu0
  %9283 = vdwg.mxu0
  %v9284 = vadd.f32 %v8760, %v9012
  %v9285 = vadd.f32 %v8761, %v9014
  %v9286 = vadd.f32 %v8762, %v9094
  %v9287 = vadd.f32 %v8763, %v9096
  %v9288 = vmul.f32 %v9284, 0.5
  %v9289 = vmul.f32 %v9285, 0.5
  %v9290 = vmul.f32 %v9286, 0.5
  %v9291 = vmul.f32 %v9287, 0.5
  %v9292 = vtanh.pop %v9288
  %v9293 = vtanh.pop %v9289
  %v9294 = vtanh.pop %v9290
  %v9295 = vtanh.pop %v9291
  %v9296 = vmul.f32 %v9292, 0.5
  %v9297 = vmul.f32 %v9293, 0.5
  %v9298 = vmul.f32 %v9294, 0.5
  %v9299 = vmul.f32 %v9295, 0.5
  %v9300 = vadd.f32 %v9296, 0.5
  %v9301 = vadd.f32 %v9297, 0.5
  %v9302 = vadd.f32 %v9298, 0.5
  %v9303 = vadd.f32 %v9299, 0.5
  %9304 = vmatprep.subr.bf16.mxu0 %v4447
  %9305 = vmatpush1.bf16.msra.mxu0 %v4446
  %9306 = vmatprep.subr.bf16.mxu0 %v4451
  %9307 = vmatpush1.bf16.msra.mxu0 %v4450
  %9308 = vmatprep.subr.bf16.mxu0 %v4455
  %9309 = vmatpush1.bf16.msra.mxu0 %v4454
  %9310 = vmatprep.subr.bf16.mxu0 %v4459
  %9311 = vmatpush1.bf16.msra.mxu0 %v4458
  %9312 = vmatprep.subr.bf16.mxu0 %v4463
  %9313 = vmatpush1.bf16.msra.mxu0 %v4462
  %9314 = vmatprep.subr.bf16.mxu0 %v4467
  %9315 = vmatpush1.bf16.msra.mxu0 %v4466
  %9316 = vmatprep.subr.bf16.mxu0 %v4471
  %9317 = vmatpush1.bf16.msra.mxu0 %v4470
  %9318 = vmatprep.subr.bf16.mxu0 %v4475
  %9319 = vmatpush1.bf16.msra.mxu0 %v4474
  %9320 = vmatprep.subr.bf16.mxu0 %v4479
  %9321 = vmatpush1.bf16.msra.mxu0 %v4478
  %9322 = vmatprep.subr.bf16.mxu0 %v4483
  %9323 = vmatpush1.bf16.msra.mxu0 %v4482
  %9324 = vmatprep.subr.bf16.mxu0 %v4487
  %9325 = vmatpush1.bf16.msra.mxu0 %v4486
  %9326 = vmatprep.subr.bf16.mxu0 %v4491
  %9327 = vmatpush1.bf16.msra.mxu0 %v4490
  %9328 = vmatprep.subr.bf16.mxu0 %v4495
  %9329 = vmatpush1.bf16.msra.mxu0 %v4494
  %9330 = vmatprep.subr.bf16.mxu0 %v4499
  %9331 = vmatpush1.bf16.msra.mxu0 %v4498
  %9332 = vmatprep.subr.bf16.mxu0 %v4503
  %9333 = vmatpush1.bf16.msra.mxu0 %v4502
  %9334 = vmatprep.subr.bf16.mxu0 %v4507
  %9335 = vmatpush1.bf16.msra.mxu0 %v4506
  %9336 = vmatprep.mubr.bf16.mxu0 %v8750
  %9337 = vmatmul.mubr.bf16.gmra.mrb[0].mxu0 %v8749
  %v9338 = vpop.f32.mrb[0].mxu0
  %v9339 = vadd.f32 0.0, %v9338
  %v9340 = vpop.f32.mrb[0].mxu0
  %v9341 = vadd.f32 0.0, %v9340
  %v9342 = vpop.f32.mrb[0].mxu0
  %v9343 = vpop.f32.mrb[0].mxu0
  %9344 = vdwg.mxu0
  %9345 = vmatprep.subr.bf16.mxu0 %v4511
  %9346 = vmatpush1.bf16.msra.mxu0 %v4510
  %9347 = vmatprep.subr.bf16.mxu0 %v4515
  %9348 = vmatpush1.bf16.msra.mxu0 %v4514
  %9349 = vmatprep.subr.bf16.mxu0 %v4519
  %9350 = vmatpush1.bf16.msra.mxu0 %v4518
  %9351 = vmatprep.subr.bf16.mxu0 %v4523
  %9352 = vmatpush1.bf16.msra.mxu0 %v4522
  %9353 = vmatprep.subr.bf16.mxu0 %v4527
  %9354 = vmatpush1.bf16.msra.mxu0 %v4526
  %9355 = vmatprep.subr.bf16.mxu0 %v4531
  %9356 = vmatpush1.bf16.msra.mxu0 %v4530
  %9357 = vmatprep.subr.bf16.mxu0 %v4535
  %9358 = vmatpush1.bf16.msra.mxu0 %v4534
  %9359 = vmatprep.subr.bf16.mxu0 %v4539
  %9360 = vmatpush1.bf16.msra.mxu0 %v4538
  %9361 = vmatprep.subr.bf16.mxu0 %v4543
  %9362 = vmatpush1.bf16.msra.mxu0 %v4542
  %9363 = vmatprep.subr.bf16.mxu0 %v4547
  %9364 = vmatpush1.bf16.msra.mxu0 %v4546
  %9365 = vmatprep.subr.bf16.mxu0 %v4551
  %9366 = vmatpush1.bf16.msra.mxu0 %v4550
  %9367 = vmatprep.subr.bf16.mxu0 %v4555
  %9368 = vmatpush1.bf16.msra.mxu0 %v4554
  %9369 = vmatprep.subr.bf16.mxu0 %v4559
  %9370 = vmatpush1.bf16.msra.mxu0 %v4558
  %9371 = vmatprep.subr.bf16.mxu0 %v4563
  %9372 = vmatpush1.bf16.msra.mxu0 %v4562
  %9373 = vmatprep.subr.bf16.mxu0 %v4567
  %9374 = vmatpush1.bf16.msra.mxu0 %v4566
  %9375 = vmatprep.subr.bf16.mxu0 %v4571
  %9376 = vmatpush1.bf16.msra.mxu0 %v4570
  %9377 = vmatprep.mubr.bf16.mxu0 %v8752
  %9378 = vmatmul.mubr.bf16.gmra.mrb[0].mxu0 %v8751
  %v9379 = vpop.f32.mrb[0].mxu0
  %v9380 = vadd.f32 %v9339, %v9379
  %v9381 = vpop.f32.mrb[0].mxu0
  %v9382 = vadd.f32 %v9341, %v9381
  %v9383 = vpop.f32.mrb[0].mxu0
  %v9384 = vpop.f32.mrb[0].mxu0
  %9385 = vdwg.mxu0
  %9386 = vmatprep.subr.bf16.mxu0 %v4449
  %9387 = vmatpush1.bf16.msra.mxu0 %v4448
  %9388 = vmatprep.subr.bf16.mxu0 %v4453
  %9389 = vmatpush1.bf16.msra.mxu0 %v4452
  %9390 = vmatprep.subr.bf16.mxu0 %v4457
  %9391 = vmatpush1.bf16.msra.mxu0 %v4456
  %9392 = vmatprep.subr.bf16.mxu0 %v4461
  %9393 = vmatpush1.bf16.msra.mxu0 %v4460
  %9394 = vmatprep.subr.bf16.mxu0 %v4465
  %9395 = vmatpush1.bf16.msra.mxu0 %v4464
  %9396 = vmatprep.subr.bf16.mxu0 %v4469
  %9397 = vmatpush1.bf16.msra.mxu0 %v4468
  %9398 = vmatprep.subr.bf16.mxu0 %v4473
  %9399 = vmatpush1.bf16.msra.mxu0 %v4472
  %9400 = vmatprep.subr.bf16.mxu0 %v4477
  %9401 = vmatpush1.bf16.msra.mxu0 %v4476
  %9402 = vmatprep.subr.bf16.mxu0 %v4481
  %9403 = vmatpush1.bf16.msra.mxu0 %v4480
  %9404 = vmatprep.subr.bf16.mxu0 %v4485
  %9405 = vmatpush1.bf16.msra.mxu0 %v4484
  %9406 = vmatprep.subr.bf16.mxu0 %v4489
  %9407 = vmatpush1.bf16.msra.mxu0 %v4488
  %9408 = vmatprep.subr.bf16.mxu0 %v4493
  %9409 = vmatpush1.bf16.msra.mxu0 %v4492
  %9410 = vmatprep.subr.bf16.mxu0 %v4497
  %9411 = vmatpush1.bf16.msra.mxu0 %v4496
  %9412 = vmatprep.subr.bf16.mxu0 %v4501
  %9413 = vmatpush1.bf16.msra.mxu0 %v4500
  %9414 = vmatprep.subr.bf16.mxu0 %v4505
  %9415 = vmatpush1.bf16.msra.mxu0 %v4504
  %9416 = vmatprep.subr.bf16.mxu0 %v4509
  %9417 = vmatpush1.bf16.msra.mxu0 %v4508
  %9418 = vmatprep.mubr.bf16.mxu0 %v8750
  %9419 = vmatmul.mubr.bf16.gmra.mrb[0].mxu0 %v8749
  %v9420 = vpop.f32.mrb[0].mxu0
  %v9421 = vadd.f32 0.0, %v9420
  %v9422 = vpop.f32.mrb[0].mxu0
  %v9423 = vadd.f32 0.0, %v9422
  %v9424 = vpop.f32.mrb[0].mxu0
  %v9425 = vpop.f32.mrb[0].mxu0
  %9426 = vdwg.mxu0
  %9427 = vmatprep.subr.bf16.mxu0 %v4513
  %9428 = vmatpush1.bf16.msra.mxu0 %v4512
  %9429 = vmatprep.subr.bf16.mxu0 %v4517
  %9430 = vmatpush1.bf16.msra.mxu0 %v4516
  %9431 = vmatprep.subr.bf16.mxu0 %v4521
  %9432 = vmatpush1.bf16.msra.mxu0 %v4520
  %9433 = vmatprep.subr.bf16.mxu0 %v4525
  %9434 = vmatpush1.bf16.msra.mxu0 %v4524
  %9435 = vmatprep.subr.bf16.mxu0 %v4529
  %9436 = vmatpush1.bf16.msra.mxu0 %v4528
  %9437 = vmatprep.subr.bf16.mxu0 %v4533
  %9438 = vmatpush1.bf16.msra.mxu0 %v4532
  %9439 = vmatprep.subr.bf16.mxu0 %v4537
  %9440 = vmatpush1.bf16.msra.mxu0 %v4536
  %9441 = vmatprep.subr.bf16.mxu0 %v4541
  %9442 = vmatpush1.bf16.msra.mxu0 %v4540
  %9443 = vmatprep.subr.bf16.mxu0 %v4545
  %9444 = vmatpush1.bf16.msra.mxu0 %v4544
  %9445 = vmatprep.subr.bf16.mxu0 %v4549
  %9446 = vmatpush1.bf16.msra.mxu0 %v4548
  %9447 = vmatprep.subr.bf16.mxu0 %v4553
  %9448 = vmatpush1.bf16.msra.mxu0 %v4552
  %9449 = vmatprep.subr.bf16.mxu0 %v4557
  %9450 = vmatpush1.bf16.msra.mxu0 %v4556
  %9451 = vmatprep.subr.bf16.mxu0 %v4561
  %9452 = vmatpush1.bf16.msra.mxu0 %v4560
  %9453 = vmatprep.subr.bf16.mxu0 %v4565
  %9454 = vmatpush1.bf16.msra.mxu0 %v4564
  %9455 = vmatprep.subr.bf16.mxu0 %v4569
  %9456 = vmatpush1.bf16.msra.mxu0 %v4568
  %9457 = vmatprep.subr.bf16.mxu0 %v4573
  %9458 = vmatpush1.bf16.msra.mxu0 %v4572
  %9459 = vmatprep.mubr.bf16.mxu0 %v8752
  %9460 = vmatmul.mubr.bf16.gmra.mrb[0].mxu0 %v8751
  %v9461 = vpop.f32.mrb[0].mxu0
  %v9462 = vadd.f32 %v9421, %v9461
  %v9463 = vpop.f32.mrb[0].mxu0
  %v9464 = vadd.f32 %v9423, %v9463
  %v9465 = vpop.f32.mrb[0].mxu0
  %v9466 = vpop.f32.mrb[0].mxu0
  %9467 = vdwg.mxu0
  %v9468 = vadd.f32 %v8764, %v9196
  %v9469 = vadd.f32 %v8765, %v9198
  %v9470 = vadd.f32 %v8766, %v9278
  %v9471 = vadd.f32 %v8767, %v9280
  %v9472 = vtanh.pop %v9468
  %v9473 = vtanh.pop %v9469
  %v9474 = vtanh.pop %v9470
  %v9475 = vtanh.pop %v9471
  %v9476 = vadd.f32 %v8768, %v9380
  %v9477 = vadd.f32 %v8769, %v9382
  %v9478 = vadd.f32 %v8770, %v9462
  %v9479 = vadd.f32 %v8771, %v9464
  %v9480 = vmul.f32 %v9476, 0.5
  %v9481 = vmul.f32 %v9477, 0.5
  %v9482 = vmul.f32 %v9478, 0.5
  %v9483 = vmul.f32 %v9479, 0.5
  %v9484 = vtanh.pop %v9480
  %v9485 = vtanh.pop %v9481
  %v9486 = vtanh.pop %v9482
  %v9487 = vtanh.pop %v9483
  %v9488 = vmul.f32 %v9484, 0.5
  %v9489 = vmul.f32 %v9485, 0.5
  %v9490 = vmul.f32 %v9486, 0.5
  %v9491 = vmul.f32 %v9487, 0.5
  %v9492 = vadd.f32 %v9488, 0.5
  %v9493 = vadd.f32 %v9489, 0.5
  %v9494 = vadd.f32 %v9490, 0.5
  %v9495 = vadd.f32 %v9491, 0.5
  %v9496 = vmul.f32 %v9300, %v8737
  %v9497 = vmul.f32 %v9301, %v8738
  %v9498 = vmul.f32 %v9302, %v8739
  %v9499 = vmul.f32 %v9303, %v8740
  %v9500 = vmul.f32 %v9116, %v9472
  %v9501 = vmul.f32 %v9117, %v9473
  %v9502 = vmul.f32 %v9118, %v9474
  %v9503 = vmul.f32 %v9119, %v9475
  %v9504 = vadd.f32 %v9496, %v9500
  %v9505 = vadd.f32 %v9497, %v9501
  %v9506 = vadd.f32 %v9498, %v9502
  %v9507 = vadd.f32 %v9499, %v9503
  %v9508 = vtanh.pop %v9504
  %v9509 = vtanh.pop %v9505
  %v9510 = vtanh.pop %v9506
  %v9511 = vtanh.pop %v9507
  %v9512 = vmul.f32 %v9492, %v9508
  %v9513 = vmul.f32 %v9493, %v9509
  %v9514 = vmul.f32 %v9494, %v9510
  %v9515 = vmul.f32 %v9495, %v9511
  %v9516 = vpack.c.bf16 %v9512, %v9512
  %v9517 = vpack.c.bf16 %v9513, %v9513
  %v9518 = vpack.c.bf16 %v9514, %v9514
  %v9519 = vpack.c.bf16 %v9515, %v9515
  %s9520 = smul.u32 7, 16
  %s9521 = smul.addr %s9520, 8
  %s9522 = scalar_lea.vmem [#allocation2], %s9521
  %v9523 = vld [vmem:[%s9522] sm:$0xff]
  %v9524 = vld [vmem:[%s9522 + $0x8] sm:$0xff]
  %v9525 = vld [vmem:[%s9522 + $0x10] sm:$0xff]
  %v9526 = vld [vmem:[%s9522 + $0x18] sm:$0xff]
  %v9527 = vld [vmem:[%s9522 + $0x20] sm:$0xff]
  %v9528 = vld [vmem:[%s9522 + $0x28] sm:$0xff]
  %v9529 = vld [vmem:[%s9522 + $0x30] sm:$0xff]
  %v9530 = vld [vmem:[%s9522 + $0x38] sm:$0xff]
  %v9531 = vld [vmem:[%s9522 + $0x40] sm:$0xff]
  %v9532 = vld [vmem:[%s9522 + $0x48] sm:$0xff]
  %v9533 = vld [vmem:[%s9522 + $0x50] sm:$0xff]
  %v9534 = vld [vmem:[%s9522 + $0x58] sm:$0xff]
  %v9535 = vld [vmem:[%s9522 + $0x60] sm:$0xff]
  %v9536 = vld [vmem:[%s9522 + $0x68] sm:$0xff]
  %v9537 = vld [vmem:[%s9522 + $0x70] sm:$0xff]
  %v9538 = vld [vmem:[%s9522 + $0x78] sm:$0xff]
  %9539 = vmatprep.subr.bf16.mxu0 %v1611
  %9540 = vmatpush1.bf16.msra.mxu0 %v1610
  %9541 = vmatprep.subr.bf16.mxu0 %v1615
  %9542 = vmatpush1.bf16.msra.mxu0 %v1614
  %9543 = vmatprep.subr.bf16.mxu0 %v1619
  %9544 = vmatpush1.bf16.msra.mxu0 %v1618
  %9545 = vmatprep.subr.bf16.mxu0 %v1623
  %9546 = vmatpush1.bf16.msra.mxu0 %v1622
  %9547 = vmatprep.subr.bf16.mxu0 %v1627
  %9548 = vmatpush1.bf16.msra.mxu0 %v1626
  %9549 = vmatprep.subr.bf16.mxu0 %v1631
  %9550 = vmatpush1.bf16.msra.mxu0 %v1630
  %9551 = vmatprep.subr.bf16.mxu0 %v1635
  %9552 = vmatpush1.bf16.msra.mxu0 %v1634
  %9553 = vmatprep.subr.bf16.mxu0 %v1639
  %9554 = vmatpush1.bf16.msra.mxu0 %v1638
  %9555 = vmatprep.subr.bf16.mxu0 %v1643
  %9556 = vmatpush1.bf16.msra.mxu0 %v1642
  %9557 = vmatprep.subr.bf16.mxu0 %v1647
  %9558 = vmatpush1.bf16.msra.mxu0 %v1646
  %9559 = vmatprep.subr.bf16.mxu0 %v1651
  %9560 = vmatpush1.bf16.msra.mxu0 %v1650
  %9561 = vmatprep.subr.bf16.mxu0 %v1655
  %9562 = vmatpush1.bf16.msra.mxu0 %v1654
  %9563 = vmatprep.subr.bf16.mxu0 %v1659
  %9564 = vmatpush1.bf16.msra.mxu0 %v1658
  %9565 = vmatprep.subr.bf16.mxu0 %v1663
  %9566 = vmatpush1.bf16.msra.mxu0 %v1662
  %9567 = vmatprep.subr.bf16.mxu0 %v1667
  %9568 = vmatpush1.bf16.msra.mxu0 %v1666
  %9569 = vmatprep.subr.bf16.mxu0 %v1671
  %9570 = vmatpush1.bf16.msra.mxu0 %v1670
  %9571 = vmatprep.mubr.bf16.mxu0 %v9517
  %9572 = vmatmul.mubr.bf16.gmra.mrb[0].mxu0 %v9516
  %v9573 = vpop.f32.mrb[0].mxu0
  %v9574 = vadd.f32 0.0, %v9573
  %v9575 = vpop.f32.mrb[0].mxu0
  %v9576 = vadd.f32 0.0, %v9575
  %v9577 = vpop.f32.mrb[0].mxu0
  %v9578 = vpop.f32.mrb[0].mxu0
  %9579 = vdwg.mxu0
  %9580 = vmatprep.subr.bf16.mxu0 %v1675
  %9581 = vmatpush1.bf16.msra.mxu0 %v1674
  %9582 = vmatprep.subr.bf16.mxu0 %v1679
  %9583 = vmatpush1.bf16.msra.mxu0 %v1678
  %9584 = vmatprep.subr.bf16.mxu0 %v1683
  %9585 = vmatpush1.bf16.msra.mxu0 %v1682
  %9586 = vmatprep.subr.bf16.mxu0 %v1687
  %9587 = vmatpush1.bf16.msra.mxu0 %v1686
  %9588 = vmatprep.subr.bf16.mxu0 %v1691
  %9589 = vmatpush1.bf16.msra.mxu0 %v1690
  %9590 = vmatprep.subr.bf16.mxu0 %v1695
  %9591 = vmatpush1.bf16.msra.mxu0 %v1694
  %9592 = vmatprep.subr.bf16.mxu0 %v1699
  %9593 = vmatpush1.bf16.msra.mxu0 %v1698
  %9594 = vmatprep.subr.bf16.mxu0 %v1703
  %9595 = vmatpush1.bf16.msra.mxu0 %v1702
  %9596 = vmatprep.subr.bf16.mxu0 %v1707
  %9597 = vmatpush1.bf16.msra.mxu0 %v1706
  %9598 = vmatprep.subr.bf16.mxu0 %v1711
  %9599 = vmatpush1.bf16.msra.mxu0 %v1710
  %9600 = vmatprep.subr.bf16.mxu0 %v1715
  %9601 = vmatpush1.bf16.msra.mxu0 %v1714
  %9602 = vmatprep.subr.bf16.mxu0 %v1719
  %9603 = vmatpush1.bf16.msra.mxu0 %v1718
  %9604 = vmatprep.subr.bf16.mxu0 %v1723
  %9605 = vmatpush1.bf16.msra.mxu0 %v1722
  %9606 = vmatprep.subr.bf16.mxu0 %v1727
  %9607 = vmatpush1.bf16.msra.mxu0 %v1726
  %9608 = vmatprep.subr.bf16.mxu0 %v1731
  %9609 = vmatpush1.bf16.msra.mxu0 %v1730
  %9610 = vmatprep.subr.bf16.mxu0 %v1735
  %9611 = vmatpush1.bf16.msra.mxu0 %v1734
  %9612 = vmatprep.mubr.bf16.mxu0 %v9519
  %9613 = vmatmul.mubr.bf16.gmra.mrb[0].mxu0 %v9518
  %v9614 = vpop.f32.mrb[0].mxu0
  %v9615 = vadd.f32 %v9574, %v9614
  %v9616 = vpop.f32.mrb[0].mxu0
  %v9617 = vadd.f32 %v9576, %v9616
  %v9618 = vpop.f32.mrb[0].mxu0
  %v9619 = vpop.f32.mrb[0].mxu0
  %9620 = vdwg.mxu0
  %9621 = vmatprep.subr.bf16.mxu0 %v1613
  %9622 = vmatpush1.bf16.msra.mxu0 %v1612
  %9623 = vmatprep.subr.bf16.mxu0 %v1617
  %9624 = vmatpush1.bf16.msra.mxu0 %v1616
  %9625 = vmatprep.subr.bf16.mxu0 %v1621
  %9626 = vmatpush1.bf16.msra.mxu0 %v1620
  %9627 = vmatprep.subr.bf16.mxu0 %v1625
  %9628 = vmatpush1.bf16.msra.mxu0 %v1624
  %9629 = vmatprep.subr.bf16.mxu0 %v1629
  %9630 = vmatpush1.bf16.msra.mxu0 %v1628
  %9631 = vmatprep.subr.bf16.mxu0 %v1633
  %9632 = vmatpush1.bf16.msra.mxu0 %v1632
  %9633 = vmatprep.subr.bf16.mxu0 %v1637
  %9634 = vmatpush1.bf16.msra.mxu0 %v1636
  %9635 = vmatprep.subr.bf16.mxu0 %v1641
  %9636 = vmatpush1.bf16.msra.mxu0 %v1640
  %9637 = vmatprep.subr.bf16.mxu0 %v1645
  %9638 = vmatpush1.bf16.msra.mxu0 %v1644
  %9639 = vmatprep.subr.bf16.mxu0 %v1649
  %9640 = vmatpush1.bf16.msra.mxu0 %v1648
  %9641 = vmatprep.subr.bf16.mxu0 %v1653
  %9642 = vmatpush1.bf16.msra.mxu0 %v1652
  %9643 = vmatprep.subr.bf16.mxu0 %v1657
  %9644 = vmatpush1.bf16.msra.mxu0 %v1656
  %9645 = vmatprep.subr.bf16.mxu0 %v1661
  %9646 = vmatpush1.bf16.msra.mxu0 %v1660
  %9647 = vmatprep.subr.bf16.mxu0 %v1665
  %9648 = vmatpush1.bf16.msra.mxu0 %v1664
  %9649 = vmatprep.subr.bf16.mxu0 %v1669
  %9650 = vmatpush1.bf16.msra.mxu0 %v1668
  %9651 = vmatprep.subr.bf16.mxu0 %v1673
  %9652 = vmatpush1.bf16.msra.mxu0 %v1672
  %9653 = vmatprep.mubr.bf16.mxu0 %v9517
  %9654 = vmatmul.mubr.bf16.gmra.mrb[0].mxu0 %v9516
  %v9655 = vpop.f32.mrb[0].mxu0
  %v9656 = vadd.f32 0.0, %v9655
  %v9657 = vpop.f32.mrb[0].mxu0
  %v9658 = vadd.f32 0.0, %v9657
  %v9659 = vpop.f32.mrb[0].mxu0
  %v9660 = vpop.f32.mrb[0].mxu0
  %9661 = vdwg.mxu0
  %9662 = vmatprep.subr.bf16.mxu0 %v1677
  %9663 = vmatpush1.bf16.msra.mxu0 %v1676
  %9664 = vmatprep.subr.bf16.mxu0 %v1681
  %9665 = vmatpush1.bf16.msra.mxu0 %v1680
  %9666 = vmatprep.subr.bf16.mxu0 %v1685
  %9667 = vmatpush1.bf16.msra.mxu0 %v1684
  %9668 = vmatprep.subr.bf16.mxu0 %v1689
  %9669 = vmatpush1.bf16.msra.mxu0 %v1688
  %9670 = vmatprep.subr.bf16.mxu0 %v1693
  %9671 = vmatpush1.bf16.msra.mxu0 %v1692
  %9672 = vmatprep.subr.bf16.mxu0 %v1697
  %9673 = vmatpush1.bf16.msra.mxu0 %v1696
  %9674 = vmatprep.subr.bf16.mxu0 %v1701
  %9675 = vmatpush1.bf16.msra.mxu0 %v1700
  %9676 = vmatprep.subr.bf16.mxu0 %v1705
  %9677 = vmatpush1.bf16.msra.mxu0 %v1704
  %9678 = vmatprep.subr.bf16.mxu0 %v1709
  %9679 = vmatpush1.bf16.msra.mxu0 %v1708
  %9680 = vmatprep.subr.bf16.mxu0 %v1713
  %9681 = vmatpush1.bf16.msra.mxu0 %v1712
  %9682 = vmatprep.subr.bf16.mxu0 %v1717
  %9683 = vmatpush1.bf16.msra.mxu0 %v1716
  %9684 = vmatprep.subr.bf16.mxu0 %v1721
  %9685 = vmatpush1.bf16.msra.mxu0 %v1720
  %9686 = vmatprep.subr.bf16.mxu0 %v1725
  %9687 = vmatpush1.bf16.msra.mxu0 %v1724
  %9688 = vmatprep.subr.bf16.mxu0 %v1729
  %9689 = vmatpush1.bf16.msra.mxu0 %v1728
  %9690 = vmatprep.subr.bf16.mxu0 %v1733
  %9691 = vmatpush1.bf16.msra.mxu0 %v1732
  %9692 = vmatprep.subr.bf16.mxu0 %v1737
  %9693 = vmatpush1.bf16.msra.mxu0 %v1736
  %9694 = vmatprep.mubr.bf16.mxu0 %v9519
  %9695 = vmatmul.mubr.bf16.gmra.mrb[0].mxu0 %v9518
  %v9696 = vpop.f32.mrb[0].mxu0
  %v9697 = vadd.f32 %v9656, %v9696
  %v9698 = vpop.f32.mrb[0].mxu0
  %v9699 = vadd.f32 %v9658, %v9698
  %v9700 = vpop.f32.mrb[0].mxu0
  %v9701 = vpop.f32.mrb[0].mxu0
  %9702 = vdwg.mxu0
  %9703 = vmatprep.subr.bf16.mxu0 %v2543
  %9704 = vmatpush1.bf16.msra.mxu0 %v2542
  %9705 = vmatprep.subr.bf16.mxu0 %v2547
  %9706 = vmatpush1.bf16.msra.mxu0 %v2546
  %9707 = vmatprep.subr.bf16.mxu0 %v2551
  %9708 = vmatpush1.bf16.msra.mxu0 %v2550
  %9709 = vmatprep.subr.bf16.mxu0 %v2555
  %9710 = vmatpush1.bf16.msra.mxu0 %v2554
  %9711 = vmatprep.subr.bf16.mxu0 %v2559
  %9712 = vmatpush1.bf16.msra.mxu0 %v2558
  %9713 = vmatprep.subr.bf16.mxu0 %v2563
  %9714 = vmatpush1.bf16.msra.mxu0 %v2562
  %9715 = vmatprep.subr.bf16.mxu0 %v2567
  %9716 = vmatpush1.bf16.msra.mxu0 %v2566
  %9717 = vmatprep.subr.bf16.mxu0 %v2571
  %9718 = vmatpush1.bf16.msra.mxu0 %v2570
  %9719 = vmatprep.subr.bf16.mxu0 %v2575
  %9720 = vmatpush1.bf16.msra.mxu0 %v2574
  %9721 = vmatprep.subr.bf16.mxu0 %v2579
  %9722 = vmatpush1.bf16.msra.mxu0 %v2578
  %9723 = vmatprep.subr.bf16.mxu0 %v2583
  %9724 = vmatpush1.bf16.msra.mxu0 %v2582
  %9725 = vmatprep.subr.bf16.mxu0 %v2587
  %9726 = vmatpush1.bf16.msra.mxu0 %v2586
  %9727 = vmatprep.subr.bf16.mxu0 %v2591
  %9728 = vmatpush1.bf16.msra.mxu0 %v2590
  %9729 = vmatprep.subr.bf16.mxu0 %v2595
  %9730 = vmatpush1.bf16.msra.mxu0 %v2594
  %9731 = vmatprep.subr.bf16.mxu0 %v2599
  %9732 = vmatpush1.bf16.msra.mxu0 %v2598
  %9733 = vmatprep.subr.bf16.mxu0 %v2603
  %9734 = vmatpush1.bf16.msra.mxu0 %v2602
  %9735 = vmatprep.mubr.bf16.mxu0 %v9517
  %9736 = vmatmul.mubr.bf16.gmra.mrb[0].mxu0 %v9516
  %v9737 = vpop.f32.mrb[0].mxu0
  %v9738 = vadd.f32 0.0, %v9737
  %v9739 = vpop.f32.mrb[0].mxu0
  %v9740 = vadd.f32 0.0, %v9739
  %v9741 = vpop.f32.mrb[0].mxu0
  %v9742 = vpop.f32.mrb[0].mxu0
  %9743 = vdwg.mxu0
  %9744 = vmatprep.subr.bf16.mxu0 %v2607
  %9745 = vmatpush1.bf16.msra.mxu0 %v2606
  %9746 = vmatprep.subr.bf16.mxu0 %v2611
  %9747 = vmatpush1.bf16.msra.mxu0 %v2610
  %9748 = vmatprep.subr.bf16.mxu0 %v2615
  %9749 = vmatpush1.bf16.msra.mxu0 %v2614
  %9750 = vmatprep.subr.bf16.mxu0 %v2619
  %9751 = vmatpush1.bf16.msra.mxu0 %v2618
  %9752 = vmatprep.subr.bf16.mxu0 %v2623
  %9753 = vmatpush1.bf16.msra.mxu0 %v2622
  %9754 = vmatprep.subr.bf16.mxu0 %v2627
  %9755 = vmatpush1.bf16.msra.mxu0 %v2626
  %9756 = vmatprep.subr.bf16.mxu0 %v2631
  %9757 = vmatpush1.bf16.msra.mxu0 %v2630
  %9758 = vmatprep.subr.bf16.mxu0 %v2635
  %9759 = vmatpush1.bf16.msra.mxu0 %v2634
  %9760 = vmatprep.subr.bf16.mxu0 %v2639
  %9761 = vmatpush1.bf16.msra.mxu0 %v2638
  %9762 = vmatprep.subr.bf16.mxu0 %v2643
  %9763 = vmatpush1.bf16.msra.mxu0 %v2642
  %9764 = vmatprep.subr.bf16.mxu0 %v2647
  %9765 = vmatpush1.bf16.msra.mxu0 %v2646
  %9766 = vmatprep.subr.bf16.mxu0 %v2651
  %9767 = vmatpush1.bf16.msra.mxu0 %v2650
  %9768 = vmatprep.subr.bf16.mxu0 %v2655
  %9769 = vmatpush1.bf16.msra.mxu0 %v2654
  %9770 = vmatprep.subr.bf16.mxu0 %v2659
  %9771 = vmatpush1.bf16.msra.mxu0 %v2658
  %9772 = vmatprep.subr.bf16.mxu0 %v2663
  %9773 = vmatpush1.bf16.msra.mxu0 %v2662
  %9774 = vmatprep.subr.bf16.mxu0 %v2667
  %9775 = vmatpush1.bf16.msra.mxu0 %v2666
  %9776 = vmatprep.mubr.bf16.mxu0 %v9519
  %9777 = vmatmul.mubr.bf16.gmra.mrb[0].mxu0 %v9518
  %v9778 = vpop.f32.mrb[0].mxu0
  %v9779 = vadd.f32 %v9738, %v9778
  %v9780 = vpop.f32.mrb[0].mxu0
  %v9781 = vadd.f32 %v9740, %v9780
  %v9782 = vpop.f32.mrb[0].mxu0
  %v9783 = vpop.f32.mrb[0].mxu0
  %9784 = vdwg.mxu0
  %9785 = vmatprep.subr.bf16.mxu0 %v2545
  %9786 = vmatpush1.bf16.msra.mxu0 %v2544
  %9787 = vmatprep.subr.bf16.mxu0 %v2549
  %9788 = vmatpush1.bf16.msra.mxu0 %v2548
  %9789 = vmatprep.subr.bf16.mxu0 %v2553
  %9790 = vmatpush1.bf16.msra.mxu0 %v2552
  %9791 = vmatprep.subr.bf16.mxu0 %v2557
  %9792 = vmatpush1.bf16.msra.mxu0 %v2556
  %9793 = vmatprep.subr.bf16.mxu0 %v2561
  %9794 = vmatpush1.bf16.msra.mxu0 %v2560
  %9795 = vmatprep.subr.bf16.mxu0 %v2565
  %9796 = vmatpush1.bf16.msra.mxu0 %v2564
  %9797 = vmatprep.subr.bf16.mxu0 %v2569
  %9798 = vmatpush1.bf16.msra.mxu0 %v2568
  %9799 = vmatprep.subr.bf16.mxu0 %v2573
  %9800 = vmatpush1.bf16.msra.mxu0 %v2572
  %9801 = vmatprep.subr.bf16.mxu0 %v2577
  %9802 = vmatpush1.bf16.msra.mxu0 %v2576
  %9803 = vmatprep.subr.bf16.mxu0 %v2581
  %9804 = vmatpush1.bf16.msra.mxu0 %v2580
  %9805 = vmatprep.subr.bf16.mxu0 %v2585
  %9806 = vmatpush1.bf16.msra.mxu0 %v2584
  %9807 = vmatprep.subr.bf16.mxu0 %v2589
  %9808 = vmatpush1.bf16.msra.mxu0 %v2588
  %9809 = vmatprep.subr.bf16.mxu0 %v2593
  %9810 = vmatpush1.bf16.msra.mxu0 %v2592
  %9811 = vmatprep.subr.bf16.mxu0 %v2597
  %9812 = vmatpush1.bf16.msra.mxu0 %v2596
  %9813 = vmatprep.subr.bf16.mxu0 %v2601
  %9814 = vmatpush1.bf16.msra.mxu0 %v2600
  %9815 = vmatprep.subr.bf16.mxu0 %v2605
  %9816 = vmatpush1.bf16.msra.mxu0 %v2604
  %9817 = vmatprep.mubr.bf16.mxu0 %v9517
  %9818 = vmatmul.mubr.bf16.gmra.mrb[0].mxu0 %v9516
  %v9819 = vpop.f32.mrb[0].mxu0
  %v9820 = vadd.f32 0.0, %v9819
  %v9821 = vpop.f32.mrb[0].mxu0
  %v9822 = vadd.f32 0.0, %v9821
  %v9823 = vpop.f32.mrb[0].mxu0
  %v9824 = vpop.f32.mrb[0].mxu0
  %9825 = vdwg.mxu0
  %9826 = vmatprep.subr.bf16.mxu0 %v2609
  %9827 = vmatpush1.bf16.msra.mxu0 %v2608
  %9828 = vmatprep.subr.bf16.mxu0 %v2613
  %9829 = vmatpush1.bf16.msra.mxu0 %v2612
  %9830 = vmatprep.subr.bf16.mxu0 %v2617
  %9831 = vmatpush1.bf16.msra.mxu0 %v2616
  %9832 = vmatprep.subr.bf16.mxu0 %v2621
  %9833 = vmatpush1.bf16.msra.mxu0 %v2620
  %9834 = vmatprep.subr.bf16.mxu0 %v2625
  %9835 = vmatpush1.bf16.msra.mxu0 %v2624
  %9836 = vmatprep.subr.bf16.mxu0 %v2629
  %9837 = vmatpush1.bf16.msra.mxu0 %v2628
  %9838 = vmatprep.subr.bf16.mxu0 %v2633
  %9839 = vmatpush1.bf16.msra.mxu0 %v2632
  %9840 = vmatprep.subr.bf16.mxu0 %v2637
  %9841 = vmatpush1.bf16.msra.mxu0 %v2636
  %9842 = vmatprep.subr.bf16.mxu0 %v2641
  %9843 = vmatpush1.bf16.msra.mxu0 %v2640
  %9844 = vmatprep.subr.bf16.mxu0 %v2645
  %9845 = vmatpush1.bf16.msra.mxu0 %v2644
  %9846 = vmatprep.subr.bf16.mxu0 %v2649
  %9847 = vmatpush1.bf16.msra.mxu0 %v2648
  %9848 = vmatprep.subr.bf16.mxu0 %v2653
  %9849 = vmatpush1.bf16.msra.mxu0 %v2652
  %9850 = vmatprep.subr.bf16.mxu0 %v2657
  %9851 = vmatpush1.bf16.msra.mxu0 %v2656
  %9852 = vmatprep.subr.bf16.mxu0 %v2661
  %9853 = vmatpush1.bf16.msra.mxu0 %v2660
  %9854 = vmatprep.subr.bf16.mxu0 %v2665
  %9855 = vmatpush1.bf16.msra.mxu0 %v2664
  %9856 = vmatprep.subr.bf16.mxu0 %v2669
  %9857 = vmatpush1.bf16.msra.mxu0 %v2668
  %9858 = vmatprep.mubr.bf16.mxu0 %v9519
  %9859 = vmatmul.mubr.bf16.gmra.mrb[0].mxu0 %v9518
  %v9860 = vpop.f32.mrb[0].mxu0
  %v9861 = vadd.f32 %v9820, %v9860
  %v9862 = vpop.f32.mrb[0].mxu0
  %v9863 = vadd.f32 %v9822, %v9862
  %v9864 = vpop.f32.mrb[0].mxu0
  %v9865 = vpop.f32.mrb[0].mxu0
  %9866 = vdwg.mxu0
  %v9867 = vadd.f32 %v9523, %v9615
  %v9868 = vadd.f32 %v9524, %v9617
  %v9869 = vadd.f32 %v9525, %v9697
  %v9870 = vadd.f32 %v9526, %v9699
  %v9871 = vmul.f32 %v9867, 0.5
  %v9872 = vmul.f32 %v9868, 0.5
  %v9873 = vmul.f32 %v9869, 0.5
  %v9874 = vmul.f32 %v9870, 0.5
  %v9875 = vtanh.pop %v9871
  %v9876 = vtanh.pop %v9872
  %v9877 = vtanh.pop %v9873
  %v9878 = vtanh.pop %v9874
  %v9879 = vmul.f32 %v9875, 0.5
  %v9880 = vmul.f32 %v9876, 0.5
  %v9881 = vmul.f32 %v9877, 0.5
  %v9882 = vmul.f32 %v9878, 0.5
  %v9883 = vadd.f32 %v9879, 0.5
  %v9884 = vadd.f32 %v9880, 0.5
  %v9885 = vadd.f32 %v9881, 0.5
  %v9886 = vadd.f32 %v9882, 0.5
  %9887 = vmatprep.subr.bf16.mxu0 %v3495
  %9888 = vmatpush1.bf16.msra.mxu0 %v3494
  %9889 = vmatprep.subr.bf16.mxu0 %v3499
  %9890 = vmatpush1.bf16.msra.mxu0 %v3498
  %9891 = vmatprep.subr.bf16.mxu0 %v3503
  %9892 = vmatpush1.bf16.msra.mxu0 %v3502
  %9893 = vmatprep.subr.bf16.mxu0 %v3507
  %9894 = vmatpush1.bf16.msra.mxu0 %v3506
  %9895 = vmatprep.subr.bf16.mxu0 %v3511
  %9896 = vmatpush1.bf16.msra.mxu0 %v3510
  %9897 = vmatprep.subr.bf16.mxu0 %v3515
  %9898 = vmatpush1.bf16.msra.mxu0 %v3514
  %9899 = vmatprep.subr.bf16.mxu0 %v3519
  %9900 = vmatpush1.bf16.msra.mxu0 %v3518
  %9901 = vmatprep.subr.bf16.mxu0 %v3523
  %9902 = vmatpush1.bf16.msra.mxu0 %v3522
  %9903 = vmatprep.subr.bf16.mxu0 %v3527
  %9904 = vmatpush1.bf16.msra.mxu0 %v3526
  %9905 = vmatprep.subr.bf16.mxu0 %v3531
  %9906 = vmatpush1.bf16.msra.mxu0 %v3530
  %9907 = vmatprep.subr.bf16.mxu0 %v3535
  %9908 = vmatpush1.bf16.msra.mxu0 %v3534
  %9909 = vmatprep.subr.bf16.mxu0 %v3539
  %9910 = vmatpush1.bf16.msra.mxu0 %v3538
  %9911 = vmatprep.subr.bf16.mxu0 %v3543
  %9912 = vmatpush1.bf16.msra.mxu0 %v3542
  %9913 = vmatprep.subr.bf16.mxu0 %v3547
  %9914 = vmatpush1.bf16.msra.mxu0 %v3546
  %9915 = vmatprep.subr.bf16.mxu0 %v3551
  %9916 = vmatpush1.bf16.msra.mxu0 %v3550
  %9917 = vmatprep.subr.bf16.mxu0 %v3555
  %9918 = vmatpush1.bf16.msra.mxu0 %v3554
  %9919 = vmatprep.mubr.bf16.mxu0 %v9517
  %9920 = vmatmul.mubr.bf16.gmra.mrb[0].mxu0 %v9516
  %v9921 = vpop.f32.mrb[0].mxu0
  %v9922 = vadd.f32 0.0, %v9921
  %v9923 = vpop.f32.mrb[0].mxu0
  %v9924 = vadd.f32 0.0, %v9923
  %v9925 = vpop.f32.mrb[0].mxu0
  %v9926 = vpop.f32.mrb[0].mxu0
  %9927 = vdwg.mxu0
  %9928 = vmatprep.subr.bf16.mxu0 %v3559
  %9929 = vmatpush1.bf16.msra.mxu0 %v3558
  %9930 = vmatprep.subr.bf16.mxu0 %v3563
  %9931 = vmatpush1.bf16.msra.mxu0 %v3562
  %9932 = vmatprep.subr.bf16.mxu0 %v3567
  %9933 = vmatpush1.bf16.msra.mxu0 %v3566
  %9934 = vmatprep.subr.bf16.mxu0 %v3571
  %9935 = vmatpush1.bf16.msra.mxu0 %v3570
  %9936 = vmatprep.subr.bf16.mxu0 %v3575
  %9937 = vmatpush1.bf16.msra.mxu0 %v3574
  %9938 = vmatprep.subr.bf16.mxu0 %v3579
  %9939 = vmatpush1.bf16.msra.mxu0 %v3578
  %9940 = vmatprep.subr.bf16.mxu0 %v3583
  %9941 = vmatpush1.bf16.msra.mxu0 %v3582
  %9942 = vmatprep.subr.bf16.mxu0 %v3587
  %9943 = vmatpush1.bf16.msra.mxu0 %v3586
  %9944 = vmatprep.subr.bf16.mxu0 %v3591
  %9945 = vmatpush1.bf16.msra.mxu0 %v3590
  %9946 = vmatprep.subr.bf16.mxu0 %v3595
  %9947 = vmatpush1.bf16.msra.mxu0 %v3594
  %9948 = vmatprep.subr.bf16.mxu0 %v3599
  %9949 = vmatpush1.bf16.msra.mxu0 %v3598
  %9950 = vmatprep.subr.bf16.mxu0 %v3603
  %9951 = vmatpush1.bf16.msra.mxu0 %v3602
  %9952 = vmatprep.subr.bf16.mxu0 %v3607
  %9953 = vmatpush1.bf16.msra.mxu0 %v3606
  %9954 = vmatprep.subr.bf16.mxu0 %v3611
  %9955 = vmatpush1.bf16.msra.mxu0 %v3610
  %9956 = vmatprep.subr.bf16.mxu0 %v3615
  %9957 = vmatpush1.bf16.msra.mxu0 %v3614
  %9958 = vmatprep.subr.bf16.mxu0 %v3619
  %9959 = vmatpush1.bf16.msra.mxu0 %v3618
  %9960 = vmatprep.mubr.bf16.mxu0 %v9519
  %9961 = vmatmul.mubr.bf16.gmra.mrb[0].mxu0 %v9518
  %v9962 = vpop.f32.mrb[0].mxu0
  %v9963 = vadd.f32 %v9922, %v9962
  %v9964 = vpop.f32.mrb[0].mxu0
  %v9965 = vadd.f32 %v9924, %v9964
  %v9966 = vpop.f32.mrb[0].mxu0
  %v9967 = vpop.f32.mrb[0].mxu0
  %9968 = vdwg.mxu0
  %9969 = vmatprep.subr.bf16.mxu0 %v3497
  %9970 = vmatpush1.bf16.msra.mxu0 %v3496
  %9971 = vmatprep.subr.bf16.mxu0 %v3501
  %9972 = vmatpush1.bf16.msra.mxu0 %v3500
  %9973 = vmatprep.subr.bf16.mxu0 %v3505
  %9974 = vmatpush1.bf16.msra.mxu0 %v3504
  %9975 = vmatprep.subr.bf16.mxu0 %v3509
  %9976 = vmatpush1.bf16.msra.mxu0 %v3508
  %9977 = vmatprep.subr.bf16.mxu0 %v3513
  %9978 = vmatpush1.bf16.msra.mxu0 %v3512
  %9979 = vmatprep.subr.bf16.mxu0 %v3517
  %9980 = vmatpush1.bf16.msra.mxu0 %v3516
  %9981 = vmatprep.subr.bf16.mxu0 %v3521
  %9982 = vmatpush1.bf16.msra.mxu0 %v3520
  %9983 = vmatprep.subr.bf16.mxu0 %v3525
  %9984 = vmatpush1.bf16.msra.mxu0 %v3524
  %9985 = vmatprep.subr.bf16.mxu0 %v3529
  %9986 = vmatpush1.bf16.msra.mxu0 %v3528
  %9987 = vmatprep.subr.bf16.mxu0 %v3533
  %9988 = vmatpush1.bf16.msra.mxu0 %v3532
  %9989 = vmatprep.subr.bf16.mxu0 %v3537
  %9990 = vmatpush1.bf16.msra.mxu0 %v3536
  %9991 = vmatprep.subr.bf16.mxu0 %v3541
  %9992 = vmatpush1.bf16.msra.mxu0 %v3540
  %9993 = vmatprep.subr.bf16.mxu0 %v3545
  %9994 = vmatpush1.bf16.msra.mxu0 %v3544
  %9995 = vmatprep.subr.bf16.mxu0 %v3549
  %9996 = vmatpush1.bf16.msra.mxu0 %v3548
  %9997 = vmatprep.subr.bf16.mxu0 %v3553
  %9998 = vmatpush1.bf16.msra.mxu0 %v3552
  %9999 = vmatprep.subr.bf16.mxu0 %v3557
  %10000 = vmatpush1.bf16.msra.mxu0 %v3556
  %10001 = vmatprep.mubr.bf16.mxu0 %v9517
  %10002 = vmatmul.mubr.bf16.gmra.mrb[0].mxu0 %v9516
  %v10003 = vpop.f32.mrb[0].mxu0
  %v10004 = vadd.f32 0.0, %v10003
  %v10005 = vpop.f32.mrb[0].mxu0
  %v10006 = vadd.f32 0.0, %v10005
  %v10007 = vpop.f32.mrb[0].mxu0
  %v10008 = vpop.f32.mrb[0].mxu0
  %10009 = vdwg.mxu0
  %10010 = vmatprep.subr.bf16.mxu0 %v3561
  %10011 = vmatpush1.bf16.msra.mxu0 %v3560
  %10012 = vmatprep.subr.bf16.mxu0 %v3565
  %10013 = vmatpush1.bf16.msra.mxu0 %v3564
  %10014 = vmatprep.subr.bf16.mxu0 %v3569
  %10015 = vmatpush1.bf16.msra.mxu0 %v3568
  %10016 = vmatprep.subr.bf16.mxu0 %v3573
  %10017 = vmatpush1.bf16.msra.mxu0 %v3572
  %10018 = vmatprep.subr.bf16.mxu0 %v3577
  %10019 = vmatpush1.bf16.msra.mxu0 %v3576
  %10020 = vmatprep.subr.bf16.mxu0 %v3581
  %10021 = vmatpush1.bf16.msra.mxu0 %v3580
  %10022 = vmatprep.subr.bf16.mxu0 %v3585
  %10023 = vmatpush1.bf16.msra.mxu0 %v3584
  %10024 = vmatprep.subr.bf16.mxu0 %v3589
  %10025 = vmatpush1.bf16.msra.mxu0 %v3588
  %10026 = vmatprep.subr.bf16.mxu0 %v3593
  %10027 = vmatpush1.bf16.msra.mxu0 %v3592
  %10028 = vmatprep.subr.bf16.mxu0 %v3597
  %10029 = vmatpush1.bf16.msra.mxu0 %v3596
  %10030 = vmatprep.subr.bf16.mxu0 %v3601
  %10031 = vmatpush1.bf16.msra.mxu0 %v3600
  %10032 = vmatprep.subr.bf16.mxu0 %v3605
  %10033 = vmatpush1.bf16.msra.mxu0 %v3604
  %10034 = vmatprep.subr.bf16.mxu0 %v3609
  %10035 = vmatpush1.bf16.msra.mxu0 %v3608
  %10036 = vmatprep.subr.bf16.mxu0 %v3613
  %10037 = vmatpush1.bf16.msra.mxu0 %v3612
  %10038 = vmatprep.subr.bf16.mxu0 %v3617
  %10039 = vmatpush1.bf16.msra.mxu0 %v3616
  %10040 = vmatprep.subr.bf16.mxu0 %v3621
  %10041 = vmatpush1.bf16.msra.mxu0 %v3620
  %10042 = vmatprep.mubr.bf16.mxu0 %v9519
  %10043 = vmatmul.mubr.bf16.gmra.mrb[0].mxu0 %v9518
  %v10044 = vpop.f32.mrb[0].mxu0
  %v10045 = vadd.f32 %v10004, %v10044
  %v10046 = vpop.f32.mrb[0].mxu0
  %v10047 = vadd.f32 %v10006, %v10046
  %v10048 = vpop.f32.mrb[0].mxu0
  %v10049 = vpop.f32.mrb[0].mxu0
  %10050 = vdwg.mxu0
  %v10051 = vadd.f32 %v9527, %v9779
  %v10052 = vadd.f32 %v9528, %v9781
  %v10053 = vadd.f32 %v9529, %v9861
  %v10054 = vadd.f32 %v9530, %v9863
  %v10055 = vmul.f32 %v10051, 0.5
  %v10056 = vmul.f32 %v10052, 0.5
  %v10057 = vmul.f32 %v10053, 0.5
  %v10058 = vmul.f32 %v10054, 0.5
  %v10059 = vtanh.pop %v10055
  %v10060 = vtanh.pop %v10056
  %v10061 = vtanh.pop %v10057
  %v10062 = vtanh.pop %v10058
  %v10063 = vmul.f32 %v10059, 0.5
  %v10064 = vmul.f32 %v10060, 0.5
  %v10065 = vmul.f32 %v10061, 0.5
  %v10066 = vmul.f32 %v10062, 0.5
  %v10067 = vadd.f32 %v10063, 0.5
  %v10068 = vadd.f32 %v10064, 0.5
  %v10069 = vadd.f32 %v10065, 0.5
  %v10070 = vadd.f32 %v10066, 0.5
  %10071 = vmatprep.subr.bf16.mxu0 %v4447
  %10072 = vmatpush1.bf16.msra.mxu0 %v4446
  %10073 = vmatprep.subr.bf16.mxu0 %v4451
  %10074 = vmatpush1.bf16.msra.mxu0 %v4450
  %10075 = vmatprep.subr.bf16.mxu0 %v4455
  %10076 = vmatpush1.bf16.msra.mxu0 %v4454
  %10077 = vmatprep.subr.bf16.mxu0 %v4459
  %10078 = vmatpush1.bf16.msra.mxu0 %v4458
  %10079 = vmatprep.subr.bf16.mxu0 %v4463
  %10080 = vmatpush1.bf16.msra.mxu0 %v4462
  %10081 = vmatprep.subr.bf16.mxu0 %v4467
  %10082 = vmatpush1.bf16.msra.mxu0 %v4466
  %10083 = vmatprep.subr.bf16.mxu0 %v4471
  %10084 = vmatpush1.bf16.msra.mxu0 %v4470
  %10085 = vmatprep.subr.bf16.mxu0 %v4475
  %10086 = vmatpush1.bf16.msra.mxu0 %v4474
  %10087 = vmatprep.subr.bf16.mxu0 %v4479
  %10088 = vmatpush1.bf16.msra.mxu0 %v4478
  %10089 = vmatprep.subr.bf16.mxu0 %v4483
  %10090 = vmatpush1.bf16.msra.mxu0 %v4482
  %10091 = vmatprep.subr.bf16.mxu0 %v4487
  %10092 = vmatpush1.bf16.msra.mxu0 %v4486
  %10093 = vmatprep.subr.bf16.mxu0 %v4491
  %10094 = vmatpush1.bf16.msra.mxu0 %v4490
  %10095 = vmatprep.subr.bf16.mxu0 %v4495
  %10096 = vmatpush1.bf16.msra.mxu0 %v4494
  %10097 = vmatprep.subr.bf16.mxu0 %v4499
  %10098 = vmatpush1.bf16.msra.mxu0 %v4498
  %10099 = vmatprep.subr.bf16.mxu0 %v4503
  %10100 = vmatpush1.bf16.msra.mxu0 %v4502
  %10101 = vmatprep.subr.bf16.mxu0 %v4507
  %10102 = vmatpush1.bf16.msra.mxu0 %v4506
  %10103 = vmatprep.mubr.bf16.mxu0 %v9517
  %10104 = vmatmul.mubr.bf16.gmra.mrb[0].mxu0 %v9516
  %v10105 = vpop.f32.mrb[0].mxu0
  %v10106 = vadd.f32 0.0, %v10105
  %v10107 = vpop.f32.mrb[0].mxu0
  %v10108 = vadd.f32 0.0, %v10107
  %v10109 = vpop.f32.mrb[0].mxu0
  %v10110 = vpop.f32.mrb[0].mxu0
  %10111 = vdwg.mxu0
  %10112 = vmatprep.subr.bf16.mxu0 %v4511
  %10113 = vmatpush1.bf16.msra.mxu0 %v4510
  %10114 = vmatprep.subr.bf16.mxu0 %v4515
  %10115 = vmatpush1.bf16.msra.mxu0 %v4514
  %10116 = vmatprep.subr.bf16.mxu0 %v4519
  %10117 = vmatpush1.bf16.msra.mxu0 %v4518
  %10118 = vmatprep.subr.bf16.mxu0 %v4523
  %10119 = vmatpush1.bf16.msra.mxu0 %v4522
  %10120 = vmatprep.subr.bf16.mxu0 %v4527
  %10121 = vmatpush1.bf16.msra.mxu0 %v4526
  %10122 = vmatprep.subr.bf16.mxu0 %v4531
  %10123 = vmatpush1.bf16.msra.mxu0 %v4530
  %10124 = vmatprep.subr.bf16.mxu0 %v4535
  %10125 = vmatpush1.bf16.msra.mxu0 %v4534
  %10126 = vmatprep.subr.bf16.mxu0 %v4539
  %10127 = vmatpush1.bf16.msra.mxu0 %v4538
  %10128 = vmatprep.subr.bf16.mxu0 %v4543
  %10129 = vmatpush1.bf16.msra.mxu0 %v4542
  %10130 = vmatprep.subr.bf16.mxu0 %v4547
  %10131 = vmatpush1.bf16.msra.mxu0 %v4546
  %10132 = vmatprep.subr.bf16.mxu0 %v4551
  %10133 = vmatpush1.bf16.msra.mxu0 %v4550
  %10134 = vmatprep.subr.bf16.mxu0 %v4555
  %10135 = vmatpush1.bf16.msra.mxu0 %v4554
  %10136 = vmatprep.subr.bf16.mxu0 %v4559
  %10137 = vmatpush1.bf16.msra.mxu0 %v4558
  %10138 = vmatprep.subr.bf16.mxu0 %v4563
  %10139 = vmatpush1.bf16.msra.mxu0 %v4562
  %10140 = vmatprep.subr.bf16.mxu0 %v4567
  %10141 = vmatpush1.bf16.msra.mxu0 %v4566
  %10142 = vmatprep.subr.bf16.mxu0 %v4571
  %10143 = vmatpush1.bf16.msra.mxu0 %v4570
  %10144 = vmatprep.mubr.bf16.mxu0 %v9519
  %10145 = vmatmul.mubr.bf16.gmra.mrb[0].mxu0 %v9518
  %v10146 = vpop.f32.mrb[0].mxu0
  %v10147 = vadd.f32 %v10106, %v10146
  %v10148 = vpop.f32.mrb[0].mxu0
  %v10149 = vadd.f32 %v10108, %v10148
  %v10150 = vpop.f32.mrb[0].mxu0
  %v10151 = vpop.f32.mrb[0].mxu0
  %10152 = vdwg.mxu0
  %10153 = vmatprep.subr.bf16.mxu0 %v4449
  %10154 = vmatpush1.bf16.msra.mxu0 %v4448
  %10155 = vmatprep.subr.bf16.mxu0 %v4453
  %10156 = vmatpush1.bf16.msra.mxu0 %v4452
  %10157 = vmatprep.subr.bf16.mxu0 %v4457
  %10158 = vmatpush1.bf16.msra.mxu0 %v4456
  %10159 = vmatprep.subr.bf16.mxu0 %v4461
  %10160 = vmatpush1.bf16.msra.mxu0 %v4460
  %10161 = vmatprep.subr.bf16.mxu0 %v4465
  %10162 = vmatpush1.bf16.msra.mxu0 %v4464
  %10163 = vmatprep.subr.bf16.mxu0 %v4469
  %10164 = vmatpush1.bf16.msra.mxu0 %v4468
  %10165 = vmatprep.subr.bf16.mxu0 %v4473
  %10166 = vmatpush1.bf16.msra.mxu0 %v4472
  %10167 = vmatprep.subr.bf16.mxu0 %v4477
  %10168 = vmatpush1.bf16.msra.mxu0 %v4476
  %10169 = vmatprep.subr.bf16.mxu0 %v4481
  %10170 = vmatpush1.bf16.msra.mxu0 %v4480
  %10171 = vmatprep.subr.bf16.mxu0 %v4485
  %10172 = vmatpush1.bf16.msra.mxu0 %v4484
  %10173 = vmatprep.subr.bf16.mxu0 %v4489
  %10174 = vmatpush1.bf16.msra.mxu0 %v4488
  %10175 = vmatprep.subr.bf16.mxu0 %v4493
  %10176 = vmatpush1.bf16.msra.mxu0 %v4492
  %10177 = vmatprep.subr.bf16.mxu0 %v4497
  %10178 = vmatpush1.bf16.msra.mxu0 %v4496
  %10179 = vmatprep.subr.bf16.mxu0 %v4501
  %10180 = vmatpush1.bf16.msra.mxu0 %v4500
  %10181 = vmatprep.subr.bf16.mxu0 %v4505
  %10182 = vmatpush1.bf16.msra.mxu0 %v4504
  %10183 = vmatprep.subr.bf16.mxu0 %v4509
  %10184 = vmatpush1.bf16.msra.mxu0 %v4508
  %10185 = vmatprep.mubr.bf16.mxu0 %v9517
  %10186 = vmatmul.mubr.bf16.gmra.mrb[0].mxu0 %v9516
  %v10187 = vpop.f32.mrb[0].mxu0
  %v10188 = vadd.f32 0.0, %v10187
  %v10189 = vpop.f32.mrb[0].mxu0
  %v10190 = vadd.f32 0.0, %v10189
  %v10191 = vpop.f32.mrb[0].mxu0
  %v10192 = vpop.f32.mrb[0].mxu0
  %10193 = vdwg.mxu0
  %10194 = vmatprep.subr.bf16.mxu0 %v4513
  %10195 = vmatpush1.bf16.msra.mxu0 %v4512
  %10196 = vmatprep.subr.bf16.mxu0 %v4517
  %10197 = vmatpush1.bf16.msra.mxu0 %v4516
  %10198 = vmatprep.subr.bf16.mxu0 %v4521
  %10199 = vmatpush1.bf16.msra.mxu0 %v4520
  %10200 = vmatprep.subr.bf16.mxu0 %v4525
  %10201 = vmatpush1.bf16.msra.mxu0 %v4524
  %10202 = vmatprep.subr.bf16.mxu0 %v4529
  %10203 = vmatpush1.bf16.msra.mxu0 %v4528
  %10204 = vmatprep.subr.bf16.mxu0 %v4533
  %10205 = vmatpush1.bf16.msra.mxu0 %v4532
  %10206 = vmatprep.subr.bf16.mxu0 %v4537
  %10207 = vmatpush1.bf16.msra.mxu0 %v4536
  %10208 = vmatprep.subr.bf16.mxu0 %v4541
  %10209 = vmatpush1.bf16.msra.mxu0 %v4540
  %10210 = vmatprep.subr.bf16.mxu0 %v4545
  %10211 = vmatpush1.bf16.msra.mxu0 %v4544
  %10212 = vmatprep.subr.bf16.mxu0 %v4549
  %10213 = vmatpush1.bf16.msra.mxu0 %v4548
  %10214 = vmatprep.subr.bf16.mxu0 %v4553
  %10215 = vmatpush1.bf16.msra.mxu0 %v4552
  %10216 = vmatprep.subr.bf16.mxu0 %v4557
  %10217 = vmatpush1.bf16.msra.mxu0 %v4556
  %10218 = vmatprep.subr.bf16.mxu0 %v4561
  %10219 = vmatpush1.bf16.msra.mxu0 %v4560
  %10220 = vmatprep.subr.bf16.mxu0 %v4565
  %10221 = vmatpush1.bf16.msra.mxu0 %v4564
  %10222 = vmatprep.subr.bf16.mxu0 %v4569
  %10223 = vmatpush1.bf16.msra.mxu0 %v4568
  %10224 = vmatprep.subr.bf16.mxu0 %v4573
  %10225 = vmatpush1.bf16.msra.mxu0 %v4572
  %10226 = vmatprep.mubr.bf16.mxu0 %v9519
  %10227 = vmatmul.mubr.bf16.gmra.mrb[0].mxu0 %v9518
  %v10228 = vpop.f32.mrb[0].mxu0
  %v10229 = vadd.f32 %v10188, %v10228
  %v10230 = vpop.f32.mrb[0].mxu0
  %v10231 = vadd.f32 %v10190, %v10230
  %v10232 = vpop.f32.mrb[0].mxu0
  %v10233 = vpop.f32.mrb[0].mxu0
  %10234 = vdwg.mxu0
  %v10235 = vadd.f32 %v9531, %v9963
  %v10236 = vadd.f32 %v9532, %v9965
  %v10237 = vadd.f32 %v9533, %v10045
  %v10238 = vadd.f32 %v9534, %v10047
  %v10239 = vtanh.pop %v10235
  %v10240 = vtanh.pop %v10236
  %v10241 = vtanh.pop %v10237
  %v10242 = vtanh.pop %v10238
  %v10243 = vadd.f32 %v9535, %v10147
  %v10244 = vadd.f32 %v9536, %v10149
  %v10245 = vadd.f32 %v9537, %v10229
  %v10246 = vadd.f32 %v9538, %v10231
  %v10247 = vmul.f32 %v10243, 0.5
  %v10248 = vmul.f32 %v10244, 0.5
  %v10249 = vmul.f32 %v10245, 0.5
  %v10250 = vmul.f32 %v10246, 0.5
  %v10251 = vtanh.pop %v10247
  %v10252 = vtanh.pop %v10248
  %v10253 = vtanh.pop %v10249
  %v10254 = vtanh.pop %v10250
  %v10255 = vmul.f32 %v10251, 0.5
  %v10256 = vmul.f32 %v10252, 0.5
  %v10257 = vmul.f32 %v10253, 0.5
  %v10258 = vmul.f32 %v10254, 0.5
  %v10259 = vadd.f32 %v10255, 0.5
  %v10260 = vadd.f32 %v10256, 0.5
  %v10261 = vadd.f32 %v10257, 0.5
  %v10262 = vadd.f32 %v10258, 0.5
  %v10263 = vmul.f32 %v10067, %v9504
  %v10264 = vmul.f32 %v10068, %v9505
  %v10265 = vmul.f32 %v10069, %v9506
  %v10266 = vmul.f32 %v10070, %v9507
  %v10267 = vmul.f32 %v9883, %v10239
  %v10268 = vmul.f32 %v9884, %v10240
  %v10269 = vmul.f32 %v9885, %v10241
  %v10270 = vmul.f32 %v9886, %v10242
  %v10271 = vadd.f32 %v10263, %v10267
  %v10272 = vadd.f32 %v10264, %v10268
  %v10273 = vadd.f32 %v10265, %v10269
  %v10274 = vadd.f32 %v10266, %v10270
  %v10275 = vtanh.pop %v10271
  %v10276 = vtanh.pop %v10272
  %v10277 = vtanh.pop %v10273
  %v10278 = vtanh.pop %v10274
  %v10279 = vmul.f32 %v10259, %v10275
  %v10280 = vmul.f32 %v10260, %v10276
  %v10281 = vmul.f32 %v10261, %v10277
  %v10282 = vmul.f32 %v10262, %v10278
  %10283 = vst [vmem:[#allocation3] sm:$0xff] %v10279
  %10284 = vst [vmem:[#allocation3 + $0x8] sm:$0xff] %v10280
  %10285 = vst [vmem:[#allocation3 + $0x10] sm:$0xff] %v10281
  %10286 = vst [vmem:[#allocation3 + $0x18] sm:$0xff] %v10282
  %10287 = vst [vmem:[#allocation4] sm:$0xff] %v10271
  %10288 = vst [vmem:[#allocation4 + $0x8] sm:$0xff] %v10272
  %10289 = vst [vmem:[#allocation4 + $0x10] sm:$0xff] %v10273
  %10290 = vst [vmem:[#allocation4 + $0x18] sm:$0xff] %v10274
  // Predicated region
  $region30: #{lstm_score.1} parent=0 // pred_check
    %p10291 = pneg %p26
  $region31: #{lstm_score.1} parent=0 // pred_check_branch
    %10293 = sbr.rel (%p10291) target = $region33
  $region32: #{lstm_score.1} parent=0 // pred_region
    %v10294 = vld [vmem:[%s4] sm:$0xf]
    %v10296 = vlaneseq
    %v10297 = vshrl.u32 %v10296, 7
    %v10298 = vsub.s32 0, %v10297
    %v10299 = vrot.slane %v10294, %v10298
    %v10300 = vlaneseq
    %v10301 = vshrl.u32 %v10300, 7
    %v10302 = vsub.s32 1, %v10301
    %v10303 = vrot.slane %v10294, %v10302
    %v10304 = vlaneseq
    %v10305 = vshrl.u32 %v10304, 7
    %v10306 = vsub.s32 2, %v10305
    %v10307 = vrot.slane %v10294, %v10306
    %v10308 = vlaneseq
    %v10309 = vshrl.u32 %v10308, 7
    %v10310 = vsub.s32 3, %v10309
    %v10311 = vrot.slane %v10294, %v10310
    %v10316 = vmul.f32 %v10279, %v10299
    %v10317 = vmul.f32 %v10280, %v10303
    %v10318 = vmul.f32 %v10281, %v10307
    %v10319 = vmul.f32 %v10282, %v10311
    %v10320 = vadd.f32 %v10316, %v10317
    %v10321 = vadd.f32 %v10320, %v10318
    %v10322 = vadd.f32 %v10321, %v10319
    %10323 = vadd.xlane.f32.xlu0 %v10322
    %v10324 = vpop.xlane.xlu0 %10323
    %v10325 = vld [vmem:[#allocation5] sm:$0x1]
    %v10327 = vlaneseq
    %v10328 = vshrl.u32 %v10327, 7
    %v10329 = vsub.s32 0, %v10328
    %v10330 = vrot.slane %v10325, %v10329
    %v10332 = vadd.f32 %v10324, %v10330
    %vm10333 = vcmask 7168
    %10334 = vst.msk [vmem:[%s6] sm:$0xff] %vm10333, %v10332
  $region33: #{lstm_score.1} parent=0 // pred_fallthru
    _
  // Predicated region
  $region34: #{lstm_score.1} parent=0 // pred_check
    _
  $region35: #{lstm_score.1} parent=0 // pred_check_branch
    %10336 = sbr.rel (0) target = $region37
  $region36: #{lstm_score.1} parent=0 // pred_region
    _
  $region37: #{lstm_score.1} parent=0 // pred_fallthru
    _
  // Predicated region
  $region38: #{lstm_score.1} parent=0 // pred_check
    _
  $region39: #{lstm_score.1} parent=0 // pred_check_branch
    %10338 = sbr.rel (0) target = $region41
  $region40: #{lstm_score.1} parent=0 // pred_region
    _
  $region41: #{lstm_score.1} parent=0 // pred_fallthru
    _

</llo_original>
